<compile_context>
chip_gen: v5e
topology: v5e:2x2
jax: 0.10.0
libtpu: 0.0.40
codegen_flags: <defaults>
</compile_context>

<pallas_src>
import numpy as np
import jax
import jax.numpy as jnp
from jax.experimental import pallas as pl
from jax.experimental.pallas import tpu as pltpu

EPS = 1e-5


# ---------------------------------------------------------------------------
# Pallas kernels
# ---------------------------------------------------------------------------
def _conv_bn_relu_acc_kernel(p_ref, w_ref, bias_ref, o_ref):
    """o = relu(sum_k p_k @ w_k + bias); output block resident across K axis."""
    k = pl.program_id(1)
    part = jnp.dot(p_ref[...], w_ref[...], preferred_element_type=jnp.float32)

    @pl.when(k == 0)
    def _():
        o_ref[...] = part

    @pl.when(k > 0)
    def _():
        o_ref[...] += part

    @pl.when(k == pl.num_programs(1) - 1)
    def _():
        o_ref[...] = jnp.maximum(o_ref[...] + bias_ref[...], 0.0)


def _conv_bn_relu_single_kernel(p_ref, w_ref, bias_ref, o_ref):
    """Single K-step fast path: no accumulation / pl.when overhead."""
    y = jnp.dot(p_ref[...], w_ref[...], preferred_element_type=jnp.float32)
    o_ref[...] = jnp.maximum(y + bias_ref[...], 0.0)


def _conv3_pool_fc_kernel(p_ref, w_ref, b_ref, pool_ref, fcw_ref, fcb_ref, o_ref):
    """Fused conv3+BN+ReLU -> global avg-pool -> fc(128, 2)."""
    y = jnp.dot(p_ref[...], w_ref[...], preferred_element_type=jnp.float32)
    y = jnp.maximum(y + b_ref[...], 0.0)                       # (M, 128) f32
    # Global average pool as a tiny matmul: (N, M) @ (M, 128) -> (N, 128).
    pooled = jnp.dot(pool_ref[...], y, preferred_element_type=jnp.float32)
    # fc: (N, 128) @ (128, 2) + b.
    o_ref[...] = (jnp.dot(pooled, fcw_ref[...],
                          preferred_element_type=jnp.float32) + fcb_ref[...])


# ---------------------------------------------------------------------------
# Pallas wrappers
# ---------------------------------------------------------------------------
def _choose_tk(K, max_tile=1536):
    """K tile: multiple of 128, divides K, >= 2 steps so weight DMA overlaps MXU."""
    if K % 128 == 0 and K > max_tile:
        for steps in range(2, 65):
            if K % steps == 0 and (K // steps) % 128 == 0 and (K // steps) <= max_tile:
                return K // steps
    return K   # small K -> single-step fast path


def _choose_tm(M, max_tm=512):
    """M tile: divides M, multiple of 8, <= max_tm (parallel row axis for megacore)."""
    if M <= max_tm:
        return M
    for tm in range(max_tm - max_tm % 8, 7, -8):
        if M % tm == 0:
            return tm
    return M


def fused_conv_bn_relu(patches_bf16, w_bf16, bias_f32):
    """patches: (M, K) bf16, w: (K, Cout) bf16 (BN scale folded in), bias: (Cout,) f32."""
    M, K = patches_bf16.shape
    Cout = w_bf16.shape[1]
    tk = _choose_tk(K)
    tm = _choose_tm(M)
    num_k = K // tk
    num_m = M // tm
    kernel = _conv_bn_relu_single_kernel if num_k == 1 else _conv_bn_relu_acc_kernel
    # NOTE: on v6e, pipeline_mode=pl.Buffered(3) on the weight spec could hide a bit
    # more of the conv1 weight-stream latency; left at the default depth here.
    return pl.pallas_call(
        kernel,
        out_shape=jax.ShapeDtypeStruct((M, Cout), jnp.float32),
        grid_spec=pltpu.PrefetchScalarGridSpec(
            num_scalar_prefetch=0,
            grid=(num_m, num_k),
            in_specs=[
                pl.BlockSpec((tm, tk), lambda i, k: (i, k)),
                pl.BlockSpec((tk, Cout), lambda i, k: (k, 0)),
                pl.BlockSpec((1, Cout), lambda i, k: (0, 0)),
            ],
            out_specs=pl.BlockSpec((tm, Cout), lambda i, k: (i, 0)),
        ),
        compiler_params=pltpu.CompilerParams(
            dimension_semantics=("parallel", "arbitrary")),
    )(patches_bf16, w_bf16, bias_f32.reshape(1, Cout))


def conv3_pool_fc(patches_bf16, w_bf16, bias_f32, pool_mat, fc_wt, fc_b):
    N = pool_mat.shape[0]
    Cout = w_bf16.shape[1]
    vmem = pl.BlockSpec(memory_space=pltpu.MemorySpace.VMEM)
    return pl.pallas_call(
        _conv3_pool_fc_kernel,
        out_shape=jax.ShapeDtypeStruct((N, 2), jnp.float32),
        in_specs=[vmem] * 6,
        out_specs=vmem,
    )(patches_bf16, w_bf16, bias_f32.reshape(1, Cout), pool_mat,
      fc_wt, fc_b.reshape(1, 2))


# ---------------------------------------------------------------------------
# Plain-JAX glue (im2col, BN folding, weight reshapes)
# ---------------------------------------------------------------------------
def im2col_3x3_s2_p1(x_nhwc):
    """3x3, stride 2, pad 1 im2col. Returns (N*OH*OW, 9*C), taps ordered [kh, kw, ci]."""
    N, H, W, C = x_nhwc.shape
    OH = (H - 1) // 2 + 1
    OW = (W - 1) // 2 + 1
    xp = jnp.pad(x_nhwc, ((0, 0), (1, 1), (1, 1), (0, 0)))
    cols = [xp[:, kh::2, kw::2, :][:, :OH, :OW, :]
            for kh in range(3) for kw in range(3)]
    patches = jnp.concatenate(cols, axis=-1)            # (N, OH, OW, 9*C)
    return patches.reshape(N * OH * OW, 9 * C), (N, OH, OW)


def fold_bn(gamma, beta, mean, var):
    scale = gamma / jnp.sqrt(var + EPS)
    bias = beta - mean * scale
    return scale, bias


def conv_w_to_mat(w_oihw):
    # PyTorch conv weight (Cout, Cin, 3, 3) -> (9*Cin, Cout), matching [kh, kw, ci].
    return jnp.transpose(w_oihw, (2, 3, 1, 0)).reshape(-1, w_oihw.shape[0])


def _prep_conv(w_oihw, bn_params):
    """Fold BN scale into the weight matrix; return bf16 weights + f32 bias."""
    scale, bias = fold_bn(*bn_params)
    w_mat = conv_w_to_mat(w_oihw) * scale[None, :]
    return w_mat.astype(jnp.bfloat16), bias


def init_params(key):
    ks = jax.random.split(key, 8)

    def conv_w(k, cout, cin):
        return 0.05 * jax.random.normal(k, (cout, cin, 3, 3), jnp.float32)

    def bn(k, c):
        k1, k2, k3 = jax.random.split(k, 3)
        gamma = 1.0 + 0.1 * jax.random.normal(k1, (c,), jnp.float32)
        beta = 0.1 * jax.random.normal(k2, (c,), jnp.float32)
        mean = 0.1 * jax.random.normal(k3, (c,), jnp.float32)
        var = jnp.ones((c,), jnp.float32)
        return (gamma, beta, mean, var)

    return {
        "conv1": conv_w(ks[0], 512, 512),
        "bn1": bn(ks[1], 512),
        "conv2": conv_w(ks[2], 128, 512),
        "bn2": bn(ks[3], 128),
        "conv3": conv_w(ks[4], 128, 128),
        "bn3": bn(ks[5], 128),
        "fc_w": 0.05 * jax.random.normal(ks[6], (2, 128), jnp.float32),
        "fc_b": 0.05 * jax.random.normal(ks[7], (2,), jnp.float32),
    }


@jax.jit
def netD3_forward(x_nchw, params):
    # NCHW (PyTorch) -> NHWC for TPU.
    x = jnp.transpose(x_nchw, (0, 2, 3, 1)).astype(jnp.float32)
    # TODO(synk): F.dropout is identity in eval mode (training=False), so it is omitted.

    # conv1 + bn1 + relu  (512 -> 512, H/2)
    w1, b1 = _prep_conv(params["conv1"], params["bn1"])
    p1, (N, OH, OW) = im2col_3x3_s2_p1(x)
    x = fused_conv_bn_relu(p1.astype(jnp.bfloat16), w1, b1).reshape(N, OH, OW, -1)

    # conv2 + bn2 + relu  (512 -> 128, H/4)
    w2, b2 = _prep_conv(params["conv2"], params["bn2"])
    p2, (N, OH, OW) = im2col_3x3_s2_p1(x)
    x = fused_conv_bn_relu(p2.astype(jnp.bfloat16), w2, b2).reshape(N, OH, OW, -1)

    # conv3 + bn3 + relu + global avg-pool + fc fused in one Pallas kernel.
    w3, b3 = _prep_conv(params["conv3"], params["bn3"])
    p3, (N, OH, OW) = im2col_3x3_s2_p1(x)
    S = OH * OW
    pool_mat = jnp.kron(jnp.eye(N, dtype=jnp.float32),
                        jnp.ones((1, S), jnp.float32)) / S     # (N, N*S)
    return conv3_pool_fc(p3.astype(jnp.bfloat16), w3, b3, pool_mat,
                         params["fc_w"].T.astype(jnp.float32), params["fc_b"])


# ---------------------------------------------------------------------------
# Pure-JAX references for sanity checks
# ---------------------------------------------------------------------------
def reference_forward(x_nchw, params, matmul_dtype=jnp.float32):
    x = jnp.transpose(x_nchw, (0, 2, 3, 1)).astype(jnp.float32)

    def conv_bn_relu(x, w_oihw, bnp):
        gamma, beta, mean, var = bnp
        scale = gamma / jnp.sqrt(var + EPS)
        bias = beta - mean * scale
        w = jnp.transpose(w_oihw, (2, 3, 1, 0)) * scale        # HWIO, scale folded
        y = jax.lax.conv_general_dilated(
            x.astype(matmul_dtype), w.astype(matmul_dtype),
            window_strides=(2, 2), padding=((1, 1), (1, 1)),
            dimension_numbers=("NHWC", "HWIO", "NHWC"),
            preferred_element_type=jnp.float32)
        return jnp.maximum(y + bias, 0.0)

    x = conv_bn_relu(x, params["conv1"], params["bn1"])
    x = conv_bn_relu(x, params["conv2"], params["bn2"])
    x = conv_bn_relu(x, params["conv3"], params["bn3"])
    pooled = jnp.mean(x, axis=(1, 2))
    return pooled @ params["fc_w"].T + params["fc_b"]


if __name__ == "__main__":
    key = jax.random.PRNGKey(0)
    kx, kp = jax.random.split(key)
    # NCHW input like PyTorch; channels must be 512 per the module, spatial kept small.
    x = jax.random.normal(kx, (2, 512, 16, 16), jnp.float32)
    params = init_params(kp)

    out = jax.block_until_ready(netD3_forward(x, params))
    assert out.shape == (2, 2)

    # Tight check vs a matched-precision (bf16-operand, f32-accumulate) reference.
    ref_bf16 = reference_forward(x, params, matmul_dtype=jnp.bfloat16)
    np.testing.assert_allclose(np.asarray(out), np.asarray(ref_bf16),
                               rtol=2e-2, atol=2e-2)
    # Looser check vs the full-f32 reference (bounds the bf16 operand-cast error).
    ref_f32 = reference_forward(x, params, matmul_dtype=jnp.float32)
    np.testing.assert_allclose(np.asarray(out), np.asarray(ref_f32),
                               rtol=1e-1, atol=1e-1)
    print("KERNEL_OK")
</pallas_src>

<mosaic_0001>
module attributes {stable_mosaic.version = 11 : i64} {
  func.func @_conv_bn_relu_acc_kernel(%arg0: i32, %arg1: i32, %arg2: memref<128x1536xbf16, #tpu.memory_space<vmem>>, %arg3: memref<1536x512xbf16, #tpu.memory_space<vmem>>, %arg4: memref<1x512xf32, #tpu.memory_space<vmem>>, %arg5: memref<128x512xf32, #tpu.memory_space<vmem>>) attributes {dimension_semantics = [#tpu.dimension_semantics<parallel>, #tpu.dimension_semantics<arbitrary>], iteration_bounds = array<i64: 1, 3>, scalar_prefetch = 0 : i64, scratch_operands = 0 : i64, tpu.core_type = #tpu.core_type<tc>, window_params = [{transform_indices = @transform_0, window_bounds = array<i64: 128, 1536>}, {transform_indices = @transform_1, window_bounds = array<i64: 1536, 512>}, {pipeline_mode = #tpu.pipeline_mode<synchronous>, transform_indices = @transform_2, window_bounds = array<i64: 1, 512>}, {transform_indices = @transform_3, window_bounds = array<i64: 128, 512>}]} {
    %c0 = arith.constant 0 : index
    %c0_0 = arith.constant 0 : index
    %0 = vector.load %arg2[%c0, %c0_0] : memref<128x1536xbf16, #tpu.memory_space<vmem>>, vector<128x1536xbf16>
    %c0_1 = arith.constant 0 : index
    %c0_2 = arith.constant 0 : index
    %1 = vector.load %arg3[%c0_1, %c0_2] : memref<1536x512xbf16, #tpu.memory_space<vmem>>, vector<1536x512xbf16>
    %cst = arith.constant dense<0.000000e+00> : vector<128x512xf32>
    %2 = tpu.matmul %0, %1, %cst {dimension_numbers = #tpu.dot_dimension_numbers<[1], [0], [0], [1], [0, 0, 1, 1], [], []>} : vector<128x1536xbf16>, vector<1536x512xbf16>, vector<128x512xf32> -> vector<128x512xf32>
    %c0_i32 = arith.constant 0 : i32
    %3 = arith.cmpi eq, %arg1, %c0_i32 : i32
    %4 = arith.extui %3 : i1 to i32
    %c0_i32_3 = arith.constant 0 : i32
    %5 = arith.cmpi ne, %4, %c0_i32_3 : i32
    scf.if %5 {
      %c0_7 = arith.constant 0 : index
      %c0_8 = arith.constant 0 : index
      %12 = vector.load %arg5[%c0_7, %c0_8] : memref<128x512xf32, #tpu.memory_space<vmem>>, vector<128x512xf32>
      tpu.vector_store %arg5[%c0_7, %c0_8], %2 {strides = array<i32>} : memref<128x512xf32, #tpu.memory_space<vmem>>, vector<128x512xf32>,
    } else {
    }
    %c0_i32_4 = arith.constant 0 : i32
    %6 = arith.cmpi sgt, %arg1, %c0_i32_4 : i32
    %7 = arith.extui %6 : i1 to i32
    %c0_i32_5 = arith.constant 0 : i32
    %8 = arith.cmpi ne, %7, %c0_i32_5 : i32
    scf.if %8 {
      %c0_7 = arith.constant 0 : index
      %c0_8 = arith.constant 0 : index
      %12 = vector.load %arg5[%c0_7, %c0_8] : memref<128x512xf32, #tpu.memory_space<vmem>>, vector<128x512xf32>
      %13 = arith.addf %12, %2 : vector<128x512xf32>
      %c0_9 = arith.constant 0 : index
      %c0_10 = arith.constant 0 : index
      %14 = vector.load %arg5[%c0_9, %c0_10] : memref<128x512xf32, #tpu.memory_space<vmem>>, vector<128x512xf32>
      tpu.vector_store %arg5[%c0_9, %c0_10], %13 {strides = array<i32>} : memref<128x512xf32, #tpu.memory_space<vmem>>, vector<128x512xf32>,
    } else {
    }
    %c2_i32 = arith.constant 2 : i32
    %9 = arith.cmpi eq, %arg1, %c2_i32 : i32
    %10 = arith.extui %9 : i1 to i32
    %c0_i32_6 = arith.constant 0 : i32
    %11 = arith.cmpi ne, %10, %c0_i32_6 : i32
    scf.if %11 {
      %c0_7 = arith.constant 0 : index
      %c0_8 = arith.constant 0 : index
      %12 = vector.load %arg5[%c0_7, %c0_8] : memref<128x512xf32, #tpu.memory_space<vmem>>, vector<128x512xf32>
      %c0_9 = arith.constant 0 : index
      %c0_10 = arith.constant 0 : index
      %13 = vector.load %arg4[%c0_9, %c0_10] : memref<1x512xf32, #tpu.memory_space<vmem>>, vector<1x512xf32>
      %14 = vector.broadcast %13 : vector<1x512xf32> to vector<128x512xf32>
      %15 = arith.addf %12, %14 : vector<128x512xf32>
      %cst_11 = arith.constant 0.000000e+00 : f32
      %16 = vector.broadcast %cst_11 : f32 to vector<128x512xf32>
      %17 = arith.maximumf %15, %16 : vector<128x512xf32>
      %c0_12 = arith.constant 0 : index
      %c0_13 = arith.constant 0 : index
      %18 = vector.load %arg5[%c0_12, %c0_13] : memref<128x512xf32, #tpu.memory_space<vmem>>, vector<128x512xf32>
      tpu.vector_store %arg5[%c0_12, %c0_13], %17 {strides = array<i32>} : memref<128x512xf32, #tpu.memory_space<vmem>>, vector<128x512xf32>,
    } else {
    }
    return
  }
  func.func @transform_0(%arg0: i32, %arg1: i32) -> (i32, i32) {
    %c0_i32 = arith.constant 0 : i32
    return %arg0, %arg1 : i32, i32
  }
  func.func @transform_1(%arg0: i32, %arg1: i32) -> (i32, i32) {
    %c0_i32 = arith.constant 0 : i32
    %c0_i32_0 = arith.constant 0 : i32
    return %arg1, %c0_i32 : i32, i32
  }
  func.func @transform_2(%arg0: i32, %arg1: i32) -> (i32, i32) {
    %c0_i32 = arith.constant 0 : i32
    %c0_i32_0 = arith.constant 0 : i32
    %c0_i32_1 = arith.constant 0 : i32
    return %c0_i32, %c0_i32_0 : i32, i32
  }
  func.func @transform_3(%arg0: i32, %arg1: i32) -> (i32, i32) {
    %c0_i32 = arith.constant 0 : i32
    %c0_i32_0 = arith.constant 0 : i32
    return %arg0, %c0_i32 : i32, i32
  }
}

module attributes {stable_mosaic.version = 11 : i64} {
  func.func @_conv_bn_relu_acc_kernel(%arg0: i32, %arg1: i32, %arg2: memref<32x1536xbf16, #tpu.memory_space<vmem>>, %arg3: memref<1536x128xbf16, #tpu.memory_space<vmem>>, %arg4: memref<1x128xf32, #tpu.memory_space<vmem>>, %arg5: memref<32x128xf32, #tpu.memory_space<vmem>>) attributes {dimension_semantics = [#tpu.dimension_semantics<parallel>, #tpu.dimension_semantics<arbitrary>], iteration_bounds = array<i64: 1, 3>, scalar_prefetch = 0 : i64, scratch_operands = 0 : i64, tpu.core_type = #tpu.core_type<tc>, window_params = [{transform_indices = @transform_0, window_bounds = array<i64: 32, 1536>}, {transform_indices = @transform_1, window_bounds = array<i64: 1536, 128>}, {pipeline_mode = #tpu.pipeline_mode<synchronous>, transform_indices = @transform_2, window_bounds = array<i64: 1, 128>}, {transform_indices = @transform_3, window_bounds = array<i64: 32, 128>}]} {
    %c0 = arith.constant 0 : index
    %c0_0 = arith.constant 0 : index
    %0 = vector.load %arg2[%c0, %c0_0] : memref<32x1536xbf16, #tpu.memory_space<vmem>>, vector<32x1536xbf16>
    %c0_1 = arith.constant 0 : index
    %c0_2 = arith.constant 0 : index
    %1 = vector.load %arg3[%c0_1, %c0_2] : memref<1536x128xbf16, #tpu.memory_space<vmem>>, vector<1536x128xbf16>
    %cst = arith.constant dense<0.000000e+00> : vector<32x128xf32>
    %2 = tpu.matmul %0, %1, %cst {dimension_numbers = #tpu.dot_dimension_numbers<[1], [0], [0], [1], [0, 0, 1, 1], [], []>} : vector<32x1536xbf16>, vector<1536x128xbf16>, vector<32x128xf32> -> vector<32x128xf32>
    %c0_i32 = arith.constant 0 : i32
    %3 = arith.cmpi eq, %arg1, %c0_i32 : i32
    %4 = arith.extui %3 : i1 to i32
    %c0_i32_3 = arith.constant 0 : i32
    %5 = arith.cmpi ne, %4, %c0_i32_3 : i32
    scf.if %5 {
      %c0_7 = arith.constant 0 : index
      %c0_8 = arith.constant 0 : index
      %12 = vector.load %arg5[%c0_7, %c0_8] : memref<32x128xf32, #tpu.memory_space<vmem>>, vector<32x128xf32>
      tpu.vector_store %arg5[%c0_7, %c0_8], %2 {strides = array<i32>} : memref<32x128xf32, #tpu.memory_space<vmem>>, vector<32x128xf32>,
    } else {
    }
    %c0_i32_4 = arith.constant 0 : i32
    %6 = arith.cmpi sgt, %arg1, %c0_i32_4 : i32
    %7 = arith.extui %6 : i1 to i32
    %c0_i32_5 = arith.constant 0 : i32
    %8 = arith.cmpi ne, %7, %c0_i32_5 : i32
    scf.if %8 {
      %c0_7 = arith.constant 0 : index
      %c0_8 = arith.constant 0 : index
      %12 = vector.load %arg5[%c0_7, %c0_8] : memref<32x128xf32, #tpu.memory_space<vmem>>, vector<32x128xf32>
      %13 = arith.addf %12, %2 : vector<32x128xf32>
      %c0_9 = arith.constant 0 : index
      %c0_10 = arith.constant 0 : index
      %14 = vector.load %arg5[%c0_9, %c0_10] : memref<32x128xf32, #tpu.memory_space<vmem>>, vector<32x128xf32>
      tpu.vector_store %arg5[%c0_9, %c0_10], %13 {strides = array<i32>} : memref<32x128xf32, #tpu.memory_space<vmem>>, vector<32x128xf32>,
    } else {
    }
    %c2_i32 = arith.constant 2 : i32
    %9 = arith.cmpi eq, %arg1, %c2_i32 : i32
    %10 = arith.extui %9 : i1 to i32
    %c0_i32_6 = arith.constant 0 : i32
    %11 = arith.cmpi ne, %10, %c0_i32_6 : i32
    scf.if %11 {
      %c0_7 = arith.constant 0 : index
      %c0_8 = arith.constant 0 : index
      %12 = vector.load %arg5[%c0_7, %c0_8] : memref<32x128xf32, #tpu.memory_space<vmem>>, vector<32x128xf32>
      %c0_9 = arith.constant 0 : index
      %c0_10 = arith.constant 0 : index
      %13 = vector.load %arg4[%c0_9, %c0_10] : memref<1x128xf32, #tpu.memory_space<vmem>>, vector<1x128xf32>
      %14 = vector.broadcast %13 : vector<1x128xf32> to vector<32x128xf32>
      %15 = arith.addf %12, %14 : vector<32x128xf32>
      %cst_11 = arith.constant 0.000000e+00 : f32
      %16 = vector.broadcast %cst_11 : f32 to vector<32x128xf32>
      %17 = arith.maximumf %15, %16 : vector<32x128xf32>
      %c0_12 = arith.constant 0 : index
      %c0_13 = arith.constant 0 : index
      %18 = vector.load %arg5[%c0_12, %c0_13] : memref<32x128xf32, #tpu.memory_space<vmem>>, vector<32x128xf32>
      tpu.vector_store %arg5[%c0_12, %c0_13], %17 {strides = array<i32>} : memref<32x128xf32, #tpu.memory_space<vmem>>, vector<32x128xf32>,
    } else {
    }
    return
  }
  func.func @transform_0(%arg0: i32, %arg1: i32) -> (i32, i32) {
    %c0_i32 = arith.constant 0 : i32
    return %arg0, %arg1 : i32, i32
  }
  func.func @transform_1(%arg0: i32, %arg1: i32) -> (i32, i32) {
    %c0_i32 = arith.constant 0 : i32
    %c0_i32_0 = arith.constant 0 : i32
    return %arg1, %c0_i32 : i32, i32
  }
  func.func @transform_2(%arg0: i32, %arg1: i32) -> (i32, i32) {
    %c0_i32 = arith.constant 0 : i32
    %c0_i32_0 = arith.constant 0 : i32
    %c0_i32_1 = arith.constant 0 : i32
    return %c0_i32, %c0_i32_0 : i32, i32
  }
  func.func @transform_3(%arg0: i32, %arg1: i32) -> (i32, i32) {
    %c0_i32 = arith.constant 0 : i32
    %c0_i32_0 = arith.constant 0 : i32
    return %arg0, %c0_i32 : i32, i32
  }
}

module attributes {stable_mosaic.version = 11 : i64} {
  func.func @_conv3_pool_fc_kernel(%arg0: memref<8x1152xbf16, #tpu.memory_space<vmem>>, %arg1: memref<1152x128xbf16, #tpu.memory_space<vmem>>, %arg2: memref<1x128xf32, #tpu.memory_space<vmem>>, %arg3: memref<2x8xf32, #tpu.memory_space<vmem>>, %arg4: memref<128x2xf32, #tpu.memory_space<vmem>>, %arg5: memref<1x2xf32, #tpu.memory_space<vmem>>, %arg6: memref<2x2xf32, #tpu.memory_space<vmem>>) attributes {dimension_semantics = [], scalar_prefetch = 0 : i64, scratch_operands = 0 : i64, tpu.core_type = #tpu.core_type<tc>} {
    %c0 = arith.constant 0 : index
    %c0_0 = arith.constant 0 : index
    %0 = vector.load %arg0[%c0, %c0_0] : memref<8x1152xbf16, #tpu.memory_space<vmem>>, vector<8x1152xbf16>
    %c0_1 = arith.constant 0 : index
    %c0_2 = arith.constant 0 : index
    %1 = vector.load %arg1[%c0_1, %c0_2] : memref<1152x128xbf16, #tpu.memory_space<vmem>>, vector<1152x128xbf16>
    %cst = arith.constant dense<0.000000e+00> : vector<8x128xf32>
    %2 = tpu.matmul %0, %1, %cst {dimension_numbers = #tpu.dot_dimension_numbers<[1], [0], [0], [1], [0, 0, 1, 1], [], []>} : vector<8x1152xbf16>, vector<1152x128xbf16>, vector<8x128xf32> -> vector<8x128xf32>
    %c0_3 = arith.constant 0 : index
    %c0_4 = arith.constant 0 : index
    %3 = vector.load %arg2[%c0_3, %c0_4] : memref<1x128xf32, #tpu.memory_space<vmem>>, vector<1x128xf32>
    %4 = vector.broadcast %3 : vector<1x128xf32> to vector<8x128xf32>
    %5 = arith.addf %2, %4 : vector<8x128xf32>
    %cst_5 = arith.constant 0.000000e+00 : f32
    %6 = vector.broadcast %cst_5 : f32 to vector<8x128xf32>
    %7 = arith.maximumf %5, %6 : vector<8x128xf32>
    %c0_6 = arith.constant 0 : index
    %c0_7 = arith.constant 0 : index
    %8 = vector.load %arg3[%c0_6, %c0_7] : memref<2x8xf32, #tpu.memory_space<vmem>>, vector<2x8xf32>
    %cst_8 = arith.constant dense<0.000000e+00> : vector<2x128xf32>
    %9 = tpu.matmul %8, %7, %cst_8 {dimension_numbers = #tpu.dot_dimension_numbers<[1], [0], [0], [1], [0, 0, 1, 1], [], []>} : vector<2x8xf32>, vector<8x128xf32>, vector<2x128xf32> -> vector<2x128xf32>
    %c0_9 = arith.constant 0 : index
    %c0_10 = arith.constant 0 : index
    %10 = vector.load %arg4[%c0_9, %c0_10] : memref<128x2xf32, #tpu.memory_space<vmem>>, vector<128x2xf32>
    %cst_11 = arith.constant dense<0.000000e+00> : vector<2x2xf32>
    %11 = tpu.matmul %9, %10, %cst_11 {dimension_numbers = #tpu.dot_dimension_numbers<[1], [0], [0], [1], [0, 0, 1, 1], [], []>} : vector<2x128xf32>, vector<128x2xf32>, vector<2x2xf32> -> vector<2x2xf32>
    %c0_12 = arith.constant 0 : index
    %c0_13 = arith.constant 0 : index
    %12 = vector.load %arg5[%c0_12, %c0_13] : memref<1x2xf32, #tpu.memory_space<vmem>>, vector<1x2xf32>
    %13 = vector.broadcast %12 : vector<1x2xf32> to vector<2x2xf32>
    %14 = arith.addf %11, %13 : vector<2x2xf32>
    %c0_14 = arith.constant 0 : index
    %c0_15 = arith.constant 0 : index
    %15 = vector.load %arg6[%c0_14, %c0_15] : memref<2x2xf32, #tpu.memory_space<vmem>>, vector<2x2xf32>
    tpu.vector_store %arg6[%c0_14, %c0_15], %14 {strides = array<i32>} : memref<2x2xf32, #tpu.memory_space<vmem>>, vector<2x2xf32>,
    return
  }
}

</mosaic_0001>

<llo_original>
// kernel: netD3_forward.3
$region0: #{netD3_forward.3}
  #allocation0 [shape = 'u32[]', space=smem, size = 0x4, offset = 0x4, fixed_abs, tag = 'smem constant byte address 0x4 - core index']
  #allocation1 [shape = 'u32[72,128]{1,0:T(1,128)}', space=vmem, size = 0x9000, scoped, tag = 'internal scratch']
  %s0 = inlined_call_operand.vmem [shape: bf16[128,4608], index: 0, kind: input, shape index: {}]
  %s1 = inlined_call_operand.vmem [shape: bf16[4608,512], index: 1, kind: input, shape index: {}]
  %s2 = inlined_call_operand.vmem [shape: f32[1,512], index: 2, kind: input, shape index: {}]
  %s3 = inlined_call_operand.vmem [shape: f32[128,512], index: 3, kind: output, shape index: {}]
  %s4 = sld [smem:[#allocation0]]
  $region80: #{netD3_forward.3} parent=0
    _
  %s6 = ssub.s32 1, %s4
  %s7 = scalar_select 0, %s6, %s4
  $region1: #{netD3_forward.3} parent=0
    #allocation2 [shape = 'u8[786432]{0}', space=vmem, size = 0xc0000, scoped, tag = 'input window, operand 0']
    loop: start=0, step=1, limit=5
    $region2: #{netD3_forward.3} parent=1 // loop_pre_header
      _
    $region3: #{netD3_forward.3} parent=1 // loop_header
      %s9 = sphi 0, %s13
      %p10 = scmp.ge.s32.totalorder %s9, 5
      %s16 = sphi 0, %s28
      %s17 = sphi 0, %s24
      %s18 = sphi 0, %s16
      %s19 = sphi 0, %s17
      %s20 = sphi 0, %s18
      %s21 = sphi 0, %s19
      %s33 = sphi 0, %s35
      %s36 = sphi 0, %s33
      %s37 = sphi 0, %s36
      %s53 = sphi 0, %s37
      %s59 = sphi 0, %s61
      %s62 = sphi 0, %s59
      %s63 = sphi 0, %s62
      %s79 = sphi 0, %s63
      %s83 = sphi 0, %s83
      %s85 = sphi 0, %s83
      %s86 = sphi 0, %s85
      %s100 = sphi 0, %s86
      %s106 = sphi 0, %s108
      %s109 = sphi 0, %s106
      %s110 = sphi 0, %s109
      %s126 = sphi 0, %s110
    $region4: #{netD3_forward.3} parent=1 // loop_header_branch
      %12 = sbr.rel (%p10) target = $region8
    $region5: #{netD3_forward.3} parent=1 // loop_body
      %s14 = ssub.s32 %s9, 1
      %s15 = ssub.s32 %s9, 2
      %s22 = sadd.s32 1, %s17
      %p23 = scmp.ge.s32.totalorder %s22, 3
      %s24 = scalar_select %p23, 0, %s22
      %s25 = sadd.s32 1, %s16
      %s26 = scalar_select %p23, %s25, %s16
      %p27 = scmp.ge.s32.totalorder %s26, 1
      %s28 = scalar_select %p27, 0, %s26
      %s29 = ssub.s32 %s16, %s28
      %s30 = ssub.s32 %s17, %s24
      %s31 = sor.u32 %s29, %s30
      %p32 = scmp.eq.s32.totalorder %s31, 0
      %s34 = sadd.s32 %s33, 1
      %s35 = scalar_select %p32, %s33, %s34
      %p38 = pneg %p32
      %p39 = scmp.eq.s32.totalorder %s9, 2
      %p40 = por %p38, %p39
      %p41 = scmp.ne.s32.totalorder %s33, %s36
      %p42 = scmp.eq.s32.totalorder %s9, 0
      %p43 = por %p41, %p42
      %p44 = scmp.ne.s32.totalorder %s33, %s36
      %p45 = scmp.eq.s32.totalorder %s14, 2
      %p46 = por %p44, %p45
      %p47 = scmp.ne.s32.totalorder %s36, %s37
      %p48 = scmp.eq.s32.totalorder %s14, 0
      %p49 = por %p47, %p48
      %p50 = scmp.ne.s32.totalorder %s36, %s37
      %p51 = scmp.eq.s32.totalorder %s15, 2
      %p52 = por %p50, %p51
      %p54 = scmp.ne.s32.totalorder %s37, %s53
      %p55 = scmp.eq.s32.totalorder %s15, 0
      %p56 = por %p54, %p55
      %s57 = ssub.s32 %s17, %s24
      %p58 = scmp.eq.s32.totalorder %s57, 0
      %s60 = sadd.s32 %s59, 1
      %s61 = scalar_select %p58, %s59, %s60
      %p64 = pneg %p58
      %p65 = scmp.eq.s32.totalorder %s9, 2
      %p66 = por %p64, %p65
      %p67 = scmp.ne.s32.totalorder %s59, %s62
      %p68 = scmp.eq.s32.totalorder %s9, 0
      %p69 = por %p67, %p68
      %p70 = scmp.ne.s32.totalorder %s59, %s62
      %p71 = scmp.eq.s32.totalorder %s14, 2
      %p72 = por %p70, %p71
      %p73 = scmp.ne.s32.totalorder %s62, %s63
      %p74 = scmp.eq.s32.totalorder %s14, 0
      %p75 = por %p73, %p74
      %p76 = scmp.ne.s32.totalorder %s62, %s63
      %p77 = scmp.eq.s32.totalorder %s15, 2
      %p78 = por %p76, %p77
      %p80 = scmp.ne.s32.totalorder %s63, %s79
      %p81 = scmp.eq.s32.totalorder %s15, 0
      %p82 = por %p80, %p81
      %s84 = sadd.s32 %s83, 1
      %p87 = scmp.eq.s32.totalorder %s9, 2
      %p88 = scmp.ne.s32.totalorder %s83, %s85
      %p89 = scmp.eq.s32.totalorder %s9, 0
      %p90 = por %p88, %p89
      %p91 = scmp.ne.s32.totalorder %s83, %s85
      %p92 = scmp.eq.s32.totalorder %s14, 2
      %p93 = por %p91, %p92
      %p94 = scmp.ne.s32.totalorder %s85, %s86
      %p95 = scmp.eq.s32.totalorder %s14, 0
      %p96 = por %p94, %p95
      %p97 = scmp.ne.s32.totalorder %s85, %s86
      %p98 = scmp.eq.s32.totalorder %s15, 2
      %p99 = por %p97, %p98
      %p101 = scmp.ne.s32.totalorder %s86, %s100
      %p102 = scmp.eq.s32.totalorder %s15, 0
      %p103 = por %p101, %p102
      %s104 = ssub.s32 %s16, %s28
      %p105 = scmp.eq.s32.totalorder %s104, 0
      %s107 = sadd.s32 %s106, 1
      %s108 = scalar_select %p105, %s106, %s107
      %p111 = pneg %p105
      %p112 = scmp.eq.s32.totalorder %s9, 2
      %p113 = por %p111, %p112
      %p114 = scmp.ne.s32.totalorder %s106, %s109
      %p115 = scmp.eq.s32.totalorder %s9, 0
      %p116 = por %p114, %p115
      %p117 = scmp.ne.s32.totalorder %s106, %s109
      %p118 = scmp.eq.s32.totalorder %s14, 2
      %p119 = por %p117, %p118
      %p120 = scmp.ne.s32.totalorder %s109, %s110
      %p121 = scmp.eq.s32.totalorder %s14, 0
      %p122 = por %p120, %p121
      %p123 = scmp.ne.s32.totalorder %s109, %s110
      %p124 = scmp.eq.s32.totalorder %s15, 2
      %p125 = por %p123, %p124
      %p127 = scmp.ne.s32.totalorder %s110, %s126
      %p128 = scmp.eq.s32.totalorder %s15, 0
      %p129 = por %p127, %p128
      %p130 = scmp.le.s32.totalorder 1, %s9
      %p131 = scmp.lt.s32.totalorder %s9, 4
      %p132 = pnand %p130, %p131
      %p133 = pneg %p132
      // Predicated region
      $region9: #{netD3_forward.3} parent=5 // pred_check
        _
      $region10: #{netD3_forward.3} parent=5 // pred_check_branch
        %135 = sbr.rel (%p132) target = $region12
      $region11: #{netD3_forward.3} parent=5 // pred_region
        %s136 = ssub.s32 %s9, 1
        // Predicated region
        $region13: #{netD3_forward.3} parent=11 // pred_check
          %p137 = pneg %p96
        $region14: #{netD3_forward.3} parent=11 // pred_check_branch
          %139 = sbr.rel (%p137) target = $region16
        $region15: #{netD3_forward.3} parent=11 // pred_region
          _
        $region16: #{netD3_forward.3} parent=11 // pred_fallthru
          _
      $region12: #{netD3_forward.3} parent=5 // pred_fallthru
        _
      %p140 = scmp.lt.s32.totalorder %s9, 3
      // Predicated region
      $region17: #{netD3_forward.3} parent=5 // pred_check
        %p141 = pneg %p140
      $region18: #{netD3_forward.3} parent=5 // pred_check_branch
        %143 = sbr.rel (%p141) target = $region20
      $region19: #{netD3_forward.3} parent=5 // pred_region
        // Predicated region
        $region21: #{netD3_forward.3} parent=19 // pred_check
          %p144 = pneg %p43
        $region22: #{netD3_forward.3} parent=19 // pred_check_branch
          %146 = sbr.rel (%p144) target = $region24
        $region23: #{netD3_forward.3} parent=19 // pred_region
          %s147 = sand.u32 %s33, 1
          %s148 = sand.u32 %s33, 1
          %s149 = smul.addr %s148, 768
          %s150 = scalar_lea.vmem [#allocation2], %s149
          %s151 = smul.u32 16, %s16
          %s152 = smul.u32 12, %s17
          %s153 = smul.addr %s151, 36
          %s154 = sadd.s32 %s152, %s153
          %s155 = smul.addr %s154, 4
          %s156 = scalar_lea.vmem %s0, %s155
          // Predicated region
          $region25: #{netD3_forward.3} parent=23 // pred_check
            _
          $region26: #{netD3_forward.3} parent=23 // pred_check_branch
            %158 = sbr.rel (0) target = $region28
          $region27: #{netD3_forward.3} parent=23 // pred_region
            // Predicated region
            $region29: #{netD3_forward.3} parent=27 // pred_check
              _
            $region30: #{netD3_forward.3} parent=27 // pred_check_branch
              %160 = sbr.rel (0) target = $region32
            $region31: #{netD3_forward.3} parent=27 // pred_region
              loop: start=0, step=1, limit=1
              $region33: #{netD3_forward.3} parent=31 // loop_pre_header
                _
              $region34: #{netD3_forward.3} parent=31 // loop_header
                %s162 = sphi 0, %s166
                %p163 = scmp.ge.s32.totalorder %s162, 1
                %s167 = sphi %s156, %s156
                %s168 = sphi %s150, %s150
              $region35: #{netD3_forward.3} parent=31 // loop_header_branch
                %165 = sbr.rel (%p163) target = $region39
              $region36: #{netD3_forward.3} parent=31 // loop_body
                %v169 = vld [vmem:[%s167] sm:$0xff]
                %170 = vst [vmem:[%s168] sm:$0xff] %v169
                %v171 = vld [vmem:[%s167 + $0x8] sm:$0xff]
                %172 = vst [vmem:[%s168 + $0x8] sm:$0xff] %v171
                %v173 = vld [vmem:[%s167 + $0x10] sm:$0xff]
                %174 = vst [vmem:[%s168 + $0x10] sm:$0xff] %v173
                %v175 = vld [vmem:[%s167 + $0x18] sm:$0xff]
                %176 = vst [vmem:[%s168 + $0x18] sm:$0xff] %v175
                %v177 = vld [vmem:[%s167 + $0x20] sm:$0xff]
                %178 = vst [vmem:[%s168 + $0x20] sm:$0xff] %v177
                %v179 = vld [vmem:[%s167 + $0x28] sm:$0xff]
                %180 = vst [vmem:[%s168 + $0x28] sm:$0xff] %v179
                %v181 = vld [vmem:[%s167 + $0x90] sm:$0xff]
                %182 = vst [vmem:[%s168 + $0x30] sm:$0xff] %v181
                %v183 = vld [vmem:[%s167 + $0x98] sm:$0xff]
                %184 = vst [vmem:[%s168 + $0x38] sm:$0xff] %v183
                %v185 = vld [vmem:[%s167 + $0xa0] sm:$0xff]
                %186 = vst [vmem:[%s168 + $0x40] sm:$0xff] %v185
                %v187 = vld [vmem:[%s167 + $0xa8] sm:$0xff]
                %188 = vst [vmem:[%s168 + $0x48] sm:$0xff] %v187
                %v189 = vld [vmem:[%s167 + $0xb0] sm:$0xff]
                %190 = vst [vmem:[%s168 + $0x50] sm:$0xff] %v189
                %v191 = vld [vmem:[%s167 + $0xb8] sm:$0xff]
                %192 = vst [vmem:[%s168 + $0x58] sm:$0xff] %v191
                %v193 = vld [vmem:[%s167 + $0x120] sm:$0xff]
                %194 = vst [vmem:[%s168 + $0x60] sm:$0xff] %v193
                %v195 = vld [vmem:[%s167 + $0x128] sm:$0xff]
                %196 = vst [vmem:[%s168 + $0x68] sm:$0xff] %v195
                %v197 = vld [vmem:[%s167 + $0x130] sm:$0xff]
                %198 = vst [vmem:[%s168 + $0x70] sm:$0xff] %v197
                %v199 = vld [vmem:[%s167 + $0x138] sm:$0xff]
                %200 = vst [vmem:[%s168 + $0x78] sm:$0xff] %v199
                %v201 = vld [vmem:[%s167 + $0x140] sm:$0xff]
                %202 = vst [vmem:[%s168 + $0x80] sm:$0xff] %v201
                %v203 = vld [vmem:[%s167 + $0x148] sm:$0xff]
                %204 = vst [vmem:[%s168 + $0x88] sm:$0xff] %v203
                %v205 = vld [vmem:[%s167 + $0x1b0] sm:$0xff]
                %206 = vst [vmem:[%s168 + $0x90] sm:$0xff] %v205
                %v207 = vld [vmem:[%s167 + $0x1b8] sm:$0xff]
                %208 = vst [vmem:[%s168 + $0x98] sm:$0xff] %v207
                %v209 = vld [vmem:[%s167 + $0x1c0] sm:$0xff]
                %210 = vst [vmem:[%s168 + $0xa0] sm:$0xff] %v209
                %v211 = vld [vmem:[%s167 + $0x1c8] sm:$0xff]
                %212 = vst [vmem:[%s168 + $0xa8] sm:$0xff] %v211
                %v213 = vld [vmem:[%s167 + $0x1d0] sm:$0xff]
                %214 = vst [vmem:[%s168 + $0xb0] sm:$0xff] %v213
                %v215 = vld [vmem:[%s167 + $0x1d8] sm:$0xff]
                %216 = vst [vmem:[%s168 + $0xb8] sm:$0xff] %v215
                %v217 = vld [vmem:[%s167 + $0x240] sm:$0xff]
                %218 = vst [vmem:[%s168 + $0xc0] sm:$0xff] %v217
                %v219 = vld [vmem:[%s167 + $0x248] sm:$0xff]
                %220 = vst [vmem:[%s168 + $0xc8] sm:$0xff] %v219
                %v221 = vld [vmem:[%s167 + $0x250] sm:$0xff]
                %222 = vst [vmem:[%s168 + $0xd0] sm:$0xff] %v221
                %v223 = vld [vmem:[%s167 + $0x258] sm:$0xff]
                %224 = vst [vmem:[%s168 + $0xd8] sm:$0xff] %v223
                %v225 = vld [vmem:[%s167 + $0x260] sm:$0xff]
                %226 = vst [vmem:[%s168 + $0xe0] sm:$0xff] %v225
                %v227 = vld [vmem:[%s167 + $0x268] sm:$0xff]
                %228 = vst [vmem:[%s168 + $0xe8] sm:$0xff] %v227
                %v229 = vld [vmem:[%s167 + $0x2d0] sm:$0xff]
                %230 = vst [vmem:[%s168 + $0xf0] sm:$0xff] %v229
                %v231 = vld [vmem:[%s167 + $0x2d8] sm:$0xff]
                %232 = vst [vmem:[%s168 + $0xf8] sm:$0xff] %v231
                %v233 = vld [vmem:[%s167 + $0x2e0] sm:$0xff]
                %234 = vst [vmem:[%s168 + $0x100] sm:$0xff] %v233
                %v235 = vld [vmem:[%s167 + $0x2e8] sm:$0xff]
                %236 = vst [vmem:[%s168 + $0x108] sm:$0xff] %v235
                %v237 = vld [vmem:[%s167 + $0x2f0] sm:$0xff]
                %238 = vst [vmem:[%s168 + $0x110] sm:$0xff] %v237
                %v239 = vld [vmem:[%s167 + $0x2f8] sm:$0xff]
                %240 = vst [vmem:[%s168 + $0x118] sm:$0xff] %v239
                %v241 = vld [vmem:[%s167 + $0x360] sm:$0xff]
                %242 = vst [vmem:[%s168 + $0x120] sm:$0xff] %v241
                %v243 = vld [vmem:[%s167 + $0x368] sm:$0xff]
                %244 = vst [vmem:[%s168 + $0x128] sm:$0xff] %v243
                %v245 = vld [vmem:[%s167 + $0x370] sm:$0xff]
                %246 = vst [vmem:[%s168 + $0x130] sm:$0xff] %v245
                %v247 = vld [vmem:[%s167 + $0x378] sm:$0xff]
                %248 = vst [vmem:[%s168 + $0x138] sm:$0xff] %v247
                %v249 = vld [vmem:[%s167 + $0x380] sm:$0xff]
                %250 = vst [vmem:[%s168 + $0x140] sm:$0xff] %v249
                %v251 = vld [vmem:[%s167 + $0x388] sm:$0xff]
                %252 = vst [vmem:[%s168 + $0x148] sm:$0xff] %v251
                %v253 = vld [vmem:[%s167 + $0x3f0] sm:$0xff]
                %254 = vst [vmem:[%s168 + $0x150] sm:$0xff] %v253
                %v255 = vld [vmem:[%s167 + $0x3f8] sm:$0xff]
                %256 = vst [vmem:[%s168 + $0x158] sm:$0xff] %v255
                %v257 = vld [vmem:[%s167 + $0x400] sm:$0xff]
                %258 = vst [vmem:[%s168 + $0x160] sm:$0xff] %v257
                %v259 = vld [vmem:[%s167 + $0x408] sm:$0xff]
                %260 = vst [vmem:[%s168 + $0x168] sm:$0xff] %v259
                %v261 = vld [vmem:[%s167 + $0x410] sm:$0xff]
                %262 = vst [vmem:[%s168 + $0x170] sm:$0xff] %v261
                %v263 = vld [vmem:[%s167 + $0x418] sm:$0xff]
                %264 = vst [vmem:[%s168 + $0x178] sm:$0xff] %v263
                %v265 = vld [vmem:[%s167 + $0x480] sm:$0xff]
                %266 = vst [vmem:[%s168 + $0x180] sm:$0xff] %v265
                %v267 = vld [vmem:[%s167 + $0x488] sm:$0xff]
                %268 = vst [vmem:[%s168 + $0x188] sm:$0xff] %v267
                %v269 = vld [vmem:[%s167 + $0x490] sm:$0xff]
                %270 = vst [vmem:[%s168 + $0x190] sm:$0xff] %v269
                %v271 = vld [vmem:[%s167 + $0x498] sm:$0xff]
                %272 = vst [vmem:[%s168 + $0x198] sm:$0xff] %v271
                %v273 = vld [vmem:[%s167 + $0x4a0] sm:$0xff]
                %274 = vst [vmem:[%s168 + $0x1a0] sm:$0xff] %v273
                %v275 = vld [vmem:[%s167 + $0x4a8] sm:$0xff]
                %276 = vst [vmem:[%s168 + $0x1a8] sm:$0xff] %v275
                %v277 = vld [vmem:[%s167 + $0x510] sm:$0xff]
                %278 = vst [vmem:[%s168 + $0x1b0] sm:$0xff] %v277
                %v279 = vld [vmem:[%s167 + $0x518] sm:$0xff]
                %280 = vst [vmem:[%s168 + $0x1b8] sm:$0xff] %v279
                %v281 = vld [vmem:[%s167 + $0x520] sm:$0xff]
                %282 = vst [vmem:[%s168 + $0x1c0] sm:$0xff] %v281
                %v283 = vld [vmem:[%s167 + $0x528] sm:$0xff]
                %284 = vst [vmem:[%s168 + $0x1c8] sm:$0xff] %v283
                %v285 = vld [vmem:[%s167 + $0x530] sm:$0xff]
                %286 = vst [vmem:[%s168 + $0x1d0] sm:$0xff] %v285
                %v287 = vld [vmem:[%s167 + $0x538] sm:$0xff]
                %288 = vst [vmem:[%s168 + $0x1d8] sm:$0xff] %v287
                %v289 = vld [vmem:[%s167 + $0x5a0] sm:$0xff]
                %290 = vst [vmem:[%s168 + $0x1e0] sm:$0xff] %v289
                %v291 = vld [vmem:[%s167 + $0x5a8] sm:$0xff]
                %292 = vst [vmem:[%s168 + $0x1e8] sm:$0xff] %v291
                %v293 = vld [vmem:[%s167 + $0x5b0] sm:$0xff]
                %294 = vst [vmem:[%s168 + $0x1f0] sm:$0xff] %v293
                %v295 = vld [vmem:[%s167 + $0x5b8] sm:$0xff]
                %296 = vst [vmem:[%s168 + $0x1f8] sm:$0xff] %v295
                %v297 = vld [vmem:[%s167 + $0x5c0] sm:$0xff]
                %298 = vst [vmem:[%s168 + $0x200] sm:$0xff] %v297
                %v299 = vld [vmem:[%s167 + $0x5c8] sm:$0xff]
                %300 = vst [vmem:[%s168 + $0x208] sm:$0xff] %v299
                %v301 = vld [vmem:[%s167 + $0x630] sm:$0xff]
                %302 = vst [vmem:[%s168 + $0x210] sm:$0xff] %v301
                %v303 = vld [vmem:[%s167 + $0x638] sm:$0xff]
                %304 = vst [vmem:[%s168 + $0x218] sm:$0xff] %v303
                %v305 = vld [vmem:[%s167 + $0x640] sm:$0xff]
                %306 = vst [vmem:[%s168 + $0x220] sm:$0xff] %v305
                %v307 = vld [vmem:[%s167 + $0x648] sm:$0xff]
                %308 = vst [vmem:[%s168 + $0x228] sm:$0xff] %v307
                %v309 = vld [vmem:[%s167 + $0x650] sm:$0xff]
                %310 = vst [vmem:[%s168 + $0x230] sm:$0xff] %v309
                %v311 = vld [vmem:[%s167 + $0x658] sm:$0xff]
                %312 = vst [vmem:[%s168 + $0x238] sm:$0xff] %v311
                %v313 = vld [vmem:[%s167 + $0x6c0] sm:$0xff]
                %314 = vst [vmem:[%s168 + $0x240] sm:$0xff] %v313
                %v315 = vld [vmem:[%s167 + $0x6c8] sm:$0xff]
                %316 = vst [vmem:[%s168 + $0x248] sm:$0xff] %v315
                %v317 = vld [vmem:[%s167 + $0x6d0] sm:$0xff]
                %318 = vst [vmem:[%s168 + $0x250] sm:$0xff] %v317
                %v319 = vld [vmem:[%s167 + $0x6d8] sm:$0xff]
                %320 = vst [vmem:[%s168 + $0x258] sm:$0xff] %v319
                %v321 = vld [vmem:[%s167 + $0x6e0] sm:$0xff]
                %322 = vst [vmem:[%s168 + $0x260] sm:$0xff] %v321
                %v323 = vld [vmem:[%s167 + $0x6e8] sm:$0xff]
                %324 = vst [vmem:[%s168 + $0x268] sm:$0xff] %v323
                %v325 = vld [vmem:[%s167 + $0x750] sm:$0xff]
                %326 = vst [vmem:[%s168 + $0x270] sm:$0xff] %v325
                %v327 = vld [vmem:[%s167 + $0x758] sm:$0xff]
                %328 = vst [vmem:[%s168 + $0x278] sm:$0xff] %v327
                %v329 = vld [vmem:[%s167 + $0x760] sm:$0xff]
                %330 = vst [vmem:[%s168 + $0x280] sm:$0xff] %v329
                %v331 = vld [vmem:[%s167 + $0x768] sm:$0xff]
                %332 = vst [vmem:[%s168 + $0x288] sm:$0xff] %v331
                %v333 = vld [vmem:[%s167 + $0x770] sm:$0xff]
                %334 = vst [vmem:[%s168 + $0x290] sm:$0xff] %v333
                %v335 = vld [vmem:[%s167 + $0x778] sm:$0xff]
                %336 = vst [vmem:[%s168 + $0x298] sm:$0xff] %v335
                %v337 = vld [vmem:[%s167 + $0x7e0] sm:$0xff]
                %338 = vst [vmem:[%s168 + $0x2a0] sm:$0xff] %v337
                %v339 = vld [vmem:[%s167 + $0x7e8] sm:$0xff]
                %340 = vst [vmem:[%s168 + $0x2a8] sm:$0xff] %v339
                %v341 = vld [vmem:[%s167 + $0x7f0] sm:$0xff]
                %342 = vst [vmem:[%s168 + $0x2b0] sm:$0xff] %v341
                %v343 = vld [vmem:[%s167 + $0x7f8] sm:$0xff]
                %344 = vst [vmem:[%s168 + $0x2b8] sm:$0xff] %v343
                %v345 = vld [vmem:[%s167 + $0x800] sm:$0xff]
                %346 = vst [vmem:[%s168 + $0x2c0] sm:$0xff] %v345
                %v347 = vld [vmem:[%s167 + $0x808] sm:$0xff]
                %348 = vst [vmem:[%s168 + $0x2c8] sm:$0xff] %v347
                %v349 = vld [vmem:[%s167 + $0x870] sm:$0xff]
                %350 = vst [vmem:[%s168 + $0x2d0] sm:$0xff] %v349
                %v351 = vld [vmem:[%s167 + $0x878] sm:$0xff]
                %352 = vst [vmem:[%s168 + $0x2d8] sm:$0xff] %v351
                %v353 = vld [vmem:[%s167 + $0x880] sm:$0xff]
                %354 = vst [vmem:[%s168 + $0x2e0] sm:$0xff] %v353
                %v355 = vld [vmem:[%s167 + $0x888] sm:$0xff]
                %356 = vst [vmem:[%s168 + $0x2e8] sm:$0xff] %v355
                %v357 = vld [vmem:[%s167 + $0x890] sm:$0xff]
                %358 = vst [vmem:[%s168 + $0x2f0] sm:$0xff] %v357
                %v359 = vld [vmem:[%s167 + $0x898] sm:$0xff]
                %360 = vst [vmem:[%s168 + $0x2f8] sm:$0xff] %v359
              $region37: #{netD3_forward.3} parent=31 // loop_footer
                %s166 = sadd.s32 1, %s162
              $region38: #{netD3_forward.3} parent=31 // loop_footer_branch
                %161 = sbr.rel target = $region34
              $region39: #{netD3_forward.3} parent=31 // loop_exit
                _
            $region32: #{netD3_forward.3} parent=27 // pred_fallthru
              _
            // Predicated region
            $region40: #{netD3_forward.3} parent=27 // pred_check
              _
            $region41: #{netD3_forward.3} parent=27 // pred_check_branch
              %362 = sbr.rel target = $region43
            $region42: #{netD3_forward.3} parent=27 // pred_region
              _
            $region43: #{netD3_forward.3} parent=27 // pred_fallthru
              _
          $region28: #{netD3_forward.3} parent=23 // pred_fallthru
            _
          %363 = vnop
        $region24: #{netD3_forward.3} parent=19 // pred_fallthru
          _
        // Predicated region
        $region44: #{netD3_forward.3} parent=19 // pred_check
          %p364 = pneg %p69
        $region45: #{netD3_forward.3} parent=19 // pred_check_branch
          %366 = sbr.rel (%p364) target = $region47
        $region46: #{netD3_forward.3} parent=19 // pred_region
          %s367 = smul.u32 192, %s17
          %p368 = scmp.lt.s32.totalorder %s367, 575
          %s369 = scalar_select %p368, %s367, 575
          %s370 = smul.addr %s369, 4
          %s371 = smul.addr %s370, 4
          %s372 = scalar_lea.vmem %s1, %s371
          %s373 = smul.u32 192, %s17
        $region47: #{netD3_forward.3} parent=19 // pred_fallthru
          _
      $region20: #{netD3_forward.3} parent=5 // pred_fallthru
        _
      %p374 = scmp.le.s32.totalorder 1, %s9
      %p375 = scmp.lt.s32.totalorder %s9, 4
      %p376 = pnand %p374, %p375
      %p377 = pneg %p376
      // Predicated region
      $region48: #{netD3_forward.3} parent=5 // pred_check
        _
      $region49: #{netD3_forward.3} parent=5 // pred_check_branch
        %379 = sbr.rel (%p376) target = $region51
      $region50: #{netD3_forward.3} parent=5 // pred_region
        %s380 = ssub.s32 %s9, 1
        %s381 = sand.u32 %s36, 1
        %s382 = sand.u32 %s36, 1
        %s383 = smul.addr %s382, 768
        %s384 = scalar_lea.vmem [#allocation2], %s383
        // Predicated region
        $region52: #{netD3_forward.3} parent=50 // pred_check
          %p385 = pneg %p49
        $region53: #{netD3_forward.3} parent=50 // pred_check_branch
          %387 = sbr.rel (%p385) target = $region55
        $region54: #{netD3_forward.3} parent=50 // pred_region
          _
        $region55: #{netD3_forward.3} parent=50 // pred_fallthru
          _
        %s388 = sand.u32 %s36, 1
        %s389 = sand.u32 %s36, 1
        %s390 = smul.addr %s389, 768
        %s391 = scalar_lea.vmem [#allocation2], %s390
        %p392 = pneg %p49
        %p393 = pneg %p46
        %s394 = smul.u32 192, %s19
        %p395 = scmp.lt.s32.totalorder %s394, 575
        %s396 = scalar_select %p395, %s394, 575
        %s397 = smul.addr %s396, 4
        %s398 = smul.addr %s397, 4
        %s399 = scalar_lea.vmem %s1, %s398
        %p400 = pneg %p75
        %p401 = pneg %p72
        %p402 = pneg %p96
        %p403 = pneg %p93
        %p404 = pneg %p122
        %p405 = pneg %p119
        %s406 = smul.u32 16, %s18
        %p407 = scmp.lt.s32.totalorder %s406, 15
        %s408 = scalar_select %p407, %s406, 15
        %s409 = smul.addr %s408, 4
        %s410 = smul.addr %s409, 8
        %s411 = scalar_lea.vmem %s3, %s410
        %s412 = smul.u32 16, %s18
        %s413 = smul.u32 12, %s19
        %s414 = smul.u32 192, %s19
        %p415 = scmp.lt.s32.totalorder %s414, 575
        %s416 = scalar_select %p415, %s414, 575
        %s417 = smul.addr %s416, 4
        %s418 = smul.addr %s417, 4
        %s419 = scalar_lea.vmem %s1, %s418
        %s420 = smul.u32 192, %s19
        %s421 = smul.u32 16, %s18
        %p422 = scmp.lt.s32.totalorder %s421, 15
        %s423 = scalar_select %p422, %s421, 15
        %s424 = smul.addr %s423, 4
        %s425 = smul.addr %s424, 8
        %s426 = scalar_lea.vmem %s3, %s425
        %s427 = smul.u32 16, %s18
        %v428 = vld [vmem:[%s384] sm:$0xff]
        %v429 = vld [vmem:[%s384 + $0x8] sm:$0xff]
        %v430 = vld [vmem:[%s384 + $0x10] sm:$0xff]
        %v431 = vld [vmem:[%s384 + $0x18] sm:$0xff]
        %v432 = vld [vmem:[%s384 + $0x20] sm:$0xff]
        %v433 = vld [vmem:[%s384 + $0x28] sm:$0xff]
        %v434 = vld [vmem:[%s384 + $0x30] sm:$0xff]
        %v435 = vld [vmem:[%s384 + $0x38] sm:$0xff]
        %v436 = vld [vmem:[%s384 + $0x40] sm:$0xff]
        %v437 = vld [vmem:[%s384 + $0x48] sm:$0xff]
        %v438 = vld [vmem:[%s384 + $0x50] sm:$0xff]
        %v439 = vld [vmem:[%s384 + $0x58] sm:$0xff]
        %v440 = vld [vmem:[%s384 + $0x60] sm:$0xff]
        %v441 = vld [vmem:[%s384 + $0x68] sm:$0xff]
        %v442 = vld [vmem:[%s384 + $0x70] sm:$0xff]
        %v443 = vld [vmem:[%s384 + $0x78] sm:$0xff]
        %v444 = vld [vmem:[%s384 + $0x80] sm:$0xff]
        %v445 = vld [vmem:[%s384 + $0x88] sm:$0xff]
        %v446 = vld [vmem:[%s384 + $0x90] sm:$0xff]
        %v447 = vld [vmem:[%s384 + $0x98] sm:$0xff]
        %v448 = vld [vmem:[%s384 + $0xa0] sm:$0xff]
        %v449 = vld [vmem:[%s384 + $0xa8] sm:$0xff]
        %v450 = vld [vmem:[%s384 + $0xb0] sm:$0xff]
        %v451 = vld [vmem:[%s384 + $0xb8] sm:$0xff]
        %v452 = vld [vmem:[%s384 + $0xc0] sm:$0xff]
        %v453 = vld [vmem:[%s384 + $0xc8] sm:$0xff]
        %v454 = vld [vmem:[%s384 + $0xd0] sm:$0xff]
        %v455 = vld [vmem:[%s384 + $0xd8] sm:$0xff]
        %v456 = vld [vmem:[%s384 + $0xe0] sm:$0xff]
        %v457 = vld [vmem:[%s384 + $0xe8] sm:$0xff]
        %v458 = vld [vmem:[%s384 + $0xf0] sm:$0xff]
        %v459 = vld [vmem:[%s384 + $0xf8] sm:$0xff]
        %v460 = vld [vmem:[%s384 + $0x100] sm:$0xff]
        %v461 = vld [vmem:[%s384 + $0x108] sm:$0xff]
        %v462 = vld [vmem:[%s384 + $0x110] sm:$0xff]
        %v463 = vld [vmem:[%s384 + $0x118] sm:$0xff]
        %v464 = vld [vmem:[%s384 + $0x120] sm:$0xff]
        %v465 = vld [vmem:[%s384 + $0x128] sm:$0xff]
        %v466 = vld [vmem:[%s384 + $0x130] sm:$0xff]
        %v467 = vld [vmem:[%s384 + $0x138] sm:$0xff]
        %v468 = vld [vmem:[%s384 + $0x140] sm:$0xff]
        %v469 = vld [vmem:[%s384 + $0x148] sm:$0xff]
        %v470 = vld [vmem:[%s384 + $0x150] sm:$0xff]
        %v471 = vld [vmem:[%s384 + $0x158] sm:$0xff]
        %v472 = vld [vmem:[%s384 + $0x160] sm:$0xff]
        %v473 = vld [vmem:[%s384 + $0x168] sm:$0xff]
        %v474 = vld [vmem:[%s384 + $0x170] sm:$0xff]
        %v475 = vld [vmem:[%s384 + $0x178] sm:$0xff]
        %v476 = vld [vmem:[%s384 + $0x180] sm:$0xff]
        %v477 = vld [vmem:[%s384 + $0x188] sm:$0xff]
        %v478 = vld [vmem:[%s384 + $0x190] sm:$0xff]
        %v479 = vld [vmem:[%s384 + $0x198] sm:$0xff]
        %v480 = vld [vmem:[%s384 + $0x1a0] sm:$0xff]
        %v481 = vld [vmem:[%s384 + $0x1a8] sm:$0xff]
        %v482 = vld [vmem:[%s384 + $0x1b0] sm:$0xff]
        %v483 = vld [vmem:[%s384 + $0x1b8] sm:$0xff]
        %v484 = vld [vmem:[%s384 + $0x1c0] sm:$0xff]
        %v485 = vld [vmem:[%s384 + $0x1c8] sm:$0xff]
        %v486 = vld [vmem:[%s384 + $0x1d0] sm:$0xff]
        %v487 = vld [vmem:[%s384 + $0x1d8] sm:$0xff]
        %v488 = vld [vmem:[%s384 + $0x1e0] sm:$0xff]
        %v489 = vld [vmem:[%s384 + $0x1e8] sm:$0xff]
        %v490 = vld [vmem:[%s384 + $0x1f0] sm:$0xff]
        %v491 = vld [vmem:[%s384 + $0x1f8] sm:$0xff]
        %v492 = vld [vmem:[%s384 + $0x200] sm:$0xff]
        %v493 = vld [vmem:[%s384 + $0x208] sm:$0xff]
        %v494 = vld [vmem:[%s384 + $0x210] sm:$0xff]
        %v495 = vld [vmem:[%s384 + $0x218] sm:$0xff]
        %v496 = vld [vmem:[%s384 + $0x220] sm:$0xff]
        %v497 = vld [vmem:[%s384 + $0x228] sm:$0xff]
        %v498 = vld [vmem:[%s384 + $0x230] sm:$0xff]
        %v499 = vld [vmem:[%s384 + $0x238] sm:$0xff]
        %v500 = vld [vmem:[%s384 + $0x240] sm:$0xff]
        %v501 = vld [vmem:[%s384 + $0x248] sm:$0xff]
        %v502 = vld [vmem:[%s384 + $0x250] sm:$0xff]
        %v503 = vld [vmem:[%s384 + $0x258] sm:$0xff]
        %v504 = vld [vmem:[%s384 + $0x260] sm:$0xff]
        %v505 = vld [vmem:[%s384 + $0x268] sm:$0xff]
        %v506 = vld [vmem:[%s384 + $0x270] sm:$0xff]
        %v507 = vld [vmem:[%s384 + $0x278] sm:$0xff]
        %v508 = vld [vmem:[%s384 + $0x280] sm:$0xff]
        %v509 = vld [vmem:[%s384 + $0x288] sm:$0xff]
        %v510 = vld [vmem:[%s384 + $0x290] sm:$0xff]
        %v511 = vld [vmem:[%s384 + $0x298] sm:$0xff]
        %v512 = vld [vmem:[%s384 + $0x2a0] sm:$0xff]
        %v513 = vld [vmem:[%s384 + $0x2a8] sm:$0xff]
        %v514 = vld [vmem:[%s384 + $0x2b0] sm:$0xff]
        %v515 = vld [vmem:[%s384 + $0x2b8] sm:$0xff]
        %v516 = vld [vmem:[%s384 + $0x2c0] sm:$0xff]
        %v517 = vld [vmem:[%s384 + $0x2c8] sm:$0xff]
        %v518 = vld [vmem:[%s384 + $0x2d0] sm:$0xff]
        %v519 = vld [vmem:[%s384 + $0x2d8] sm:$0xff]
        %v520 = vld [vmem:[%s384 + $0x2e0] sm:$0xff]
        %v521 = vld [vmem:[%s384 + $0x2e8] sm:$0xff]
        %v522 = vld [vmem:[%s384 + $0x2f0] sm:$0xff]
        %v523 = vld [vmem:[%s384 + $0x2f8] sm:$0xff]
        %v524 = vld [vmem:[%s419] sm:$0xff]
        %v525 = vld [vmem:[%s419 + $0x8] sm:$0xff]
        %v526 = vld [vmem:[%s419 + $0x10] sm:$0xff]
        %v527 = vld [vmem:[%s419 + $0x18] sm:$0xff]
        %v528 = vld [vmem:[%s419 + $0x20] sm:$0xff]
        %v529 = vld [vmem:[%s419 + $0x28] sm:$0xff]
        %v530 = vld [vmem:[%s419 + $0x30] sm:$0xff]
        %v531 = vld [vmem:[%s419 + $0x38] sm:$0xff]
        %v532 = vld [vmem:[%s419 + $0x40] sm:$0xff]
        %v533 = vld [vmem:[%s419 + $0x48] sm:$0xff]
        %v534 = vld [vmem:[%s419 + $0x50] sm:$0xff]
        %v535 = vld [vmem:[%s419 + $0x58] sm:$0xff]
        %v536 = vld [vmem:[%s419 + $0x60] sm:$0xff]
        %v537 = vld [vmem:[%s419 + $0x68] sm:$0xff]
        %v538 = vld [vmem:[%s419 + $0x70] sm:$0xff]
        %v539 = vld [vmem:[%s419 + $0x78] sm:$0xff]
        %v540 = vld [vmem:[%s419 + $0x80] sm:$0xff]
        %v541 = vld [vmem:[%s419 + $0x88] sm:$0xff]
        %v542 = vld [vmem:[%s419 + $0x90] sm:$0xff]
        %v543 = vld [vmem:[%s419 + $0x98] sm:$0xff]
        %v544 = vld [vmem:[%s419 + $0xa0] sm:$0xff]
        %v545 = vld [vmem:[%s419 + $0xa8] sm:$0xff]
        %v546 = vld [vmem:[%s419 + $0xb0] sm:$0xff]
        %v547 = vld [vmem:[%s419 + $0xb8] sm:$0xff]
        %v548 = vld [vmem:[%s419 + $0xc0] sm:$0xff]
        %v549 = vld [vmem:[%s419 + $0xc8] sm:$0xff]
        %v550 = vld [vmem:[%s419 + $0xd0] sm:$0xff]
        %v551 = vld [vmem:[%s419 + $0xd8] sm:$0xff]
        %v552 = vld [vmem:[%s419 + $0xe0] sm:$0xff]
        %v553 = vld [vmem:[%s419 + $0xe8] sm:$0xff]
        %v554 = vld [vmem:[%s419 + $0xf0] sm:$0xff]
        %v555 = vld [vmem:[%s419 + $0xf8] sm:$0xff]
        %v556 = vld [vmem:[%s419 + $0x100] sm:$0xff]
        %v557 = vld [vmem:[%s419 + $0x108] sm:$0xff]
        %v558 = vld [vmem:[%s419 + $0x110] sm:$0xff]
        %v559 = vld [vmem:[%s419 + $0x118] sm:$0xff]
        %v560 = vld [vmem:[%s419 + $0x120] sm:$0xff]
        %v561 = vld [vmem:[%s419 + $0x128] sm:$0xff]
        %v562 = vld [vmem:[%s419 + $0x130] sm:$0xff]
        %v563 = vld [vmem:[%s419 + $0x138] sm:$0xff]
        %v564 = vld [vmem:[%s419 + $0x140] sm:$0xff]
        %v565 = vld [vmem:[%s419 + $0x148] sm:$0xff]
        %v566 = vld [vmem:[%s419 + $0x150] sm:$0xff]
        %v567 = vld [vmem:[%s419 + $0x158] sm:$0xff]
        %v568 = vld [vmem:[%s419 + $0x160] sm:$0xff]
        %v569 = vld [vmem:[%s419 + $0x168] sm:$0xff]
        %v570 = vld [vmem:[%s419 + $0x170] sm:$0xff]
        %v571 = vld [vmem:[%s419 + $0x178] sm:$0xff]
        %v572 = vld [vmem:[%s419 + $0x180] sm:$0xff]
        %v573 = vld [vmem:[%s419 + $0x188] sm:$0xff]
        %v574 = vld [vmem:[%s419 + $0x190] sm:$0xff]
        %v575 = vld [vmem:[%s419 + $0x198] sm:$0xff]
        %v576 = vld [vmem:[%s419 + $0x1a0] sm:$0xff]
        %v577 = vld [vmem:[%s419 + $0x1a8] sm:$0xff]
        %v578 = vld [vmem:[%s419 + $0x1b0] sm:$0xff]
        %v579 = vld [vmem:[%s419 + $0x1b8] sm:$0xff]
        %v580 = vld [vmem:[%s419 + $0x1c0] sm:$0xff]
        %v581 = vld [vmem:[%s419 + $0x1c8] sm:$0xff]
        %v582 = vld [vmem:[%s419 + $0x1d0] sm:$0xff]
        %v583 = vld [vmem:[%s419 + $0x1d8] sm:$0xff]
        %v584 = vld [vmem:[%s419 + $0x1e0] sm:$0xff]
        %v585 = vld [vmem:[%s419 + $0x1e8] sm:$0xff]
        %v586 = vld [vmem:[%s419 + $0x1f0] sm:$0xff]
        %v587 = vld [vmem:[%s419 + $0x1f8] sm:$0xff]
        %v588 = vld [vmem:[%s419 + $0x200] sm:$0xff]
        %v589 = vld [vmem:[%s419 + $0x208] sm:$0xff]
        %v590 = vld [vmem:[%s419 + $0x210] sm:$0xff]
        %v591 = vld [vmem:[%s419 + $0x218] sm:$0xff]
        %v592 = vld [vmem:[%s419 + $0x220] sm:$0xff]
        %v593 = vld [vmem:[%s419 + $0x228] sm:$0xff]
        %v594 = vld [vmem:[%s419 + $0x230] sm:$0xff]
        %v595 = vld [vmem:[%s419 + $0x238] sm:$0xff]
        %v596 = vld [vmem:[%s419 + $0x240] sm:$0xff]
        %v597 = vld [vmem:[%s419 + $0x248] sm:$0xff]
        %v598 = vld [vmem:[%s419 + $0x250] sm:$0xff]
        %v599 = vld [vmem:[%s419 + $0x258] sm:$0xff]
        %v600 = vld [vmem:[%s419 + $0x260] sm:$0xff]
        %v601 = vld [vmem:[%s419 + $0x268] sm:$0xff]
        %v602 = vld [vmem:[%s419 + $0x270] sm:$0xff]
        %v603 = vld [vmem:[%s419 + $0x278] sm:$0xff]
        %v604 = vld [vmem:[%s419 + $0x280] sm:$0xff]
        %v605 = vld [vmem:[%s419 + $0x288] sm:$0xff]
        %v606 = vld [vmem:[%s419 + $0x290] sm:$0xff]
        %v607 = vld [vmem:[%s419 + $0x298] sm:$0xff]
        %v608 = vld [vmem:[%s419 + $0x2a0] sm:$0xff]
        %v609 = vld [vmem:[%s419 + $0x2a8] sm:$0xff]
        %v610 = vld [vmem:[%s419 + $0x2b0] sm:$0xff]
        %v611 = vld [vmem:[%s419 + $0x2b8] sm:$0xff]
        %v612 = vld [vmem:[%s419 + $0x2c0] sm:$0xff]
        %v613 = vld [vmem:[%s419 + $0x2c8] sm:$0xff]
        %v614 = vld [vmem:[%s419 + $0x2d0] sm:$0xff]
        %v615 = vld [vmem:[%s419 + $0x2d8] sm:$0xff]
        %v616 = vld [vmem:[%s419 + $0x2e0] sm:$0xff]
        %v617 = vld [vmem:[%s419 + $0x2e8] sm:$0xff]
        %v618 = vld [vmem:[%s419 + $0x2f0] sm:$0xff]
        %v619 = vld [vmem:[%s419 + $0x2f8] sm:$0xff]
        %v620 = vld [vmem:[%s419 + $0x300] sm:$0xff]
        %v621 = vld [vmem:[%s419 + $0x308] sm:$0xff]
        %v622 = vld [vmem:[%s419 + $0x310] sm:$0xff]
        %v623 = vld [vmem:[%s419 + $0x318] sm:$0xff]
        %v624 = vld [vmem:[%s419 + $0x320] sm:$0xff]
        %v625 = vld [vmem:[%s419 + $0x328] sm:$0xff]
        %v626 = vld [vmem:[%s419 + $0x330] sm:$0xff]
        %v627 = vld [vmem:[%s419 + $0x338] sm:$0xff]
        %v628 = vld [vmem:[%s419 + $0x340] sm:$0xff]
        %v629 = vld [vmem:[%s419 + $0x348] sm:$0xff]
        %v630 = vld [vmem:[%s419 + $0x350] sm:$0xff]
        %v631 = vld [vmem:[%s419 + $0x358] sm:$0xff]
        %v632 = vld [vmem:[%s419 + $0x360] sm:$0xff]
        %v633 = vld [vmem:[%s419 + $0x368] sm:$0xff]
        %v634 = vld [vmem:[%s419 + $0x370] sm:$0xff]
        %v635 = vld [vmem:[%s419 + $0x378] sm:$0xff]
        %v636 = vld [vmem:[%s419 + $0x380] sm:$0xff]
        %v637 = vld [vmem:[%s419 + $0x388] sm:$0xff]
        %v638 = vld [vmem:[%s419 + $0x390] sm:$0xff]
        %v639 = vld [vmem:[%s419 + $0x398] sm:$0xff]
        %v640 = vld [vmem:[%s419 + $0x3a0] sm:$0xff]
        %v641 = vld [vmem:[%s419 + $0x3a8] sm:$0xff]
        %v642 = vld [vmem:[%s419 + $0x3b0] sm:$0xff]
        %v643 = vld [vmem:[%s419 + $0x3b8] sm:$0xff]
        %v644 = vld [vmem:[%s419 + $0x3c0] sm:$0xff]
        %v645 = vld [vmem:[%s419 + $0x3c8] sm:$0xff]
        %v646 = vld [vmem:[%s419 + $0x3d0] sm:$0xff]
        %v647 = vld [vmem:[%s419 + $0x3d8] sm:$0xff]
        %v648 = vld [vmem:[%s419 + $0x3e0] sm:$0xff]
        %v649 = vld [vmem:[%s419 + $0x3e8] sm:$0xff]
        %v650 = vld [vmem:[%s419 + $0x3f0] sm:$0xff]
        %v651 = vld [vmem:[%s419 + $0x3f8] sm:$0xff]
        %v652 = vld [vmem:[%s419 + $0x400] sm:$0xff]
        %v653 = vld [vmem:[%s419 + $0x408] sm:$0xff]
        %v654 = vld [vmem:[%s419 + $0x410] sm:$0xff]
        %v655 = vld [vmem:[%s419 + $0x418] sm:$0xff]
        %v656 = vld [vmem:[%s419 + $0x420] sm:$0xff]
        %v657 = vld [vmem:[%s419 + $0x428] sm:$0xff]
        %v658 = vld [vmem:[%s419 + $0x430] sm:$0xff]
        %v659 = vld [vmem:[%s419 + $0x438] sm:$0xff]
        %v660 = vld [vmem:[%s419 + $0x440] sm:$0xff]
        %v661 = vld [vmem:[%s419 + $0x448] sm:$0xff]
        %v662 = vld [vmem:[%s419 + $0x450] sm:$0xff]
        %v663 = vld [vmem:[%s419 + $0x458] sm:$0xff]
        %v664 = vld [vmem:[%s419 + $0x460] sm:$0xff]
        %v665 = vld [vmem:[%s419 + $0x468] sm:$0xff]
        %v666 = vld [vmem:[%s419 + $0x470] sm:$0xff]
        %v667 = vld [vmem:[%s419 + $0x478] sm:$0xff]
        %v668 = vld [vmem:[%s419 + $0x480] sm:$0xff]
        %v669 = vld [vmem:[%s419 + $0x488] sm:$0xff]
        %v670 = vld [vmem:[%s419 + $0x490] sm:$0xff]
        %v671 = vld [vmem:[%s419 + $0x498] sm:$0xff]
        %v672 = vld [vmem:[%s419 + $0x4a0] sm:$0xff]
        %v673 = vld [vmem:[%s419 + $0x4a8] sm:$0xff]
        %v674 = vld [vmem:[%s419 + $0x4b0] sm:$0xff]
        %v675 = vld [vmem:[%s419 + $0x4b8] sm:$0xff]
        %v676 = vld [vmem:[%s419 + $0x4c0] sm:$0xff]
        %v677 = vld [vmem:[%s419 + $0x4c8] sm:$0xff]
        %v678 = vld [vmem:[%s419 + $0x4d0] sm:$0xff]
        %v679 = vld [vmem:[%s419 + $0x4d8] sm:$0xff]
        %v680 = vld [vmem:[%s419 + $0x4e0] sm:$0xff]
        %v681 = vld [vmem:[%s419 + $0x4e8] sm:$0xff]
        %v682 = vld [vmem:[%s419 + $0x4f0] sm:$0xff]
        %v683 = vld [vmem:[%s419 + $0x4f8] sm:$0xff]
        %v684 = vld [vmem:[%s419 + $0x500] sm:$0xff]
        %v685 = vld [vmem:[%s419 + $0x508] sm:$0xff]
        %v686 = vld [vmem:[%s419 + $0x510] sm:$0xff]
        %v687 = vld [vmem:[%s419 + $0x518] sm:$0xff]
        %v688 = vld [vmem:[%s419 + $0x520] sm:$0xff]
        %v689 = vld [vmem:[%s419 + $0x528] sm:$0xff]
        %v690 = vld [vmem:[%s419 + $0x530] sm:$0xff]
        %v691 = vld [vmem:[%s419 + $0x538] sm:$0xff]
        %v692 = vld [vmem:[%s419 + $0x540] sm:$0xff]
        %v693 = vld [vmem:[%s419 + $0x548] sm:$0xff]
        %v694 = vld [vmem:[%s419 + $0x550] sm:$0xff]
        %v695 = vld [vmem:[%s419 + $0x558] sm:$0xff]
        %v696 = vld [vmem:[%s419 + $0x560] sm:$0xff]
        %v697 = vld [vmem:[%s419 + $0x568] sm:$0xff]
        %v698 = vld [vmem:[%s419 + $0x570] sm:$0xff]
        %v699 = vld [vmem:[%s419 + $0x578] sm:$0xff]
        %v700 = vld [vmem:[%s419 + $0x580] sm:$0xff]
        %v701 = vld [vmem:[%s419 + $0x588] sm:$0xff]
        %v702 = vld [vmem:[%s419 + $0x590] sm:$0xff]
        %v703 = vld [vmem:[%s419 + $0x598] sm:$0xff]
        %v704 = vld [vmem:[%s419 + $0x5a0] sm:$0xff]
        %v705 = vld [vmem:[%s419 + $0x5a8] sm:$0xff]
        %v706 = vld [vmem:[%s419 + $0x5b0] sm:$0xff]
        %v707 = vld [vmem:[%s419 + $0x5b8] sm:$0xff]
        %v708 = vld [vmem:[%s419 + $0x5c0] sm:$0xff]
        %v709 = vld [vmem:[%s419 + $0x5c8] sm:$0xff]
        %v710 = vld [vmem:[%s419 + $0x5d0] sm:$0xff]
        %v711 = vld [vmem:[%s419 + $0x5d8] sm:$0xff]
        %v712 = vld [vmem:[%s419 + $0x5e0] sm:$0xff]
        %v713 = vld [vmem:[%s419 + $0x5e8] sm:$0xff]
        %v714 = vld [vmem:[%s419 + $0x5f0] sm:$0xff]
        %v715 = vld [vmem:[%s419 + $0x5f8] sm:$0xff]
        %v716 = vld [vmem:[%s419 + $0x600] sm:$0xff]
        %v717 = vld [vmem:[%s419 + $0x608] sm:$0xff]
        %v718 = vld [vmem:[%s419 + $0x610] sm:$0xff]
        %v719 = vld [vmem:[%s419 + $0x618] sm:$0xff]
        %v720 = vld [vmem:[%s419 + $0x620] sm:$0xff]
        %v721 = vld [vmem:[%s419 + $0x628] sm:$0xff]
        %v722 = vld [vmem:[%s419 + $0x630] sm:$0xff]
        %v723 = vld [vmem:[%s419 + $0x638] sm:$0xff]
        %v724 = vld [vmem:[%s419 + $0x640] sm:$0xff]
        %v725 = vld [vmem:[%s419 + $0x648] sm:$0xff]
        %v726 = vld [vmem:[%s419 + $0x650] sm:$0xff]
        %v727 = vld [vmem:[%s419 + $0x658] sm:$0xff]
        %v728 = vld [vmem:[%s419 + $0x660] sm:$0xff]
        %v729 = vld [vmem:[%s419 + $0x668] sm:$0xff]
        %v730 = vld [vmem:[%s419 + $0x670] sm:$0xff]
        %v731 = vld [vmem:[%s419 + $0x678] sm:$0xff]
        %v732 = vld [vmem:[%s419 + $0x680] sm:$0xff]
        %v733 = vld [vmem:[%s419 + $0x688] sm:$0xff]
        %v734 = vld [vmem:[%s419 + $0x690] sm:$0xff]
        %v735 = vld [vmem:[%s419 + $0x698] sm:$0xff]
        %v736 = vld [vmem:[%s419 + $0x6a0] sm:$0xff]
        %v737 = vld [vmem:[%s419 + $0x6a8] sm:$0xff]
        %v738 = vld [vmem:[%s419 + $0x6b0] sm:$0xff]
        %v739 = vld [vmem:[%s419 + $0x6b8] sm:$0xff]
        %v740 = vld [vmem:[%s419 + $0x6c0] sm:$0xff]
        %v741 = vld [vmem:[%s419 + $0x6c8] sm:$0xff]
        %v742 = vld [vmem:[%s419 + $0x6d0] sm:$0xff]
        %v743 = vld [vmem:[%s419 + $0x6d8] sm:$0xff]
        %v744 = vld [vmem:[%s419 + $0x6e0] sm:$0xff]
        %v745 = vld [vmem:[%s419 + $0x6e8] sm:$0xff]
        %v746 = vld [vmem:[%s419 + $0x6f0] sm:$0xff]
        %v747 = vld [vmem:[%s419 + $0x6f8] sm:$0xff]
        %v748 = vld [vmem:[%s419 + $0x700] sm:$0xff]
        %v749 = vld [vmem:[%s419 + $0x708] sm:$0xff]
        %v750 = vld [vmem:[%s419 + $0x710] sm:$0xff]
        %v751 = vld [vmem:[%s419 + $0x718] sm:$0xff]
        %v752 = vld [vmem:[%s419 + $0x720] sm:$0xff]
        %v753 = vld [vmem:[%s419 + $0x728] sm:$0xff]
        %v754 = vld [vmem:[%s419 + $0x730] sm:$0xff]
        %v755 = vld [vmem:[%s419 + $0x738] sm:$0xff]
        %v756 = vld [vmem:[%s419 + $0x740] sm:$0xff]
        %v757 = vld [vmem:[%s419 + $0x748] sm:$0xff]
        %v758 = vld [vmem:[%s419 + $0x750] sm:$0xff]
        %v759 = vld [vmem:[%s419 + $0x758] sm:$0xff]
        %v760 = vld [vmem:[%s419 + $0x760] sm:$0xff]
        %v761 = vld [vmem:[%s419 + $0x768] sm:$0xff]
        %v762 = vld [vmem:[%s419 + $0x770] sm:$0xff]
        %v763 = vld [vmem:[%s419 + $0x778] sm:$0xff]
        %v764 = vld [vmem:[%s419 + $0x780] sm:$0xff]
        %v765 = vld [vmem:[%s419 + $0x788] sm:$0xff]
        %v766 = vld [vmem:[%s419 + $0x790] sm:$0xff]
        %v767 = vld [vmem:[%s419 + $0x798] sm:$0xff]
        %v768 = vld [vmem:[%s419 + $0x7a0] sm:$0xff]
        %v769 = vld [vmem:[%s419 + $0x7a8] sm:$0xff]
        %v770 = vld [vmem:[%s419 + $0x7b0] sm:$0xff]
        %v771 = vld [vmem:[%s419 + $0x7b8] sm:$0xff]
        %v772 = vld [vmem:[%s419 + $0x7c0] sm:$0xff]
        %v773 = vld [vmem:[%s419 + $0x7c8] sm:$0xff]
        %v774 = vld [vmem:[%s419 + $0x7d0] sm:$0xff]
        %v775 = vld [vmem:[%s419 + $0x7d8] sm:$0xff]
        %v776 = vld [vmem:[%s419 + $0x7e0] sm:$0xff]
        %v777 = vld [vmem:[%s419 + $0x7e8] sm:$0xff]
        %v778 = vld [vmem:[%s419 + $0x7f0] sm:$0xff]
        %v779 = vld [vmem:[%s419 + $0x7f8] sm:$0xff]
        %v780 = vld [vmem:[%s419 + $0x800] sm:$0xff]
        %v781 = vld [vmem:[%s419 + $0x808] sm:$0xff]
        %v782 = vld [vmem:[%s419 + $0x810] sm:$0xff]
        %v783 = vld [vmem:[%s419 + $0x818] sm:$0xff]
        %v784 = vld [vmem:[%s419 + $0x820] sm:$0xff]
        %v785 = vld [vmem:[%s419 + $0x828] sm:$0xff]
        %v786 = vld [vmem:[%s419 + $0x830] sm:$0xff]
        %v787 = vld [vmem:[%s419 + $0x838] sm:$0xff]
        %v788 = vld [vmem:[%s419 + $0x840] sm:$0xff]
        %v789 = vld [vmem:[%s419 + $0x848] sm:$0xff]
        %v790 = vld [vmem:[%s419 + $0x850] sm:$0xff]
        %v791 = vld [vmem:[%s419 + $0x858] sm:$0xff]
        %v792 = vld [vmem:[%s419 + $0x860] sm:$0xff]
        %v793 = vld [vmem:[%s419 + $0x868] sm:$0xff]
        %v794 = vld [vmem:[%s419 + $0x870] sm:$0xff]
        %v795 = vld [vmem:[%s419 + $0x878] sm:$0xff]
        %v796 = vld [vmem:[%s419 + $0x880] sm:$0xff]
        %v797 = vld [vmem:[%s419 + $0x888] sm:$0xff]
        %v798 = vld [vmem:[%s419 + $0x890] sm:$0xff]
        %v799 = vld [vmem:[%s419 + $0x898] sm:$0xff]
        %v800 = vld [vmem:[%s419 + $0x8a0] sm:$0xff]
        %v801 = vld [vmem:[%s419 + $0x8a8] sm:$0xff]
        %v802 = vld [vmem:[%s419 + $0x8b0] sm:$0xff]
        %v803 = vld [vmem:[%s419 + $0x8b8] sm:$0xff]
        %v804 = vld [vmem:[%s419 + $0x8c0] sm:$0xff]
        %v805 = vld [vmem:[%s419 + $0x8c8] sm:$0xff]
        %v806 = vld [vmem:[%s419 + $0x8d0] sm:$0xff]
        %v807 = vld [vmem:[%s419 + $0x8d8] sm:$0xff]
        %v808 = vld [vmem:[%s419 + $0x8e0] sm:$0xff]
        %v809 = vld [vmem:[%s419 + $0x8e8] sm:$0xff]
        %v810 = vld [vmem:[%s419 + $0x8f0] sm:$0xff]
        %v811 = vld [vmem:[%s419 + $0x8f8] sm:$0xff]
        %v812 = vld [vmem:[%s419 + $0x900] sm:$0xff]
        %v813 = vld [vmem:[%s419 + $0x908] sm:$0xff]
        %v814 = vld [vmem:[%s419 + $0x910] sm:$0xff]
        %v815 = vld [vmem:[%s419 + $0x918] sm:$0xff]
        %v816 = vld [vmem:[%s419 + $0x920] sm:$0xff]
        %v817 = vld [vmem:[%s419 + $0x928] sm:$0xff]
        %v818 = vld [vmem:[%s419 + $0x930] sm:$0xff]
        %v819 = vld [vmem:[%s419 + $0x938] sm:$0xff]
        %v820 = vld [vmem:[%s419 + $0x940] sm:$0xff]
        %v821 = vld [vmem:[%s419 + $0x948] sm:$0xff]
        %v822 = vld [vmem:[%s419 + $0x950] sm:$0xff]
        %v823 = vld [vmem:[%s419 + $0x958] sm:$0xff]
        %v824 = vld [vmem:[%s419 + $0x960] sm:$0xff]
        %v825 = vld [vmem:[%s419 + $0x968] sm:$0xff]
        %v826 = vld [vmem:[%s419 + $0x970] sm:$0xff]
        %v827 = vld [vmem:[%s419 + $0x978] sm:$0xff]
        %v828 = vld [vmem:[%s419 + $0x980] sm:$0xff]
        %v829 = vld [vmem:[%s419 + $0x988] sm:$0xff]
        %v830 = vld [vmem:[%s419 + $0x990] sm:$0xff]
        %v831 = vld [vmem:[%s419 + $0x998] sm:$0xff]
        %v832 = vld [vmem:[%s419 + $0x9a0] sm:$0xff]
        %v833 = vld [vmem:[%s419 + $0x9a8] sm:$0xff]
        %v834 = vld [vmem:[%s419 + $0x9b0] sm:$0xff]
        %v835 = vld [vmem:[%s419 + $0x9b8] sm:$0xff]
        %v836 = vld [vmem:[%s419 + $0x9c0] sm:$0xff]
        %v837 = vld [vmem:[%s419 + $0x9c8] sm:$0xff]
        %v838 = vld [vmem:[%s419 + $0x9d0] sm:$0xff]
        %v839 = vld [vmem:[%s419 + $0x9d8] sm:$0xff]
        %v840 = vld [vmem:[%s419 + $0x9e0] sm:$0xff]
        %v841 = vld [vmem:[%s419 + $0x9e8] sm:$0xff]
        %v842 = vld [vmem:[%s419 + $0x9f0] sm:$0xff]
        %v843 = vld [vmem:[%s419 + $0x9f8] sm:$0xff]
        %v844 = vld [vmem:[%s419 + $0xa00] sm:$0xff]
        %v845 = vld [vmem:[%s419 + $0xa08] sm:$0xff]
        %v846 = vld [vmem:[%s419 + $0xa10] sm:$0xff]
        %v847 = vld [vmem:[%s419 + $0xa18] sm:$0xff]
        %v848 = vld [vmem:[%s419 + $0xa20] sm:$0xff]
        %v849 = vld [vmem:[%s419 + $0xa28] sm:$0xff]
        %v850 = vld [vmem:[%s419 + $0xa30] sm:$0xff]
        %v851 = vld [vmem:[%s419 + $0xa38] sm:$0xff]
        %v852 = vld [vmem:[%s419 + $0xa40] sm:$0xff]
        %v853 = vld [vmem:[%s419 + $0xa48] sm:$0xff]
        %v854 = vld [vmem:[%s419 + $0xa50] sm:$0xff]
        %v855 = vld [vmem:[%s419 + $0xa58] sm:$0xff]
        %v856 = vld [vmem:[%s419 + $0xa60] sm:$0xff]
        %v857 = vld [vmem:[%s419 + $0xa68] sm:$0xff]
        %v858 = vld [vmem:[%s419 + $0xa70] sm:$0xff]
        %v859 = vld [vmem:[%s419 + $0xa78] sm:$0xff]
        %v860 = vld [vmem:[%s419 + $0xa80] sm:$0xff]
        %v861 = vld [vmem:[%s419 + $0xa88] sm:$0xff]
        %v862 = vld [vmem:[%s419 + $0xa90] sm:$0xff]
        %v863 = vld [vmem:[%s419 + $0xa98] sm:$0xff]
        %v864 = vld [vmem:[%s419 + $0xaa0] sm:$0xff]
        %v865 = vld [vmem:[%s419 + $0xaa8] sm:$0xff]
        %v866 = vld [vmem:[%s419 + $0xab0] sm:$0xff]
        %v867 = vld [vmem:[%s419 + $0xab8] sm:$0xff]
        %v868 = vld [vmem:[%s419 + $0xac0] sm:$0xff]
        %v869 = vld [vmem:[%s419 + $0xac8] sm:$0xff]
        %v870 = vld [vmem:[%s419 + $0xad0] sm:$0xff]
        %v871 = vld [vmem:[%s419 + $0xad8] sm:$0xff]
        %v872 = vld [vmem:[%s419 + $0xae0] sm:$0xff]
        %v873 = vld [vmem:[%s419 + $0xae8] sm:$0xff]
        %v874 = vld [vmem:[%s419 + $0xaf0] sm:$0xff]
        %v875 = vld [vmem:[%s419 + $0xaf8] sm:$0xff]
        %v876 = vld [vmem:[%s419 + $0xb00] sm:$0xff]
        %v877 = vld [vmem:[%s419 + $0xb08] sm:$0xff]
        %v878 = vld [vmem:[%s419 + $0xb10] sm:$0xff]
        %v879 = vld [vmem:[%s419 + $0xb18] sm:$0xff]
        %v880 = vld [vmem:[%s419 + $0xb20] sm:$0xff]
        %v881 = vld [vmem:[%s419 + $0xb28] sm:$0xff]
        %v882 = vld [vmem:[%s419 + $0xb30] sm:$0xff]
        %v883 = vld [vmem:[%s419 + $0xb38] sm:$0xff]
        %v884 = vld [vmem:[%s419 + $0xb40] sm:$0xff]
        %v885 = vld [vmem:[%s419 + $0xb48] sm:$0xff]
        %v886 = vld [vmem:[%s419 + $0xb50] sm:$0xff]
        %v887 = vld [vmem:[%s419 + $0xb58] sm:$0xff]
        %v888 = vld [vmem:[%s419 + $0xb60] sm:$0xff]
        %v889 = vld [vmem:[%s419 + $0xb68] sm:$0xff]
        %v890 = vld [vmem:[%s419 + $0xb70] sm:$0xff]
        %v891 = vld [vmem:[%s419 + $0xb78] sm:$0xff]
        %v892 = vld [vmem:[%s419 + $0xb80] sm:$0xff]
        %v893 = vld [vmem:[%s419 + $0xb88] sm:$0xff]
        %v894 = vld [vmem:[%s419 + $0xb90] sm:$0xff]
        %v895 = vld [vmem:[%s419 + $0xb98] sm:$0xff]
        %v896 = vld [vmem:[%s419 + $0xba0] sm:$0xff]
        %v897 = vld [vmem:[%s419 + $0xba8] sm:$0xff]
        %v898 = vld [vmem:[%s419 + $0xbb0] sm:$0xff]
        %v899 = vld [vmem:[%s419 + $0xbb8] sm:$0xff]
        %v900 = vld [vmem:[%s419 + $0xbc0] sm:$0xff]
        %v901 = vld [vmem:[%s419 + $0xbc8] sm:$0xff]
        %v902 = vld [vmem:[%s419 + $0xbd0] sm:$0xff]
        %v903 = vld [vmem:[%s419 + $0xbd8] sm:$0xff]
        %v904 = vld [vmem:[%s419 + $0xbe0] sm:$0xff]
        %v905 = vld [vmem:[%s419 + $0xbe8] sm:$0xff]
        %v906 = vld [vmem:[%s419 + $0xbf0] sm:$0xff]
        %v907 = vld [vmem:[%s419 + $0xbf8] sm:$0xff]
        %v1004 = vunpack.c.l.b16 %v428
        %v1005 = vunpack.c.h.b16 %v428
        %v1006 = vunpack.c.l.b16 %v429
        %v1007 = vunpack.c.h.b16 %v429
        %v1008 = vunpack.c.l.b16 %v430
        %v1009 = vunpack.c.h.b16 %v430
        %v1010 = vunpack.c.l.b16 %v431
        %v1011 = vunpack.c.h.b16 %v431
        %v1012 = vunpack.c.l.b16 %v432
        %v1013 = vunpack.c.h.b16 %v432
        %v1014 = vunpack.c.l.b16 %v433
        %v1015 = vunpack.c.h.b16 %v433
        %v1016 = vunpack.c.l.b16 %v434
        %v1017 = vunpack.c.h.b16 %v434
        %v1018 = vunpack.c.l.b16 %v435
        %v1019 = vunpack.c.h.b16 %v435
        %v1020 = vunpack.c.l.b16 %v436
        %v1021 = vunpack.c.h.b16 %v436
        %v1022 = vunpack.c.l.b16 %v437
        %v1023 = vunpack.c.h.b16 %v437
        %v1024 = vunpack.c.l.b16 %v438
        %v1025 = vunpack.c.h.b16 %v438
        %v1026 = vunpack.c.l.b16 %v439
        %v1027 = vunpack.c.h.b16 %v439
        %v1028 = vunpack.c.l.b16 %v440
        %v1029 = vunpack.c.h.b16 %v440
        %v1030 = vunpack.c.l.b16 %v441
        %v1031 = vunpack.c.h.b16 %v441
        %v1032 = vunpack.c.l.b16 %v442
        %v1033 = vunpack.c.h.b16 %v442
        %v1034 = vunpack.c.l.b16 %v443
        %v1035 = vunpack.c.h.b16 %v443
        %v1036 = vunpack.c.l.b16 %v444
        %v1037 = vunpack.c.h.b16 %v444
        %v1038 = vunpack.c.l.b16 %v445
        %v1039 = vunpack.c.h.b16 %v445
        %v1040 = vunpack.c.l.b16 %v446
        %v1041 = vunpack.c.h.b16 %v446
        %v1042 = vunpack.c.l.b16 %v447
        %v1043 = vunpack.c.h.b16 %v447
        %v1044 = vunpack.c.l.b16 %v448
        %v1045 = vunpack.c.h.b16 %v448
        %v1046 = vunpack.c.l.b16 %v449
        %v1047 = vunpack.c.h.b16 %v449
        %v1048 = vunpack.c.l.b16 %v450
        %v1049 = vunpack.c.h.b16 %v450
        %v1050 = vunpack.c.l.b16 %v451
        %v1051 = vunpack.c.h.b16 %v451
        %v1052 = vunpack.c.l.b16 %v452
        %v1053 = vunpack.c.h.b16 %v452
        %v1054 = vunpack.c.l.b16 %v453
        %v1055 = vunpack.c.h.b16 %v453
        %v1056 = vunpack.c.l.b16 %v454
        %v1057 = vunpack.c.h.b16 %v454
        %v1058 = vunpack.c.l.b16 %v455
        %v1059 = vunpack.c.h.b16 %v455
        %v1060 = vunpack.c.l.b16 %v456
        %v1061 = vunpack.c.h.b16 %v456
        %v1062 = vunpack.c.l.b16 %v457
        %v1063 = vunpack.c.h.b16 %v457
        %v1064 = vunpack.c.l.b16 %v458
        %v1065 = vunpack.c.h.b16 %v458
        %v1066 = vunpack.c.l.b16 %v459
        %v1067 = vunpack.c.h.b16 %v459
        %v1068 = vunpack.c.l.b16 %v460
        %v1069 = vunpack.c.h.b16 %v460
        %v1070 = vunpack.c.l.b16 %v461
        %v1071 = vunpack.c.h.b16 %v461
        %v1072 = vunpack.c.l.b16 %v462
        %v1073 = vunpack.c.h.b16 %v462
        %v1074 = vunpack.c.l.b16 %v463
        %v1075 = vunpack.c.h.b16 %v463
        %v1076 = vunpack.c.l.b16 %v464
        %v1077 = vunpack.c.h.b16 %v464
        %v1078 = vunpack.c.l.b16 %v465
        %v1079 = vunpack.c.h.b16 %v465
        %v1080 = vunpack.c.l.b16 %v466
        %v1081 = vunpack.c.h.b16 %v466
        %v1082 = vunpack.c.l.b16 %v467
        %v1083 = vunpack.c.h.b16 %v467
        %v1084 = vunpack.c.l.b16 %v468
        %v1085 = vunpack.c.h.b16 %v468
        %v1086 = vunpack.c.l.b16 %v469
        %v1087 = vunpack.c.h.b16 %v469
        %v1088 = vunpack.c.l.b16 %v470
        %v1089 = vunpack.c.h.b16 %v470
        %v1090 = vunpack.c.l.b16 %v471
        %v1091 = vunpack.c.h.b16 %v471
        %v1092 = vunpack.c.l.b16 %v472
        %v1093 = vunpack.c.h.b16 %v472
        %v1094 = vunpack.c.l.b16 %v473
        %v1095 = vunpack.c.h.b16 %v473
        %v1096 = vunpack.c.l.b16 %v474
        %v1097 = vunpack.c.h.b16 %v474
        %v1098 = vunpack.c.l.b16 %v475
        %v1099 = vunpack.c.h.b16 %v475
        %v1100 = vunpack.c.l.b16 %v476
        %v1101 = vunpack.c.h.b16 %v476
        %v1102 = vunpack.c.l.b16 %v477
        %v1103 = vunpack.c.h.b16 %v477
        %v1104 = vunpack.c.l.b16 %v478
        %v1105 = vunpack.c.h.b16 %v478
        %v1106 = vunpack.c.l.b16 %v479
        %v1107 = vunpack.c.h.b16 %v479
        %v1108 = vunpack.c.l.b16 %v480
        %v1109 = vunpack.c.h.b16 %v480
        %v1110 = vunpack.c.l.b16 %v481
        %v1111 = vunpack.c.h.b16 %v481
        %v1112 = vunpack.c.l.b16 %v482
        %v1113 = vunpack.c.h.b16 %v482
        %v1114 = vunpack.c.l.b16 %v483
        %v1115 = vunpack.c.h.b16 %v483
        %v1116 = vunpack.c.l.b16 %v484
        %v1117 = vunpack.c.h.b16 %v484
        %v1118 = vunpack.c.l.b16 %v485
        %v1119 = vunpack.c.h.b16 %v485
        %v1120 = vunpack.c.l.b16 %v486
        %v1121 = vunpack.c.h.b16 %v486
        %v1122 = vunpack.c.l.b16 %v487
        %v1123 = vunpack.c.h.b16 %v487
        %v1124 = vunpack.c.l.b16 %v488
        %v1125 = vunpack.c.h.b16 %v488
        %v1126 = vunpack.c.l.b16 %v489
        %v1127 = vunpack.c.h.b16 %v489
        %v1128 = vunpack.c.l.b16 %v490
        %v1129 = vunpack.c.h.b16 %v490
        %v1130 = vunpack.c.l.b16 %v491
        %v1131 = vunpack.c.h.b16 %v491
        %v1132 = vunpack.c.l.b16 %v492
        %v1133 = vunpack.c.h.b16 %v492
        %v1134 = vunpack.c.l.b16 %v493
        %v1135 = vunpack.c.h.b16 %v493
        %v1136 = vunpack.c.l.b16 %v494
        %v1137 = vunpack.c.h.b16 %v494
        %v1138 = vunpack.c.l.b16 %v495
        %v1139 = vunpack.c.h.b16 %v495
        %v1140 = vunpack.c.l.b16 %v496
        %v1141 = vunpack.c.h.b16 %v496
        %v1142 = vunpack.c.l.b16 %v497
        %v1143 = vunpack.c.h.b16 %v497
        %v1144 = vunpack.c.l.b16 %v498
        %v1145 = vunpack.c.h.b16 %v498
        %v1146 = vunpack.c.l.b16 %v499
        %v1147 = vunpack.c.h.b16 %v499
        %v1148 = vunpack.c.l.b16 %v500
        %v1149 = vunpack.c.h.b16 %v500
        %v1150 = vunpack.c.l.b16 %v501
        %v1151 = vunpack.c.h.b16 %v501
        %v1152 = vunpack.c.l.b16 %v502
        %v1153 = vunpack.c.h.b16 %v502
        %v1154 = vunpack.c.l.b16 %v503
        %v1155 = vunpack.c.h.b16 %v503
        %v1156 = vunpack.c.l.b16 %v504
        %v1157 = vunpack.c.h.b16 %v504
        %v1158 = vunpack.c.l.b16 %v505
        %v1159 = vunpack.c.h.b16 %v505
        %v1160 = vunpack.c.l.b16 %v506
        %v1161 = vunpack.c.h.b16 %v506
        %v1162 = vunpack.c.l.b16 %v507
        %v1163 = vunpack.c.h.b16 %v507
        %v1164 = vunpack.c.l.b16 %v508
        %v1165 = vunpack.c.h.b16 %v508
        %v1166 = vunpack.c.l.b16 %v509
        %v1167 = vunpack.c.h.b16 %v509
        %v1168 = vunpack.c.l.b16 %v510
        %v1169 = vunpack.c.h.b16 %v510
        %v1170 = vunpack.c.l.b16 %v511
        %v1171 = vunpack.c.h.b16 %v511
        %v1172 = vunpack.c.l.b16 %v512
        %v1173 = vunpack.c.h.b16 %v512
        %v1174 = vunpack.c.l.b16 %v513
        %v1175 = vunpack.c.h.b16 %v513
        %v1176 = vunpack.c.l.b16 %v514
        %v1177 = vunpack.c.h.b16 %v514
        %v1178 = vunpack.c.l.b16 %v515
        %v1179 = vunpack.c.h.b16 %v515
        %v1180 = vunpack.c.l.b16 %v516
        %v1181 = vunpack.c.h.b16 %v516
        %v1182 = vunpack.c.l.b16 %v517
        %v1183 = vunpack.c.h.b16 %v517
        %v1184 = vunpack.c.l.b16 %v518
        %v1185 = vunpack.c.h.b16 %v518
        %v1186 = vunpack.c.l.b16 %v519
        %v1187 = vunpack.c.h.b16 %v519
        %v1188 = vunpack.c.l.b16 %v520
        %v1189 = vunpack.c.h.b16 %v520
        %v1190 = vunpack.c.l.b16 %v521
        %v1191 = vunpack.c.h.b16 %v521
        %v1192 = vunpack.c.l.b16 %v522
        %v1193 = vunpack.c.h.b16 %v522
        %v1194 = vunpack.c.l.b16 %v523
        %v1195 = vunpack.c.h.b16 %v523
        %v1196 = vpack.c.b16 %v1016, %v1004
        %v1197 = vpack.c.b16 %v1017, %v1005
        %v1198 = vpack.c.b16 %v1018, %v1006
        %v1199 = vpack.c.b16 %v1019, %v1007
        %v1200 = vpack.c.b16 %v1020, %v1008
        %v1201 = vpack.c.b16 %v1021, %v1009
        %v1202 = vpack.c.b16 %v1022, %v1010
        %v1203 = vpack.c.b16 %v1023, %v1011
        %v1204 = vpack.c.b16 %v1024, %v1012
        %v1205 = vpack.c.b16 %v1025, %v1013
        %v1206 = vpack.c.b16 %v1026, %v1014
        %v1207 = vpack.c.b16 %v1027, %v1015
        %v1208 = vpack.c.b16 %v1040, %v1028
        %v1209 = vpack.c.b16 %v1041, %v1029
        %v1210 = vpack.c.b16 %v1042, %v1030
        %v1211 = vpack.c.b16 %v1043, %v1031
        %v1212 = vpack.c.b16 %v1044, %v1032
        %v1213 = vpack.c.b16 %v1045, %v1033
        %v1214 = vpack.c.b16 %v1046, %v1034
        %v1215 = vpack.c.b16 %v1047, %v1035
        %v1216 = vpack.c.b16 %v1048, %v1036
        %v1217 = vpack.c.b16 %v1049, %v1037
        %v1218 = vpack.c.b16 %v1050, %v1038
        %v1219 = vpack.c.b16 %v1051, %v1039
        %v1220 = vpack.c.b16 %v1064, %v1052
        %v1221 = vpack.c.b16 %v1065, %v1053
        %v1222 = vpack.c.b16 %v1066, %v1054
        %v1223 = vpack.c.b16 %v1067, %v1055
        %v1224 = vpack.c.b16 %v1068, %v1056
        %v1225 = vpack.c.b16 %v1069, %v1057
        %v1226 = vpack.c.b16 %v1070, %v1058
        %v1227 = vpack.c.b16 %v1071, %v1059
        %v1228 = vpack.c.b16 %v1072, %v1060
        %v1229 = vpack.c.b16 %v1073, %v1061
        %v1230 = vpack.c.b16 %v1074, %v1062
        %v1231 = vpack.c.b16 %v1075, %v1063
        %v1232 = vpack.c.b16 %v1088, %v1076
        %v1233 = vpack.c.b16 %v1089, %v1077
        %v1234 = vpack.c.b16 %v1090, %v1078
        %v1235 = vpack.c.b16 %v1091, %v1079
        %v1236 = vpack.c.b16 %v1092, %v1080
        %v1237 = vpack.c.b16 %v1093, %v1081
        %v1238 = vpack.c.b16 %v1094, %v1082
        %v1239 = vpack.c.b16 %v1095, %v1083
        %v1240 = vpack.c.b16 %v1096, %v1084
        %v1241 = vpack.c.b16 %v1097, %v1085
        %v1242 = vpack.c.b16 %v1098, %v1086
        %v1243 = vpack.c.b16 %v1099, %v1087
        %v1244 = vpack.c.b16 %v1112, %v1100
        %v1245 = vpack.c.b16 %v1113, %v1101
        %v1246 = vpack.c.b16 %v1114, %v1102
        %v1247 = vpack.c.b16 %v1115, %v1103
        %v1248 = vpack.c.b16 %v1116, %v1104
        %v1249 = vpack.c.b16 %v1117, %v1105
        %v1250 = vpack.c.b16 %v1118, %v1106
        %v1251 = vpack.c.b16 %v1119, %v1107
        %v1252 = vpack.c.b16 %v1120, %v1108
        %v1253 = vpack.c.b16 %v1121, %v1109
        %v1254 = vpack.c.b16 %v1122, %v1110
        %v1255 = vpack.c.b16 %v1123, %v1111
        %v1256 = vpack.c.b16 %v1136, %v1124
        %v1257 = vpack.c.b16 %v1137, %v1125
        %v1258 = vpack.c.b16 %v1138, %v1126
        %v1259 = vpack.c.b16 %v1139, %v1127
        %v1260 = vpack.c.b16 %v1140, %v1128
        %v1261 = vpack.c.b16 %v1141, %v1129
        %v1262 = vpack.c.b16 %v1142, %v1130
        %v1263 = vpack.c.b16 %v1143, %v1131
        %v1264 = vpack.c.b16 %v1144, %v1132
        %v1265 = vpack.c.b16 %v1145, %v1133
        %v1266 = vpack.c.b16 %v1146, %v1134
        %v1267 = vpack.c.b16 %v1147, %v1135
        %v1268 = vpack.c.b16 %v1160, %v1148
        %v1269 = vpack.c.b16 %v1161, %v1149
        %v1270 = vpack.c.b16 %v1162, %v1150
        %v1271 = vpack.c.b16 %v1163, %v1151
        %v1272 = vpack.c.b16 %v1164, %v1152
        %v1273 = vpack.c.b16 %v1165, %v1153
        %v1274 = vpack.c.b16 %v1166, %v1154
        %v1275 = vpack.c.b16 %v1167, %v1155
        %v1276 = vpack.c.b16 %v1168, %v1156
        %v1277 = vpack.c.b16 %v1169, %v1157
        %v1278 = vpack.c.b16 %v1170, %v1158
        %v1279 = vpack.c.b16 %v1171, %v1159
        %v1280 = vpack.c.b16 %v1184, %v1172
        %v1281 = vpack.c.b16 %v1185, %v1173
        %v1282 = vpack.c.b16 %v1186, %v1174
        %v1283 = vpack.c.b16 %v1187, %v1175
        %v1284 = vpack.c.b16 %v1188, %v1176
        %v1285 = vpack.c.b16 %v1189, %v1177
        %v1286 = vpack.c.b16 %v1190, %v1178
        %v1287 = vpack.c.b16 %v1191, %v1179
        %v1288 = vpack.c.b16 %v1192, %v1180
        %v1289 = vpack.c.b16 %v1193, %v1181
        %v1290 = vpack.c.b16 %v1194, %v1182
        %v1291 = vpack.c.b16 %v1195, %v1183
        %v1772 = vunpack.c.l.b16 %v524
        %v1773 = vunpack.c.h.b16 %v524
        %v1774 = vunpack.c.l.b16 %v525
        %v1775 = vunpack.c.h.b16 %v525
        %v1776 = vunpack.c.l.b16 %v526
        %v1777 = vunpack.c.h.b16 %v526
        %v1778 = vunpack.c.l.b16 %v527
        %v1779 = vunpack.c.h.b16 %v527
        %v1780 = vunpack.c.l.b16 %v528
        %v1781 = vunpack.c.h.b16 %v528
        %v1782 = vunpack.c.l.b16 %v529
        %v1783 = vunpack.c.h.b16 %v529
        %v1784 = vunpack.c.l.b16 %v530
        %v1785 = vunpack.c.h.b16 %v530
        %v1786 = vunpack.c.l.b16 %v531
        %v1787 = vunpack.c.h.b16 %v531
        %v1788 = vunpack.c.l.b16 %v532
        %v1789 = vunpack.c.h.b16 %v532
        %v1790 = vunpack.c.l.b16 %v533
        %v1791 = vunpack.c.h.b16 %v533
        %v1792 = vunpack.c.l.b16 %v534
        %v1793 = vunpack.c.h.b16 %v534
        %v1794 = vunpack.c.l.b16 %v535
        %v1795 = vunpack.c.h.b16 %v535
        %v1796 = vunpack.c.l.b16 %v536
        %v1797 = vunpack.c.h.b16 %v536
        %v1798 = vunpack.c.l.b16 %v537
        %v1799 = vunpack.c.h.b16 %v537
        %v1800 = vunpack.c.l.b16 %v538
        %v1801 = vunpack.c.h.b16 %v538
        %v1802 = vunpack.c.l.b16 %v539
        %v1803 = vunpack.c.h.b16 %v539
        %v1804 = vunpack.c.l.b16 %v540
        %v1805 = vunpack.c.h.b16 %v540
        %v1806 = vunpack.c.l.b16 %v541
        %v1807 = vunpack.c.h.b16 %v541
        %v1808 = vunpack.c.l.b16 %v542
        %v1809 = vunpack.c.h.b16 %v542
        %v1810 = vunpack.c.l.b16 %v543
        %v1811 = vunpack.c.h.b16 %v543
        %v1812 = vunpack.c.l.b16 %v544
        %v1813 = vunpack.c.h.b16 %v544
        %v1814 = vunpack.c.l.b16 %v545
        %v1815 = vunpack.c.h.b16 %v545
        %v1816 = vunpack.c.l.b16 %v546
        %v1817 = vunpack.c.h.b16 %v546
        %v1818 = vunpack.c.l.b16 %v547
        %v1819 = vunpack.c.h.b16 %v547
        %v1820 = vunpack.c.l.b16 %v548
        %v1821 = vunpack.c.h.b16 %v548
        %v1822 = vunpack.c.l.b16 %v549
        %v1823 = vunpack.c.h.b16 %v549
        %v1824 = vunpack.c.l.b16 %v550
        %v1825 = vunpack.c.h.b16 %v550
        %v1826 = vunpack.c.l.b16 %v551
        %v1827 = vunpack.c.h.b16 %v551
        %v1828 = vunpack.c.l.b16 %v552
        %v1829 = vunpack.c.h.b16 %v552
        %v1830 = vunpack.c.l.b16 %v553
        %v1831 = vunpack.c.h.b16 %v553
        %v1832 = vunpack.c.l.b16 %v554
        %v1833 = vunpack.c.h.b16 %v554
        %v1834 = vunpack.c.l.b16 %v555
        %v1835 = vunpack.c.h.b16 %v555
        %v1836 = vunpack.c.l.b16 %v556
        %v1837 = vunpack.c.h.b16 %v556
        %v1838 = vunpack.c.l.b16 %v557
        %v1839 = vunpack.c.h.b16 %v557
        %v1840 = vunpack.c.l.b16 %v558
        %v1841 = vunpack.c.h.b16 %v558
        %v1842 = vunpack.c.l.b16 %v559
        %v1843 = vunpack.c.h.b16 %v559
        %v1844 = vunpack.c.l.b16 %v560
        %v1845 = vunpack.c.h.b16 %v560
        %v1846 = vunpack.c.l.b16 %v561
        %v1847 = vunpack.c.h.b16 %v561
        %v1848 = vunpack.c.l.b16 %v562
        %v1849 = vunpack.c.h.b16 %v562
        %v1850 = vunpack.c.l.b16 %v563
        %v1851 = vunpack.c.h.b16 %v563
        %v1852 = vunpack.c.l.b16 %v564
        %v1853 = vunpack.c.h.b16 %v564
        %v1854 = vunpack.c.l.b16 %v565
        %v1855 = vunpack.c.h.b16 %v565
        %v1856 = vunpack.c.l.b16 %v566
        %v1857 = vunpack.c.h.b16 %v566
        %v1858 = vunpack.c.l.b16 %v567
        %v1859 = vunpack.c.h.b16 %v567
        %v1860 = vunpack.c.l.b16 %v568
        %v1861 = vunpack.c.h.b16 %v568
        %v1862 = vunpack.c.l.b16 %v569
        %v1863 = vunpack.c.h.b16 %v569
        %v1864 = vunpack.c.l.b16 %v570
        %v1865 = vunpack.c.h.b16 %v570
        %v1866 = vunpack.c.l.b16 %v571
        %v1867 = vunpack.c.h.b16 %v571
        %v1868 = vunpack.c.l.b16 %v572
        %v1869 = vunpack.c.h.b16 %v572
        %v1870 = vunpack.c.l.b16 %v573
        %v1871 = vunpack.c.h.b16 %v573
        %v1872 = vunpack.c.l.b16 %v574
        %v1873 = vunpack.c.h.b16 %v574
        %v1874 = vunpack.c.l.b16 %v575
        %v1875 = vunpack.c.h.b16 %v575
        %v1876 = vunpack.c.l.b16 %v576
        %v1877 = vunpack.c.h.b16 %v576
        %v1878 = vunpack.c.l.b16 %v577
        %v1879 = vunpack.c.h.b16 %v577
        %v1880 = vunpack.c.l.b16 %v578
        %v1881 = vunpack.c.h.b16 %v578
        %v1882 = vunpack.c.l.b16 %v579
        %v1883 = vunpack.c.h.b16 %v579
        %v1884 = vunpack.c.l.b16 %v580
        %v1885 = vunpack.c.h.b16 %v580
        %v1886 = vunpack.c.l.b16 %v581
        %v1887 = vunpack.c.h.b16 %v581
        %v1888 = vunpack.c.l.b16 %v582
        %v1889 = vunpack.c.h.b16 %v582
        %v1890 = vunpack.c.l.b16 %v583
        %v1891 = vunpack.c.h.b16 %v583
        %v1892 = vunpack.c.l.b16 %v584
        %v1893 = vunpack.c.h.b16 %v584
        %v1894 = vunpack.c.l.b16 %v585
        %v1895 = vunpack.c.h.b16 %v585
        %v1896 = vunpack.c.l.b16 %v586
        %v1897 = vunpack.c.h.b16 %v586
        %v1898 = vunpack.c.l.b16 %v587
        %v1899 = vunpack.c.h.b16 %v587
        %v1900 = vunpack.c.l.b16 %v588
        %v1901 = vunpack.c.h.b16 %v588
        %v1902 = vunpack.c.l.b16 %v589
        %v1903 = vunpack.c.h.b16 %v589
        %v1904 = vunpack.c.l.b16 %v590
        %v1905 = vunpack.c.h.b16 %v590
        %v1906 = vunpack.c.l.b16 %v591
        %v1907 = vunpack.c.h.b16 %v591
        %v1908 = vunpack.c.l.b16 %v592
        %v1909 = vunpack.c.h.b16 %v592
        %v1910 = vunpack.c.l.b16 %v593
        %v1911 = vunpack.c.h.b16 %v593
        %v1912 = vunpack.c.l.b16 %v594
        %v1913 = vunpack.c.h.b16 %v594
        %v1914 = vunpack.c.l.b16 %v595
        %v1915 = vunpack.c.h.b16 %v595
        %v1916 = vunpack.c.l.b16 %v596
        %v1917 = vunpack.c.h.b16 %v596
        %v1918 = vunpack.c.l.b16 %v597
        %v1919 = vunpack.c.h.b16 %v597
        %v1920 = vunpack.c.l.b16 %v598
        %v1921 = vunpack.c.h.b16 %v598
        %v1922 = vunpack.c.l.b16 %v599
        %v1923 = vunpack.c.h.b16 %v599
        %v1924 = vunpack.c.l.b16 %v600
        %v1925 = vunpack.c.h.b16 %v600
        %v1926 = vunpack.c.l.b16 %v601
        %v1927 = vunpack.c.h.b16 %v601
        %v1928 = vunpack.c.l.b16 %v602
        %v1929 = vunpack.c.h.b16 %v602
        %v1930 = vunpack.c.l.b16 %v603
        %v1931 = vunpack.c.h.b16 %v603
        %v1932 = vunpack.c.l.b16 %v604
        %v1933 = vunpack.c.h.b16 %v604
        %v1934 = vunpack.c.l.b16 %v605
        %v1935 = vunpack.c.h.b16 %v605
        %v1936 = vunpack.c.l.b16 %v606
        %v1937 = vunpack.c.h.b16 %v606
        %v1938 = vunpack.c.l.b16 %v607
        %v1939 = vunpack.c.h.b16 %v607
        %v1940 = vunpack.c.l.b16 %v608
        %v1941 = vunpack.c.h.b16 %v608
        %v1942 = vunpack.c.l.b16 %v609
        %v1943 = vunpack.c.h.b16 %v609
        %v1944 = vunpack.c.l.b16 %v610
        %v1945 = vunpack.c.h.b16 %v610
        %v1946 = vunpack.c.l.b16 %v611
        %v1947 = vunpack.c.h.b16 %v611
        %v1948 = vunpack.c.l.b16 %v612
        %v1949 = vunpack.c.h.b16 %v612
        %v1950 = vunpack.c.l.b16 %v613
        %v1951 = vunpack.c.h.b16 %v613
        %v1952 = vunpack.c.l.b16 %v614
        %v1953 = vunpack.c.h.b16 %v614
        %v1954 = vunpack.c.l.b16 %v615
        %v1955 = vunpack.c.h.b16 %v615
        %v1956 = vunpack.c.l.b16 %v616
        %v1957 = vunpack.c.h.b16 %v616
        %v1958 = vunpack.c.l.b16 %v617
        %v1959 = vunpack.c.h.b16 %v617
        %v1960 = vunpack.c.l.b16 %v618
        %v1961 = vunpack.c.h.b16 %v618
        %v1962 = vunpack.c.l.b16 %v619
        %v1963 = vunpack.c.h.b16 %v619
        %v1964 = vunpack.c.l.b16 %v620
        %v1965 = vunpack.c.h.b16 %v620
        %v1966 = vunpack.c.l.b16 %v621
        %v1967 = vunpack.c.h.b16 %v621
        %v1968 = vunpack.c.l.b16 %v622
        %v1969 = vunpack.c.h.b16 %v622
        %v1970 = vunpack.c.l.b16 %v623
        %v1971 = vunpack.c.h.b16 %v623
        %v1972 = vunpack.c.l.b16 %v624
        %v1973 = vunpack.c.h.b16 %v624
        %v1974 = vunpack.c.l.b16 %v625
        %v1975 = vunpack.c.h.b16 %v625
        %v1976 = vunpack.c.l.b16 %v626
        %v1977 = vunpack.c.h.b16 %v626
        %v1978 = vunpack.c.l.b16 %v627
        %v1979 = vunpack.c.h.b16 %v627
        %v1980 = vunpack.c.l.b16 %v628
        %v1981 = vunpack.c.h.b16 %v628
        %v1982 = vunpack.c.l.b16 %v629
        %v1983 = vunpack.c.h.b16 %v629
        %v1984 = vunpack.c.l.b16 %v630
        %v1985 = vunpack.c.h.b16 %v630
        %v1986 = vunpack.c.l.b16 %v631
        %v1987 = vunpack.c.h.b16 %v631
        %v1988 = vunpack.c.l.b16 %v632
        %v1989 = vunpack.c.h.b16 %v632
        %v1990 = vunpack.c.l.b16 %v633
        %v1991 = vunpack.c.h.b16 %v633
        %v1992 = vunpack.c.l.b16 %v634
        %v1993 = vunpack.c.h.b16 %v634
        %v1994 = vunpack.c.l.b16 %v635
        %v1995 = vunpack.c.h.b16 %v635
        %v1996 = vunpack.c.l.b16 %v636
        %v1997 = vunpack.c.h.b16 %v636
        %v1998 = vunpack.c.l.b16 %v637
        %v1999 = vunpack.c.h.b16 %v637
        %v2000 = vunpack.c.l.b16 %v638
        %v2001 = vunpack.c.h.b16 %v638
        %v2002 = vunpack.c.l.b16 %v639
        %v2003 = vunpack.c.h.b16 %v639
        %v2004 = vunpack.c.l.b16 %v640
        %v2005 = vunpack.c.h.b16 %v640
        %v2006 = vunpack.c.l.b16 %v641
        %v2007 = vunpack.c.h.b16 %v641
        %v2008 = vunpack.c.l.b16 %v642
        %v2009 = vunpack.c.h.b16 %v642
        %v2010 = vunpack.c.l.b16 %v643
        %v2011 = vunpack.c.h.b16 %v643
        %v2012 = vunpack.c.l.b16 %v644
        %v2013 = vunpack.c.h.b16 %v644
        %v2014 = vunpack.c.l.b16 %v645
        %v2015 = vunpack.c.h.b16 %v645
        %v2016 = vunpack.c.l.b16 %v646
        %v2017 = vunpack.c.h.b16 %v646
        %v2018 = vunpack.c.l.b16 %v647
        %v2019 = vunpack.c.h.b16 %v647
        %v2020 = vunpack.c.l.b16 %v648
        %v2021 = vunpack.c.h.b16 %v648
        %v2022 = vunpack.c.l.b16 %v649
        %v2023 = vunpack.c.h.b16 %v649
        %v2024 = vunpack.c.l.b16 %v650
        %v2025 = vunpack.c.h.b16 %v650
        %v2026 = vunpack.c.l.b16 %v651
        %v2027 = vunpack.c.h.b16 %v651
        %v2028 = vunpack.c.l.b16 %v652
        %v2029 = vunpack.c.h.b16 %v652
        %v2030 = vunpack.c.l.b16 %v653
        %v2031 = vunpack.c.h.b16 %v653
        %v2032 = vunpack.c.l.b16 %v654
        %v2033 = vunpack.c.h.b16 %v654
        %v2034 = vunpack.c.l.b16 %v655
        %v2035 = vunpack.c.h.b16 %v655
        %v2036 = vunpack.c.l.b16 %v656
        %v2037 = vunpack.c.h.b16 %v656
        %v2038 = vunpack.c.l.b16 %v657
        %v2039 = vunpack.c.h.b16 %v657
        %v2040 = vunpack.c.l.b16 %v658
        %v2041 = vunpack.c.h.b16 %v658
        %v2042 = vunpack.c.l.b16 %v659
        %v2043 = vunpack.c.h.b16 %v659
        %v2044 = vunpack.c.l.b16 %v660
        %v2045 = vunpack.c.h.b16 %v660
        %v2046 = vunpack.c.l.b16 %v661
        %v2047 = vunpack.c.h.b16 %v661
        %v2048 = vunpack.c.l.b16 %v662
        %v2049 = vunpack.c.h.b16 %v662
        %v2050 = vunpack.c.l.b16 %v663
        %v2051 = vunpack.c.h.b16 %v663
        %v2052 = vunpack.c.l.b16 %v664
        %v2053 = vunpack.c.h.b16 %v664
        %v2054 = vunpack.c.l.b16 %v665
        %v2055 = vunpack.c.h.b16 %v665
        %v2056 = vunpack.c.l.b16 %v666
        %v2057 = vunpack.c.h.b16 %v666
        %v2058 = vunpack.c.l.b16 %v667
        %v2059 = vunpack.c.h.b16 %v667
        %v2060 = vunpack.c.l.b16 %v668
        %v2061 = vunpack.c.h.b16 %v668
        %v2062 = vunpack.c.l.b16 %v669
        %v2063 = vunpack.c.h.b16 %v669
        %v2064 = vunpack.c.l.b16 %v670
        %v2065 = vunpack.c.h.b16 %v670
        %v2066 = vunpack.c.l.b16 %v671
        %v2067 = vunpack.c.h.b16 %v671
        %v2068 = vunpack.c.l.b16 %v672
        %v2069 = vunpack.c.h.b16 %v672
        %v2070 = vunpack.c.l.b16 %v673
        %v2071 = vunpack.c.h.b16 %v673
        %v2072 = vunpack.c.l.b16 %v674
        %v2073 = vunpack.c.h.b16 %v674
        %v2074 = vunpack.c.l.b16 %v675
        %v2075 = vunpack.c.h.b16 %v675
        %v2076 = vunpack.c.l.b16 %v676
        %v2077 = vunpack.c.h.b16 %v676
        %v2078 = vunpack.c.l.b16 %v677
        %v2079 = vunpack.c.h.b16 %v677
        %v2080 = vunpack.c.l.b16 %v678
        %v2081 = vunpack.c.h.b16 %v678
        %v2082 = vunpack.c.l.b16 %v679
        %v2083 = vunpack.c.h.b16 %v679
        %v2084 = vunpack.c.l.b16 %v680
        %v2085 = vunpack.c.h.b16 %v680
        %v2086 = vunpack.c.l.b16 %v681
        %v2087 = vunpack.c.h.b16 %v681
        %v2088 = vunpack.c.l.b16 %v682
        %v2089 = vunpack.c.h.b16 %v682
        %v2090 = vunpack.c.l.b16 %v683
        %v2091 = vunpack.c.h.b16 %v683
        %v2092 = vunpack.c.l.b16 %v684
        %v2093 = vunpack.c.h.b16 %v684
        %v2094 = vunpack.c.l.b16 %v685
        %v2095 = vunpack.c.h.b16 %v685
        %v2096 = vunpack.c.l.b16 %v686
        %v2097 = vunpack.c.h.b16 %v686
        %v2098 = vunpack.c.l.b16 %v687
        %v2099 = vunpack.c.h.b16 %v687
        %v2100 = vunpack.c.l.b16 %v688
        %v2101 = vunpack.c.h.b16 %v688
        %v2102 = vunpack.c.l.b16 %v689
        %v2103 = vunpack.c.h.b16 %v689
        %v2104 = vunpack.c.l.b16 %v690
        %v2105 = vunpack.c.h.b16 %v690
        %v2106 = vunpack.c.l.b16 %v691
        %v2107 = vunpack.c.h.b16 %v691
        %v2108 = vunpack.c.l.b16 %v692
        %v2109 = vunpack.c.h.b16 %v692
        %v2110 = vunpack.c.l.b16 %v693
        %v2111 = vunpack.c.h.b16 %v693
        %v2112 = vunpack.c.l.b16 %v694
        %v2113 = vunpack.c.h.b16 %v694
        %v2114 = vunpack.c.l.b16 %v695
        %v2115 = vunpack.c.h.b16 %v695
        %v2116 = vunpack.c.l.b16 %v696
        %v2117 = vunpack.c.h.b16 %v696
        %v2118 = vunpack.c.l.b16 %v697
        %v2119 = vunpack.c.h.b16 %v697
        %v2120 = vunpack.c.l.b16 %v698
        %v2121 = vunpack.c.h.b16 %v698
        %v2122 = vunpack.c.l.b16 %v699
        %v2123 = vunpack.c.h.b16 %v699
        %v2124 = vunpack.c.l.b16 %v700
        %v2125 = vunpack.c.h.b16 %v700
        %v2126 = vunpack.c.l.b16 %v701
        %v2127 = vunpack.c.h.b16 %v701
        %v2128 = vunpack.c.l.b16 %v702
        %v2129 = vunpack.c.h.b16 %v702
        %v2130 = vunpack.c.l.b16 %v703
        %v2131 = vunpack.c.h.b16 %v703
        %v2132 = vunpack.c.l.b16 %v704
        %v2133 = vunpack.c.h.b16 %v704
        %v2134 = vunpack.c.l.b16 %v705
        %v2135 = vunpack.c.h.b16 %v705
        %v2136 = vunpack.c.l.b16 %v706
        %v2137 = vunpack.c.h.b16 %v706
        %v2138 = vunpack.c.l.b16 %v707
        %v2139 = vunpack.c.h.b16 %v707
        %v2140 = vunpack.c.l.b16 %v708
        %v2141 = vunpack.c.h.b16 %v708
        %v2142 = vunpack.c.l.b16 %v709
        %v2143 = vunpack.c.h.b16 %v709
        %v2144 = vunpack.c.l.b16 %v710
        %v2145 = vunpack.c.h.b16 %v710
        %v2146 = vunpack.c.l.b16 %v711
        %v2147 = vunpack.c.h.b16 %v711
        %v2148 = vunpack.c.l.b16 %v712
        %v2149 = vunpack.c.h.b16 %v712
        %v2150 = vunpack.c.l.b16 %v713
        %v2151 = vunpack.c.h.b16 %v713
        %v2152 = vunpack.c.l.b16 %v714
        %v2153 = vunpack.c.h.b16 %v714
        %v2154 = vunpack.c.l.b16 %v715
        %v2155 = vunpack.c.h.b16 %v715
        %v2156 = vunpack.c.l.b16 %v716
        %v2157 = vunpack.c.h.b16 %v716
        %v2158 = vunpack.c.l.b16 %v717
        %v2159 = vunpack.c.h.b16 %v717
        %v2160 = vunpack.c.l.b16 %v718
        %v2161 = vunpack.c.h.b16 %v718
        %v2162 = vunpack.c.l.b16 %v719
        %v2163 = vunpack.c.h.b16 %v719
        %v2164 = vunpack.c.l.b16 %v720
        %v2165 = vunpack.c.h.b16 %v720
        %v2166 = vunpack.c.l.b16 %v721
        %v2167 = vunpack.c.h.b16 %v721
        %v2168 = vunpack.c.l.b16 %v722
        %v2169 = vunpack.c.h.b16 %v722
        %v2170 = vunpack.c.l.b16 %v723
        %v2171 = vunpack.c.h.b16 %v723
        %v2172 = vunpack.c.l.b16 %v724
        %v2173 = vunpack.c.h.b16 %v724
        %v2174 = vunpack.c.l.b16 %v725
        %v2175 = vunpack.c.h.b16 %v725
        %v2176 = vunpack.c.l.b16 %v726
        %v2177 = vunpack.c.h.b16 %v726
        %v2178 = vunpack.c.l.b16 %v727
        %v2179 = vunpack.c.h.b16 %v727
        %v2180 = vunpack.c.l.b16 %v728
        %v2181 = vunpack.c.h.b16 %v728
        %v2182 = vunpack.c.l.b16 %v729
        %v2183 = vunpack.c.h.b16 %v729
        %v2184 = vunpack.c.l.b16 %v730
        %v2185 = vunpack.c.h.b16 %v730
        %v2186 = vunpack.c.l.b16 %v731
        %v2187 = vunpack.c.h.b16 %v731
        %v2188 = vunpack.c.l.b16 %v732
        %v2189 = vunpack.c.h.b16 %v732
        %v2190 = vunpack.c.l.b16 %v733
        %v2191 = vunpack.c.h.b16 %v733
        %v2192 = vunpack.c.l.b16 %v734
        %v2193 = vunpack.c.h.b16 %v734
        %v2194 = vunpack.c.l.b16 %v735
        %v2195 = vunpack.c.h.b16 %v735
        %v2196 = vunpack.c.l.b16 %v736
        %v2197 = vunpack.c.h.b16 %v736
        %v2198 = vunpack.c.l.b16 %v737
        %v2199 = vunpack.c.h.b16 %v737
        %v2200 = vunpack.c.l.b16 %v738
        %v2201 = vunpack.c.h.b16 %v738
        %v2202 = vunpack.c.l.b16 %v739
        %v2203 = vunpack.c.h.b16 %v739
        %v2204 = vunpack.c.l.b16 %v740
        %v2205 = vunpack.c.h.b16 %v740
        %v2206 = vunpack.c.l.b16 %v741
        %v2207 = vunpack.c.h.b16 %v741
        %v2208 = vunpack.c.l.b16 %v742
        %v2209 = vunpack.c.h.b16 %v742
        %v2210 = vunpack.c.l.b16 %v743
        %v2211 = vunpack.c.h.b16 %v743
        %v2212 = vunpack.c.l.b16 %v744
        %v2213 = vunpack.c.h.b16 %v744
        %v2214 = vunpack.c.l.b16 %v745
        %v2215 = vunpack.c.h.b16 %v745
        %v2216 = vunpack.c.l.b16 %v746
        %v2217 = vunpack.c.h.b16 %v746
        %v2218 = vunpack.c.l.b16 %v747
        %v2219 = vunpack.c.h.b16 %v747
        %v2220 = vunpack.c.l.b16 %v748
        %v2221 = vunpack.c.h.b16 %v748
        %v2222 = vunpack.c.l.b16 %v749
        %v2223 = vunpack.c.h.b16 %v749
        %v2224 = vunpack.c.l.b16 %v750
        %v2225 = vunpack.c.h.b16 %v750
        %v2226 = vunpack.c.l.b16 %v751
        %v2227 = vunpack.c.h.b16 %v751
        %v2228 = vunpack.c.l.b16 %v752
        %v2229 = vunpack.c.h.b16 %v752
        %v2230 = vunpack.c.l.b16 %v753
        %v2231 = vunpack.c.h.b16 %v753
        %v2232 = vunpack.c.l.b16 %v754
        %v2233 = vunpack.c.h.b16 %v754
        %v2234 = vunpack.c.l.b16 %v755
        %v2235 = vunpack.c.h.b16 %v755
        %v2236 = vunpack.c.l.b16 %v756
        %v2237 = vunpack.c.h.b16 %v756
        %v2238 = vunpack.c.l.b16 %v757
        %v2239 = vunpack.c.h.b16 %v757
        %v2240 = vunpack.c.l.b16 %v758
        %v2241 = vunpack.c.h.b16 %v758
        %v2242 = vunpack.c.l.b16 %v759
        %v2243 = vunpack.c.h.b16 %v759
        %v2244 = vunpack.c.l.b16 %v760
        %v2245 = vunpack.c.h.b16 %v760
        %v2246 = vunpack.c.l.b16 %v761
        %v2247 = vunpack.c.h.b16 %v761
        %v2248 = vunpack.c.l.b16 %v762
        %v2249 = vunpack.c.h.b16 %v762
        %v2250 = vunpack.c.l.b16 %v763
        %v2251 = vunpack.c.h.b16 %v763
        %v2252 = vunpack.c.l.b16 %v764
        %v2253 = vunpack.c.h.b16 %v764
        %v2254 = vunpack.c.l.b16 %v765
        %v2255 = vunpack.c.h.b16 %v765
        %v2256 = vunpack.c.l.b16 %v766
        %v2257 = vunpack.c.h.b16 %v766
        %v2258 = vunpack.c.l.b16 %v767
        %v2259 = vunpack.c.h.b16 %v767
        %v2260 = vunpack.c.l.b16 %v768
        %v2261 = vunpack.c.h.b16 %v768
        %v2262 = vunpack.c.l.b16 %v769
        %v2263 = vunpack.c.h.b16 %v769
        %v2264 = vunpack.c.l.b16 %v770
        %v2265 = vunpack.c.h.b16 %v770
        %v2266 = vunpack.c.l.b16 %v771
        %v2267 = vunpack.c.h.b16 %v771
        %v2268 = vunpack.c.l.b16 %v772
        %v2269 = vunpack.c.h.b16 %v772
        %v2270 = vunpack.c.l.b16 %v773
        %v2271 = vunpack.c.h.b16 %v773
        %v2272 = vunpack.c.l.b16 %v774
        %v2273 = vunpack.c.h.b16 %v774
        %v2274 = vunpack.c.l.b16 %v775
        %v2275 = vunpack.c.h.b16 %v775
        %v2276 = vunpack.c.l.b16 %v776
        %v2277 = vunpack.c.h.b16 %v776
        %v2278 = vunpack.c.l.b16 %v777
        %v2279 = vunpack.c.h.b16 %v777
        %v2280 = vunpack.c.l.b16 %v778
        %v2281 = vunpack.c.h.b16 %v778
        %v2282 = vunpack.c.l.b16 %v779
        %v2283 = vunpack.c.h.b16 %v779
        %v2284 = vunpack.c.l.b16 %v780
        %v2285 = vunpack.c.h.b16 %v780
        %v2286 = vunpack.c.l.b16 %v781
        %v2287 = vunpack.c.h.b16 %v781
        %v2288 = vunpack.c.l.b16 %v782
        %v2289 = vunpack.c.h.b16 %v782
        %v2290 = vunpack.c.l.b16 %v783
        %v2291 = vunpack.c.h.b16 %v783
        %v2292 = vunpack.c.l.b16 %v784
        %v2293 = vunpack.c.h.b16 %v784
        %v2294 = vunpack.c.l.b16 %v785
        %v2295 = vunpack.c.h.b16 %v785
        %v2296 = vunpack.c.l.b16 %v786
        %v2297 = vunpack.c.h.b16 %v786
        %v2298 = vunpack.c.l.b16 %v787
        %v2299 = vunpack.c.h.b16 %v787
        %v2300 = vunpack.c.l.b16 %v788
        %v2301 = vunpack.c.h.b16 %v788
        %v2302 = vunpack.c.l.b16 %v789
        %v2303 = vunpack.c.h.b16 %v789
        %v2304 = vunpack.c.l.b16 %v790
        %v2305 = vunpack.c.h.b16 %v790
        %v2306 = vunpack.c.l.b16 %v791
        %v2307 = vunpack.c.h.b16 %v791
        %v2308 = vunpack.c.l.b16 %v792
        %v2309 = vunpack.c.h.b16 %v792
        %v2310 = vunpack.c.l.b16 %v793
        %v2311 = vunpack.c.h.b16 %v793
        %v2312 = vunpack.c.l.b16 %v794
        %v2313 = vunpack.c.h.b16 %v794
        %v2314 = vunpack.c.l.b16 %v795
        %v2315 = vunpack.c.h.b16 %v795
        %v2316 = vunpack.c.l.b16 %v796
        %v2317 = vunpack.c.h.b16 %v796
        %v2318 = vunpack.c.l.b16 %v797
        %v2319 = vunpack.c.h.b16 %v797
        %v2320 = vunpack.c.l.b16 %v798
        %v2321 = vunpack.c.h.b16 %v798
        %v2322 = vunpack.c.l.b16 %v799
        %v2323 = vunpack.c.h.b16 %v799
        %v2324 = vunpack.c.l.b16 %v800
        %v2325 = vunpack.c.h.b16 %v800
        %v2326 = vunpack.c.l.b16 %v801
        %v2327 = vunpack.c.h.b16 %v801
        %v2328 = vunpack.c.l.b16 %v802
        %v2329 = vunpack.c.h.b16 %v802
        %v2330 = vunpack.c.l.b16 %v803
        %v2331 = vunpack.c.h.b16 %v803
        %v2332 = vunpack.c.l.b16 %v804
        %v2333 = vunpack.c.h.b16 %v804
        %v2334 = vunpack.c.l.b16 %v805
        %v2335 = vunpack.c.h.b16 %v805
        %v2336 = vunpack.c.l.b16 %v806
        %v2337 = vunpack.c.h.b16 %v806
        %v2338 = vunpack.c.l.b16 %v807
        %v2339 = vunpack.c.h.b16 %v807
        %v2340 = vunpack.c.l.b16 %v808
        %v2341 = vunpack.c.h.b16 %v808
        %v2342 = vunpack.c.l.b16 %v809
        %v2343 = vunpack.c.h.b16 %v809
        %v2344 = vunpack.c.l.b16 %v810
        %v2345 = vunpack.c.h.b16 %v810
        %v2346 = vunpack.c.l.b16 %v811
        %v2347 = vunpack.c.h.b16 %v811
        %v2348 = vunpack.c.l.b16 %v812
        %v2349 = vunpack.c.h.b16 %v812
        %v2350 = vunpack.c.l.b16 %v813
        %v2351 = vunpack.c.h.b16 %v813
        %v2352 = vunpack.c.l.b16 %v814
        %v2353 = vunpack.c.h.b16 %v814
        %v2354 = vunpack.c.l.b16 %v815
        %v2355 = vunpack.c.h.b16 %v815
        %v2356 = vunpack.c.l.b16 %v816
        %v2357 = vunpack.c.h.b16 %v816
        %v2358 = vunpack.c.l.b16 %v817
        %v2359 = vunpack.c.h.b16 %v817
        %v2360 = vunpack.c.l.b16 %v818
        %v2361 = vunpack.c.h.b16 %v818
        %v2362 = vunpack.c.l.b16 %v819
        %v2363 = vunpack.c.h.b16 %v819
        %v2364 = vunpack.c.l.b16 %v820
        %v2365 = vunpack.c.h.b16 %v820
        %v2366 = vunpack.c.l.b16 %v821
        %v2367 = vunpack.c.h.b16 %v821
        %v2368 = vunpack.c.l.b16 %v822
        %v2369 = vunpack.c.h.b16 %v822
        %v2370 = vunpack.c.l.b16 %v823
        %v2371 = vunpack.c.h.b16 %v823
        %v2372 = vunpack.c.l.b16 %v824
        %v2373 = vunpack.c.h.b16 %v824
        %v2374 = vunpack.c.l.b16 %v825
        %v2375 = vunpack.c.h.b16 %v825
        %v2376 = vunpack.c.l.b16 %v826
        %v2377 = vunpack.c.h.b16 %v826
        %v2378 = vunpack.c.l.b16 %v827
        %v2379 = vunpack.c.h.b16 %v827
        %v2380 = vunpack.c.l.b16 %v828
        %v2381 = vunpack.c.h.b16 %v828
        %v2382 = vunpack.c.l.b16 %v829
        %v2383 = vunpack.c.h.b16 %v829
        %v2384 = vunpack.c.l.b16 %v830
        %v2385 = vunpack.c.h.b16 %v830
        %v2386 = vunpack.c.l.b16 %v831
        %v2387 = vunpack.c.h.b16 %v831
        %v2388 = vunpack.c.l.b16 %v832
        %v2389 = vunpack.c.h.b16 %v832
        %v2390 = vunpack.c.l.b16 %v833
        %v2391 = vunpack.c.h.b16 %v833
        %v2392 = vunpack.c.l.b16 %v834
        %v2393 = vunpack.c.h.b16 %v834
        %v2394 = vunpack.c.l.b16 %v835
        %v2395 = vunpack.c.h.b16 %v835
        %v2396 = vunpack.c.l.b16 %v836
        %v2397 = vunpack.c.h.b16 %v836
        %v2398 = vunpack.c.l.b16 %v837
        %v2399 = vunpack.c.h.b16 %v837
        %v2400 = vunpack.c.l.b16 %v838
        %v2401 = vunpack.c.h.b16 %v838
        %v2402 = vunpack.c.l.b16 %v839
        %v2403 = vunpack.c.h.b16 %v839
        %v2404 = vunpack.c.l.b16 %v840
        %v2405 = vunpack.c.h.b16 %v840
        %v2406 = vunpack.c.l.b16 %v841
        %v2407 = vunpack.c.h.b16 %v841
        %v2408 = vunpack.c.l.b16 %v842
        %v2409 = vunpack.c.h.b16 %v842
        %v2410 = vunpack.c.l.b16 %v843
        %v2411 = vunpack.c.h.b16 %v843
        %v2412 = vunpack.c.l.b16 %v844
        %v2413 = vunpack.c.h.b16 %v844
        %v2414 = vunpack.c.l.b16 %v845
        %v2415 = vunpack.c.h.b16 %v845
        %v2416 = vunpack.c.l.b16 %v846
        %v2417 = vunpack.c.h.b16 %v846
        %v2418 = vunpack.c.l.b16 %v847
        %v2419 = vunpack.c.h.b16 %v847
        %v2420 = vunpack.c.l.b16 %v848
        %v2421 = vunpack.c.h.b16 %v848
        %v2422 = vunpack.c.l.b16 %v849
        %v2423 = vunpack.c.h.b16 %v849
        %v2424 = vunpack.c.l.b16 %v850
        %v2425 = vunpack.c.h.b16 %v850
        %v2426 = vunpack.c.l.b16 %v851
        %v2427 = vunpack.c.h.b16 %v851
        %v2428 = vunpack.c.l.b16 %v852
        %v2429 = vunpack.c.h.b16 %v852
        %v2430 = vunpack.c.l.b16 %v853
        %v2431 = vunpack.c.h.b16 %v853
        %v2432 = vunpack.c.l.b16 %v854
        %v2433 = vunpack.c.h.b16 %v854
        %v2434 = vunpack.c.l.b16 %v855
        %v2435 = vunpack.c.h.b16 %v855
        %v2436 = vunpack.c.l.b16 %v856
        %v2437 = vunpack.c.h.b16 %v856
        %v2438 = vunpack.c.l.b16 %v857
        %v2439 = vunpack.c.h.b16 %v857
        %v2440 = vunpack.c.l.b16 %v858
        %v2441 = vunpack.c.h.b16 %v858
        %v2442 = vunpack.c.l.b16 %v859
        %v2443 = vunpack.c.h.b16 %v859
        %v2444 = vunpack.c.l.b16 %v860
        %v2445 = vunpack.c.h.b16 %v860
        %v2446 = vunpack.c.l.b16 %v861
        %v2447 = vunpack.c.h.b16 %v861
        %v2448 = vunpack.c.l.b16 %v862
        %v2449 = vunpack.c.h.b16 %v862
        %v2450 = vunpack.c.l.b16 %v863
        %v2451 = vunpack.c.h.b16 %v863
        %v2452 = vunpack.c.l.b16 %v864
        %v2453 = vunpack.c.h.b16 %v864
        %v2454 = vunpack.c.l.b16 %v865
        %v2455 = vunpack.c.h.b16 %v865
        %v2456 = vunpack.c.l.b16 %v866
        %v2457 = vunpack.c.h.b16 %v866
        %v2458 = vunpack.c.l.b16 %v867
        %v2459 = vunpack.c.h.b16 %v867
        %v2460 = vunpack.c.l.b16 %v868
        %v2461 = vunpack.c.h.b16 %v868
        %v2462 = vunpack.c.l.b16 %v869
        %v2463 = vunpack.c.h.b16 %v869
        %v2464 = vunpack.c.l.b16 %v870
        %v2465 = vunpack.c.h.b16 %v870
        %v2466 = vunpack.c.l.b16 %v871
        %v2467 = vunpack.c.h.b16 %v871
        %v2468 = vunpack.c.l.b16 %v872
        %v2469 = vunpack.c.h.b16 %v872
        %v2470 = vunpack.c.l.b16 %v873
        %v2471 = vunpack.c.h.b16 %v873
        %v2472 = vunpack.c.l.b16 %v874
        %v2473 = vunpack.c.h.b16 %v874
        %v2474 = vunpack.c.l.b16 %v875
        %v2475 = vunpack.c.h.b16 %v875
        %v2476 = vunpack.c.l.b16 %v876
        %v2477 = vunpack.c.h.b16 %v876
        %v2478 = vunpack.c.l.b16 %v877
        %v2479 = vunpack.c.h.b16 %v877
        %v2480 = vunpack.c.l.b16 %v878
        %v2481 = vunpack.c.h.b16 %v878
        %v2482 = vunpack.c.l.b16 %v879
        %v2483 = vunpack.c.h.b16 %v879
        %v2484 = vunpack.c.l.b16 %v880
        %v2485 = vunpack.c.h.b16 %v880
        %v2486 = vunpack.c.l.b16 %v881
        %v2487 = vunpack.c.h.b16 %v881
        %v2488 = vunpack.c.l.b16 %v882
        %v2489 = vunpack.c.h.b16 %v882
        %v2490 = vunpack.c.l.b16 %v883
        %v2491 = vunpack.c.h.b16 %v883
        %v2492 = vunpack.c.l.b16 %v884
        %v2493 = vunpack.c.h.b16 %v884
        %v2494 = vunpack.c.l.b16 %v885
        %v2495 = vunpack.c.h.b16 %v885
        %v2496 = vunpack.c.l.b16 %v886
        %v2497 = vunpack.c.h.b16 %v886
        %v2498 = vunpack.c.l.b16 %v887
        %v2499 = vunpack.c.h.b16 %v887
        %v2500 = vunpack.c.l.b16 %v888
        %v2501 = vunpack.c.h.b16 %v888
        %v2502 = vunpack.c.l.b16 %v889
        %v2503 = vunpack.c.h.b16 %v889
        %v2504 = vunpack.c.l.b16 %v890
        %v2505 = vunpack.c.h.b16 %v890
        %v2506 = vunpack.c.l.b16 %v891
        %v2507 = vunpack.c.h.b16 %v891
        %v2508 = vunpack.c.l.b16 %v892
        %v2509 = vunpack.c.h.b16 %v892
        %v2510 = vunpack.c.l.b16 %v893
        %v2511 = vunpack.c.h.b16 %v893
        %v2512 = vunpack.c.l.b16 %v894
        %v2513 = vunpack.c.h.b16 %v894
        %v2514 = vunpack.c.l.b16 %v895
        %v2515 = vunpack.c.h.b16 %v895
        %v2516 = vunpack.c.l.b16 %v896
        %v2517 = vunpack.c.h.b16 %v896
        %v2518 = vunpack.c.l.b16 %v897
        %v2519 = vunpack.c.h.b16 %v897
        %v2520 = vunpack.c.l.b16 %v898
        %v2521 = vunpack.c.h.b16 %v898
        %v2522 = vunpack.c.l.b16 %v899
        %v2523 = vunpack.c.h.b16 %v899
        %v2524 = vunpack.c.l.b16 %v900
        %v2525 = vunpack.c.h.b16 %v900
        %v2526 = vunpack.c.l.b16 %v901
        %v2527 = vunpack.c.h.b16 %v901
        %v2528 = vunpack.c.l.b16 %v902
        %v2529 = vunpack.c.h.b16 %v902
        %v2530 = vunpack.c.l.b16 %v903
        %v2531 = vunpack.c.h.b16 %v903
        %v2532 = vunpack.c.l.b16 %v904
        %v2533 = vunpack.c.h.b16 %v904
        %v2534 = vunpack.c.l.b16 %v905
        %v2535 = vunpack.c.h.b16 %v905
        %v2536 = vunpack.c.l.b16 %v906
        %v2537 = vunpack.c.h.b16 %v906
        %v2538 = vunpack.c.l.b16 %v907
        %v2539 = vunpack.c.h.b16 %v907
        %v2540 = vpack.c.b16 %v1776, %v1772
        %v2541 = vpack.c.b16 %v1777, %v1773
        %v2542 = vpack.c.b16 %v1778, %v1774
        %v2543 = vpack.c.b16 %v1779, %v1775
        %v2544 = vpack.c.b16 %v1784, %v1780
        %v2545 = vpack.c.b16 %v1785, %v1781
        %v2546 = vpack.c.b16 %v1786, %v1782
        %v2547 = vpack.c.b16 %v1787, %v1783
        %v2548 = vpack.c.b16 %v1792, %v1788
        %v2549 = vpack.c.b16 %v1793, %v1789
        %v2550 = vpack.c.b16 %v1794, %v1790
        %v2551 = vpack.c.b16 %v1795, %v1791
        %v2552 = vpack.c.b16 %v1800, %v1796
        %v2553 = vpack.c.b16 %v1801, %v1797
        %v2554 = vpack.c.b16 %v1802, %v1798
        %v2555 = vpack.c.b16 %v1803, %v1799
        %v2556 = vpack.c.b16 %v1808, %v1804
        %v2557 = vpack.c.b16 %v1809, %v1805
        %v2558 = vpack.c.b16 %v1810, %v1806
        %v2559 = vpack.c.b16 %v1811, %v1807
        %v2560 = vpack.c.b16 %v1816, %v1812
        %v2561 = vpack.c.b16 %v1817, %v1813
        %v2562 = vpack.c.b16 %v1818, %v1814
        %v2563 = vpack.c.b16 %v1819, %v1815
        %v2564 = vpack.c.b16 %v1824, %v1820
        %v2565 = vpack.c.b16 %v1825, %v1821
        %v2566 = vpack.c.b16 %v1826, %v1822
        %v2567 = vpack.c.b16 %v1827, %v1823
        %v2568 = vpack.c.b16 %v1832, %v1828
        %v2569 = vpack.c.b16 %v1833, %v1829
        %v2570 = vpack.c.b16 %v1834, %v1830
        %v2571 = vpack.c.b16 %v1835, %v1831
        %v2572 = vpack.c.b16 %v1840, %v1836
        %v2573 = vpack.c.b16 %v1841, %v1837
        %v2574 = vpack.c.b16 %v1842, %v1838
        %v2575 = vpack.c.b16 %v1843, %v1839
        %v2576 = vpack.c.b16 %v1848, %v1844
        %v2577 = vpack.c.b16 %v1849, %v1845
        %v2578 = vpack.c.b16 %v1850, %v1846
        %v2579 = vpack.c.b16 %v1851, %v1847
        %v2580 = vpack.c.b16 %v1856, %v1852
        %v2581 = vpack.c.b16 %v1857, %v1853
        %v2582 = vpack.c.b16 %v1858, %v1854
        %v2583 = vpack.c.b16 %v1859, %v1855
        %v2584 = vpack.c.b16 %v1864, %v1860
        %v2585 = vpack.c.b16 %v1865, %v1861
        %v2586 = vpack.c.b16 %v1866, %v1862
        %v2587 = vpack.c.b16 %v1867, %v1863
        %v2588 = vpack.c.b16 %v1872, %v1868
        %v2589 = vpack.c.b16 %v1873, %v1869
        %v2590 = vpack.c.b16 %v1874, %v1870
        %v2591 = vpack.c.b16 %v1875, %v1871
        %v2592 = vpack.c.b16 %v1880, %v1876
        %v2593 = vpack.c.b16 %v1881, %v1877
        %v2594 = vpack.c.b16 %v1882, %v1878
        %v2595 = vpack.c.b16 %v1883, %v1879
        %v2596 = vpack.c.b16 %v1888, %v1884
        %v2597 = vpack.c.b16 %v1889, %v1885
        %v2598 = vpack.c.b16 %v1890, %v1886
        %v2599 = vpack.c.b16 %v1891, %v1887
        %v2600 = vpack.c.b16 %v1896, %v1892
        %v2601 = vpack.c.b16 %v1897, %v1893
        %v2602 = vpack.c.b16 %v1898, %v1894
        %v2603 = vpack.c.b16 %v1899, %v1895
        %v2604 = vpack.c.b16 %v1904, %v1900
        %v2605 = vpack.c.b16 %v1905, %v1901
        %v2606 = vpack.c.b16 %v1906, %v1902
        %v2607 = vpack.c.b16 %v1907, %v1903
        %v2608 = vpack.c.b16 %v1912, %v1908
        %v2609 = vpack.c.b16 %v1913, %v1909
        %v2610 = vpack.c.b16 %v1914, %v1910
        %v2611 = vpack.c.b16 %v1915, %v1911
        %v2612 = vpack.c.b16 %v1920, %v1916
        %v2613 = vpack.c.b16 %v1921, %v1917
        %v2614 = vpack.c.b16 %v1922, %v1918
        %v2615 = vpack.c.b16 %v1923, %v1919
        %v2616 = vpack.c.b16 %v1928, %v1924
        %v2617 = vpack.c.b16 %v1929, %v1925
        %v2618 = vpack.c.b16 %v1930, %v1926
        %v2619 = vpack.c.b16 %v1931, %v1927
        %v2620 = vpack.c.b16 %v1936, %v1932
        %v2621 = vpack.c.b16 %v1937, %v1933
        %v2622 = vpack.c.b16 %v1938, %v1934
        %v2623 = vpack.c.b16 %v1939, %v1935
        %v2624 = vpack.c.b16 %v1944, %v1940
        %v2625 = vpack.c.b16 %v1945, %v1941
        %v2626 = vpack.c.b16 %v1946, %v1942
        %v2627 = vpack.c.b16 %v1947, %v1943
        %v2628 = vpack.c.b16 %v1952, %v1948
        %v2629 = vpack.c.b16 %v1953, %v1949
        %v2630 = vpack.c.b16 %v1954, %v1950
        %v2631 = vpack.c.b16 %v1955, %v1951
        %v2632 = vpack.c.b16 %v1960, %v1956
        %v2633 = vpack.c.b16 %v1961, %v1957
        %v2634 = vpack.c.b16 %v1962, %v1958
        %v2635 = vpack.c.b16 %v1963, %v1959
        %v2636 = vpack.c.b16 %v1968, %v1964
        %v2637 = vpack.c.b16 %v1969, %v1965
        %v2638 = vpack.c.b16 %v1970, %v1966
        %v2639 = vpack.c.b16 %v1971, %v1967
        %v2640 = vpack.c.b16 %v1976, %v1972
        %v2641 = vpack.c.b16 %v1977, %v1973
        %v2642 = vpack.c.b16 %v1978, %v1974
        %v2643 = vpack.c.b16 %v1979, %v1975
        %v2644 = vpack.c.b16 %v1984, %v1980
        %v2645 = vpack.c.b16 %v1985, %v1981
        %v2646 = vpack.c.b16 %v1986, %v1982
        %v2647 = vpack.c.b16 %v1987, %v1983
        %v2648 = vpack.c.b16 %v1992, %v1988
        %v2649 = vpack.c.b16 %v1993, %v1989
        %v2650 = vpack.c.b16 %v1994, %v1990
        %v2651 = vpack.c.b16 %v1995, %v1991
        %v2652 = vpack.c.b16 %v2000, %v1996
        %v2653 = vpack.c.b16 %v2001, %v1997
        %v2654 = vpack.c.b16 %v2002, %v1998
        %v2655 = vpack.c.b16 %v2003, %v1999
        %v2656 = vpack.c.b16 %v2008, %v2004
        %v2657 = vpack.c.b16 %v2009, %v2005
        %v2658 = vpack.c.b16 %v2010, %v2006
        %v2659 = vpack.c.b16 %v2011, %v2007
        %v2660 = vpack.c.b16 %v2016, %v2012
        %v2661 = vpack.c.b16 %v2017, %v2013
        %v2662 = vpack.c.b16 %v2018, %v2014
        %v2663 = vpack.c.b16 %v2019, %v2015
        %v2664 = vpack.c.b16 %v2024, %v2020
        %v2665 = vpack.c.b16 %v2025, %v2021
        %v2666 = vpack.c.b16 %v2026, %v2022
        %v2667 = vpack.c.b16 %v2027, %v2023
        %v2668 = vpack.c.b16 %v2032, %v2028
        %v2669 = vpack.c.b16 %v2033, %v2029
        %v2670 = vpack.c.b16 %v2034, %v2030
        %v2671 = vpack.c.b16 %v2035, %v2031
        %v2672 = vpack.c.b16 %v2040, %v2036
        %v2673 = vpack.c.b16 %v2041, %v2037
        %v2674 = vpack.c.b16 %v2042, %v2038
        %v2675 = vpack.c.b16 %v2043, %v2039
        %v2676 = vpack.c.b16 %v2048, %v2044
        %v2677 = vpack.c.b16 %v2049, %v2045
        %v2678 = vpack.c.b16 %v2050, %v2046
        %v2679 = vpack.c.b16 %v2051, %v2047
        %v2680 = vpack.c.b16 %v2056, %v2052
        %v2681 = vpack.c.b16 %v2057, %v2053
        %v2682 = vpack.c.b16 %v2058, %v2054
        %v2683 = vpack.c.b16 %v2059, %v2055
        %v2684 = vpack.c.b16 %v2064, %v2060
        %v2685 = vpack.c.b16 %v2065, %v2061
        %v2686 = vpack.c.b16 %v2066, %v2062
        %v2687 = vpack.c.b16 %v2067, %v2063
        %v2688 = vpack.c.b16 %v2072, %v2068
        %v2689 = vpack.c.b16 %v2073, %v2069
        %v2690 = vpack.c.b16 %v2074, %v2070
        %v2691 = vpack.c.b16 %v2075, %v2071
        %v2692 = vpack.c.b16 %v2080, %v2076
        %v2693 = vpack.c.b16 %v2081, %v2077
        %v2694 = vpack.c.b16 %v2082, %v2078
        %v2695 = vpack.c.b16 %v2083, %v2079
        %v2696 = vpack.c.b16 %v2088, %v2084
        %v2697 = vpack.c.b16 %v2089, %v2085
        %v2698 = vpack.c.b16 %v2090, %v2086
        %v2699 = vpack.c.b16 %v2091, %v2087
        %v2700 = vpack.c.b16 %v2096, %v2092
        %v2701 = vpack.c.b16 %v2097, %v2093
        %v2702 = vpack.c.b16 %v2098, %v2094
        %v2703 = vpack.c.b16 %v2099, %v2095
        %v2704 = vpack.c.b16 %v2104, %v2100
        %v2705 = vpack.c.b16 %v2105, %v2101
        %v2706 = vpack.c.b16 %v2106, %v2102
        %v2707 = vpack.c.b16 %v2107, %v2103
        %v2708 = vpack.c.b16 %v2112, %v2108
        %v2709 = vpack.c.b16 %v2113, %v2109
        %v2710 = vpack.c.b16 %v2114, %v2110
        %v2711 = vpack.c.b16 %v2115, %v2111
        %v2712 = vpack.c.b16 %v2120, %v2116
        %v2713 = vpack.c.b16 %v2121, %v2117
        %v2714 = vpack.c.b16 %v2122, %v2118
        %v2715 = vpack.c.b16 %v2123, %v2119
        %v2716 = vpack.c.b16 %v2128, %v2124
        %v2717 = vpack.c.b16 %v2129, %v2125
        %v2718 = vpack.c.b16 %v2130, %v2126
        %v2719 = vpack.c.b16 %v2131, %v2127
        %v2720 = vpack.c.b16 %v2136, %v2132
        %v2721 = vpack.c.b16 %v2137, %v2133
        %v2722 = vpack.c.b16 %v2138, %v2134
        %v2723 = vpack.c.b16 %v2139, %v2135
        %v2724 = vpack.c.b16 %v2144, %v2140
        %v2725 = vpack.c.b16 %v2145, %v2141
        %v2726 = vpack.c.b16 %v2146, %v2142
        %v2727 = vpack.c.b16 %v2147, %v2143
        %v2728 = vpack.c.b16 %v2152, %v2148
        %v2729 = vpack.c.b16 %v2153, %v2149
        %v2730 = vpack.c.b16 %v2154, %v2150
        %v2731 = vpack.c.b16 %v2155, %v2151
        %v2732 = vpack.c.b16 %v2160, %v2156
        %v2733 = vpack.c.b16 %v2161, %v2157
        %v2734 = vpack.c.b16 %v2162, %v2158
        %v2735 = vpack.c.b16 %v2163, %v2159
        %v2736 = vpack.c.b16 %v2168, %v2164
        %v2737 = vpack.c.b16 %v2169, %v2165
        %v2738 = vpack.c.b16 %v2170, %v2166
        %v2739 = vpack.c.b16 %v2171, %v2167
        %v2740 = vpack.c.b16 %v2176, %v2172
        %v2741 = vpack.c.b16 %v2177, %v2173
        %v2742 = vpack.c.b16 %v2178, %v2174
        %v2743 = vpack.c.b16 %v2179, %v2175
        %v2744 = vpack.c.b16 %v2184, %v2180
        %v2745 = vpack.c.b16 %v2185, %v2181
        %v2746 = vpack.c.b16 %v2186, %v2182
        %v2747 = vpack.c.b16 %v2187, %v2183
        %v2748 = vpack.c.b16 %v2192, %v2188
        %v2749 = vpack.c.b16 %v2193, %v2189
        %v2750 = vpack.c.b16 %v2194, %v2190
        %v2751 = vpack.c.b16 %v2195, %v2191
        %v2752 = vpack.c.b16 %v2200, %v2196
        %v2753 = vpack.c.b16 %v2201, %v2197
        %v2754 = vpack.c.b16 %v2202, %v2198
        %v2755 = vpack.c.b16 %v2203, %v2199
        %v2756 = vpack.c.b16 %v2208, %v2204
        %v2757 = vpack.c.b16 %v2209, %v2205
        %v2758 = vpack.c.b16 %v2210, %v2206
        %v2759 = vpack.c.b16 %v2211, %v2207
        %v2760 = vpack.c.b16 %v2216, %v2212
        %v2761 = vpack.c.b16 %v2217, %v2213
        %v2762 = vpack.c.b16 %v2218, %v2214
        %v2763 = vpack.c.b16 %v2219, %v2215
        %v2764 = vpack.c.b16 %v2224, %v2220
        %v2765 = vpack.c.b16 %v2225, %v2221
        %v2766 = vpack.c.b16 %v2226, %v2222
        %v2767 = vpack.c.b16 %v2227, %v2223
        %v2768 = vpack.c.b16 %v2232, %v2228
        %v2769 = vpack.c.b16 %v2233, %v2229
        %v2770 = vpack.c.b16 %v2234, %v2230
        %v2771 = vpack.c.b16 %v2235, %v2231
        %v2772 = vpack.c.b16 %v2240, %v2236
        %v2773 = vpack.c.b16 %v2241, %v2237
        %v2774 = vpack.c.b16 %v2242, %v2238
        %v2775 = vpack.c.b16 %v2243, %v2239
        %v2776 = vpack.c.b16 %v2248, %v2244
        %v2777 = vpack.c.b16 %v2249, %v2245
        %v2778 = vpack.c.b16 %v2250, %v2246
        %v2779 = vpack.c.b16 %v2251, %v2247
        %v2780 = vpack.c.b16 %v2256, %v2252
        %v2781 = vpack.c.b16 %v2257, %v2253
        %v2782 = vpack.c.b16 %v2258, %v2254
        %v2783 = vpack.c.b16 %v2259, %v2255
        %v2784 = vpack.c.b16 %v2264, %v2260
        %v2785 = vpack.c.b16 %v2265, %v2261
        %v2786 = vpack.c.b16 %v2266, %v2262
        %v2787 = vpack.c.b16 %v2267, %v2263
        %v2788 = vpack.c.b16 %v2272, %v2268
        %v2789 = vpack.c.b16 %v2273, %v2269
        %v2790 = vpack.c.b16 %v2274, %v2270
        %v2791 = vpack.c.b16 %v2275, %v2271
        %v2792 = vpack.c.b16 %v2280, %v2276
        %v2793 = vpack.c.b16 %v2281, %v2277
        %v2794 = vpack.c.b16 %v2282, %v2278
        %v2795 = vpack.c.b16 %v2283, %v2279
        %v2796 = vpack.c.b16 %v2288, %v2284
        %v2797 = vpack.c.b16 %v2289, %v2285
        %v2798 = vpack.c.b16 %v2290, %v2286
        %v2799 = vpack.c.b16 %v2291, %v2287
        %v2800 = vpack.c.b16 %v2296, %v2292
        %v2801 = vpack.c.b16 %v2297, %v2293
        %v2802 = vpack.c.b16 %v2298, %v2294
        %v2803 = vpack.c.b16 %v2299, %v2295
        %v2804 = vpack.c.b16 %v2304, %v2300
        %v2805 = vpack.c.b16 %v2305, %v2301
        %v2806 = vpack.c.b16 %v2306, %v2302
        %v2807 = vpack.c.b16 %v2307, %v2303
        %v2808 = vpack.c.b16 %v2312, %v2308
        %v2809 = vpack.c.b16 %v2313, %v2309
        %v2810 = vpack.c.b16 %v2314, %v2310
        %v2811 = vpack.c.b16 %v2315, %v2311
        %v2812 = vpack.c.b16 %v2320, %v2316
        %v2813 = vpack.c.b16 %v2321, %v2317
        %v2814 = vpack.c.b16 %v2322, %v2318
        %v2815 = vpack.c.b16 %v2323, %v2319
        %v2816 = vpack.c.b16 %v2328, %v2324
        %v2817 = vpack.c.b16 %v2329, %v2325
        %v2818 = vpack.c.b16 %v2330, %v2326
        %v2819 = vpack.c.b16 %v2331, %v2327
        %v2820 = vpack.c.b16 %v2336, %v2332
        %v2821 = vpack.c.b16 %v2337, %v2333
        %v2822 = vpack.c.b16 %v2338, %v2334
        %v2823 = vpack.c.b16 %v2339, %v2335
        %v2824 = vpack.c.b16 %v2344, %v2340
        %v2825 = vpack.c.b16 %v2345, %v2341
        %v2826 = vpack.c.b16 %v2346, %v2342
        %v2827 = vpack.c.b16 %v2347, %v2343
        %v2828 = vpack.c.b16 %v2352, %v2348
        %v2829 = vpack.c.b16 %v2353, %v2349
        %v2830 = vpack.c.b16 %v2354, %v2350
        %v2831 = vpack.c.b16 %v2355, %v2351
        %v2832 = vpack.c.b16 %v2360, %v2356
        %v2833 = vpack.c.b16 %v2361, %v2357
        %v2834 = vpack.c.b16 %v2362, %v2358
        %v2835 = vpack.c.b16 %v2363, %v2359
        %v2836 = vpack.c.b16 %v2368, %v2364
        %v2837 = vpack.c.b16 %v2369, %v2365
        %v2838 = vpack.c.b16 %v2370, %v2366
        %v2839 = vpack.c.b16 %v2371, %v2367
        %v2840 = vpack.c.b16 %v2376, %v2372
        %v2841 = vpack.c.b16 %v2377, %v2373
        %v2842 = vpack.c.b16 %v2378, %v2374
        %v2843 = vpack.c.b16 %v2379, %v2375
        %v2844 = vpack.c.b16 %v2384, %v2380
        %v2845 = vpack.c.b16 %v2385, %v2381
        %v2846 = vpack.c.b16 %v2386, %v2382
        %v2847 = vpack.c.b16 %v2387, %v2383
        %v2848 = vpack.c.b16 %v2392, %v2388
        %v2849 = vpack.c.b16 %v2393, %v2389
        %v2850 = vpack.c.b16 %v2394, %v2390
        %v2851 = vpack.c.b16 %v2395, %v2391
        %v2852 = vpack.c.b16 %v2400, %v2396
        %v2853 = vpack.c.b16 %v2401, %v2397
        %v2854 = vpack.c.b16 %v2402, %v2398
        %v2855 = vpack.c.b16 %v2403, %v2399
        %v2856 = vpack.c.b16 %v2408, %v2404
        %v2857 = vpack.c.b16 %v2409, %v2405
        %v2858 = vpack.c.b16 %v2410, %v2406
        %v2859 = vpack.c.b16 %v2411, %v2407
        %v2860 = vpack.c.b16 %v2416, %v2412
        %v2861 = vpack.c.b16 %v2417, %v2413
        %v2862 = vpack.c.b16 %v2418, %v2414
        %v2863 = vpack.c.b16 %v2419, %v2415
        %v2864 = vpack.c.b16 %v2424, %v2420
        %v2865 = vpack.c.b16 %v2425, %v2421
        %v2866 = vpack.c.b16 %v2426, %v2422
        %v2867 = vpack.c.b16 %v2427, %v2423
        %v2868 = vpack.c.b16 %v2432, %v2428
        %v2869 = vpack.c.b16 %v2433, %v2429
        %v2870 = vpack.c.b16 %v2434, %v2430
        %v2871 = vpack.c.b16 %v2435, %v2431
        %v2872 = vpack.c.b16 %v2440, %v2436
        %v2873 = vpack.c.b16 %v2441, %v2437
        %v2874 = vpack.c.b16 %v2442, %v2438
        %v2875 = vpack.c.b16 %v2443, %v2439
        %v2876 = vpack.c.b16 %v2448, %v2444
        %v2877 = vpack.c.b16 %v2449, %v2445
        %v2878 = vpack.c.b16 %v2450, %v2446
        %v2879 = vpack.c.b16 %v2451, %v2447
        %v2880 = vpack.c.b16 %v2456, %v2452
        %v2881 = vpack.c.b16 %v2457, %v2453
        %v2882 = vpack.c.b16 %v2458, %v2454
        %v2883 = vpack.c.b16 %v2459, %v2455
        %v2884 = vpack.c.b16 %v2464, %v2460
        %v2885 = vpack.c.b16 %v2465, %v2461
        %v2886 = vpack.c.b16 %v2466, %v2462
        %v2887 = vpack.c.b16 %v2467, %v2463
        %v2888 = vpack.c.b16 %v2472, %v2468
        %v2889 = vpack.c.b16 %v2473, %v2469
        %v2890 = vpack.c.b16 %v2474, %v2470
        %v2891 = vpack.c.b16 %v2475, %v2471
        %v2892 = vpack.c.b16 %v2480, %v2476
        %v2893 = vpack.c.b16 %v2481, %v2477
        %v2894 = vpack.c.b16 %v2482, %v2478
        %v2895 = vpack.c.b16 %v2483, %v2479
        %v2896 = vpack.c.b16 %v2488, %v2484
        %v2897 = vpack.c.b16 %v2489, %v2485
        %v2898 = vpack.c.b16 %v2490, %v2486
        %v2899 = vpack.c.b16 %v2491, %v2487
        %v2900 = vpack.c.b16 %v2496, %v2492
        %v2901 = vpack.c.b16 %v2497, %v2493
        %v2902 = vpack.c.b16 %v2498, %v2494
        %v2903 = vpack.c.b16 %v2499, %v2495
        %v2904 = vpack.c.b16 %v2504, %v2500
        %v2905 = vpack.c.b16 %v2505, %v2501
        %v2906 = vpack.c.b16 %v2506, %v2502
        %v2907 = vpack.c.b16 %v2507, %v2503
        %v2908 = vpack.c.b16 %v2512, %v2508
        %v2909 = vpack.c.b16 %v2513, %v2509
        %v2910 = vpack.c.b16 %v2514, %v2510
        %v2911 = vpack.c.b16 %v2515, %v2511
        %v2912 = vpack.c.b16 %v2520, %v2516
        %v2913 = vpack.c.b16 %v2521, %v2517
        %v2914 = vpack.c.b16 %v2522, %v2518
        %v2915 = vpack.c.b16 %v2523, %v2519
        %v2916 = vpack.c.b16 %v2528, %v2524
        %v2917 = vpack.c.b16 %v2529, %v2525
        %v2918 = vpack.c.b16 %v2530, %v2526
        %v2919 = vpack.c.b16 %v2531, %v2527
        %v2920 = vpack.c.b16 %v2536, %v2532
        %v2921 = vpack.c.b16 %v2537, %v2533
        %v2922 = vpack.c.b16 %v2538, %v2534
        %v2923 = vpack.c.b16 %v2539, %v2535
        %3308 = vmatpush.bf16.msra.mxu0 %v2568
        %3309 = vmatpush.bf16.msra.mxu0 %v2564
        %3310 = vmatpush.bf16.msra.mxu0 %v2560
        %3311 = vmatpush.bf16.msra.mxu0 %v2556
        %3312 = vmatpush.bf16.msra.mxu0 %v2552
        %3313 = vmatpush.bf16.msra.mxu0 %v2548
        %3314 = vmatpush.bf16.msra.mxu0 %v2544
        %3315 = vmatpush.bf16.msra.mxu0 %v2540
        %3316 = vmatmul.bf16.gmra.mxu0 %v1196
        %v3317 = vpop.f32.mrf.mxu0
        %v3318 = vadd.f32 0.0, %v3317
        %v3319 = vpop.f32.mrf.mxu0
        %v3320 = vadd.f32 0.0, %v3319
        %3321 = vmatmul.bf16.gmra.mxu0 %v1208
        %v3322 = vpop.f32.mrf.mxu0
        %v3323 = vadd.f32 0.0, %v3322
        %v3324 = vpop.f32.mrf.mxu0
        %v3325 = vadd.f32 0.0, %v3324
        %3326 = vmatmul.bf16.gmra.mxu0 %v1220
        %v3327 = vpop.f32.mrf.mxu0
        %v3328 = vadd.f32 0.0, %v3327
        %v3329 = vpop.f32.mrf.mxu0
        %v3330 = vadd.f32 0.0, %v3329
        %3331 = vmatmul.bf16.gmra.mxu0 %v1232
        %v3332 = vpop.f32.mrf.mxu0
        %v3333 = vadd.f32 0.0, %v3332
        %v3334 = vpop.f32.mrf.mxu0
        %v3335 = vadd.f32 0.0, %v3334
        %3336 = vmatmul.bf16.gmra.mxu0 %v1244
        %v3337 = vpop.f32.mrf.mxu0
        %v3338 = vadd.f32 0.0, %v3337
        %v3339 = vpop.f32.mrf.mxu0
        %v3340 = vadd.f32 0.0, %v3339
        %3341 = vmatmul.bf16.gmra.mxu0 %v1256
        %v3342 = vpop.f32.mrf.mxu0
        %v3343 = vadd.f32 0.0, %v3342
        %v3344 = vpop.f32.mrf.mxu0
        %v3345 = vadd.f32 0.0, %v3344
        %3346 = vmatmul.bf16.gmra.mxu0 %v1268
        %v3347 = vpop.f32.mrf.mxu0
        %v3348 = vadd.f32 0.0, %v3347
        %v3349 = vpop.f32.mrf.mxu0
        %v3350 = vadd.f32 0.0, %v3349
        %3351 = vmatmul.bf16.gmra.mxu0 %v1280
        %v3352 = vpop.f32.mrf.mxu0
        %v3353 = vadd.f32 0.0, %v3352
        %v3354 = vpop.f32.mrf.mxu0
        %v3355 = vadd.f32 0.0, %v3354
        %3356 = vdwg.mxu0
        %3357 = vmatpush.bf16.msra.mxu0 %v2600
        %3358 = vmatpush.bf16.msra.mxu0 %v2596
        %3359 = vmatpush.bf16.msra.mxu0 %v2592
        %3360 = vmatpush.bf16.msra.mxu0 %v2588
        %3361 = vmatpush.bf16.msra.mxu0 %v2584
        %3362 = vmatpush.bf16.msra.mxu0 %v2580
        %3363 = vmatpush.bf16.msra.mxu0 %v2576
        %3364 = vmatpush.bf16.msra.mxu0 %v2572
        %3365 = vmatmul.bf16.gmra.mxu0 %v1197
        %v3366 = vpop.f32.mrf.mxu0
        %v3367 = vadd.f32 %v3318, %v3366
        %v3368 = vpop.f32.mrf.mxu0
        %v3369 = vadd.f32 %v3320, %v3368
        %3370 = vmatmul.bf16.gmra.mxu0 %v1209
        %v3371 = vpop.f32.mrf.mxu0
        %v3372 = vadd.f32 %v3323, %v3371
        %v3373 = vpop.f32.mrf.mxu0
        %v3374 = vadd.f32 %v3325, %v3373
        %3375 = vmatmul.bf16.gmra.mxu0 %v1221
        %v3376 = vpop.f32.mrf.mxu0
        %v3377 = vadd.f32 %v3328, %v3376
        %v3378 = vpop.f32.mrf.mxu0
        %v3379 = vadd.f32 %v3330, %v3378
        %3380 = vmatmul.bf16.gmra.mxu0 %v1233
        %v3381 = vpop.f32.mrf.mxu0
        %v3382 = vadd.f32 %v3333, %v3381
        %v3383 = vpop.f32.mrf.mxu0
        %v3384 = vadd.f32 %v3335, %v3383
        %3385 = vmatmul.bf16.gmra.mxu0 %v1245
        %v3386 = vpop.f32.mrf.mxu0
        %v3387 = vadd.f32 %v3338, %v3386
        %v3388 = vpop.f32.mrf.mxu0
        %v3389 = vadd.f32 %v3340, %v3388
        %3390 = vmatmul.bf16.gmra.mxu0 %v1257
        %v3391 = vpop.f32.mrf.mxu0
        %v3392 = vadd.f32 %v3343, %v3391
        %v3393 = vpop.f32.mrf.mxu0
        %v3394 = vadd.f32 %v3345, %v3393
        %3395 = vmatmul.bf16.gmra.mxu0 %v1269
        %v3396 = vpop.f32.mrf.mxu0
        %v3397 = vadd.f32 %v3348, %v3396
        %v3398 = vpop.f32.mrf.mxu0
        %v3399 = vadd.f32 %v3350, %v3398
        %3400 = vmatmul.bf16.gmra.mxu0 %v1281
        %v3401 = vpop.f32.mrf.mxu0
        %v3402 = vadd.f32 %v3353, %v3401
        %v3403 = vpop.f32.mrf.mxu0
        %v3404 = vadd.f32 %v3355, %v3403
        %3405 = vdwg.mxu0
        %3406 = vmatpush.bf16.msra.mxu0 %v2632
        %3407 = vmatpush.bf16.msra.mxu0 %v2628
        %3408 = vmatpush.bf16.msra.mxu0 %v2624
        %3409 = vmatpush.bf16.msra.mxu0 %v2620
        %3410 = vmatpush.bf16.msra.mxu0 %v2616
        %3411 = vmatpush.bf16.msra.mxu0 %v2612
        %3412 = vmatpush.bf16.msra.mxu0 %v2608
        %3413 = vmatpush.bf16.msra.mxu0 %v2604
        %3414 = vmatmul.bf16.gmra.mxu0 %v1198
        %v3415 = vpop.f32.mrf.mxu0
        %v3416 = vadd.f32 %v3367, %v3415
        %v3417 = vpop.f32.mrf.mxu0
        %v3418 = vadd.f32 %v3369, %v3417
        %3419 = vmatmul.bf16.gmra.mxu0 %v1210
        %v3420 = vpop.f32.mrf.mxu0
        %v3421 = vadd.f32 %v3372, %v3420
        %v3422 = vpop.f32.mrf.mxu0
        %v3423 = vadd.f32 %v3374, %v3422
        %3424 = vmatmul.bf16.gmra.mxu0 %v1222
        %v3425 = vpop.f32.mrf.mxu0
        %v3426 = vadd.f32 %v3377, %v3425
        %v3427 = vpop.f32.mrf.mxu0
        %v3428 = vadd.f32 %v3379, %v3427
        %3429 = vmatmul.bf16.gmra.mxu0 %v1234
        %v3430 = vpop.f32.mrf.mxu0
        %v3431 = vadd.f32 %v3382, %v3430
        %v3432 = vpop.f32.mrf.mxu0
        %v3433 = vadd.f32 %v3384, %v3432
        %3434 = vmatmul.bf16.gmra.mxu0 %v1246
        %v3435 = vpop.f32.mrf.mxu0
        %v3436 = vadd.f32 %v3387, %v3435
        %v3437 = vpop.f32.mrf.mxu0
        %v3438 = vadd.f32 %v3389, %v3437
        %3439 = vmatmul.bf16.gmra.mxu0 %v1258
        %v3440 = vpop.f32.mrf.mxu0
        %v3441 = vadd.f32 %v3392, %v3440
        %v3442 = vpop.f32.mrf.mxu0
        %v3443 = vadd.f32 %v3394, %v3442
        %3444 = vmatmul.bf16.gmra.mxu0 %v1270
        %v3445 = vpop.f32.mrf.mxu0
        %v3446 = vadd.f32 %v3397, %v3445
        %v3447 = vpop.f32.mrf.mxu0
        %v3448 = vadd.f32 %v3399, %v3447
        %3449 = vmatmul.bf16.gmra.mxu0 %v1282
        %v3450 = vpop.f32.mrf.mxu0
        %v3451 = vadd.f32 %v3402, %v3450
        %v3452 = vpop.f32.mrf.mxu0
        %v3453 = vadd.f32 %v3404, %v3452
        %3454 = vdwg.mxu0
        %3455 = vmatpush.bf16.msra.mxu0 %v2664
        %3456 = vmatpush.bf16.msra.mxu0 %v2660
        %3457 = vmatpush.bf16.msra.mxu0 %v2656
        %3458 = vmatpush.bf16.msra.mxu0 %v2652
        %3459 = vmatpush.bf16.msra.mxu0 %v2648
        %3460 = vmatpush.bf16.msra.mxu0 %v2644
        %3461 = vmatpush.bf16.msra.mxu0 %v2640
        %3462 = vmatpush.bf16.msra.mxu0 %v2636
        %3463 = vmatmul.bf16.gmra.mxu0 %v1199
        %v3464 = vpop.f32.mrf.mxu0
        %v3465 = vadd.f32 %v3416, %v3464
        %v3466 = vpop.f32.mrf.mxu0
        %v3467 = vadd.f32 %v3418, %v3466
        %3468 = vmatmul.bf16.gmra.mxu0 %v1211
        %v3469 = vpop.f32.mrf.mxu0
        %v3470 = vadd.f32 %v3421, %v3469
        %v3471 = vpop.f32.mrf.mxu0
        %v3472 = vadd.f32 %v3423, %v3471
        %3473 = vmatmul.bf16.gmra.mxu0 %v1223
        %v3474 = vpop.f32.mrf.mxu0
        %v3475 = vadd.f32 %v3426, %v3474
        %v3476 = vpop.f32.mrf.mxu0
        %v3477 = vadd.f32 %v3428, %v3476
        %3478 = vmatmul.bf16.gmra.mxu0 %v1235
        %v3479 = vpop.f32.mrf.mxu0
        %v3480 = vadd.f32 %v3431, %v3479
        %v3481 = vpop.f32.mrf.mxu0
        %v3482 = vadd.f32 %v3433, %v3481
        %3483 = vmatmul.bf16.gmra.mxu0 %v1247
        %v3484 = vpop.f32.mrf.mxu0
        %v3485 = vadd.f32 %v3436, %v3484
        %v3486 = vpop.f32.mrf.mxu0
        %v3487 = vadd.f32 %v3438, %v3486
        %3488 = vmatmul.bf16.gmra.mxu0 %v1259
        %v3489 = vpop.f32.mrf.mxu0
        %v3490 = vadd.f32 %v3441, %v3489
        %v3491 = vpop.f32.mrf.mxu0
        %v3492 = vadd.f32 %v3443, %v3491
        %3493 = vmatmul.bf16.gmra.mxu0 %v1271
        %v3494 = vpop.f32.mrf.mxu0
        %v3495 = vadd.f32 %v3446, %v3494
        %v3496 = vpop.f32.mrf.mxu0
        %v3497 = vadd.f32 %v3448, %v3496
        %3498 = vmatmul.bf16.gmra.mxu0 %v1283
        %v3499 = vpop.f32.mrf.mxu0
        %v3500 = vadd.f32 %v3451, %v3499
        %v3501 = vpop.f32.mrf.mxu0
        %v3502 = vadd.f32 %v3453, %v3501
        %3503 = vdwg.mxu0
        %3504 = vmatpush.bf16.msra.mxu0 %v2696
        %3505 = vmatpush.bf16.msra.mxu0 %v2692
        %3506 = vmatpush.bf16.msra.mxu0 %v2688
        %3507 = vmatpush.bf16.msra.mxu0 %v2684
        %3508 = vmatpush.bf16.msra.mxu0 %v2680
        %3509 = vmatpush.bf16.msra.mxu0 %v2676
        %3510 = vmatpush.bf16.msra.mxu0 %v2672
        %3511 = vmatpush.bf16.msra.mxu0 %v2668
        %3512 = vmatmul.bf16.gmra.mxu0 %v1200
        %v3513 = vpop.f32.mrf.mxu0
        %v3514 = vadd.f32 %v3465, %v3513
        %v3515 = vpop.f32.mrf.mxu0
        %v3516 = vadd.f32 %v3467, %v3515
        %3517 = vmatmul.bf16.gmra.mxu0 %v1212
        %v3518 = vpop.f32.mrf.mxu0
        %v3519 = vadd.f32 %v3470, %v3518
        %v3520 = vpop.f32.mrf.mxu0
        %v3521 = vadd.f32 %v3472, %v3520
        %3522 = vmatmul.bf16.gmra.mxu0 %v1224
        %v3523 = vpop.f32.mrf.mxu0
        %v3524 = vadd.f32 %v3475, %v3523
        %v3525 = vpop.f32.mrf.mxu0
        %v3526 = vadd.f32 %v3477, %v3525
        %3527 = vmatmul.bf16.gmra.mxu0 %v1236
        %v3528 = vpop.f32.mrf.mxu0
        %v3529 = vadd.f32 %v3480, %v3528
        %v3530 = vpop.f32.mrf.mxu0
        %v3531 = vadd.f32 %v3482, %v3530
        %3532 = vmatmul.bf16.gmra.mxu0 %v1248
        %v3533 = vpop.f32.mrf.mxu0
        %v3534 = vadd.f32 %v3485, %v3533
        %v3535 = vpop.f32.mrf.mxu0
        %v3536 = vadd.f32 %v3487, %v3535
        %3537 = vmatmul.bf16.gmra.mxu0 %v1260
        %v3538 = vpop.f32.mrf.mxu0
        %v3539 = vadd.f32 %v3490, %v3538
        %v3540 = vpop.f32.mrf.mxu0
        %v3541 = vadd.f32 %v3492, %v3540
        %3542 = vmatmul.bf16.gmra.mxu0 %v1272
        %v3543 = vpop.f32.mrf.mxu0
        %v3544 = vadd.f32 %v3495, %v3543
        %v3545 = vpop.f32.mrf.mxu0
        %v3546 = vadd.f32 %v3497, %v3545
        %3547 = vmatmul.bf16.gmra.mxu0 %v1284
        %v3548 = vpop.f32.mrf.mxu0
        %v3549 = vadd.f32 %v3500, %v3548
        %v3550 = vpop.f32.mrf.mxu0
        %v3551 = vadd.f32 %v3502, %v3550
        %3552 = vdwg.mxu0
        %3553 = vmatpush.bf16.msra.mxu0 %v2728
        %3554 = vmatpush.bf16.msra.mxu0 %v2724
        %3555 = vmatpush.bf16.msra.mxu0 %v2720
        %3556 = vmatpush.bf16.msra.mxu0 %v2716
        %3557 = vmatpush.bf16.msra.mxu0 %v2712
        %3558 = vmatpush.bf16.msra.mxu0 %v2708
        %3559 = vmatpush.bf16.msra.mxu0 %v2704
        %3560 = vmatpush.bf16.msra.mxu0 %v2700
        %3561 = vmatmul.bf16.gmra.mxu0 %v1201
        %v3562 = vpop.f32.mrf.mxu0
        %v3563 = vadd.f32 %v3514, %v3562
        %v3564 = vpop.f32.mrf.mxu0
        %v3565 = vadd.f32 %v3516, %v3564
        %3566 = vmatmul.bf16.gmra.mxu0 %v1213
        %v3567 = vpop.f32.mrf.mxu0
        %v3568 = vadd.f32 %v3519, %v3567
        %v3569 = vpop.f32.mrf.mxu0
        %v3570 = vadd.f32 %v3521, %v3569
        %3571 = vmatmul.bf16.gmra.mxu0 %v1225
        %v3572 = vpop.f32.mrf.mxu0
        %v3573 = vadd.f32 %v3524, %v3572
        %v3574 = vpop.f32.mrf.mxu0
        %v3575 = vadd.f32 %v3526, %v3574
        %3576 = vmatmul.bf16.gmra.mxu0 %v1237
        %v3577 = vpop.f32.mrf.mxu0
        %v3578 = vadd.f32 %v3529, %v3577
        %v3579 = vpop.f32.mrf.mxu0
        %v3580 = vadd.f32 %v3531, %v3579
        %3581 = vmatmul.bf16.gmra.mxu0 %v1249
        %v3582 = vpop.f32.mrf.mxu0
        %v3583 = vadd.f32 %v3534, %v3582
        %v3584 = vpop.f32.mrf.mxu0
        %v3585 = vadd.f32 %v3536, %v3584
        %3586 = vmatmul.bf16.gmra.mxu0 %v1261
        %v3587 = vpop.f32.mrf.mxu0
        %v3588 = vadd.f32 %v3539, %v3587
        %v3589 = vpop.f32.mrf.mxu0
        %v3590 = vadd.f32 %v3541, %v3589
        %3591 = vmatmul.bf16.gmra.mxu0 %v1273
        %v3592 = vpop.f32.mrf.mxu0
        %v3593 = vadd.f32 %v3544, %v3592
        %v3594 = vpop.f32.mrf.mxu0
        %v3595 = vadd.f32 %v3546, %v3594
        %3596 = vmatmul.bf16.gmra.mxu0 %v1285
        %v3597 = vpop.f32.mrf.mxu0
        %v3598 = vadd.f32 %v3549, %v3597
        %v3599 = vpop.f32.mrf.mxu0
        %v3600 = vadd.f32 %v3551, %v3599
        %3601 = vdwg.mxu0
        %3602 = vmatpush.bf16.msra.mxu0 %v2760
        %3603 = vmatpush.bf16.msra.mxu0 %v2756
        %3604 = vmatpush.bf16.msra.mxu0 %v2752
        %3605 = vmatpush.bf16.msra.mxu0 %v2748
        %3606 = vmatpush.bf16.msra.mxu0 %v2744
        %3607 = vmatpush.bf16.msra.mxu0 %v2740
        %3608 = vmatpush.bf16.msra.mxu0 %v2736
        %3609 = vmatpush.bf16.msra.mxu0 %v2732
        %3610 = vmatmul.bf16.gmra.mxu0 %v1202
        %v3611 = vpop.f32.mrf.mxu0
        %v3612 = vadd.f32 %v3563, %v3611
        %v3613 = vpop.f32.mrf.mxu0
        %v3614 = vadd.f32 %v3565, %v3613
        %3615 = vmatmul.bf16.gmra.mxu0 %v1214
        %v3616 = vpop.f32.mrf.mxu0
        %v3617 = vadd.f32 %v3568, %v3616
        %v3618 = vpop.f32.mrf.mxu0
        %v3619 = vadd.f32 %v3570, %v3618
        %3620 = vmatmul.bf16.gmra.mxu0 %v1226
        %v3621 = vpop.f32.mrf.mxu0
        %v3622 = vadd.f32 %v3573, %v3621
        %v3623 = vpop.f32.mrf.mxu0
        %v3624 = vadd.f32 %v3575, %v3623
        %3625 = vmatmul.bf16.gmra.mxu0 %v1238
        %v3626 = vpop.f32.mrf.mxu0
        %v3627 = vadd.f32 %v3578, %v3626
        %v3628 = vpop.f32.mrf.mxu0
        %v3629 = vadd.f32 %v3580, %v3628
        %3630 = vmatmul.bf16.gmra.mxu0 %v1250
        %v3631 = vpop.f32.mrf.mxu0
        %v3632 = vadd.f32 %v3583, %v3631
        %v3633 = vpop.f32.mrf.mxu0
        %v3634 = vadd.f32 %v3585, %v3633
        %3635 = vmatmul.bf16.gmra.mxu0 %v1262
        %v3636 = vpop.f32.mrf.mxu0
        %v3637 = vadd.f32 %v3588, %v3636
        %v3638 = vpop.f32.mrf.mxu0
        %v3639 = vadd.f32 %v3590, %v3638
        %3640 = vmatmul.bf16.gmra.mxu0 %v1274
        %v3641 = vpop.f32.mrf.mxu0
        %v3642 = vadd.f32 %v3593, %v3641
        %v3643 = vpop.f32.mrf.mxu0
        %v3644 = vadd.f32 %v3595, %v3643
        %3645 = vmatmul.bf16.gmra.mxu0 %v1286
        %v3646 = vpop.f32.mrf.mxu0
        %v3647 = vadd.f32 %v3598, %v3646
        %v3648 = vpop.f32.mrf.mxu0
        %v3649 = vadd.f32 %v3600, %v3648
        %3650 = vdwg.mxu0
        %3651 = vmatpush.bf16.msra.mxu0 %v2792
        %3652 = vmatpush.bf16.msra.mxu0 %v2788
        %3653 = vmatpush.bf16.msra.mxu0 %v2784
        %3654 = vmatpush.bf16.msra.mxu0 %v2780
        %3655 = vmatpush.bf16.msra.mxu0 %v2776
        %3656 = vmatpush.bf16.msra.mxu0 %v2772
        %3657 = vmatpush.bf16.msra.mxu0 %v2768
        %3658 = vmatpush.bf16.msra.mxu0 %v2764
        %3659 = vmatmul.bf16.gmra.mxu0 %v1203
        %v3660 = vpop.f32.mrf.mxu0
        %v3661 = vadd.f32 %v3612, %v3660
        %v3662 = vpop.f32.mrf.mxu0
        %v3663 = vadd.f32 %v3614, %v3662
        %3664 = vmatmul.bf16.gmra.mxu0 %v1215
        %v3665 = vpop.f32.mrf.mxu0
        %v3666 = vadd.f32 %v3617, %v3665
        %v3667 = vpop.f32.mrf.mxu0
        %v3668 = vadd.f32 %v3619, %v3667
        %3669 = vmatmul.bf16.gmra.mxu0 %v1227
        %v3670 = vpop.f32.mrf.mxu0
        %v3671 = vadd.f32 %v3622, %v3670
        %v3672 = vpop.f32.mrf.mxu0
        %v3673 = vadd.f32 %v3624, %v3672
        %3674 = vmatmul.bf16.gmra.mxu0 %v1239
        %v3675 = vpop.f32.mrf.mxu0
        %v3676 = vadd.f32 %v3627, %v3675
        %v3677 = vpop.f32.mrf.mxu0
        %v3678 = vadd.f32 %v3629, %v3677
        %3679 = vmatmul.bf16.gmra.mxu0 %v1251
        %v3680 = vpop.f32.mrf.mxu0
        %v3681 = vadd.f32 %v3632, %v3680
        %v3682 = vpop.f32.mrf.mxu0
        %v3683 = vadd.f32 %v3634, %v3682
        %3684 = vmatmul.bf16.gmra.mxu0 %v1263
        %v3685 = vpop.f32.mrf.mxu0
        %v3686 = vadd.f32 %v3637, %v3685
        %v3687 = vpop.f32.mrf.mxu0
        %v3688 = vadd.f32 %v3639, %v3687
        %3689 = vmatmul.bf16.gmra.mxu0 %v1275
        %v3690 = vpop.f32.mrf.mxu0
        %v3691 = vadd.f32 %v3642, %v3690
        %v3692 = vpop.f32.mrf.mxu0
        %v3693 = vadd.f32 %v3644, %v3692
        %3694 = vmatmul.bf16.gmra.mxu0 %v1287
        %v3695 = vpop.f32.mrf.mxu0
        %v3696 = vadd.f32 %v3647, %v3695
        %v3697 = vpop.f32.mrf.mxu0
        %v3698 = vadd.f32 %v3649, %v3697
        %3699 = vdwg.mxu0
        %3700 = vmatpush.bf16.msra.mxu0 %v2824
        %3701 = vmatpush.bf16.msra.mxu0 %v2820
        %3702 = vmatpush.bf16.msra.mxu0 %v2816
        %3703 = vmatpush.bf16.msra.mxu0 %v2812
        %3704 = vmatpush.bf16.msra.mxu0 %v2808
        %3705 = vmatpush.bf16.msra.mxu0 %v2804
        %3706 = vmatpush.bf16.msra.mxu0 %v2800
        %3707 = vmatpush.bf16.msra.mxu0 %v2796
        %3708 = vmatmul.bf16.gmra.mxu0 %v1204
        %v3709 = vpop.f32.mrf.mxu0
        %v3710 = vadd.f32 %v3661, %v3709
        %v3711 = vpop.f32.mrf.mxu0
        %v3712 = vadd.f32 %v3663, %v3711
        %3713 = vmatmul.bf16.gmra.mxu0 %v1216
        %v3714 = vpop.f32.mrf.mxu0
        %v3715 = vadd.f32 %v3666, %v3714
        %v3716 = vpop.f32.mrf.mxu0
        %v3717 = vadd.f32 %v3668, %v3716
        %3718 = vmatmul.bf16.gmra.mxu0 %v1228
        %v3719 = vpop.f32.mrf.mxu0
        %v3720 = vadd.f32 %v3671, %v3719
        %v3721 = vpop.f32.mrf.mxu0
        %v3722 = vadd.f32 %v3673, %v3721
        %3723 = vmatmul.bf16.gmra.mxu0 %v1240
        %v3724 = vpop.f32.mrf.mxu0
        %v3725 = vadd.f32 %v3676, %v3724
        %v3726 = vpop.f32.mrf.mxu0
        %v3727 = vadd.f32 %v3678, %v3726
        %3728 = vmatmul.bf16.gmra.mxu0 %v1252
        %v3729 = vpop.f32.mrf.mxu0
        %v3730 = vadd.f32 %v3681, %v3729
        %v3731 = vpop.f32.mrf.mxu0
        %v3732 = vadd.f32 %v3683, %v3731
        %3733 = vmatmul.bf16.gmra.mxu0 %v1264
        %v3734 = vpop.f32.mrf.mxu0
        %v3735 = vadd.f32 %v3686, %v3734
        %v3736 = vpop.f32.mrf.mxu0
        %v3737 = vadd.f32 %v3688, %v3736
        %3738 = vmatmul.bf16.gmra.mxu0 %v1276
        %v3739 = vpop.f32.mrf.mxu0
        %v3740 = vadd.f32 %v3691, %v3739
        %v3741 = vpop.f32.mrf.mxu0
        %v3742 = vadd.f32 %v3693, %v3741
        %3743 = vmatmul.bf16.gmra.mxu0 %v1288
        %v3744 = vpop.f32.mrf.mxu0
        %v3745 = vadd.f32 %v3696, %v3744
        %v3746 = vpop.f32.mrf.mxu0
        %v3747 = vadd.f32 %v3698, %v3746
        %3748 = vdwg.mxu0
        %3749 = vmatpush.bf16.msra.mxu0 %v2856
        %3750 = vmatpush.bf16.msra.mxu0 %v2852
        %3751 = vmatpush.bf16.msra.mxu0 %v2848
        %3752 = vmatpush.bf16.msra.mxu0 %v2844
        %3753 = vmatpush.bf16.msra.mxu0 %v2840
        %3754 = vmatpush.bf16.msra.mxu0 %v2836
        %3755 = vmatpush.bf16.msra.mxu0 %v2832
        %3756 = vmatpush.bf16.msra.mxu0 %v2828
        %3757 = vmatmul.bf16.gmra.mxu0 %v1205
        %v3758 = vpop.f32.mrf.mxu0
        %v3759 = vadd.f32 %v3710, %v3758
        %v3760 = vpop.f32.mrf.mxu0
        %v3761 = vadd.f32 %v3712, %v3760
        %3762 = vmatmul.bf16.gmra.mxu0 %v1217
        %v3763 = vpop.f32.mrf.mxu0
        %v3764 = vadd.f32 %v3715, %v3763
        %v3765 = vpop.f32.mrf.mxu0
        %v3766 = vadd.f32 %v3717, %v3765
        %3767 = vmatmul.bf16.gmra.mxu0 %v1229
        %v3768 = vpop.f32.mrf.mxu0
        %v3769 = vadd.f32 %v3720, %v3768
        %v3770 = vpop.f32.mrf.mxu0
        %v3771 = vadd.f32 %v3722, %v3770
        %3772 = vmatmul.bf16.gmra.mxu0 %v1241
        %v3773 = vpop.f32.mrf.mxu0
        %v3774 = vadd.f32 %v3725, %v3773
        %v3775 = vpop.f32.mrf.mxu0
        %v3776 = vadd.f32 %v3727, %v3775
        %3777 = vmatmul.bf16.gmra.mxu0 %v1253
        %v3778 = vpop.f32.mrf.mxu0
        %v3779 = vadd.f32 %v3730, %v3778
        %v3780 = vpop.f32.mrf.mxu0
        %v3781 = vadd.f32 %v3732, %v3780
        %3782 = vmatmul.bf16.gmra.mxu0 %v1265
        %v3783 = vpop.f32.mrf.mxu0
        %v3784 = vadd.f32 %v3735, %v3783
        %v3785 = vpop.f32.mrf.mxu0
        %v3786 = vadd.f32 %v3737, %v3785
        %3787 = vmatmul.bf16.gmra.mxu0 %v1277
        %v3788 = vpop.f32.mrf.mxu0
        %v3789 = vadd.f32 %v3740, %v3788
        %v3790 = vpop.f32.mrf.mxu0
        %v3791 = vadd.f32 %v3742, %v3790
        %3792 = vmatmul.bf16.gmra.mxu0 %v1289
        %v3793 = vpop.f32.mrf.mxu0
        %v3794 = vadd.f32 %v3745, %v3793
        %v3795 = vpop.f32.mrf.mxu0
        %v3796 = vadd.f32 %v3747, %v3795
        %3797 = vdwg.mxu0
        %3798 = vmatpush.bf16.msra.mxu0 %v2888
        %3799 = vmatpush.bf16.msra.mxu0 %v2884
        %3800 = vmatpush.bf16.msra.mxu0 %v2880
        %3801 = vmatpush.bf16.msra.mxu0 %v2876
        %3802 = vmatpush.bf16.msra.mxu0 %v2872
        %3803 = vmatpush.bf16.msra.mxu0 %v2868
        %3804 = vmatpush.bf16.msra.mxu0 %v2864
        %3805 = vmatpush.bf16.msra.mxu0 %v2860
        %3806 = vmatmul.bf16.gmra.mxu0 %v1206
        %v3807 = vpop.f32.mrf.mxu0
        %v3808 = vadd.f32 %v3759, %v3807
        %v3809 = vpop.f32.mrf.mxu0
        %v3810 = vadd.f32 %v3761, %v3809
        %3811 = vmatmul.bf16.gmra.mxu0 %v1218
        %v3812 = vpop.f32.mrf.mxu0
        %v3813 = vadd.f32 %v3764, %v3812
        %v3814 = vpop.f32.mrf.mxu0
        %v3815 = vadd.f32 %v3766, %v3814
        %3816 = vmatmul.bf16.gmra.mxu0 %v1230
        %v3817 = vpop.f32.mrf.mxu0
        %v3818 = vadd.f32 %v3769, %v3817
        %v3819 = vpop.f32.mrf.mxu0
        %v3820 = vadd.f32 %v3771, %v3819
        %3821 = vmatmul.bf16.gmra.mxu0 %v1242
        %v3822 = vpop.f32.mrf.mxu0
        %v3823 = vadd.f32 %v3774, %v3822
        %v3824 = vpop.f32.mrf.mxu0
        %v3825 = vadd.f32 %v3776, %v3824
        %3826 = vmatmul.bf16.gmra.mxu0 %v1254
        %v3827 = vpop.f32.mrf.mxu0
        %v3828 = vadd.f32 %v3779, %v3827
        %v3829 = vpop.f32.mrf.mxu0
        %v3830 = vadd.f32 %v3781, %v3829
        %3831 = vmatmul.bf16.gmra.mxu0 %v1266
        %v3832 = vpop.f32.mrf.mxu0
        %v3833 = vadd.f32 %v3784, %v3832
        %v3834 = vpop.f32.mrf.mxu0
        %v3835 = vadd.f32 %v3786, %v3834
        %3836 = vmatmul.bf16.gmra.mxu0 %v1278
        %v3837 = vpop.f32.mrf.mxu0
        %v3838 = vadd.f32 %v3789, %v3837
        %v3839 = vpop.f32.mrf.mxu0
        %v3840 = vadd.f32 %v3791, %v3839
        %3841 = vmatmul.bf16.gmra.mxu0 %v1290
        %v3842 = vpop.f32.mrf.mxu0
        %v3843 = vadd.f32 %v3794, %v3842
        %v3844 = vpop.f32.mrf.mxu0
        %v3845 = vadd.f32 %v3796, %v3844
        %3846 = vdwg.mxu0
        %3847 = vmatpush.bf16.msra.mxu0 %v2920
        %3848 = vmatpush.bf16.msra.mxu0 %v2916
        %3849 = vmatpush.bf16.msra.mxu0 %v2912
        %3850 = vmatpush.bf16.msra.mxu0 %v2908
        %3851 = vmatpush.bf16.msra.mxu0 %v2904
        %3852 = vmatpush.bf16.msra.mxu0 %v2900
        %3853 = vmatpush.bf16.msra.mxu0 %v2896
        %3854 = vmatpush.bf16.msra.mxu0 %v2892
        %3855 = vmatmul.bf16.gmra.mxu0 %v1207
        %v3856 = vpop.f32.mrf.mxu0
        %v3857 = vadd.f32 %v3808, %v3856
        %v3858 = vpop.f32.mrf.mxu0
        %v3859 = vadd.f32 %v3810, %v3858
        %3860 = vmatmul.bf16.gmra.mxu0 %v1219
        %v3861 = vpop.f32.mrf.mxu0
        %v3862 = vadd.f32 %v3813, %v3861
        %v3863 = vpop.f32.mrf.mxu0
        %v3864 = vadd.f32 %v3815, %v3863
        %3865 = vmatmul.bf16.gmra.mxu0 %v1231
        %v3866 = vpop.f32.mrf.mxu0
        %v3867 = vadd.f32 %v3818, %v3866
        %v3868 = vpop.f32.mrf.mxu0
        %v3869 = vadd.f32 %v3820, %v3868
        %3870 = vmatmul.bf16.gmra.mxu0 %v1243
        %v3871 = vpop.f32.mrf.mxu0
        %v3872 = vadd.f32 %v3823, %v3871
        %v3873 = vpop.f32.mrf.mxu0
        %v3874 = vadd.f32 %v3825, %v3873
        %3875 = vmatmul.bf16.gmra.mxu0 %v1255
        %v3876 = vpop.f32.mrf.mxu0
        %v3877 = vadd.f32 %v3828, %v3876
        %v3878 = vpop.f32.mrf.mxu0
        %v3879 = vadd.f32 %v3830, %v3878
        %3880 = vmatmul.bf16.gmra.mxu0 %v1267
        %v3881 = vpop.f32.mrf.mxu0
        %v3882 = vadd.f32 %v3833, %v3881
        %v3883 = vpop.f32.mrf.mxu0
        %v3884 = vadd.f32 %v3835, %v3883
        %3885 = vmatmul.bf16.gmra.mxu0 %v1279
        %v3886 = vpop.f32.mrf.mxu0
        %v3887 = vadd.f32 %v3838, %v3886
        %v3888 = vpop.f32.mrf.mxu0
        %v3889 = vadd.f32 %v3840, %v3888
        %3890 = vmatmul.bf16.gmra.mxu0 %v1291
        %v3891 = vpop.f32.mrf.mxu0
        %v3892 = vadd.f32 %v3843, %v3891
        %v3893 = vpop.f32.mrf.mxu0
        %v3894 = vadd.f32 %v3845, %v3893
        %3895 = vdwg.mxu0
        %3896 = vmatpush.bf16.msra.mxu0 %v2569
        %3897 = vmatpush.bf16.msra.mxu0 %v2565
        %3898 = vmatpush.bf16.msra.mxu0 %v2561
        %3899 = vmatpush.bf16.msra.mxu0 %v2557
        %3900 = vmatpush.bf16.msra.mxu0 %v2553
        %3901 = vmatpush.bf16.msra.mxu0 %v2549
        %3902 = vmatpush.bf16.msra.mxu0 %v2545
        %3903 = vmatpush.bf16.msra.mxu0 %v2541
        %3904 = vmatmul.bf16.gmra.mxu0 %v1196
        %v3905 = vpop.f32.mrf.mxu0
        %v3906 = vadd.f32 0.0, %v3905
        %v3907 = vpop.f32.mrf.mxu0
        %v3908 = vadd.f32 0.0, %v3907
        %3909 = vmatmul.bf16.gmra.mxu0 %v1208
        %v3910 = vpop.f32.mrf.mxu0
        %v3911 = vadd.f32 0.0, %v3910
        %v3912 = vpop.f32.mrf.mxu0
        %v3913 = vadd.f32 0.0, %v3912
        %3914 = vmatmul.bf16.gmra.mxu0 %v1220
        %v3915 = vpop.f32.mrf.mxu0
        %v3916 = vadd.f32 0.0, %v3915
        %v3917 = vpop.f32.mrf.mxu0
        %v3918 = vadd.f32 0.0, %v3917
        %3919 = vmatmul.bf16.gmra.mxu0 %v1232
        %v3920 = vpop.f32.mrf.mxu0
        %v3921 = vadd.f32 0.0, %v3920
        %v3922 = vpop.f32.mrf.mxu0
        %v3923 = vadd.f32 0.0, %v3922
        %3924 = vmatmul.bf16.gmra.mxu0 %v1244
        %v3925 = vpop.f32.mrf.mxu0
        %v3926 = vadd.f32 0.0, %v3925
        %v3927 = vpop.f32.mrf.mxu0
        %v3928 = vadd.f32 0.0, %v3927
        %3929 = vmatmul.bf16.gmra.mxu0 %v1256
        %v3930 = vpop.f32.mrf.mxu0
        %v3931 = vadd.f32 0.0, %v3930
        %v3932 = vpop.f32.mrf.mxu0
        %v3933 = vadd.f32 0.0, %v3932
        %3934 = vmatmul.bf16.gmra.mxu0 %v1268
        %v3935 = vpop.f32.mrf.mxu0
        %v3936 = vadd.f32 0.0, %v3935
        %v3937 = vpop.f32.mrf.mxu0
        %v3938 = vadd.f32 0.0, %v3937
        %3939 = vmatmul.bf16.gmra.mxu0 %v1280
        %v3940 = vpop.f32.mrf.mxu0
        %v3941 = vadd.f32 0.0, %v3940
        %v3942 = vpop.f32.mrf.mxu0
        %v3943 = vadd.f32 0.0, %v3942
        %3944 = vdwg.mxu0
        %3945 = vmatpush.bf16.msra.mxu0 %v2601
        %3946 = vmatpush.bf16.msra.mxu0 %v2597
        %3947 = vmatpush.bf16.msra.mxu0 %v2593
        %3948 = vmatpush.bf16.msra.mxu0 %v2589
        %3949 = vmatpush.bf16.msra.mxu0 %v2585
        %3950 = vmatpush.bf16.msra.mxu0 %v2581
        %3951 = vmatpush.bf16.msra.mxu0 %v2577
        %3952 = vmatpush.bf16.msra.mxu0 %v2573
        %3953 = vmatmul.bf16.gmra.mxu0 %v1197
        %v3954 = vpop.f32.mrf.mxu0
        %v3955 = vadd.f32 %v3906, %v3954
        %v3956 = vpop.f32.mrf.mxu0
        %v3957 = vadd.f32 %v3908, %v3956
        %3958 = vmatmul.bf16.gmra.mxu0 %v1209
        %v3959 = vpop.f32.mrf.mxu0
        %v3960 = vadd.f32 %v3911, %v3959
        %v3961 = vpop.f32.mrf.mxu0
        %v3962 = vadd.f32 %v3913, %v3961
        %3963 = vmatmul.bf16.gmra.mxu0 %v1221
        %v3964 = vpop.f32.mrf.mxu0
        %v3965 = vadd.f32 %v3916, %v3964
        %v3966 = vpop.f32.mrf.mxu0
        %v3967 = vadd.f32 %v3918, %v3966
        %3968 = vmatmul.bf16.gmra.mxu0 %v1233
        %v3969 = vpop.f32.mrf.mxu0
        %v3970 = vadd.f32 %v3921, %v3969
        %v3971 = vpop.f32.mrf.mxu0
        %v3972 = vadd.f32 %v3923, %v3971
        %3973 = vmatmul.bf16.gmra.mxu0 %v1245
        %v3974 = vpop.f32.mrf.mxu0
        %v3975 = vadd.f32 %v3926, %v3974
        %v3976 = vpop.f32.mrf.mxu0
        %v3977 = vadd.f32 %v3928, %v3976
        %3978 = vmatmul.bf16.gmra.mxu0 %v1257
        %v3979 = vpop.f32.mrf.mxu0
        %v3980 = vadd.f32 %v3931, %v3979
        %v3981 = vpop.f32.mrf.mxu0
        %v3982 = vadd.f32 %v3933, %v3981
        %3983 = vmatmul.bf16.gmra.mxu0 %v1269
        %v3984 = vpop.f32.mrf.mxu0
        %v3985 = vadd.f32 %v3936, %v3984
        %v3986 = vpop.f32.mrf.mxu0
        %v3987 = vadd.f32 %v3938, %v3986
        %3988 = vmatmul.bf16.gmra.mxu0 %v1281
        %v3989 = vpop.f32.mrf.mxu0
        %v3990 = vadd.f32 %v3941, %v3989
        %v3991 = vpop.f32.mrf.mxu0
        %v3992 = vadd.f32 %v3943, %v3991
        %3993 = vdwg.mxu0
        %3994 = vmatpush.bf16.msra.mxu0 %v2633
        %3995 = vmatpush.bf16.msra.mxu0 %v2629
        %3996 = vmatpush.bf16.msra.mxu0 %v2625
        %3997 = vmatpush.bf16.msra.mxu0 %v2621
        %3998 = vmatpush.bf16.msra.mxu0 %v2617
        %3999 = vmatpush.bf16.msra.mxu0 %v2613
        %4000 = vmatpush.bf16.msra.mxu0 %v2609
        %4001 = vmatpush.bf16.msra.mxu0 %v2605
        %4002 = vmatmul.bf16.gmra.mxu0 %v1198
        %v4003 = vpop.f32.mrf.mxu0
        %v4004 = vadd.f32 %v3955, %v4003
        %v4005 = vpop.f32.mrf.mxu0
        %v4006 = vadd.f32 %v3957, %v4005
        %4007 = vmatmul.bf16.gmra.mxu0 %v1210
        %v4008 = vpop.f32.mrf.mxu0
        %v4009 = vadd.f32 %v3960, %v4008
        %v4010 = vpop.f32.mrf.mxu0
        %v4011 = vadd.f32 %v3962, %v4010
        %4012 = vmatmul.bf16.gmra.mxu0 %v1222
        %v4013 = vpop.f32.mrf.mxu0
        %v4014 = vadd.f32 %v3965, %v4013
        %v4015 = vpop.f32.mrf.mxu0
        %v4016 = vadd.f32 %v3967, %v4015
        %4017 = vmatmul.bf16.gmra.mxu0 %v1234
        %v4018 = vpop.f32.mrf.mxu0
        %v4019 = vadd.f32 %v3970, %v4018
        %v4020 = vpop.f32.mrf.mxu0
        %v4021 = vadd.f32 %v3972, %v4020
        %4022 = vmatmul.bf16.gmra.mxu0 %v1246
        %v4023 = vpop.f32.mrf.mxu0
        %v4024 = vadd.f32 %v3975, %v4023
        %v4025 = vpop.f32.mrf.mxu0
        %v4026 = vadd.f32 %v3977, %v4025
        %4027 = vmatmul.bf16.gmra.mxu0 %v1258
        %v4028 = vpop.f32.mrf.mxu0
        %v4029 = vadd.f32 %v3980, %v4028
        %v4030 = vpop.f32.mrf.mxu0
        %v4031 = vadd.f32 %v3982, %v4030
        %4032 = vmatmul.bf16.gmra.mxu0 %v1270
        %v4033 = vpop.f32.mrf.mxu0
        %v4034 = vadd.f32 %v3985, %v4033
        %v4035 = vpop.f32.mrf.mxu0
        %v4036 = vadd.f32 %v3987, %v4035
        %4037 = vmatmul.bf16.gmra.mxu0 %v1282
        %v4038 = vpop.f32.mrf.mxu0
        %v4039 = vadd.f32 %v3990, %v4038
        %v4040 = vpop.f32.mrf.mxu0
        %v4041 = vadd.f32 %v3992, %v4040
        %4042 = vdwg.mxu0
        %4043 = vmatpush.bf16.msra.mxu0 %v2665
        %4044 = vmatpush.bf16.msra.mxu0 %v2661
        %4045 = vmatpush.bf16.msra.mxu0 %v2657
        %4046 = vmatpush.bf16.msra.mxu0 %v2653
        %4047 = vmatpush.bf16.msra.mxu0 %v2649
        %4048 = vmatpush.bf16.msra.mxu0 %v2645
        %4049 = vmatpush.bf16.msra.mxu0 %v2641
        %4050 = vmatpush.bf16.msra.mxu0 %v2637
        %4051 = vmatmul.bf16.gmra.mxu0 %v1199
        %v4052 = vpop.f32.mrf.mxu0
        %v4053 = vadd.f32 %v4004, %v4052
        %v4054 = vpop.f32.mrf.mxu0
        %v4055 = vadd.f32 %v4006, %v4054
        %4056 = vmatmul.bf16.gmra.mxu0 %v1211
        %v4057 = vpop.f32.mrf.mxu0
        %v4058 = vadd.f32 %v4009, %v4057
        %v4059 = vpop.f32.mrf.mxu0
        %v4060 = vadd.f32 %v4011, %v4059
        %4061 = vmatmul.bf16.gmra.mxu0 %v1223
        %v4062 = vpop.f32.mrf.mxu0
        %v4063 = vadd.f32 %v4014, %v4062
        %v4064 = vpop.f32.mrf.mxu0
        %v4065 = vadd.f32 %v4016, %v4064
        %4066 = vmatmul.bf16.gmra.mxu0 %v1235
        %v4067 = vpop.f32.mrf.mxu0
        %v4068 = vadd.f32 %v4019, %v4067
        %v4069 = vpop.f32.mrf.mxu0
        %v4070 = vadd.f32 %v4021, %v4069
        %4071 = vmatmul.bf16.gmra.mxu0 %v1247
        %v4072 = vpop.f32.mrf.mxu0
        %v4073 = vadd.f32 %v4024, %v4072
        %v4074 = vpop.f32.mrf.mxu0
        %v4075 = vadd.f32 %v4026, %v4074
        %4076 = vmatmul.bf16.gmra.mxu0 %v1259
        %v4077 = vpop.f32.mrf.mxu0
        %v4078 = vadd.f32 %v4029, %v4077
        %v4079 = vpop.f32.mrf.mxu0
        %v4080 = vadd.f32 %v4031, %v4079
        %4081 = vmatmul.bf16.gmra.mxu0 %v1271
        %v4082 = vpop.f32.mrf.mxu0
        %v4083 = vadd.f32 %v4034, %v4082
        %v4084 = vpop.f32.mrf.mxu0
        %v4085 = vadd.f32 %v4036, %v4084
        %4086 = vmatmul.bf16.gmra.mxu0 %v1283
        %v4087 = vpop.f32.mrf.mxu0
        %v4088 = vadd.f32 %v4039, %v4087
        %v4089 = vpop.f32.mrf.mxu0
        %v4090 = vadd.f32 %v4041, %v4089
        %4091 = vdwg.mxu0
        %4092 = vmatpush.bf16.msra.mxu0 %v2697
        %4093 = vmatpush.bf16.msra.mxu0 %v2693
        %4094 = vmatpush.bf16.msra.mxu0 %v2689
        %4095 = vmatpush.bf16.msra.mxu0 %v2685
        %4096 = vmatpush.bf16.msra.mxu0 %v2681
        %4097 = vmatpush.bf16.msra.mxu0 %v2677
        %4098 = vmatpush.bf16.msra.mxu0 %v2673
        %4099 = vmatpush.bf16.msra.mxu0 %v2669
        %4100 = vmatmul.bf16.gmra.mxu0 %v1200
        %v4101 = vpop.f32.mrf.mxu0
        %v4102 = vadd.f32 %v4053, %v4101
        %v4103 = vpop.f32.mrf.mxu0
        %v4104 = vadd.f32 %v4055, %v4103
        %4105 = vmatmul.bf16.gmra.mxu0 %v1212
        %v4106 = vpop.f32.mrf.mxu0
        %v4107 = vadd.f32 %v4058, %v4106
        %v4108 = vpop.f32.mrf.mxu0
        %v4109 = vadd.f32 %v4060, %v4108
        %4110 = vmatmul.bf16.gmra.mxu0 %v1224
        %v4111 = vpop.f32.mrf.mxu0
        %v4112 = vadd.f32 %v4063, %v4111
        %v4113 = vpop.f32.mrf.mxu0
        %v4114 = vadd.f32 %v4065, %v4113
        %4115 = vmatmul.bf16.gmra.mxu0 %v1236
        %v4116 = vpop.f32.mrf.mxu0
        %v4117 = vadd.f32 %v4068, %v4116
        %v4118 = vpop.f32.mrf.mxu0
        %v4119 = vadd.f32 %v4070, %v4118
        %4120 = vmatmul.bf16.gmra.mxu0 %v1248
        %v4121 = vpop.f32.mrf.mxu0
        %v4122 = vadd.f32 %v4073, %v4121
        %v4123 = vpop.f32.mrf.mxu0
        %v4124 = vadd.f32 %v4075, %v4123
        %4125 = vmatmul.bf16.gmra.mxu0 %v1260
        %v4126 = vpop.f32.mrf.mxu0
        %v4127 = vadd.f32 %v4078, %v4126
        %v4128 = vpop.f32.mrf.mxu0
        %v4129 = vadd.f32 %v4080, %v4128
        %4130 = vmatmul.bf16.gmra.mxu0 %v1272
        %v4131 = vpop.f32.mrf.mxu0
        %v4132 = vadd.f32 %v4083, %v4131
        %v4133 = vpop.f32.mrf.mxu0
        %v4134 = vadd.f32 %v4085, %v4133
        %4135 = vmatmul.bf16.gmra.mxu0 %v1284
        %v4136 = vpop.f32.mrf.mxu0
        %v4137 = vadd.f32 %v4088, %v4136
        %v4138 = vpop.f32.mrf.mxu0
        %v4139 = vadd.f32 %v4090, %v4138
        %4140 = vdwg.mxu0
        %4141 = vmatpush.bf16.msra.mxu0 %v2729
        %4142 = vmatpush.bf16.msra.mxu0 %v2725
        %4143 = vmatpush.bf16.msra.mxu0 %v2721
        %4144 = vmatpush.bf16.msra.mxu0 %v2717
        %4145 = vmatpush.bf16.msra.mxu0 %v2713
        %4146 = vmatpush.bf16.msra.mxu0 %v2709
        %4147 = vmatpush.bf16.msra.mxu0 %v2705
        %4148 = vmatpush.bf16.msra.mxu0 %v2701
        %4149 = vmatmul.bf16.gmra.mxu0 %v1201
        %v4150 = vpop.f32.mrf.mxu0
        %v4151 = vadd.f32 %v4102, %v4150
        %v4152 = vpop.f32.mrf.mxu0
        %v4153 = vadd.f32 %v4104, %v4152
        %4154 = vmatmul.bf16.gmra.mxu0 %v1213
        %v4155 = vpop.f32.mrf.mxu0
        %v4156 = vadd.f32 %v4107, %v4155
        %v4157 = vpop.f32.mrf.mxu0
        %v4158 = vadd.f32 %v4109, %v4157
        %4159 = vmatmul.bf16.gmra.mxu0 %v1225
        %v4160 = vpop.f32.mrf.mxu0
        %v4161 = vadd.f32 %v4112, %v4160
        %v4162 = vpop.f32.mrf.mxu0
        %v4163 = vadd.f32 %v4114, %v4162
        %4164 = vmatmul.bf16.gmra.mxu0 %v1237
        %v4165 = vpop.f32.mrf.mxu0
        %v4166 = vadd.f32 %v4117, %v4165
        %v4167 = vpop.f32.mrf.mxu0
        %v4168 = vadd.f32 %v4119, %v4167
        %4169 = vmatmul.bf16.gmra.mxu0 %v1249
        %v4170 = vpop.f32.mrf.mxu0
        %v4171 = vadd.f32 %v4122, %v4170
        %v4172 = vpop.f32.mrf.mxu0
        %v4173 = vadd.f32 %v4124, %v4172
        %4174 = vmatmul.bf16.gmra.mxu0 %v1261
        %v4175 = vpop.f32.mrf.mxu0
        %v4176 = vadd.f32 %v4127, %v4175
        %v4177 = vpop.f32.mrf.mxu0
        %v4178 = vadd.f32 %v4129, %v4177
        %4179 = vmatmul.bf16.gmra.mxu0 %v1273
        %v4180 = vpop.f32.mrf.mxu0
        %v4181 = vadd.f32 %v4132, %v4180
        %v4182 = vpop.f32.mrf.mxu0
        %v4183 = vadd.f32 %v4134, %v4182
        %4184 = vmatmul.bf16.gmra.mxu0 %v1285
        %v4185 = vpop.f32.mrf.mxu0
        %v4186 = vadd.f32 %v4137, %v4185
        %v4187 = vpop.f32.mrf.mxu0
        %v4188 = vadd.f32 %v4139, %v4187
        %4189 = vdwg.mxu0
        %4190 = vmatpush.bf16.msra.mxu0 %v2761
        %4191 = vmatpush.bf16.msra.mxu0 %v2757
        %4192 = vmatpush.bf16.msra.mxu0 %v2753
        %4193 = vmatpush.bf16.msra.mxu0 %v2749
        %4194 = vmatpush.bf16.msra.mxu0 %v2745
        %4195 = vmatpush.bf16.msra.mxu0 %v2741
        %4196 = vmatpush.bf16.msra.mxu0 %v2737
        %4197 = vmatpush.bf16.msra.mxu0 %v2733
        %4198 = vmatmul.bf16.gmra.mxu0 %v1202
        %v4199 = vpop.f32.mrf.mxu0
        %v4200 = vadd.f32 %v4151, %v4199
        %v4201 = vpop.f32.mrf.mxu0
        %v4202 = vadd.f32 %v4153, %v4201
        %4203 = vmatmul.bf16.gmra.mxu0 %v1214
        %v4204 = vpop.f32.mrf.mxu0
        %v4205 = vadd.f32 %v4156, %v4204
        %v4206 = vpop.f32.mrf.mxu0
        %v4207 = vadd.f32 %v4158, %v4206
        %4208 = vmatmul.bf16.gmra.mxu0 %v1226
        %v4209 = vpop.f32.mrf.mxu0
        %v4210 = vadd.f32 %v4161, %v4209
        %v4211 = vpop.f32.mrf.mxu0
        %v4212 = vadd.f32 %v4163, %v4211
        %4213 = vmatmul.bf16.gmra.mxu0 %v1238
        %v4214 = vpop.f32.mrf.mxu0
        %v4215 = vadd.f32 %v4166, %v4214
        %v4216 = vpop.f32.mrf.mxu0
        %v4217 = vadd.f32 %v4168, %v4216
        %4218 = vmatmul.bf16.gmra.mxu0 %v1250
        %v4219 = vpop.f32.mrf.mxu0
        %v4220 = vadd.f32 %v4171, %v4219
        %v4221 = vpop.f32.mrf.mxu0
        %v4222 = vadd.f32 %v4173, %v4221
        %4223 = vmatmul.bf16.gmra.mxu0 %v1262
        %v4224 = vpop.f32.mrf.mxu0
        %v4225 = vadd.f32 %v4176, %v4224
        %v4226 = vpop.f32.mrf.mxu0
        %v4227 = vadd.f32 %v4178, %v4226
        %4228 = vmatmul.bf16.gmra.mxu0 %v1274
        %v4229 = vpop.f32.mrf.mxu0
        %v4230 = vadd.f32 %v4181, %v4229
        %v4231 = vpop.f32.mrf.mxu0
        %v4232 = vadd.f32 %v4183, %v4231
        %4233 = vmatmul.bf16.gmra.mxu0 %v1286
        %v4234 = vpop.f32.mrf.mxu0
        %v4235 = vadd.f32 %v4186, %v4234
        %v4236 = vpop.f32.mrf.mxu0
        %v4237 = vadd.f32 %v4188, %v4236
        %4238 = vdwg.mxu0
        %4239 = vmatpush.bf16.msra.mxu0 %v2793
        %4240 = vmatpush.bf16.msra.mxu0 %v2789
        %4241 = vmatpush.bf16.msra.mxu0 %v2785
        %4242 = vmatpush.bf16.msra.mxu0 %v2781
        %4243 = vmatpush.bf16.msra.mxu0 %v2777
        %4244 = vmatpush.bf16.msra.mxu0 %v2773
        %4245 = vmatpush.bf16.msra.mxu0 %v2769
        %4246 = vmatpush.bf16.msra.mxu0 %v2765
        %4247 = vmatmul.bf16.gmra.mxu0 %v1203
        %v4248 = vpop.f32.mrf.mxu0
        %v4249 = vadd.f32 %v4200, %v4248
        %v4250 = vpop.f32.mrf.mxu0
        %v4251 = vadd.f32 %v4202, %v4250
        %4252 = vmatmul.bf16.gmra.mxu0 %v1215
        %v4253 = vpop.f32.mrf.mxu0
        %v4254 = vadd.f32 %v4205, %v4253
        %v4255 = vpop.f32.mrf.mxu0
        %v4256 = vadd.f32 %v4207, %v4255
        %4257 = vmatmul.bf16.gmra.mxu0 %v1227
        %v4258 = vpop.f32.mrf.mxu0
        %v4259 = vadd.f32 %v4210, %v4258
        %v4260 = vpop.f32.mrf.mxu0
        %v4261 = vadd.f32 %v4212, %v4260
        %4262 = vmatmul.bf16.gmra.mxu0 %v1239
        %v4263 = vpop.f32.mrf.mxu0
        %v4264 = vadd.f32 %v4215, %v4263
        %v4265 = vpop.f32.mrf.mxu0
        %v4266 = vadd.f32 %v4217, %v4265
        %4267 = vmatmul.bf16.gmra.mxu0 %v1251
        %v4268 = vpop.f32.mrf.mxu0
        %v4269 = vadd.f32 %v4220, %v4268
        %v4270 = vpop.f32.mrf.mxu0
        %v4271 = vadd.f32 %v4222, %v4270
        %4272 = vmatmul.bf16.gmra.mxu0 %v1263
        %v4273 = vpop.f32.mrf.mxu0
        %v4274 = vadd.f32 %v4225, %v4273
        %v4275 = vpop.f32.mrf.mxu0
        %v4276 = vadd.f32 %v4227, %v4275
        %4277 = vmatmul.bf16.gmra.mxu0 %v1275
        %v4278 = vpop.f32.mrf.mxu0
        %v4279 = vadd.f32 %v4230, %v4278
        %v4280 = vpop.f32.mrf.mxu0
        %v4281 = vadd.f32 %v4232, %v4280
        %4282 = vmatmul.bf16.gmra.mxu0 %v1287
        %v4283 = vpop.f32.mrf.mxu0
        %v4284 = vadd.f32 %v4235, %v4283
        %v4285 = vpop.f32.mrf.mxu0
        %v4286 = vadd.f32 %v4237, %v4285
        %4287 = vdwg.mxu0
        %4288 = vmatpush.bf16.msra.mxu0 %v2825
        %4289 = vmatpush.bf16.msra.mxu0 %v2821
        %4290 = vmatpush.bf16.msra.mxu0 %v2817
        %4291 = vmatpush.bf16.msra.mxu0 %v2813
        %4292 = vmatpush.bf16.msra.mxu0 %v2809
        %4293 = vmatpush.bf16.msra.mxu0 %v2805
        %4294 = vmatpush.bf16.msra.mxu0 %v2801
        %4295 = vmatpush.bf16.msra.mxu0 %v2797
        %4296 = vmatmul.bf16.gmra.mxu0 %v1204
        %v4297 = vpop.f32.mrf.mxu0
        %v4298 = vadd.f32 %v4249, %v4297
        %v4299 = vpop.f32.mrf.mxu0
        %v4300 = vadd.f32 %v4251, %v4299
        %4301 = vmatmul.bf16.gmra.mxu0 %v1216
        %v4302 = vpop.f32.mrf.mxu0
        %v4303 = vadd.f32 %v4254, %v4302
        %v4304 = vpop.f32.mrf.mxu0
        %v4305 = vadd.f32 %v4256, %v4304
        %4306 = vmatmul.bf16.gmra.mxu0 %v1228
        %v4307 = vpop.f32.mrf.mxu0
        %v4308 = vadd.f32 %v4259, %v4307
        %v4309 = vpop.f32.mrf.mxu0
        %v4310 = vadd.f32 %v4261, %v4309
        %4311 = vmatmul.bf16.gmra.mxu0 %v1240
        %v4312 = vpop.f32.mrf.mxu0
        %v4313 = vadd.f32 %v4264, %v4312
        %v4314 = vpop.f32.mrf.mxu0
        %v4315 = vadd.f32 %v4266, %v4314
        %4316 = vmatmul.bf16.gmra.mxu0 %v1252
        %v4317 = vpop.f32.mrf.mxu0
        %v4318 = vadd.f32 %v4269, %v4317
        %v4319 = vpop.f32.mrf.mxu0
        %v4320 = vadd.f32 %v4271, %v4319
        %4321 = vmatmul.bf16.gmra.mxu0 %v1264
        %v4322 = vpop.f32.mrf.mxu0
        %v4323 = vadd.f32 %v4274, %v4322
        %v4324 = vpop.f32.mrf.mxu0
        %v4325 = vadd.f32 %v4276, %v4324
        %4326 = vmatmul.bf16.gmra.mxu0 %v1276
        %v4327 = vpop.f32.mrf.mxu0
        %v4328 = vadd.f32 %v4279, %v4327
        %v4329 = vpop.f32.mrf.mxu0
        %v4330 = vadd.f32 %v4281, %v4329
        %4331 = vmatmul.bf16.gmra.mxu0 %v1288
        %v4332 = vpop.f32.mrf.mxu0
        %v4333 = vadd.f32 %v4284, %v4332
        %v4334 = vpop.f32.mrf.mxu0
        %v4335 = vadd.f32 %v4286, %v4334
        %4336 = vdwg.mxu0
        %4337 = vmatpush.bf16.msra.mxu0 %v2857
        %4338 = vmatpush.bf16.msra.mxu0 %v2853
        %4339 = vmatpush.bf16.msra.mxu0 %v2849
        %4340 = vmatpush.bf16.msra.mxu0 %v2845
        %4341 = vmatpush.bf16.msra.mxu0 %v2841
        %4342 = vmatpush.bf16.msra.mxu0 %v2837
        %4343 = vmatpush.bf16.msra.mxu0 %v2833
        %4344 = vmatpush.bf16.msra.mxu0 %v2829
        %4345 = vmatmul.bf16.gmra.mxu0 %v1205
        %v4346 = vpop.f32.mrf.mxu0
        %v4347 = vadd.f32 %v4298, %v4346
        %v4348 = vpop.f32.mrf.mxu0
        %v4349 = vadd.f32 %v4300, %v4348
        %4350 = vmatmul.bf16.gmra.mxu0 %v1217
        %v4351 = vpop.f32.mrf.mxu0
        %v4352 = vadd.f32 %v4303, %v4351
        %v4353 = vpop.f32.mrf.mxu0
        %v4354 = vadd.f32 %v4305, %v4353
        %4355 = vmatmul.bf16.gmra.mxu0 %v1229
        %v4356 = vpop.f32.mrf.mxu0
        %v4357 = vadd.f32 %v4308, %v4356
        %v4358 = vpop.f32.mrf.mxu0
        %v4359 = vadd.f32 %v4310, %v4358
        %4360 = vmatmul.bf16.gmra.mxu0 %v1241
        %v4361 = vpop.f32.mrf.mxu0
        %v4362 = vadd.f32 %v4313, %v4361
        %v4363 = vpop.f32.mrf.mxu0
        %v4364 = vadd.f32 %v4315, %v4363
        %4365 = vmatmul.bf16.gmra.mxu0 %v1253
        %v4366 = vpop.f32.mrf.mxu0
        %v4367 = vadd.f32 %v4318, %v4366
        %v4368 = vpop.f32.mrf.mxu0
        %v4369 = vadd.f32 %v4320, %v4368
        %4370 = vmatmul.bf16.gmra.mxu0 %v1265
        %v4371 = vpop.f32.mrf.mxu0
        %v4372 = vadd.f32 %v4323, %v4371
        %v4373 = vpop.f32.mrf.mxu0
        %v4374 = vadd.f32 %v4325, %v4373
        %4375 = vmatmul.bf16.gmra.mxu0 %v1277
        %v4376 = vpop.f32.mrf.mxu0
        %v4377 = vadd.f32 %v4328, %v4376
        %v4378 = vpop.f32.mrf.mxu0
        %v4379 = vadd.f32 %v4330, %v4378
        %4380 = vmatmul.bf16.gmra.mxu0 %v1289
        %v4381 = vpop.f32.mrf.mxu0
        %v4382 = vadd.f32 %v4333, %v4381
        %v4383 = vpop.f32.mrf.mxu0
        %v4384 = vadd.f32 %v4335, %v4383
        %4385 = vdwg.mxu0
        %4386 = vmatpush.bf16.msra.mxu0 %v2889
        %4387 = vmatpush.bf16.msra.mxu0 %v2885
        %4388 = vmatpush.bf16.msra.mxu0 %v2881
        %4389 = vmatpush.bf16.msra.mxu0 %v2877
        %4390 = vmatpush.bf16.msra.mxu0 %v2873
        %4391 = vmatpush.bf16.msra.mxu0 %v2869
        %4392 = vmatpush.bf16.msra.mxu0 %v2865
        %4393 = vmatpush.bf16.msra.mxu0 %v2861
        %4394 = vmatmul.bf16.gmra.mxu0 %v1206
        %v4395 = vpop.f32.mrf.mxu0
        %v4396 = vadd.f32 %v4347, %v4395
        %v4397 = vpop.f32.mrf.mxu0
        %v4398 = vadd.f32 %v4349, %v4397
        %4399 = vmatmul.bf16.gmra.mxu0 %v1218
        %v4400 = vpop.f32.mrf.mxu0
        %v4401 = vadd.f32 %v4352, %v4400
        %v4402 = vpop.f32.mrf.mxu0
        %v4403 = vadd.f32 %v4354, %v4402
        %4404 = vmatmul.bf16.gmra.mxu0 %v1230
        %v4405 = vpop.f32.mrf.mxu0
        %v4406 = vadd.f32 %v4357, %v4405
        %v4407 = vpop.f32.mrf.mxu0
        %v4408 = vadd.f32 %v4359, %v4407
        %4409 = vmatmul.bf16.gmra.mxu0 %v1242
        %v4410 = vpop.f32.mrf.mxu0
        %v4411 = vadd.f32 %v4362, %v4410
        %v4412 = vpop.f32.mrf.mxu0
        %v4413 = vadd.f32 %v4364, %v4412
        %4414 = vmatmul.bf16.gmra.mxu0 %v1254
        %v4415 = vpop.f32.mrf.mxu0
        %v4416 = vadd.f32 %v4367, %v4415
        %v4417 = vpop.f32.mrf.mxu0
        %v4418 = vadd.f32 %v4369, %v4417
        %4419 = vmatmul.bf16.gmra.mxu0 %v1266
        %v4420 = vpop.f32.mrf.mxu0
        %v4421 = vadd.f32 %v4372, %v4420
        %v4422 = vpop.f32.mrf.mxu0
        %v4423 = vadd.f32 %v4374, %v4422
        %4424 = vmatmul.bf16.gmra.mxu0 %v1278
        %v4425 = vpop.f32.mrf.mxu0
        %v4426 = vadd.f32 %v4377, %v4425
        %v4427 = vpop.f32.mrf.mxu0
        %v4428 = vadd.f32 %v4379, %v4427
        %4429 = vmatmul.bf16.gmra.mxu0 %v1290
        %v4430 = vpop.f32.mrf.mxu0
        %v4431 = vadd.f32 %v4382, %v4430
        %v4432 = vpop.f32.mrf.mxu0
        %v4433 = vadd.f32 %v4384, %v4432
        %4434 = vdwg.mxu0
        %4435 = vmatpush.bf16.msra.mxu0 %v2921
        %4436 = vmatpush.bf16.msra.mxu0 %v2917
        %4437 = vmatpush.bf16.msra.mxu0 %v2913
        %4438 = vmatpush.bf16.msra.mxu0 %v2909
        %4439 = vmatpush.bf16.msra.mxu0 %v2905
        %4440 = vmatpush.bf16.msra.mxu0 %v2901
        %4441 = vmatpush.bf16.msra.mxu0 %v2897
        %4442 = vmatpush.bf16.msra.mxu0 %v2893
        %4443 = vmatmul.bf16.gmra.mxu0 %v1207
        %v4444 = vpop.f32.mrf.mxu0
        %v4445 = vadd.f32 %v4396, %v4444
        %v4446 = vpop.f32.mrf.mxu0
        %v4447 = vadd.f32 %v4398, %v4446
        %4448 = vmatmul.bf16.gmra.mxu0 %v1219
        %v4449 = vpop.f32.mrf.mxu0
        %v4450 = vadd.f32 %v4401, %v4449
        %v4451 = vpop.f32.mrf.mxu0
        %v4452 = vadd.f32 %v4403, %v4451
        %4453 = vmatmul.bf16.gmra.mxu0 %v1231
        %v4454 = vpop.f32.mrf.mxu0
        %v4455 = vadd.f32 %v4406, %v4454
        %v4456 = vpop.f32.mrf.mxu0
        %v4457 = vadd.f32 %v4408, %v4456
        %4458 = vmatmul.bf16.gmra.mxu0 %v1243
        %v4459 = vpop.f32.mrf.mxu0
        %v4460 = vadd.f32 %v4411, %v4459
        %v4461 = vpop.f32.mrf.mxu0
        %v4462 = vadd.f32 %v4413, %v4461
        %4463 = vmatmul.bf16.gmra.mxu0 %v1255
        %v4464 = vpop.f32.mrf.mxu0
        %v4465 = vadd.f32 %v4416, %v4464
        %v4466 = vpop.f32.mrf.mxu0
        %v4467 = vadd.f32 %v4418, %v4466
        %4468 = vmatmul.bf16.gmra.mxu0 %v1267
        %v4469 = vpop.f32.mrf.mxu0
        %v4470 = vadd.f32 %v4421, %v4469
        %v4471 = vpop.f32.mrf.mxu0
        %v4472 = vadd.f32 %v4423, %v4471
        %4473 = vmatmul.bf16.gmra.mxu0 %v1279
        %v4474 = vpop.f32.mrf.mxu0
        %v4475 = vadd.f32 %v4426, %v4474
        %v4476 = vpop.f32.mrf.mxu0
        %v4477 = vadd.f32 %v4428, %v4476
        %4478 = vmatmul.bf16.gmra.mxu0 %v1291
        %v4479 = vpop.f32.mrf.mxu0
        %v4480 = vadd.f32 %v4431, %v4479
        %v4481 = vpop.f32.mrf.mxu0
        %v4482 = vadd.f32 %v4433, %v4481
        %4483 = vdwg.mxu0
        %4484 = vmatpush.bf16.msra.mxu0 %v2570
        %4485 = vmatpush.bf16.msra.mxu0 %v2566
        %4486 = vmatpush.bf16.msra.mxu0 %v2562
        %4487 = vmatpush.bf16.msra.mxu0 %v2558
        %4488 = vmatpush.bf16.msra.mxu0 %v2554
        %4489 = vmatpush.bf16.msra.mxu0 %v2550
        %4490 = vmatpush.bf16.msra.mxu0 %v2546
        %4491 = vmatpush.bf16.msra.mxu0 %v2542
        %4492 = vmatmul.bf16.gmra.mxu0 %v1196
        %v4493 = vpop.f32.mrf.mxu0
        %v4494 = vadd.f32 0.0, %v4493
        %v4495 = vpop.f32.mrf.mxu0
        %v4496 = vadd.f32 0.0, %v4495
        %4497 = vmatmul.bf16.gmra.mxu0 %v1208
        %v4498 = vpop.f32.mrf.mxu0
        %v4499 = vadd.f32 0.0, %v4498
        %v4500 = vpop.f32.mrf.mxu0
        %v4501 = vadd.f32 0.0, %v4500
        %4502 = vmatmul.bf16.gmra.mxu0 %v1220
        %v4503 = vpop.f32.mrf.mxu0
        %v4504 = vadd.f32 0.0, %v4503
        %v4505 = vpop.f32.mrf.mxu0
        %v4506 = vadd.f32 0.0, %v4505
        %4507 = vmatmul.bf16.gmra.mxu0 %v1232
        %v4508 = vpop.f32.mrf.mxu0
        %v4509 = vadd.f32 0.0, %v4508
        %v4510 = vpop.f32.mrf.mxu0
        %v4511 = vadd.f32 0.0, %v4510
        %4512 = vmatmul.bf16.gmra.mxu0 %v1244
        %v4513 = vpop.f32.mrf.mxu0
        %v4514 = vadd.f32 0.0, %v4513
        %v4515 = vpop.f32.mrf.mxu0
        %v4516 = vadd.f32 0.0, %v4515
        %4517 = vmatmul.bf16.gmra.mxu0 %v1256
        %v4518 = vpop.f32.mrf.mxu0
        %v4519 = vadd.f32 0.0, %v4518
        %v4520 = vpop.f32.mrf.mxu0
        %v4521 = vadd.f32 0.0, %v4520
        %4522 = vmatmul.bf16.gmra.mxu0 %v1268
        %v4523 = vpop.f32.mrf.mxu0
        %v4524 = vadd.f32 0.0, %v4523
        %v4525 = vpop.f32.mrf.mxu0
        %v4526 = vadd.f32 0.0, %v4525
        %4527 = vmatmul.bf16.gmra.mxu0 %v1280
        %v4528 = vpop.f32.mrf.mxu0
        %v4529 = vadd.f32 0.0, %v4528
        %v4530 = vpop.f32.mrf.mxu0
        %v4531 = vadd.f32 0.0, %v4530
        %4532 = vdwg.mxu0
        %4533 = vmatpush.bf16.msra.mxu0 %v2602
        %4534 = vmatpush.bf16.msra.mxu0 %v2598
        %4535 = vmatpush.bf16.msra.mxu0 %v2594
        %4536 = vmatpush.bf16.msra.mxu0 %v2590
        %4537 = vmatpush.bf16.msra.mxu0 %v2586
        %4538 = vmatpush.bf16.msra.mxu0 %v2582
        %4539 = vmatpush.bf16.msra.mxu0 %v2578
        %4540 = vmatpush.bf16.msra.mxu0 %v2574
        %4541 = vmatmul.bf16.gmra.mxu0 %v1197
        %v4542 = vpop.f32.mrf.mxu0
        %v4543 = vadd.f32 %v4494, %v4542
        %v4544 = vpop.f32.mrf.mxu0
        %v4545 = vadd.f32 %v4496, %v4544
        %4546 = vmatmul.bf16.gmra.mxu0 %v1209
        %v4547 = vpop.f32.mrf.mxu0
        %v4548 = vadd.f32 %v4499, %v4547
        %v4549 = vpop.f32.mrf.mxu0
        %v4550 = vadd.f32 %v4501, %v4549
        %4551 = vmatmul.bf16.gmra.mxu0 %v1221
        %v4552 = vpop.f32.mrf.mxu0
        %v4553 = vadd.f32 %v4504, %v4552
        %v4554 = vpop.f32.mrf.mxu0
        %v4555 = vadd.f32 %v4506, %v4554
        %4556 = vmatmul.bf16.gmra.mxu0 %v1233
        %v4557 = vpop.f32.mrf.mxu0
        %v4558 = vadd.f32 %v4509, %v4557
        %v4559 = vpop.f32.mrf.mxu0
        %v4560 = vadd.f32 %v4511, %v4559
        %4561 = vmatmul.bf16.gmra.mxu0 %v1245
        %v4562 = vpop.f32.mrf.mxu0
        %v4563 = vadd.f32 %v4514, %v4562
        %v4564 = vpop.f32.mrf.mxu0
        %v4565 = vadd.f32 %v4516, %v4564
        %4566 = vmatmul.bf16.gmra.mxu0 %v1257
        %v4567 = vpop.f32.mrf.mxu0
        %v4568 = vadd.f32 %v4519, %v4567
        %v4569 = vpop.f32.mrf.mxu0
        %v4570 = vadd.f32 %v4521, %v4569
        %4571 = vmatmul.bf16.gmra.mxu0 %v1269
        %v4572 = vpop.f32.mrf.mxu0
        %v4573 = vadd.f32 %v4524, %v4572
        %v4574 = vpop.f32.mrf.mxu0
        %v4575 = vadd.f32 %v4526, %v4574
        %4576 = vmatmul.bf16.gmra.mxu0 %v1281
        %v4577 = vpop.f32.mrf.mxu0
        %v4578 = vadd.f32 %v4529, %v4577
        %v4579 = vpop.f32.mrf.mxu0
        %v4580 = vadd.f32 %v4531, %v4579
        %4581 = vdwg.mxu0
        %4582 = vmatpush.bf16.msra.mxu0 %v2634
        %4583 = vmatpush.bf16.msra.mxu0 %v2630
        %4584 = vmatpush.bf16.msra.mxu0 %v2626
        %4585 = vmatpush.bf16.msra.mxu0 %v2622
        %4586 = vmatpush.bf16.msra.mxu0 %v2618
        %4587 = vmatpush.bf16.msra.mxu0 %v2614
        %4588 = vmatpush.bf16.msra.mxu0 %v2610
        %4589 = vmatpush.bf16.msra.mxu0 %v2606
        %4590 = vmatmul.bf16.gmra.mxu0 %v1198
        %v4591 = vpop.f32.mrf.mxu0
        %v4592 = vadd.f32 %v4543, %v4591
        %v4593 = vpop.f32.mrf.mxu0
        %v4594 = vadd.f32 %v4545, %v4593
        %4595 = vmatmul.bf16.gmra.mxu0 %v1210
        %v4596 = vpop.f32.mrf.mxu0
        %v4597 = vadd.f32 %v4548, %v4596
        %v4598 = vpop.f32.mrf.mxu0
        %v4599 = vadd.f32 %v4550, %v4598
        %4600 = vmatmul.bf16.gmra.mxu0 %v1222
        %v4601 = vpop.f32.mrf.mxu0
        %v4602 = vadd.f32 %v4553, %v4601
        %v4603 = vpop.f32.mrf.mxu0
        %v4604 = vadd.f32 %v4555, %v4603
        %4605 = vmatmul.bf16.gmra.mxu0 %v1234
        %v4606 = vpop.f32.mrf.mxu0
        %v4607 = vadd.f32 %v4558, %v4606
        %v4608 = vpop.f32.mrf.mxu0
        %v4609 = vadd.f32 %v4560, %v4608
        %4610 = vmatmul.bf16.gmra.mxu0 %v1246
        %v4611 = vpop.f32.mrf.mxu0
        %v4612 = vadd.f32 %v4563, %v4611
        %v4613 = vpop.f32.mrf.mxu0
        %v4614 = vadd.f32 %v4565, %v4613
        %4615 = vmatmul.bf16.gmra.mxu0 %v1258
        %v4616 = vpop.f32.mrf.mxu0
        %v4617 = vadd.f32 %v4568, %v4616
        %v4618 = vpop.f32.mrf.mxu0
        %v4619 = vadd.f32 %v4570, %v4618
        %4620 = vmatmul.bf16.gmra.mxu0 %v1270
        %v4621 = vpop.f32.mrf.mxu0
        %v4622 = vadd.f32 %v4573, %v4621
        %v4623 = vpop.f32.mrf.mxu0
        %v4624 = vadd.f32 %v4575, %v4623
        %4625 = vmatmul.bf16.gmra.mxu0 %v1282
        %v4626 = vpop.f32.mrf.mxu0
        %v4627 = vadd.f32 %v4578, %v4626
        %v4628 = vpop.f32.mrf.mxu0
        %v4629 = vadd.f32 %v4580, %v4628
        %4630 = vdwg.mxu0
        %4631 = vmatpush.bf16.msra.mxu0 %v2666
        %4632 = vmatpush.bf16.msra.mxu0 %v2662
        %4633 = vmatpush.bf16.msra.mxu0 %v2658
        %4634 = vmatpush.bf16.msra.mxu0 %v2654
        %4635 = vmatpush.bf16.msra.mxu0 %v2650
        %4636 = vmatpush.bf16.msra.mxu0 %v2646
        %4637 = vmatpush.bf16.msra.mxu0 %v2642
        %4638 = vmatpush.bf16.msra.mxu0 %v2638
        %4639 = vmatmul.bf16.gmra.mxu0 %v1199
        %v4640 = vpop.f32.mrf.mxu0
        %v4641 = vadd.f32 %v4592, %v4640
        %v4642 = vpop.f32.mrf.mxu0
        %v4643 = vadd.f32 %v4594, %v4642
        %4644 = vmatmul.bf16.gmra.mxu0 %v1211
        %v4645 = vpop.f32.mrf.mxu0
        %v4646 = vadd.f32 %v4597, %v4645
        %v4647 = vpop.f32.mrf.mxu0
        %v4648 = vadd.f32 %v4599, %v4647
        %4649 = vmatmul.bf16.gmra.mxu0 %v1223
        %v4650 = vpop.f32.mrf.mxu0
        %v4651 = vadd.f32 %v4602, %v4650
        %v4652 = vpop.f32.mrf.mxu0
        %v4653 = vadd.f32 %v4604, %v4652
        %4654 = vmatmul.bf16.gmra.mxu0 %v1235
        %v4655 = vpop.f32.mrf.mxu0
        %v4656 = vadd.f32 %v4607, %v4655
        %v4657 = vpop.f32.mrf.mxu0
        %v4658 = vadd.f32 %v4609, %v4657
        %4659 = vmatmul.bf16.gmra.mxu0 %v1247
        %v4660 = vpop.f32.mrf.mxu0
        %v4661 = vadd.f32 %v4612, %v4660
        %v4662 = vpop.f32.mrf.mxu0
        %v4663 = vadd.f32 %v4614, %v4662
        %4664 = vmatmul.bf16.gmra.mxu0 %v1259
        %v4665 = vpop.f32.mrf.mxu0
        %v4666 = vadd.f32 %v4617, %v4665
        %v4667 = vpop.f32.mrf.mxu0
        %v4668 = vadd.f32 %v4619, %v4667
        %4669 = vmatmul.bf16.gmra.mxu0 %v1271
        %v4670 = vpop.f32.mrf.mxu0
        %v4671 = vadd.f32 %v4622, %v4670
        %v4672 = vpop.f32.mrf.mxu0
        %v4673 = vadd.f32 %v4624, %v4672
        %4674 = vmatmul.bf16.gmra.mxu0 %v1283
        %v4675 = vpop.f32.mrf.mxu0
        %v4676 = vadd.f32 %v4627, %v4675
        %v4677 = vpop.f32.mrf.mxu0
        %v4678 = vadd.f32 %v4629, %v4677
        %4679 = vdwg.mxu0
        %4680 = vmatpush.bf16.msra.mxu0 %v2698
        %4681 = vmatpush.bf16.msra.mxu0 %v2694
        %4682 = vmatpush.bf16.msra.mxu0 %v2690
        %4683 = vmatpush.bf16.msra.mxu0 %v2686
        %4684 = vmatpush.bf16.msra.mxu0 %v2682
        %4685 = vmatpush.bf16.msra.mxu0 %v2678
        %4686 = vmatpush.bf16.msra.mxu0 %v2674
        %4687 = vmatpush.bf16.msra.mxu0 %v2670
        %4688 = vmatmul.bf16.gmra.mxu0 %v1200
        %v4689 = vpop.f32.mrf.mxu0
        %v4690 = vadd.f32 %v4641, %v4689
        %v4691 = vpop.f32.mrf.mxu0
        %v4692 = vadd.f32 %v4643, %v4691
        %4693 = vmatmul.bf16.gmra.mxu0 %v1212
        %v4694 = vpop.f32.mrf.mxu0
        %v4695 = vadd.f32 %v4646, %v4694
        %v4696 = vpop.f32.mrf.mxu0
        %v4697 = vadd.f32 %v4648, %v4696
        %4698 = vmatmul.bf16.gmra.mxu0 %v1224
        %v4699 = vpop.f32.mrf.mxu0
        %v4700 = vadd.f32 %v4651, %v4699
        %v4701 = vpop.f32.mrf.mxu0
        %v4702 = vadd.f32 %v4653, %v4701
        %4703 = vmatmul.bf16.gmra.mxu0 %v1236
        %v4704 = vpop.f32.mrf.mxu0
        %v4705 = vadd.f32 %v4656, %v4704
        %v4706 = vpop.f32.mrf.mxu0
        %v4707 = vadd.f32 %v4658, %v4706
        %4708 = vmatmul.bf16.gmra.mxu0 %v1248
        %v4709 = vpop.f32.mrf.mxu0
        %v4710 = vadd.f32 %v4661, %v4709
        %v4711 = vpop.f32.mrf.mxu0
        %v4712 = vadd.f32 %v4663, %v4711
        %4713 = vmatmul.bf16.gmra.mxu0 %v1260
        %v4714 = vpop.f32.mrf.mxu0
        %v4715 = vadd.f32 %v4666, %v4714
        %v4716 = vpop.f32.mrf.mxu0
        %v4717 = vadd.f32 %v4668, %v4716
        %4718 = vmatmul.bf16.gmra.mxu0 %v1272
        %v4719 = vpop.f32.mrf.mxu0
        %v4720 = vadd.f32 %v4671, %v4719
        %v4721 = vpop.f32.mrf.mxu0
        %v4722 = vadd.f32 %v4673, %v4721
        %4723 = vmatmul.bf16.gmra.mxu0 %v1284
        %v4724 = vpop.f32.mrf.mxu0
        %v4725 = vadd.f32 %v4676, %v4724
        %v4726 = vpop.f32.mrf.mxu0
        %v4727 = vadd.f32 %v4678, %v4726
        %4728 = vdwg.mxu0
        %4729 = vmatpush.bf16.msra.mxu0 %v2730
        %4730 = vmatpush.bf16.msra.mxu0 %v2726
        %4731 = vmatpush.bf16.msra.mxu0 %v2722
        %4732 = vmatpush.bf16.msra.mxu0 %v2718
        %4733 = vmatpush.bf16.msra.mxu0 %v2714
        %4734 = vmatpush.bf16.msra.mxu0 %v2710
        %4735 = vmatpush.bf16.msra.mxu0 %v2706
        %4736 = vmatpush.bf16.msra.mxu0 %v2702
        %4737 = vmatmul.bf16.gmra.mxu0 %v1201
        %v4738 = vpop.f32.mrf.mxu0
        %v4739 = vadd.f32 %v4690, %v4738
        %v4740 = vpop.f32.mrf.mxu0
        %v4741 = vadd.f32 %v4692, %v4740
        %4742 = vmatmul.bf16.gmra.mxu0 %v1213
        %v4743 = vpop.f32.mrf.mxu0
        %v4744 = vadd.f32 %v4695, %v4743
        %v4745 = vpop.f32.mrf.mxu0
        %v4746 = vadd.f32 %v4697, %v4745
        %4747 = vmatmul.bf16.gmra.mxu0 %v1225
        %v4748 = vpop.f32.mrf.mxu0
        %v4749 = vadd.f32 %v4700, %v4748
        %v4750 = vpop.f32.mrf.mxu0
        %v4751 = vadd.f32 %v4702, %v4750
        %4752 = vmatmul.bf16.gmra.mxu0 %v1237
        %v4753 = vpop.f32.mrf.mxu0
        %v4754 = vadd.f32 %v4705, %v4753
        %v4755 = vpop.f32.mrf.mxu0
        %v4756 = vadd.f32 %v4707, %v4755
        %4757 = vmatmul.bf16.gmra.mxu0 %v1249
        %v4758 = vpop.f32.mrf.mxu0
        %v4759 = vadd.f32 %v4710, %v4758
        %v4760 = vpop.f32.mrf.mxu0
        %v4761 = vadd.f32 %v4712, %v4760
        %4762 = vmatmul.bf16.gmra.mxu0 %v1261
        %v4763 = vpop.f32.mrf.mxu0
        %v4764 = vadd.f32 %v4715, %v4763
        %v4765 = vpop.f32.mrf.mxu0
        %v4766 = vadd.f32 %v4717, %v4765
        %4767 = vmatmul.bf16.gmra.mxu0 %v1273
        %v4768 = vpop.f32.mrf.mxu0
        %v4769 = vadd.f32 %v4720, %v4768
        %v4770 = vpop.f32.mrf.mxu0
        %v4771 = vadd.f32 %v4722, %v4770
        %4772 = vmatmul.bf16.gmra.mxu0 %v1285
        %v4773 = vpop.f32.mrf.mxu0
        %v4774 = vadd.f32 %v4725, %v4773
        %v4775 = vpop.f32.mrf.mxu0
        %v4776 = vadd.f32 %v4727, %v4775
        %4777 = vdwg.mxu0
        %4778 = vmatpush.bf16.msra.mxu0 %v2762
        %4779 = vmatpush.bf16.msra.mxu0 %v2758
        %4780 = vmatpush.bf16.msra.mxu0 %v2754
        %4781 = vmatpush.bf16.msra.mxu0 %v2750
        %4782 = vmatpush.bf16.msra.mxu0 %v2746
        %4783 = vmatpush.bf16.msra.mxu0 %v2742
        %4784 = vmatpush.bf16.msra.mxu0 %v2738
        %4785 = vmatpush.bf16.msra.mxu0 %v2734
        %4786 = vmatmul.bf16.gmra.mxu0 %v1202
        %v4787 = vpop.f32.mrf.mxu0
        %v4788 = vadd.f32 %v4739, %v4787
        %v4789 = vpop.f32.mrf.mxu0
        %v4790 = vadd.f32 %v4741, %v4789
        %4791 = vmatmul.bf16.gmra.mxu0 %v1214
        %v4792 = vpop.f32.mrf.mxu0
        %v4793 = vadd.f32 %v4744, %v4792
        %v4794 = vpop.f32.mrf.mxu0
        %v4795 = vadd.f32 %v4746, %v4794
        %4796 = vmatmul.bf16.gmra.mxu0 %v1226
        %v4797 = vpop.f32.mrf.mxu0
        %v4798 = vadd.f32 %v4749, %v4797
        %v4799 = vpop.f32.mrf.mxu0
        %v4800 = vadd.f32 %v4751, %v4799
        %4801 = vmatmul.bf16.gmra.mxu0 %v1238
        %v4802 = vpop.f32.mrf.mxu0
        %v4803 = vadd.f32 %v4754, %v4802
        %v4804 = vpop.f32.mrf.mxu0
        %v4805 = vadd.f32 %v4756, %v4804
        %4806 = vmatmul.bf16.gmra.mxu0 %v1250
        %v4807 = vpop.f32.mrf.mxu0
        %v4808 = vadd.f32 %v4759, %v4807
        %v4809 = vpop.f32.mrf.mxu0
        %v4810 = vadd.f32 %v4761, %v4809
        %4811 = vmatmul.bf16.gmra.mxu0 %v1262
        %v4812 = vpop.f32.mrf.mxu0
        %v4813 = vadd.f32 %v4764, %v4812
        %v4814 = vpop.f32.mrf.mxu0
        %v4815 = vadd.f32 %v4766, %v4814
        %4816 = vmatmul.bf16.gmra.mxu0 %v1274
        %v4817 = vpop.f32.mrf.mxu0
        %v4818 = vadd.f32 %v4769, %v4817
        %v4819 = vpop.f32.mrf.mxu0
        %v4820 = vadd.f32 %v4771, %v4819
        %4821 = vmatmul.bf16.gmra.mxu0 %v1286
        %v4822 = vpop.f32.mrf.mxu0
        %v4823 = vadd.f32 %v4774, %v4822
        %v4824 = vpop.f32.mrf.mxu0
        %v4825 = vadd.f32 %v4776, %v4824
        %4826 = vdwg.mxu0
        %4827 = vmatpush.bf16.msra.mxu0 %v2794
        %4828 = vmatpush.bf16.msra.mxu0 %v2790
        %4829 = vmatpush.bf16.msra.mxu0 %v2786
        %4830 = vmatpush.bf16.msra.mxu0 %v2782
        %4831 = vmatpush.bf16.msra.mxu0 %v2778
        %4832 = vmatpush.bf16.msra.mxu0 %v2774
        %4833 = vmatpush.bf16.msra.mxu0 %v2770
        %4834 = vmatpush.bf16.msra.mxu0 %v2766
        %4835 = vmatmul.bf16.gmra.mxu0 %v1203
        %v4836 = vpop.f32.mrf.mxu0
        %v4837 = vadd.f32 %v4788, %v4836
        %v4838 = vpop.f32.mrf.mxu0
        %v4839 = vadd.f32 %v4790, %v4838
        %4840 = vmatmul.bf16.gmra.mxu0 %v1215
        %v4841 = vpop.f32.mrf.mxu0
        %v4842 = vadd.f32 %v4793, %v4841
        %v4843 = vpop.f32.mrf.mxu0
        %v4844 = vadd.f32 %v4795, %v4843
        %4845 = vmatmul.bf16.gmra.mxu0 %v1227
        %v4846 = vpop.f32.mrf.mxu0
        %v4847 = vadd.f32 %v4798, %v4846
        %v4848 = vpop.f32.mrf.mxu0
        %v4849 = vadd.f32 %v4800, %v4848
        %4850 = vmatmul.bf16.gmra.mxu0 %v1239
        %v4851 = vpop.f32.mrf.mxu0
        %v4852 = vadd.f32 %v4803, %v4851
        %v4853 = vpop.f32.mrf.mxu0
        %v4854 = vadd.f32 %v4805, %v4853
        %4855 = vmatmul.bf16.gmra.mxu0 %v1251
        %v4856 = vpop.f32.mrf.mxu0
        %v4857 = vadd.f32 %v4808, %v4856
        %v4858 = vpop.f32.mrf.mxu0
        %v4859 = vadd.f32 %v4810, %v4858
        %4860 = vmatmul.bf16.gmra.mxu0 %v1263
        %v4861 = vpop.f32.mrf.mxu0
        %v4862 = vadd.f32 %v4813, %v4861
        %v4863 = vpop.f32.mrf.mxu0
        %v4864 = vadd.f32 %v4815, %v4863
        %4865 = vmatmul.bf16.gmra.mxu0 %v1275
        %v4866 = vpop.f32.mrf.mxu0
        %v4867 = vadd.f32 %v4818, %v4866
        %v4868 = vpop.f32.mrf.mxu0
        %v4869 = vadd.f32 %v4820, %v4868
        %4870 = vmatmul.bf16.gmra.mxu0 %v1287
        %v4871 = vpop.f32.mrf.mxu0
        %v4872 = vadd.f32 %v4823, %v4871
        %v4873 = vpop.f32.mrf.mxu0
        %v4874 = vadd.f32 %v4825, %v4873
        %4875 = vdwg.mxu0
        %4876 = vmatpush.bf16.msra.mxu0 %v2826
        %4877 = vmatpush.bf16.msra.mxu0 %v2822
        %4878 = vmatpush.bf16.msra.mxu0 %v2818
        %4879 = vmatpush.bf16.msra.mxu0 %v2814
        %4880 = vmatpush.bf16.msra.mxu0 %v2810
        %4881 = vmatpush.bf16.msra.mxu0 %v2806
        %4882 = vmatpush.bf16.msra.mxu0 %v2802
        %4883 = vmatpush.bf16.msra.mxu0 %v2798
        %4884 = vmatmul.bf16.gmra.mxu0 %v1204
        %v4885 = vpop.f32.mrf.mxu0
        %v4886 = vadd.f32 %v4837, %v4885
        %v4887 = vpop.f32.mrf.mxu0
        %v4888 = vadd.f32 %v4839, %v4887
        %4889 = vmatmul.bf16.gmra.mxu0 %v1216
        %v4890 = vpop.f32.mrf.mxu0
        %v4891 = vadd.f32 %v4842, %v4890
        %v4892 = vpop.f32.mrf.mxu0
        %v4893 = vadd.f32 %v4844, %v4892
        %4894 = vmatmul.bf16.gmra.mxu0 %v1228
        %v4895 = vpop.f32.mrf.mxu0
        %v4896 = vadd.f32 %v4847, %v4895
        %v4897 = vpop.f32.mrf.mxu0
        %v4898 = vadd.f32 %v4849, %v4897
        %4899 = vmatmul.bf16.gmra.mxu0 %v1240
        %v4900 = vpop.f32.mrf.mxu0
        %v4901 = vadd.f32 %v4852, %v4900
        %v4902 = vpop.f32.mrf.mxu0
        %v4903 = vadd.f32 %v4854, %v4902
        %4904 = vmatmul.bf16.gmra.mxu0 %v1252
        %v4905 = vpop.f32.mrf.mxu0
        %v4906 = vadd.f32 %v4857, %v4905
        %v4907 = vpop.f32.mrf.mxu0
        %v4908 = vadd.f32 %v4859, %v4907
        %4909 = vmatmul.bf16.gmra.mxu0 %v1264
        %v4910 = vpop.f32.mrf.mxu0
        %v4911 = vadd.f32 %v4862, %v4910
        %v4912 = vpop.f32.mrf.mxu0
        %v4913 = vadd.f32 %v4864, %v4912
        %4914 = vmatmul.bf16.gmra.mxu0 %v1276
        %v4915 = vpop.f32.mrf.mxu0
        %v4916 = vadd.f32 %v4867, %v4915
        %v4917 = vpop.f32.mrf.mxu0
        %v4918 = vadd.f32 %v4869, %v4917
        %4919 = vmatmul.bf16.gmra.mxu0 %v1288
        %v4920 = vpop.f32.mrf.mxu0
        %v4921 = vadd.f32 %v4872, %v4920
        %v4922 = vpop.f32.mrf.mxu0
        %v4923 = vadd.f32 %v4874, %v4922
        %4924 = vdwg.mxu0
        %4925 = vmatpush.bf16.msra.mxu0 %v2858
        %4926 = vmatpush.bf16.msra.mxu0 %v2854
        %4927 = vmatpush.bf16.msra.mxu0 %v2850
        %4928 = vmatpush.bf16.msra.mxu0 %v2846
        %4929 = vmatpush.bf16.msra.mxu0 %v2842
        %4930 = vmatpush.bf16.msra.mxu0 %v2838
        %4931 = vmatpush.bf16.msra.mxu0 %v2834
        %4932 = vmatpush.bf16.msra.mxu0 %v2830
        %4933 = vmatmul.bf16.gmra.mxu0 %v1205
        %v4934 = vpop.f32.mrf.mxu0
        %v4935 = vadd.f32 %v4886, %v4934
        %v4936 = vpop.f32.mrf.mxu0
        %v4937 = vadd.f32 %v4888, %v4936
        %4938 = vmatmul.bf16.gmra.mxu0 %v1217
        %v4939 = vpop.f32.mrf.mxu0
        %v4940 = vadd.f32 %v4891, %v4939
        %v4941 = vpop.f32.mrf.mxu0
        %v4942 = vadd.f32 %v4893, %v4941
        %4943 = vmatmul.bf16.gmra.mxu0 %v1229
        %v4944 = vpop.f32.mrf.mxu0
        %v4945 = vadd.f32 %v4896, %v4944
        %v4946 = vpop.f32.mrf.mxu0
        %v4947 = vadd.f32 %v4898, %v4946
        %4948 = vmatmul.bf16.gmra.mxu0 %v1241
        %v4949 = vpop.f32.mrf.mxu0
        %v4950 = vadd.f32 %v4901, %v4949
        %v4951 = vpop.f32.mrf.mxu0
        %v4952 = vadd.f32 %v4903, %v4951
        %4953 = vmatmul.bf16.gmra.mxu0 %v1253
        %v4954 = vpop.f32.mrf.mxu0
        %v4955 = vadd.f32 %v4906, %v4954
        %v4956 = vpop.f32.mrf.mxu0
        %v4957 = vadd.f32 %v4908, %v4956
        %4958 = vmatmul.bf16.gmra.mxu0 %v1265
        %v4959 = vpop.f32.mrf.mxu0
        %v4960 = vadd.f32 %v4911, %v4959
        %v4961 = vpop.f32.mrf.mxu0
        %v4962 = vadd.f32 %v4913, %v4961
        %4963 = vmatmul.bf16.gmra.mxu0 %v1277
        %v4964 = vpop.f32.mrf.mxu0
        %v4965 = vadd.f32 %v4916, %v4964
        %v4966 = vpop.f32.mrf.mxu0
        %v4967 = vadd.f32 %v4918, %v4966
        %4968 = vmatmul.bf16.gmra.mxu0 %v1289
        %v4969 = vpop.f32.mrf.mxu0
        %v4970 = vadd.f32 %v4921, %v4969
        %v4971 = vpop.f32.mrf.mxu0
        %v4972 = vadd.f32 %v4923, %v4971
        %4973 = vdwg.mxu0
        %4974 = vmatpush.bf16.msra.mxu0 %v2890
        %4975 = vmatpush.bf16.msra.mxu0 %v2886
        %4976 = vmatpush.bf16.msra.mxu0 %v2882
        %4977 = vmatpush.bf16.msra.mxu0 %v2878
        %4978 = vmatpush.bf16.msra.mxu0 %v2874
        %4979 = vmatpush.bf16.msra.mxu0 %v2870
        %4980 = vmatpush.bf16.msra.mxu0 %v2866
        %4981 = vmatpush.bf16.msra.mxu0 %v2862
        %4982 = vmatmul.bf16.gmra.mxu0 %v1206
        %v4983 = vpop.f32.mrf.mxu0
        %v4984 = vadd.f32 %v4935, %v4983
        %v4985 = vpop.f32.mrf.mxu0
        %v4986 = vadd.f32 %v4937, %v4985
        %4987 = vmatmul.bf16.gmra.mxu0 %v1218
        %v4988 = vpop.f32.mrf.mxu0
        %v4989 = vadd.f32 %v4940, %v4988
        %v4990 = vpop.f32.mrf.mxu0
        %v4991 = vadd.f32 %v4942, %v4990
        %4992 = vmatmul.bf16.gmra.mxu0 %v1230
        %v4993 = vpop.f32.mrf.mxu0
        %v4994 = vadd.f32 %v4945, %v4993
        %v4995 = vpop.f32.mrf.mxu0
        %v4996 = vadd.f32 %v4947, %v4995
        %4997 = vmatmul.bf16.gmra.mxu0 %v1242
        %v4998 = vpop.f32.mrf.mxu0
        %v4999 = vadd.f32 %v4950, %v4998
        %v5000 = vpop.f32.mrf.mxu0
        %v5001 = vadd.f32 %v4952, %v5000
        %5002 = vmatmul.bf16.gmra.mxu0 %v1254
        %v5003 = vpop.f32.mrf.mxu0
        %v5004 = vadd.f32 %v4955, %v5003
        %v5005 = vpop.f32.mrf.mxu0
        %v5006 = vadd.f32 %v4957, %v5005
        %5007 = vmatmul.bf16.gmra.mxu0 %v1266
        %v5008 = vpop.f32.mrf.mxu0
        %v5009 = vadd.f32 %v4960, %v5008
        %v5010 = vpop.f32.mrf.mxu0
        %v5011 = vadd.f32 %v4962, %v5010
        %5012 = vmatmul.bf16.gmra.mxu0 %v1278
        %v5013 = vpop.f32.mrf.mxu0
        %v5014 = vadd.f32 %v4965, %v5013
        %v5015 = vpop.f32.mrf.mxu0
        %v5016 = vadd.f32 %v4967, %v5015
        %5017 = vmatmul.bf16.gmra.mxu0 %v1290
        %v5018 = vpop.f32.mrf.mxu0
        %v5019 = vadd.f32 %v4970, %v5018
        %v5020 = vpop.f32.mrf.mxu0
        %v5021 = vadd.f32 %v4972, %v5020
        %5022 = vdwg.mxu0
        %5023 = vmatpush.bf16.msra.mxu0 %v2922
        %5024 = vmatpush.bf16.msra.mxu0 %v2918
        %5025 = vmatpush.bf16.msra.mxu0 %v2914
        %5026 = vmatpush.bf16.msra.mxu0 %v2910
        %5027 = vmatpush.bf16.msra.mxu0 %v2906
        %5028 = vmatpush.bf16.msra.mxu0 %v2902
        %5029 = vmatpush.bf16.msra.mxu0 %v2898
        %5030 = vmatpush.bf16.msra.mxu0 %v2894
        %5031 = vmatmul.bf16.gmra.mxu0 %v1207
        %v5032 = vpop.f32.mrf.mxu0
        %v5033 = vadd.f32 %v4984, %v5032
        %v5034 = vpop.f32.mrf.mxu0
        %v5035 = vadd.f32 %v4986, %v5034
        %5036 = vmatmul.bf16.gmra.mxu0 %v1219
        %v5037 = vpop.f32.mrf.mxu0
        %v5038 = vadd.f32 %v4989, %v5037
        %v5039 = vpop.f32.mrf.mxu0
        %v5040 = vadd.f32 %v4991, %v5039
        %5041 = vmatmul.bf16.gmra.mxu0 %v1231
        %v5042 = vpop.f32.mrf.mxu0
        %v5043 = vadd.f32 %v4994, %v5042
        %v5044 = vpop.f32.mrf.mxu0
        %v5045 = vadd.f32 %v4996, %v5044
        %5046 = vmatmul.bf16.gmra.mxu0 %v1243
        %v5047 = vpop.f32.mrf.mxu0
        %v5048 = vadd.f32 %v4999, %v5047
        %v5049 = vpop.f32.mrf.mxu0
        %v5050 = vadd.f32 %v5001, %v5049
        %5051 = vmatmul.bf16.gmra.mxu0 %v1255
        %v5052 = vpop.f32.mrf.mxu0
        %v5053 = vadd.f32 %v5004, %v5052
        %v5054 = vpop.f32.mrf.mxu0
        %v5055 = vadd.f32 %v5006, %v5054
        %5056 = vmatmul.bf16.gmra.mxu0 %v1267
        %v5057 = vpop.f32.mrf.mxu0
        %v5058 = vadd.f32 %v5009, %v5057
        %v5059 = vpop.f32.mrf.mxu0
        %v5060 = vadd.f32 %v5011, %v5059
        %5061 = vmatmul.bf16.gmra.mxu0 %v1279
        %v5062 = vpop.f32.mrf.mxu0
        %v5063 = vadd.f32 %v5014, %v5062
        %v5064 = vpop.f32.mrf.mxu0
        %v5065 = vadd.f32 %v5016, %v5064
        %5066 = vmatmul.bf16.gmra.mxu0 %v1291
        %v5067 = vpop.f32.mrf.mxu0
        %v5068 = vadd.f32 %v5019, %v5067
        %v5069 = vpop.f32.mrf.mxu0
        %v5070 = vadd.f32 %v5021, %v5069
        %5071 = vdwg.mxu0
        %5072 = vmatpush.bf16.msra.mxu0 %v2571
        %5073 = vmatpush.bf16.msra.mxu0 %v2567
        %5074 = vmatpush.bf16.msra.mxu0 %v2563
        %5075 = vmatpush.bf16.msra.mxu0 %v2559
        %5076 = vmatpush.bf16.msra.mxu0 %v2555
        %5077 = vmatpush.bf16.msra.mxu0 %v2551
        %5078 = vmatpush.bf16.msra.mxu0 %v2547
        %5079 = vmatpush.bf16.msra.mxu0 %v2543
        %5080 = vmatmul.bf16.gmra.mxu0 %v1196
        %v5081 = vpop.f32.mrf.mxu0
        %v5082 = vadd.f32 0.0, %v5081
        %v5083 = vpop.f32.mrf.mxu0
        %v5084 = vadd.f32 0.0, %v5083
        %5085 = vmatmul.bf16.gmra.mxu0 %v1208
        %v5086 = vpop.f32.mrf.mxu0
        %v5087 = vadd.f32 0.0, %v5086
        %v5088 = vpop.f32.mrf.mxu0
        %v5089 = vadd.f32 0.0, %v5088
        %5090 = vmatmul.bf16.gmra.mxu0 %v1220
        %v5091 = vpop.f32.mrf.mxu0
        %v5092 = vadd.f32 0.0, %v5091
        %v5093 = vpop.f32.mrf.mxu0
        %v5094 = vadd.f32 0.0, %v5093
        %5095 = vmatmul.bf16.gmra.mxu0 %v1232
        %v5096 = vpop.f32.mrf.mxu0
        %v5097 = vadd.f32 0.0, %v5096
        %v5098 = vpop.f32.mrf.mxu0
        %v5099 = vadd.f32 0.0, %v5098
        %5100 = vmatmul.bf16.gmra.mxu0 %v1244
        %v5101 = vpop.f32.mrf.mxu0
        %v5102 = vadd.f32 0.0, %v5101
        %v5103 = vpop.f32.mrf.mxu0
        %v5104 = vadd.f32 0.0, %v5103
        %5105 = vmatmul.bf16.gmra.mxu0 %v1256
        %v5106 = vpop.f32.mrf.mxu0
        %v5107 = vadd.f32 0.0, %v5106
        %v5108 = vpop.f32.mrf.mxu0
        %v5109 = vadd.f32 0.0, %v5108
        %5110 = vmatmul.bf16.gmra.mxu0 %v1268
        %v5111 = vpop.f32.mrf.mxu0
        %v5112 = vadd.f32 0.0, %v5111
        %v5113 = vpop.f32.mrf.mxu0
        %v5114 = vadd.f32 0.0, %v5113
        %5115 = vmatmul.bf16.gmra.mxu0 %v1280
        %v5116 = vpop.f32.mrf.mxu0
        %v5117 = vadd.f32 0.0, %v5116
        %v5118 = vpop.f32.mrf.mxu0
        %v5119 = vadd.f32 0.0, %v5118
        %5120 = vdwg.mxu0
        %5121 = vmatpush.bf16.msra.mxu0 %v2603
        %5122 = vmatpush.bf16.msra.mxu0 %v2599
        %5123 = vmatpush.bf16.msra.mxu0 %v2595
        %5124 = vmatpush.bf16.msra.mxu0 %v2591
        %5125 = vmatpush.bf16.msra.mxu0 %v2587
        %5126 = vmatpush.bf16.msra.mxu0 %v2583
        %5127 = vmatpush.bf16.msra.mxu0 %v2579
        %5128 = vmatpush.bf16.msra.mxu0 %v2575
        %5129 = vmatmul.bf16.gmra.mxu0 %v1197
        %v5130 = vpop.f32.mrf.mxu0
        %v5131 = vadd.f32 %v5082, %v5130
        %v5132 = vpop.f32.mrf.mxu0
        %v5133 = vadd.f32 %v5084, %v5132
        %5134 = vmatmul.bf16.gmra.mxu0 %v1209
        %v5135 = vpop.f32.mrf.mxu0
        %v5136 = vadd.f32 %v5087, %v5135
        %v5137 = vpop.f32.mrf.mxu0
        %v5138 = vadd.f32 %v5089, %v5137
        %5139 = vmatmul.bf16.gmra.mxu0 %v1221
        %v5140 = vpop.f32.mrf.mxu0
        %v5141 = vadd.f32 %v5092, %v5140
        %v5142 = vpop.f32.mrf.mxu0
        %v5143 = vadd.f32 %v5094, %v5142
        %5144 = vmatmul.bf16.gmra.mxu0 %v1233
        %v5145 = vpop.f32.mrf.mxu0
        %v5146 = vadd.f32 %v5097, %v5145
        %v5147 = vpop.f32.mrf.mxu0
        %v5148 = vadd.f32 %v5099, %v5147
        %5149 = vmatmul.bf16.gmra.mxu0 %v1245
        %v5150 = vpop.f32.mrf.mxu0
        %v5151 = vadd.f32 %v5102, %v5150
        %v5152 = vpop.f32.mrf.mxu0
        %v5153 = vadd.f32 %v5104, %v5152
        %5154 = vmatmul.bf16.gmra.mxu0 %v1257
        %v5155 = vpop.f32.mrf.mxu0
        %v5156 = vadd.f32 %v5107, %v5155
        %v5157 = vpop.f32.mrf.mxu0
        %v5158 = vadd.f32 %v5109, %v5157
        %5159 = vmatmul.bf16.gmra.mxu0 %v1269
        %v5160 = vpop.f32.mrf.mxu0
        %v5161 = vadd.f32 %v5112, %v5160
        %v5162 = vpop.f32.mrf.mxu0
        %v5163 = vadd.f32 %v5114, %v5162
        %5164 = vmatmul.bf16.gmra.mxu0 %v1281
        %v5165 = vpop.f32.mrf.mxu0
        %v5166 = vadd.f32 %v5117, %v5165
        %v5167 = vpop.f32.mrf.mxu0
        %v5168 = vadd.f32 %v5119, %v5167
        %5169 = vdwg.mxu0
        %5170 = vmatpush.bf16.msra.mxu0 %v2635
        %5171 = vmatpush.bf16.msra.mxu0 %v2631
        %5172 = vmatpush.bf16.msra.mxu0 %v2627
        %5173 = vmatpush.bf16.msra.mxu0 %v2623
        %5174 = vmatpush.bf16.msra.mxu0 %v2619
        %5175 = vmatpush.bf16.msra.mxu0 %v2615
        %5176 = vmatpush.bf16.msra.mxu0 %v2611
        %5177 = vmatpush.bf16.msra.mxu0 %v2607
        %5178 = vmatmul.bf16.gmra.mxu0 %v1198
        %v5179 = vpop.f32.mrf.mxu0
        %v5180 = vadd.f32 %v5131, %v5179
        %v5181 = vpop.f32.mrf.mxu0
        %v5182 = vadd.f32 %v5133, %v5181
        %5183 = vmatmul.bf16.gmra.mxu0 %v1210
        %v5184 = vpop.f32.mrf.mxu0
        %v5185 = vadd.f32 %v5136, %v5184
        %v5186 = vpop.f32.mrf.mxu0
        %v5187 = vadd.f32 %v5138, %v5186
        %5188 = vmatmul.bf16.gmra.mxu0 %v1222
        %v5189 = vpop.f32.mrf.mxu0
        %v5190 = vadd.f32 %v5141, %v5189
        %v5191 = vpop.f32.mrf.mxu0
        %v5192 = vadd.f32 %v5143, %v5191
        %5193 = vmatmul.bf16.gmra.mxu0 %v1234
        %v5194 = vpop.f32.mrf.mxu0
        %v5195 = vadd.f32 %v5146, %v5194
        %v5196 = vpop.f32.mrf.mxu0
        %v5197 = vadd.f32 %v5148, %v5196
        %5198 = vmatmul.bf16.gmra.mxu0 %v1246
        %v5199 = vpop.f32.mrf.mxu0
        %v5200 = vadd.f32 %v5151, %v5199
        %v5201 = vpop.f32.mrf.mxu0
        %v5202 = vadd.f32 %v5153, %v5201
        %5203 = vmatmul.bf16.gmra.mxu0 %v1258
        %v5204 = vpop.f32.mrf.mxu0
        %v5205 = vadd.f32 %v5156, %v5204
        %v5206 = vpop.f32.mrf.mxu0
        %v5207 = vadd.f32 %v5158, %v5206
        %5208 = vmatmul.bf16.gmra.mxu0 %v1270
        %v5209 = vpop.f32.mrf.mxu0
        %v5210 = vadd.f32 %v5161, %v5209
        %v5211 = vpop.f32.mrf.mxu0
        %v5212 = vadd.f32 %v5163, %v5211
        %5213 = vmatmul.bf16.gmra.mxu0 %v1282
        %v5214 = vpop.f32.mrf.mxu0
        %v5215 = vadd.f32 %v5166, %v5214
        %v5216 = vpop.f32.mrf.mxu0
        %v5217 = vadd.f32 %v5168, %v5216
        %5218 = vdwg.mxu0
        %5219 = vmatpush.bf16.msra.mxu0 %v2667
        %5220 = vmatpush.bf16.msra.mxu0 %v2663
        %5221 = vmatpush.bf16.msra.mxu0 %v2659
        %5222 = vmatpush.bf16.msra.mxu0 %v2655
        %5223 = vmatpush.bf16.msra.mxu0 %v2651
        %5224 = vmatpush.bf16.msra.mxu0 %v2647
        %5225 = vmatpush.bf16.msra.mxu0 %v2643
        %5226 = vmatpush.bf16.msra.mxu0 %v2639
        %5227 = vmatmul.bf16.gmra.mxu0 %v1199
        %v5228 = vpop.f32.mrf.mxu0
        %v5229 = vadd.f32 %v5180, %v5228
        %v5230 = vpop.f32.mrf.mxu0
        %v5231 = vadd.f32 %v5182, %v5230
        %5232 = vmatmul.bf16.gmra.mxu0 %v1211
        %v5233 = vpop.f32.mrf.mxu0
        %v5234 = vadd.f32 %v5185, %v5233
        %v5235 = vpop.f32.mrf.mxu0
        %v5236 = vadd.f32 %v5187, %v5235
        %5237 = vmatmul.bf16.gmra.mxu0 %v1223
        %v5238 = vpop.f32.mrf.mxu0
        %v5239 = vadd.f32 %v5190, %v5238
        %v5240 = vpop.f32.mrf.mxu0
        %v5241 = vadd.f32 %v5192, %v5240
        %5242 = vmatmul.bf16.gmra.mxu0 %v1235
        %v5243 = vpop.f32.mrf.mxu0
        %v5244 = vadd.f32 %v5195, %v5243
        %v5245 = vpop.f32.mrf.mxu0
        %v5246 = vadd.f32 %v5197, %v5245
        %5247 = vmatmul.bf16.gmra.mxu0 %v1247
        %v5248 = vpop.f32.mrf.mxu0
        %v5249 = vadd.f32 %v5200, %v5248
        %v5250 = vpop.f32.mrf.mxu0
        %v5251 = vadd.f32 %v5202, %v5250
        %5252 = vmatmul.bf16.gmra.mxu0 %v1259
        %v5253 = vpop.f32.mrf.mxu0
        %v5254 = vadd.f32 %v5205, %v5253
        %v5255 = vpop.f32.mrf.mxu0
        %v5256 = vadd.f32 %v5207, %v5255
        %5257 = vmatmul.bf16.gmra.mxu0 %v1271
        %v5258 = vpop.f32.mrf.mxu0
        %v5259 = vadd.f32 %v5210, %v5258
        %v5260 = vpop.f32.mrf.mxu0
        %v5261 = vadd.f32 %v5212, %v5260
        %5262 = vmatmul.bf16.gmra.mxu0 %v1283
        %v5263 = vpop.f32.mrf.mxu0
        %v5264 = vadd.f32 %v5215, %v5263
        %v5265 = vpop.f32.mrf.mxu0
        %v5266 = vadd.f32 %v5217, %v5265
        %5267 = vdwg.mxu0
        %5268 = vmatpush.bf16.msra.mxu0 %v2699
        %5269 = vmatpush.bf16.msra.mxu0 %v2695
        %5270 = vmatpush.bf16.msra.mxu0 %v2691
        %5271 = vmatpush.bf16.msra.mxu0 %v2687
        %5272 = vmatpush.bf16.msra.mxu0 %v2683
        %5273 = vmatpush.bf16.msra.mxu0 %v2679
        %5274 = vmatpush.bf16.msra.mxu0 %v2675
        %5275 = vmatpush.bf16.msra.mxu0 %v2671
        %5276 = vmatmul.bf16.gmra.mxu0 %v1200
        %v5277 = vpop.f32.mrf.mxu0
        %v5278 = vadd.f32 %v5229, %v5277
        %v5279 = vpop.f32.mrf.mxu0
        %v5280 = vadd.f32 %v5231, %v5279
        %5281 = vmatmul.bf16.gmra.mxu0 %v1212
        %v5282 = vpop.f32.mrf.mxu0
        %v5283 = vadd.f32 %v5234, %v5282
        %v5284 = vpop.f32.mrf.mxu0
        %v5285 = vadd.f32 %v5236, %v5284
        %5286 = vmatmul.bf16.gmra.mxu0 %v1224
        %v5287 = vpop.f32.mrf.mxu0
        %v5288 = vadd.f32 %v5239, %v5287
        %v5289 = vpop.f32.mrf.mxu0
        %v5290 = vadd.f32 %v5241, %v5289
        %5291 = vmatmul.bf16.gmra.mxu0 %v1236
        %v5292 = vpop.f32.mrf.mxu0
        %v5293 = vadd.f32 %v5244, %v5292
        %v5294 = vpop.f32.mrf.mxu0
        %v5295 = vadd.f32 %v5246, %v5294
        %5296 = vmatmul.bf16.gmra.mxu0 %v1248
        %v5297 = vpop.f32.mrf.mxu0
        %v5298 = vadd.f32 %v5249, %v5297
        %v5299 = vpop.f32.mrf.mxu0
        %v5300 = vadd.f32 %v5251, %v5299
        %5301 = vmatmul.bf16.gmra.mxu0 %v1260
        %v5302 = vpop.f32.mrf.mxu0
        %v5303 = vadd.f32 %v5254, %v5302
        %v5304 = vpop.f32.mrf.mxu0
        %v5305 = vadd.f32 %v5256, %v5304
        %5306 = vmatmul.bf16.gmra.mxu0 %v1272
        %v5307 = vpop.f32.mrf.mxu0
        %v5308 = vadd.f32 %v5259, %v5307
        %v5309 = vpop.f32.mrf.mxu0
        %v5310 = vadd.f32 %v5261, %v5309
        %5311 = vmatmul.bf16.gmra.mxu0 %v1284
        %v5312 = vpop.f32.mrf.mxu0
        %v5313 = vadd.f32 %v5264, %v5312
        %v5314 = vpop.f32.mrf.mxu0
        %v5315 = vadd.f32 %v5266, %v5314
        %5316 = vdwg.mxu0
        %5317 = vmatpush.bf16.msra.mxu0 %v2731
        %5318 = vmatpush.bf16.msra.mxu0 %v2727
        %5319 = vmatpush.bf16.msra.mxu0 %v2723
        %5320 = vmatpush.bf16.msra.mxu0 %v2719
        %5321 = vmatpush.bf16.msra.mxu0 %v2715
        %5322 = vmatpush.bf16.msra.mxu0 %v2711
        %5323 = vmatpush.bf16.msra.mxu0 %v2707
        %5324 = vmatpush.bf16.msra.mxu0 %v2703
        %5325 = vmatmul.bf16.gmra.mxu0 %v1201
        %v5326 = vpop.f32.mrf.mxu0
        %v5327 = vadd.f32 %v5278, %v5326
        %v5328 = vpop.f32.mrf.mxu0
        %v5329 = vadd.f32 %v5280, %v5328
        %5330 = vmatmul.bf16.gmra.mxu0 %v1213
        %v5331 = vpop.f32.mrf.mxu0
        %v5332 = vadd.f32 %v5283, %v5331
        %v5333 = vpop.f32.mrf.mxu0
        %v5334 = vadd.f32 %v5285, %v5333
        %5335 = vmatmul.bf16.gmra.mxu0 %v1225
        %v5336 = vpop.f32.mrf.mxu0
        %v5337 = vadd.f32 %v5288, %v5336
        %v5338 = vpop.f32.mrf.mxu0
        %v5339 = vadd.f32 %v5290, %v5338
        %5340 = vmatmul.bf16.gmra.mxu0 %v1237
        %v5341 = vpop.f32.mrf.mxu0
        %v5342 = vadd.f32 %v5293, %v5341
        %v5343 = vpop.f32.mrf.mxu0
        %v5344 = vadd.f32 %v5295, %v5343
        %5345 = vmatmul.bf16.gmra.mxu0 %v1249
        %v5346 = vpop.f32.mrf.mxu0
        %v5347 = vadd.f32 %v5298, %v5346
        %v5348 = vpop.f32.mrf.mxu0
        %v5349 = vadd.f32 %v5300, %v5348
        %5350 = vmatmul.bf16.gmra.mxu0 %v1261
        %v5351 = vpop.f32.mrf.mxu0
        %v5352 = vadd.f32 %v5303, %v5351
        %v5353 = vpop.f32.mrf.mxu0
        %v5354 = vadd.f32 %v5305, %v5353
        %5355 = vmatmul.bf16.gmra.mxu0 %v1273
        %v5356 = vpop.f32.mrf.mxu0
        %v5357 = vadd.f32 %v5308, %v5356
        %v5358 = vpop.f32.mrf.mxu0
        %v5359 = vadd.f32 %v5310, %v5358
        %5360 = vmatmul.bf16.gmra.mxu0 %v1285
        %v5361 = vpop.f32.mrf.mxu0
        %v5362 = vadd.f32 %v5313, %v5361
        %v5363 = vpop.f32.mrf.mxu0
        %v5364 = vadd.f32 %v5315, %v5363
        %5365 = vdwg.mxu0
        %5366 = vmatpush.bf16.msra.mxu0 %v2763
        %5367 = vmatpush.bf16.msra.mxu0 %v2759
        %5368 = vmatpush.bf16.msra.mxu0 %v2755
        %5369 = vmatpush.bf16.msra.mxu0 %v2751
        %5370 = vmatpush.bf16.msra.mxu0 %v2747
        %5371 = vmatpush.bf16.msra.mxu0 %v2743
        %5372 = vmatpush.bf16.msra.mxu0 %v2739
        %5373 = vmatpush.bf16.msra.mxu0 %v2735
        %5374 = vmatmul.bf16.gmra.mxu0 %v1202
        %v5375 = vpop.f32.mrf.mxu0
        %v5376 = vadd.f32 %v5327, %v5375
        %v5377 = vpop.f32.mrf.mxu0
        %v5378 = vadd.f32 %v5329, %v5377
        %5379 = vmatmul.bf16.gmra.mxu0 %v1214
        %v5380 = vpop.f32.mrf.mxu0
        %v5381 = vadd.f32 %v5332, %v5380
        %v5382 = vpop.f32.mrf.mxu0
        %v5383 = vadd.f32 %v5334, %v5382
        %5384 = vmatmul.bf16.gmra.mxu0 %v1226
        %v5385 = vpop.f32.mrf.mxu0
        %v5386 = vadd.f32 %v5337, %v5385
        %v5387 = vpop.f32.mrf.mxu0
        %v5388 = vadd.f32 %v5339, %v5387
        %5389 = vmatmul.bf16.gmra.mxu0 %v1238
        %v5390 = vpop.f32.mrf.mxu0
        %v5391 = vadd.f32 %v5342, %v5390
        %v5392 = vpop.f32.mrf.mxu0
        %v5393 = vadd.f32 %v5344, %v5392
        %5394 = vmatmul.bf16.gmra.mxu0 %v1250
        %v5395 = vpop.f32.mrf.mxu0
        %v5396 = vadd.f32 %v5347, %v5395
        %v5397 = vpop.f32.mrf.mxu0
        %v5398 = vadd.f32 %v5349, %v5397
        %5399 = vmatmul.bf16.gmra.mxu0 %v1262
        %v5400 = vpop.f32.mrf.mxu0
        %v5401 = vadd.f32 %v5352, %v5400
        %v5402 = vpop.f32.mrf.mxu0
        %v5403 = vadd.f32 %v5354, %v5402
        %5404 = vmatmul.bf16.gmra.mxu0 %v1274
        %v5405 = vpop.f32.mrf.mxu0
        %v5406 = vadd.f32 %v5357, %v5405
        %v5407 = vpop.f32.mrf.mxu0
        %v5408 = vadd.f32 %v5359, %v5407
        %5409 = vmatmul.bf16.gmra.mxu0 %v1286
        %v5410 = vpop.f32.mrf.mxu0
        %v5411 = vadd.f32 %v5362, %v5410
        %v5412 = vpop.f32.mrf.mxu0
        %v5413 = vadd.f32 %v5364, %v5412
        %5414 = vdwg.mxu0
        %5415 = vmatpush.bf16.msra.mxu0 %v2795
        %5416 = vmatpush.bf16.msra.mxu0 %v2791
        %5417 = vmatpush.bf16.msra.mxu0 %v2787
        %5418 = vmatpush.bf16.msra.mxu0 %v2783
        %5419 = vmatpush.bf16.msra.mxu0 %v2779
        %5420 = vmatpush.bf16.msra.mxu0 %v2775
        %5421 = vmatpush.bf16.msra.mxu0 %v2771
        %5422 = vmatpush.bf16.msra.mxu0 %v2767
        %5423 = vmatmul.bf16.gmra.mxu0 %v1203
        %v5424 = vpop.f32.mrf.mxu0
        %v5425 = vadd.f32 %v5376, %v5424
        %v5426 = vpop.f32.mrf.mxu0
        %v5427 = vadd.f32 %v5378, %v5426
        %5428 = vmatmul.bf16.gmra.mxu0 %v1215
        %v5429 = vpop.f32.mrf.mxu0
        %v5430 = vadd.f32 %v5381, %v5429
        %v5431 = vpop.f32.mrf.mxu0
        %v5432 = vadd.f32 %v5383, %v5431
        %5433 = vmatmul.bf16.gmra.mxu0 %v1227
        %v5434 = vpop.f32.mrf.mxu0
        %v5435 = vadd.f32 %v5386, %v5434
        %v5436 = vpop.f32.mrf.mxu0
        %v5437 = vadd.f32 %v5388, %v5436
        %5438 = vmatmul.bf16.gmra.mxu0 %v1239
        %v5439 = vpop.f32.mrf.mxu0
        %v5440 = vadd.f32 %v5391, %v5439
        %v5441 = vpop.f32.mrf.mxu0
        %v5442 = vadd.f32 %v5393, %v5441
        %5443 = vmatmul.bf16.gmra.mxu0 %v1251
        %v5444 = vpop.f32.mrf.mxu0
        %v5445 = vadd.f32 %v5396, %v5444
        %v5446 = vpop.f32.mrf.mxu0
        %v5447 = vadd.f32 %v5398, %v5446
        %5448 = vmatmul.bf16.gmra.mxu0 %v1263
        %v5449 = vpop.f32.mrf.mxu0
        %v5450 = vadd.f32 %v5401, %v5449
        %v5451 = vpop.f32.mrf.mxu0
        %v5452 = vadd.f32 %v5403, %v5451
        %5453 = vmatmul.bf16.gmra.mxu0 %v1275
        %v5454 = vpop.f32.mrf.mxu0
        %v5455 = vadd.f32 %v5406, %v5454
        %v5456 = vpop.f32.mrf.mxu0
        %v5457 = vadd.f32 %v5408, %v5456
        %5458 = vmatmul.bf16.gmra.mxu0 %v1287
        %v5459 = vpop.f32.mrf.mxu0
        %v5460 = vadd.f32 %v5411, %v5459
        %v5461 = vpop.f32.mrf.mxu0
        %v5462 = vadd.f32 %v5413, %v5461
        %5463 = vdwg.mxu0
        %5464 = vmatpush.bf16.msra.mxu0 %v2827
        %5465 = vmatpush.bf16.msra.mxu0 %v2823
        %5466 = vmatpush.bf16.msra.mxu0 %v2819
        %5467 = vmatpush.bf16.msra.mxu0 %v2815
        %5468 = vmatpush.bf16.msra.mxu0 %v2811
        %5469 = vmatpush.bf16.msra.mxu0 %v2807
        %5470 = vmatpush.bf16.msra.mxu0 %v2803
        %5471 = vmatpush.bf16.msra.mxu0 %v2799
        %5472 = vmatmul.bf16.gmra.mxu0 %v1204
        %v5473 = vpop.f32.mrf.mxu0
        %v5474 = vadd.f32 %v5425, %v5473
        %v5475 = vpop.f32.mrf.mxu0
        %v5476 = vadd.f32 %v5427, %v5475
        %5477 = vmatmul.bf16.gmra.mxu0 %v1216
        %v5478 = vpop.f32.mrf.mxu0
        %v5479 = vadd.f32 %v5430, %v5478
        %v5480 = vpop.f32.mrf.mxu0
        %v5481 = vadd.f32 %v5432, %v5480
        %5482 = vmatmul.bf16.gmra.mxu0 %v1228
        %v5483 = vpop.f32.mrf.mxu0
        %v5484 = vadd.f32 %v5435, %v5483
        %v5485 = vpop.f32.mrf.mxu0
        %v5486 = vadd.f32 %v5437, %v5485
        %5487 = vmatmul.bf16.gmra.mxu0 %v1240
        %v5488 = vpop.f32.mrf.mxu0
        %v5489 = vadd.f32 %v5440, %v5488
        %v5490 = vpop.f32.mrf.mxu0
        %v5491 = vadd.f32 %v5442, %v5490
        %5492 = vmatmul.bf16.gmra.mxu0 %v1252
        %v5493 = vpop.f32.mrf.mxu0
        %v5494 = vadd.f32 %v5445, %v5493
        %v5495 = vpop.f32.mrf.mxu0
        %v5496 = vadd.f32 %v5447, %v5495
        %5497 = vmatmul.bf16.gmra.mxu0 %v1264
        %v5498 = vpop.f32.mrf.mxu0
        %v5499 = vadd.f32 %v5450, %v5498
        %v5500 = vpop.f32.mrf.mxu0
        %v5501 = vadd.f32 %v5452, %v5500
        %5502 = vmatmul.bf16.gmra.mxu0 %v1276
        %v5503 = vpop.f32.mrf.mxu0
        %v5504 = vadd.f32 %v5455, %v5503
        %v5505 = vpop.f32.mrf.mxu0
        %v5506 = vadd.f32 %v5457, %v5505
        %5507 = vmatmul.bf16.gmra.mxu0 %v1288
        %v5508 = vpop.f32.mrf.mxu0
        %v5509 = vadd.f32 %v5460, %v5508
        %v5510 = vpop.f32.mrf.mxu0
        %v5511 = vadd.f32 %v5462, %v5510
        %5512 = vdwg.mxu0
        %5513 = vmatpush.bf16.msra.mxu0 %v2859
        %5514 = vmatpush.bf16.msra.mxu0 %v2855
        %5515 = vmatpush.bf16.msra.mxu0 %v2851
        %5516 = vmatpush.bf16.msra.mxu0 %v2847
        %5517 = vmatpush.bf16.msra.mxu0 %v2843
        %5518 = vmatpush.bf16.msra.mxu0 %v2839
        %5519 = vmatpush.bf16.msra.mxu0 %v2835
        %5520 = vmatpush.bf16.msra.mxu0 %v2831
        %5521 = vmatmul.bf16.gmra.mxu0 %v1205
        %v5522 = vpop.f32.mrf.mxu0
        %v5523 = vadd.f32 %v5474, %v5522
        %v5524 = vpop.f32.mrf.mxu0
        %v5525 = vadd.f32 %v5476, %v5524
        %5526 = vmatmul.bf16.gmra.mxu0 %v1217
        %v5527 = vpop.f32.mrf.mxu0
        %v5528 = vadd.f32 %v5479, %v5527
        %v5529 = vpop.f32.mrf.mxu0
        %v5530 = vadd.f32 %v5481, %v5529
        %5531 = vmatmul.bf16.gmra.mxu0 %v1229
        %v5532 = vpop.f32.mrf.mxu0
        %v5533 = vadd.f32 %v5484, %v5532
        %v5534 = vpop.f32.mrf.mxu0
        %v5535 = vadd.f32 %v5486, %v5534
        %5536 = vmatmul.bf16.gmra.mxu0 %v1241
        %v5537 = vpop.f32.mrf.mxu0
        %v5538 = vadd.f32 %v5489, %v5537
        %v5539 = vpop.f32.mrf.mxu0
        %v5540 = vadd.f32 %v5491, %v5539
        %5541 = vmatmul.bf16.gmra.mxu0 %v1253
        %v5542 = vpop.f32.mrf.mxu0
        %v5543 = vadd.f32 %v5494, %v5542
        %v5544 = vpop.f32.mrf.mxu0
        %v5545 = vadd.f32 %v5496, %v5544
        %5546 = vmatmul.bf16.gmra.mxu0 %v1265
        %v5547 = vpop.f32.mrf.mxu0
        %v5548 = vadd.f32 %v5499, %v5547
        %v5549 = vpop.f32.mrf.mxu0
        %v5550 = vadd.f32 %v5501, %v5549
        %5551 = vmatmul.bf16.gmra.mxu0 %v1277
        %v5552 = vpop.f32.mrf.mxu0
        %v5553 = vadd.f32 %v5504, %v5552
        %v5554 = vpop.f32.mrf.mxu0
        %v5555 = vadd.f32 %v5506, %v5554
        %5556 = vmatmul.bf16.gmra.mxu0 %v1289
        %v5557 = vpop.f32.mrf.mxu0
        %v5558 = vadd.f32 %v5509, %v5557
        %v5559 = vpop.f32.mrf.mxu0
        %v5560 = vadd.f32 %v5511, %v5559
        %5561 = vdwg.mxu0
        %5562 = vmatpush.bf16.msra.mxu0 %v2891
        %5563 = vmatpush.bf16.msra.mxu0 %v2887
        %5564 = vmatpush.bf16.msra.mxu0 %v2883
        %5565 = vmatpush.bf16.msra.mxu0 %v2879
        %5566 = vmatpush.bf16.msra.mxu0 %v2875
        %5567 = vmatpush.bf16.msra.mxu0 %v2871
        %5568 = vmatpush.bf16.msra.mxu0 %v2867
        %5569 = vmatpush.bf16.msra.mxu0 %v2863
        %5570 = vmatmul.bf16.gmra.mxu0 %v1206
        %v5571 = vpop.f32.mrf.mxu0
        %v5572 = vadd.f32 %v5523, %v5571
        %v5573 = vpop.f32.mrf.mxu0
        %v5574 = vadd.f32 %v5525, %v5573
        %5575 = vmatmul.bf16.gmra.mxu0 %v1218
        %v5576 = vpop.f32.mrf.mxu0
        %v5577 = vadd.f32 %v5528, %v5576
        %v5578 = vpop.f32.mrf.mxu0
        %v5579 = vadd.f32 %v5530, %v5578
        %5580 = vmatmul.bf16.gmra.mxu0 %v1230
        %v5581 = vpop.f32.mrf.mxu0
        %v5582 = vadd.f32 %v5533, %v5581
        %v5583 = vpop.f32.mrf.mxu0
        %v5584 = vadd.f32 %v5535, %v5583
        %5585 = vmatmul.bf16.gmra.mxu0 %v1242
        %v5586 = vpop.f32.mrf.mxu0
        %v5587 = vadd.f32 %v5538, %v5586
        %v5588 = vpop.f32.mrf.mxu0
        %v5589 = vadd.f32 %v5540, %v5588
        %5590 = vmatmul.bf16.gmra.mxu0 %v1254
        %v5591 = vpop.f32.mrf.mxu0
        %v5592 = vadd.f32 %v5543, %v5591
        %v5593 = vpop.f32.mrf.mxu0
        %v5594 = vadd.f32 %v5545, %v5593
        %5595 = vmatmul.bf16.gmra.mxu0 %v1266
        %v5596 = vpop.f32.mrf.mxu0
        %v5597 = vadd.f32 %v5548, %v5596
        %v5598 = vpop.f32.mrf.mxu0
        %v5599 = vadd.f32 %v5550, %v5598
        %5600 = vmatmul.bf16.gmra.mxu0 %v1278
        %v5601 = vpop.f32.mrf.mxu0
        %v5602 = vadd.f32 %v5553, %v5601
        %v5603 = vpop.f32.mrf.mxu0
        %v5604 = vadd.f32 %v5555, %v5603
        %5605 = vmatmul.bf16.gmra.mxu0 %v1290
        %v5606 = vpop.f32.mrf.mxu0
        %v5607 = vadd.f32 %v5558, %v5606
        %v5608 = vpop.f32.mrf.mxu0
        %v5609 = vadd.f32 %v5560, %v5608
        %5610 = vdwg.mxu0
        %5611 = vmatpush.bf16.msra.mxu0 %v2923
        %5612 = vmatpush.bf16.msra.mxu0 %v2919
        %5613 = vmatpush.bf16.msra.mxu0 %v2915
        %5614 = vmatpush.bf16.msra.mxu0 %v2911
        %5615 = vmatpush.bf16.msra.mxu0 %v2907
        %5616 = vmatpush.bf16.msra.mxu0 %v2903
        %5617 = vmatpush.bf16.msra.mxu0 %v2899
        %5618 = vmatpush.bf16.msra.mxu0 %v2895
        %5619 = vmatmul.bf16.gmra.mxu0 %v1207
        %v5620 = vpop.f32.mrf.mxu0
        %v5621 = vadd.f32 %v5572, %v5620
        %v5622 = vpop.f32.mrf.mxu0
        %v5623 = vadd.f32 %v5574, %v5622
        %5624 = vmatmul.bf16.gmra.mxu0 %v1219
        %v5625 = vpop.f32.mrf.mxu0
        %v5626 = vadd.f32 %v5577, %v5625
        %v5627 = vpop.f32.mrf.mxu0
        %v5628 = vadd.f32 %v5579, %v5627
        %5629 = vmatmul.bf16.gmra.mxu0 %v1231
        %v5630 = vpop.f32.mrf.mxu0
        %v5631 = vadd.f32 %v5582, %v5630
        %v5632 = vpop.f32.mrf.mxu0
        %v5633 = vadd.f32 %v5584, %v5632
        %5634 = vmatmul.bf16.gmra.mxu0 %v1243
        %v5635 = vpop.f32.mrf.mxu0
        %v5636 = vadd.f32 %v5587, %v5635
        %v5637 = vpop.f32.mrf.mxu0
        %v5638 = vadd.f32 %v5589, %v5637
        %5639 = vmatmul.bf16.gmra.mxu0 %v1255
        %v5640 = vpop.f32.mrf.mxu0
        %v5641 = vadd.f32 %v5592, %v5640
        %v5642 = vpop.f32.mrf.mxu0
        %v5643 = vadd.f32 %v5594, %v5642
        %5644 = vmatmul.bf16.gmra.mxu0 %v1267
        %v5645 = vpop.f32.mrf.mxu0
        %v5646 = vadd.f32 %v5597, %v5645
        %v5647 = vpop.f32.mrf.mxu0
        %v5648 = vadd.f32 %v5599, %v5647
        %5649 = vmatmul.bf16.gmra.mxu0 %v1279
        %v5650 = vpop.f32.mrf.mxu0
        %v5651 = vadd.f32 %v5602, %v5650
        %v5652 = vpop.f32.mrf.mxu0
        %v5653 = vadd.f32 %v5604, %v5652
        %5654 = vmatmul.bf16.gmra.mxu0 %v1291
        %v5655 = vpop.f32.mrf.mxu0
        %v5656 = vadd.f32 %v5607, %v5655
        %v5657 = vpop.f32.mrf.mxu0
        %v5658 = vadd.f32 %v5609, %v5657
        %5659 = vdwg.mxu0
        %p5660 = scmp.eq.s32.totalorder %s19, 0
        // Predicated region
        $region56: #{netD3_forward.3} parent=50 // pred_check
          %p5661 = pneg %p5660
        $region57: #{netD3_forward.3} parent=50 // pred_check_branch
          %5663 = sbr.rel (%p5661) target = $region59
        $region58: #{netD3_forward.3} parent=50 // pred_region
          %5664 = vst [vmem:[%s426] sm:$0xff] %v3857
          %5665 = vst [vmem:[%s426 + $0x8] sm:$0xff] %v4445
          %5666 = vst [vmem:[%s426 + $0x10] sm:$0xff] %v5033
          %5667 = vst [vmem:[%s426 + $0x18] sm:$0xff] %v5621
          %5668 = vst [vmem:[%s426 + $0x20] sm:$0xff] %v3859
          %5669 = vst [vmem:[%s426 + $0x28] sm:$0xff] %v4447
          %5670 = vst [vmem:[%s426 + $0x30] sm:$0xff] %v5035
          %5671 = vst [vmem:[%s426 + $0x38] sm:$0xff] %v5623
          %5672 = vst [vmem:[%s426 + $0x40] sm:$0xff] %v3862
          %5673 = vst [vmem:[%s426 + $0x48] sm:$0xff] %v4450
          %5674 = vst [vmem:[%s426 + $0x50] sm:$0xff] %v5038
          %5675 = vst [vmem:[%s426 + $0x58] sm:$0xff] %v5626
          %5676 = vst [vmem:[%s426 + $0x60] sm:$0xff] %v3864
          %5677 = vst [vmem:[%s426 + $0x68] sm:$0xff] %v4452
          %5678 = vst [vmem:[%s426 + $0x70] sm:$0xff] %v5040
          %5679 = vst [vmem:[%s426 + $0x78] sm:$0xff] %v5628
          %5680 = vst [vmem:[%s426 + $0x80] sm:$0xff] %v3867
          %5681 = vst [vmem:[%s426 + $0x88] sm:$0xff] %v4455
          %5682 = vst [vmem:[%s426 + $0x90] sm:$0xff] %v5043
          %5683 = vst [vmem:[%s426 + $0x98] sm:$0xff] %v5631
          %5684 = vst [vmem:[%s426 + $0xa0] sm:$0xff] %v3869
          %5685 = vst [vmem:[%s426 + $0xa8] sm:$0xff] %v4457
          %5686 = vst [vmem:[%s426 + $0xb0] sm:$0xff] %v5045
          %5687 = vst [vmem:[%s426 + $0xb8] sm:$0xff] %v5633
          %5688 = vst [vmem:[%s426 + $0xc0] sm:$0xff] %v3872
          %5689 = vst [vmem:[%s426 + $0xc8] sm:$0xff] %v4460
          %5690 = vst [vmem:[%s426 + $0xd0] sm:$0xff] %v5048
          %5691 = vst [vmem:[%s426 + $0xd8] sm:$0xff] %v5636
          %5692 = vst [vmem:[%s426 + $0xe0] sm:$0xff] %v3874
          %5693 = vst [vmem:[%s426 + $0xe8] sm:$0xff] %v4462
          %5694 = vst [vmem:[%s426 + $0xf0] sm:$0xff] %v5050
          %5695 = vst [vmem:[%s426 + $0xf8] sm:$0xff] %v5638
          %5696 = vst [vmem:[%s426 + $0x100] sm:$0xff] %v3877
          %5697 = vst [vmem:[%s426 + $0x108] sm:$0xff] %v4465
          %5698 = vst [vmem:[%s426 + $0x110] sm:$0xff] %v5053
          %5699 = vst [vmem:[%s426 + $0x118] sm:$0xff] %v5641
          %5700 = vst [vmem:[%s426 + $0x120] sm:$0xff] %v3879
          %5701 = vst [vmem:[%s426 + $0x128] sm:$0xff] %v4467
          %5702 = vst [vmem:[%s426 + $0x130] sm:$0xff] %v5055
          %5703 = vst [vmem:[%s426 + $0x138] sm:$0xff] %v5643
          %5704 = vst [vmem:[%s426 + $0x140] sm:$0xff] %v3882
          %5705 = vst [vmem:[%s426 + $0x148] sm:$0xff] %v4470
          %5706 = vst [vmem:[%s426 + $0x150] sm:$0xff] %v5058
          %5707 = vst [vmem:[%s426 + $0x158] sm:$0xff] %v5646
          %5708 = vst [vmem:[%s426 + $0x160] sm:$0xff] %v3884
          %5709 = vst [vmem:[%s426 + $0x168] sm:$0xff] %v4472
          %5710 = vst [vmem:[%s426 + $0x170] sm:$0xff] %v5060
          %5711 = vst [vmem:[%s426 + $0x178] sm:$0xff] %v5648
          %5712 = vst [vmem:[%s426 + $0x180] sm:$0xff] %v3887
          %5713 = vst [vmem:[%s426 + $0x188] sm:$0xff] %v4475
          %5714 = vst [vmem:[%s426 + $0x190] sm:$0xff] %v5063
          %5715 = vst [vmem:[%s426 + $0x198] sm:$0xff] %v5651
          %5716 = vst [vmem:[%s426 + $0x1a0] sm:$0xff] %v3889
          %5717 = vst [vmem:[%s426 + $0x1a8] sm:$0xff] %v4477
          %5718 = vst [vmem:[%s426 + $0x1b0] sm:$0xff] %v5065
          %5719 = vst [vmem:[%s426 + $0x1b8] sm:$0xff] %v5653
          %5720 = vst [vmem:[%s426 + $0x1c0] sm:$0xff] %v3892
          %5721 = vst [vmem:[%s426 + $0x1c8] sm:$0xff] %v4480
          %5722 = vst [vmem:[%s426 + $0x1d0] sm:$0xff] %v5068
          %5723 = vst [vmem:[%s426 + $0x1d8] sm:$0xff] %v5656
          %5724 = vst [vmem:[%s426 + $0x1e0] sm:$0xff] %v3894
          %5725 = vst [vmem:[%s426 + $0x1e8] sm:$0xff] %v4482
          %5726 = vst [vmem:[%s426 + $0x1f0] sm:$0xff] %v5070
          %5727 = vst [vmem:[%s426 + $0x1f8] sm:$0xff] %v5658
        $region59: #{netD3_forward.3} parent=50 // pred_fallthru
          _
        %p5728 = scmp.gt.s32.totalorder %s19, 0
        // Predicated region
        $region60: #{netD3_forward.3} parent=50 // pred_check
          %p5729 = pneg %p5728
        $region61: #{netD3_forward.3} parent=50 // pred_check_branch
          %5731 = sbr.rel (%p5729) target = $region63
        $region62: #{netD3_forward.3} parent=50 // pred_region
          %v5732 = vld [vmem:[%s426] sm:$0xff]
          %v5733 = vld [vmem:[%s426 + $0x8] sm:$0xff]
          %v5734 = vld [vmem:[%s426 + $0x10] sm:$0xff]
          %v5735 = vld [vmem:[%s426 + $0x18] sm:$0xff]
          %v5736 = vld [vmem:[%s426 + $0x20] sm:$0xff]
          %v5737 = vld [vmem:[%s426 + $0x28] sm:$0xff]
          %v5738 = vld [vmem:[%s426 + $0x30] sm:$0xff]
          %v5739 = vld [vmem:[%s426 + $0x38] sm:$0xff]
          %v5740 = vld [vmem:[%s426 + $0x40] sm:$0xff]
          %v5741 = vld [vmem:[%s426 + $0x48] sm:$0xff]
          %v5742 = vld [vmem:[%s426 + $0x50] sm:$0xff]
          %v5743 = vld [vmem:[%s426 + $0x58] sm:$0xff]
          %v5744 = vld [vmem:[%s426 + $0x60] sm:$0xff]
          %v5745 = vld [vmem:[%s426 + $0x68] sm:$0xff]
          %v5746 = vld [vmem:[%s426 + $0x70] sm:$0xff]
          %v5747 = vld [vmem:[%s426 + $0x78] sm:$0xff]
          %v5748 = vld [vmem:[%s426 + $0x80] sm:$0xff]
          %v5749 = vld [vmem:[%s426 + $0x88] sm:$0xff]
          %v5750 = vld [vmem:[%s426 + $0x90] sm:$0xff]
          %v5751 = vld [vmem:[%s426 + $0x98] sm:$0xff]
          %v5752 = vld [vmem:[%s426 + $0xa0] sm:$0xff]
          %v5753 = vld [vmem:[%s426 + $0xa8] sm:$0xff]
          %v5754 = vld [vmem:[%s426 + $0xb0] sm:$0xff]
          %v5755 = vld [vmem:[%s426 + $0xb8] sm:$0xff]
          %v5756 = vld [vmem:[%s426 + $0xc0] sm:$0xff]
          %v5757 = vld [vmem:[%s426 + $0xc8] sm:$0xff]
          %v5758 = vld [vmem:[%s426 + $0xd0] sm:$0xff]
          %v5759 = vld [vmem:[%s426 + $0xd8] sm:$0xff]
          %v5760 = vld [vmem:[%s426 + $0xe0] sm:$0xff]
          %v5761 = vld [vmem:[%s426 + $0xe8] sm:$0xff]
          %v5762 = vld [vmem:[%s426 + $0xf0] sm:$0xff]
          %v5763 = vld [vmem:[%s426 + $0xf8] sm:$0xff]
          %v5764 = vld [vmem:[%s426 + $0x100] sm:$0xff]
          %v5765 = vld [vmem:[%s426 + $0x108] sm:$0xff]
          %v5766 = vld [vmem:[%s426 + $0x110] sm:$0xff]
          %v5767 = vld [vmem:[%s426 + $0x118] sm:$0xff]
          %v5768 = vld [vmem:[%s426 + $0x120] sm:$0xff]
          %v5769 = vld [vmem:[%s426 + $0x128] sm:$0xff]
          %v5770 = vld [vmem:[%s426 + $0x130] sm:$0xff]
          %v5771 = vld [vmem:[%s426 + $0x138] sm:$0xff]
          %v5772 = vld [vmem:[%s426 + $0x140] sm:$0xff]
          %v5773 = vld [vmem:[%s426 + $0x148] sm:$0xff]
          %v5774 = vld [vmem:[%s426 + $0x150] sm:$0xff]
          %v5775 = vld [vmem:[%s426 + $0x158] sm:$0xff]
          %v5776 = vld [vmem:[%s426 + $0x160] sm:$0xff]
          %v5777 = vld [vmem:[%s426 + $0x168] sm:$0xff]
          %v5778 = vld [vmem:[%s426 + $0x170] sm:$0xff]
          %v5779 = vld [vmem:[%s426 + $0x178] sm:$0xff]
          %v5780 = vld [vmem:[%s426 + $0x180] sm:$0xff]
          %v5781 = vld [vmem:[%s426 + $0x188] sm:$0xff]
          %v5782 = vld [vmem:[%s426 + $0x190] sm:$0xff]
          %v5783 = vld [vmem:[%s426 + $0x198] sm:$0xff]
          %v5784 = vld [vmem:[%s426 + $0x1a0] sm:$0xff]
          %v5785 = vld [vmem:[%s426 + $0x1a8] sm:$0xff]
          %v5786 = vld [vmem:[%s426 + $0x1b0] sm:$0xff]
          %v5787 = vld [vmem:[%s426 + $0x1b8] sm:$0xff]
          %v5788 = vld [vmem:[%s426 + $0x1c0] sm:$0xff]
          %v5789 = vld [vmem:[%s426 + $0x1c8] sm:$0xff]
          %v5790 = vld [vmem:[%s426 + $0x1d0] sm:$0xff]
          %v5791 = vld [vmem:[%s426 + $0x1d8] sm:$0xff]
          %v5792 = vld [vmem:[%s426 + $0x1e0] sm:$0xff]
          %v5793 = vld [vmem:[%s426 + $0x1e8] sm:$0xff]
          %v5794 = vld [vmem:[%s426 + $0x1f0] sm:$0xff]
          %v5795 = vld [vmem:[%s426 + $0x1f8] sm:$0xff]
          %v5796 = vadd.f32 %v5732, %v3857
          %v5797 = vadd.f32 %v5733, %v4445
          %v5798 = vadd.f32 %v5734, %v5033
          %v5799 = vadd.f32 %v5735, %v5621
          %v5800 = vadd.f32 %v5736, %v3859
          %v5801 = vadd.f32 %v5737, %v4447
          %v5802 = vadd.f32 %v5738, %v5035
          %v5803 = vadd.f32 %v5739, %v5623
          %v5804 = vadd.f32 %v5740, %v3862
          %v5805 = vadd.f32 %v5741, %v4450
          %v5806 = vadd.f32 %v5742, %v5038
          %v5807 = vadd.f32 %v5743, %v5626
          %v5808 = vadd.f32 %v5744, %v3864
          %v5809 = vadd.f32 %v5745, %v4452
          %v5810 = vadd.f32 %v5746, %v5040
          %v5811 = vadd.f32 %v5747, %v5628
          %v5812 = vadd.f32 %v5748, %v3867
          %v5813 = vadd.f32 %v5749, %v4455
          %v5814 = vadd.f32 %v5750, %v5043
          %v5815 = vadd.f32 %v5751, %v5631
          %v5816 = vadd.f32 %v5752, %v3869
          %v5817 = vadd.f32 %v5753, %v4457
          %v5818 = vadd.f32 %v5754, %v5045
          %v5819 = vadd.f32 %v5755, %v5633
          %v5820 = vadd.f32 %v5756, %v3872
          %v5821 = vadd.f32 %v5757, %v4460
          %v5822 = vadd.f32 %v5758, %v5048
          %v5823 = vadd.f32 %v5759, %v5636
          %v5824 = vadd.f32 %v5760, %v3874
          %v5825 = vadd.f32 %v5761, %v4462
          %v5826 = vadd.f32 %v5762, %v5050
          %v5827 = vadd.f32 %v5763, %v5638
          %v5828 = vadd.f32 %v5764, %v3877
          %v5829 = vadd.f32 %v5765, %v4465
          %v5830 = vadd.f32 %v5766, %v5053
          %v5831 = vadd.f32 %v5767, %v5641
          %v5832 = vadd.f32 %v5768, %v3879
          %v5833 = vadd.f32 %v5769, %v4467
          %v5834 = vadd.f32 %v5770, %v5055
          %v5835 = vadd.f32 %v5771, %v5643
          %v5836 = vadd.f32 %v5772, %v3882
          %v5837 = vadd.f32 %v5773, %v4470
          %v5838 = vadd.f32 %v5774, %v5058
          %v5839 = vadd.f32 %v5775, %v5646
          %v5840 = vadd.f32 %v5776, %v3884
          %v5841 = vadd.f32 %v5777, %v4472
          %v5842 = vadd.f32 %v5778, %v5060
          %v5843 = vadd.f32 %v5779, %v5648
          %v5844 = vadd.f32 %v5780, %v3887
          %v5845 = vadd.f32 %v5781, %v4475
          %v5846 = vadd.f32 %v5782, %v5063
          %v5847 = vadd.f32 %v5783, %v5651
          %v5848 = vadd.f32 %v5784, %v3889
          %v5849 = vadd.f32 %v5785, %v4477
          %v5850 = vadd.f32 %v5786, %v5065
          %v5851 = vadd.f32 %v5787, %v5653
          %v5852 = vadd.f32 %v5788, %v3892
          %v5853 = vadd.f32 %v5789, %v4480
          %v5854 = vadd.f32 %v5790, %v5068
          %v5855 = vadd.f32 %v5791, %v5656
          %v5856 = vadd.f32 %v5792, %v3894
          %v5857 = vadd.f32 %v5793, %v4482
          %v5858 = vadd.f32 %v5794, %v5070
          %v5859 = vadd.f32 %v5795, %v5658
          %5860 = vst [vmem:[%s426] sm:$0xff] %v5796
          %5861 = vst [vmem:[%s426 + $0x8] sm:$0xff] %v5797
          %5862 = vst [vmem:[%s426 + $0x10] sm:$0xff] %v5798
          %5863 = vst [vmem:[%s426 + $0x18] sm:$0xff] %v5799
          %5864 = vst [vmem:[%s426 + $0x20] sm:$0xff] %v5800
          %5865 = vst [vmem:[%s426 + $0x28] sm:$0xff] %v5801
          %5866 = vst [vmem:[%s426 + $0x30] sm:$0xff] %v5802
          %5867 = vst [vmem:[%s426 + $0x38] sm:$0xff] %v5803
          %5868 = vst [vmem:[%s426 + $0x40] sm:$0xff] %v5804
          %5869 = vst [vmem:[%s426 + $0x48] sm:$0xff] %v5805
          %5870 = vst [vmem:[%s426 + $0x50] sm:$0xff] %v5806
          %5871 = vst [vmem:[%s426 + $0x58] sm:$0xff] %v5807
          %5872 = vst [vmem:[%s426 + $0x60] sm:$0xff] %v5808
          %5873 = vst [vmem:[%s426 + $0x68] sm:$0xff] %v5809
          %5874 = vst [vmem:[%s426 + $0x70] sm:$0xff] %v5810
          %5875 = vst [vmem:[%s426 + $0x78] sm:$0xff] %v5811
          %5876 = vst [vmem:[%s426 + $0x80] sm:$0xff] %v5812
          %5877 = vst [vmem:[%s426 + $0x88] sm:$0xff] %v5813
          %5878 = vst [vmem:[%s426 + $0x90] sm:$0xff] %v5814
          %5879 = vst [vmem:[%s426 + $0x98] sm:$0xff] %v5815
          %5880 = vst [vmem:[%s426 + $0xa0] sm:$0xff] %v5816
          %5881 = vst [vmem:[%s426 + $0xa8] sm:$0xff] %v5817
          %5882 = vst [vmem:[%s426 + $0xb0] sm:$0xff] %v5818
          %5883 = vst [vmem:[%s426 + $0xb8] sm:$0xff] %v5819
          %5884 = vst [vmem:[%s426 + $0xc0] sm:$0xff] %v5820
          %5885 = vst [vmem:[%s426 + $0xc8] sm:$0xff] %v5821
          %5886 = vst [vmem:[%s426 + $0xd0] sm:$0xff] %v5822
          %5887 = vst [vmem:[%s426 + $0xd8] sm:$0xff] %v5823
          %5888 = vst [vmem:[%s426 + $0xe0] sm:$0xff] %v5824
          %5889 = vst [vmem:[%s426 + $0xe8] sm:$0xff] %v5825
          %5890 = vst [vmem:[%s426 + $0xf0] sm:$0xff] %v5826
          %5891 = vst [vmem:[%s426 + $0xf8] sm:$0xff] %v5827
          %5892 = vst [vmem:[%s426 + $0x100] sm:$0xff] %v5828
          %5893 = vst [vmem:[%s426 + $0x108] sm:$0xff] %v5829
          %5894 = vst [vmem:[%s426 + $0x110] sm:$0xff] %v5830
          %5895 = vst [vmem:[%s426 + $0x118] sm:$0xff] %v5831
          %5896 = vst [vmem:[%s426 + $0x120] sm:$0xff] %v5832
          %5897 = vst [vmem:[%s426 + $0x128] sm:$0xff] %v5833
          %5898 = vst [vmem:[%s426 + $0x130] sm:$0xff] %v5834
          %5899 = vst [vmem:[%s426 + $0x138] sm:$0xff] %v5835
          %5900 = vst [vmem:[%s426 + $0x140] sm:$0xff] %v5836
          %5901 = vst [vmem:[%s426 + $0x148] sm:$0xff] %v5837
          %5902 = vst [vmem:[%s426 + $0x150] sm:$0xff] %v5838
          %5903 = vst [vmem:[%s426 + $0x158] sm:$0xff] %v5839
          %5904 = vst [vmem:[%s426 + $0x160] sm:$0xff] %v5840
          %5905 = vst [vmem:[%s426 + $0x168] sm:$0xff] %v5841
          %5906 = vst [vmem:[%s426 + $0x170] sm:$0xff] %v5842
          %5907 = vst [vmem:[%s426 + $0x178] sm:$0xff] %v5843
          %5908 = vst [vmem:[%s426 + $0x180] sm:$0xff] %v5844
          %5909 = vst [vmem:[%s426 + $0x188] sm:$0xff] %v5845
          %5910 = vst [vmem:[%s426 + $0x190] sm:$0xff] %v5846
          %5911 = vst [vmem:[%s426 + $0x198] sm:$0xff] %v5847
          %5912 = vst [vmem:[%s426 + $0x1a0] sm:$0xff] %v5848
          %5913 = vst [vmem:[%s426 + $0x1a8] sm:$0xff] %v5849
          %5914 = vst [vmem:[%s426 + $0x1b0] sm:$0xff] %v5850
          %5915 = vst [vmem:[%s426 + $0x1b8] sm:$0xff] %v5851
          %5916 = vst [vmem:[%s426 + $0x1c0] sm:$0xff] %v5852
          %5917 = vst [vmem:[%s426 + $0x1c8] sm:$0xff] %v5853
          %5918 = vst [vmem:[%s426 + $0x1d0] sm:$0xff] %v5854
          %5919 = vst [vmem:[%s426 + $0x1d8] sm:$0xff] %v5855
          %5920 = vst [vmem:[%s426 + $0x1e0] sm:$0xff] %v5856
          %5921 = vst [vmem:[%s426 + $0x1e8] sm:$0xff] %v5857
          %5922 = vst [vmem:[%s426 + $0x1f0] sm:$0xff] %v5858
          %5923 = vst [vmem:[%s426 + $0x1f8] sm:$0xff] %v5859
        $region63: #{netD3_forward.3} parent=50 // pred_fallthru
          _
        %p5924 = scmp.eq.s32.totalorder %s19, 2
        // Predicated region
        $region64: #{netD3_forward.3} parent=50 // pred_check
          %p5925 = pneg %p5924
        $region65: #{netD3_forward.3} parent=50 // pred_check_branch
          %5927 = sbr.rel (%p5925) target = $region67
        $region66: #{netD3_forward.3} parent=50 // pred_region
          %v5928 = vld [vmem:[%s426] sm:$0xff]
          %v5929 = vld [vmem:[%s426 + $0x8] sm:$0xff]
          %v5930 = vld [vmem:[%s426 + $0x10] sm:$0xff]
          %v5931 = vld [vmem:[%s426 + $0x18] sm:$0xff]
          %v5932 = vld [vmem:[%s426 + $0x20] sm:$0xff]
          %v5933 = vld [vmem:[%s426 + $0x28] sm:$0xff]
          %v5934 = vld [vmem:[%s426 + $0x30] sm:$0xff]
          %v5935 = vld [vmem:[%s426 + $0x38] sm:$0xff]
          %v5936 = vld [vmem:[%s426 + $0x40] sm:$0xff]
          %v5937 = vld [vmem:[%s426 + $0x48] sm:$0xff]
          %v5938 = vld [vmem:[%s426 + $0x50] sm:$0xff]
          %v5939 = vld [vmem:[%s426 + $0x58] sm:$0xff]
          %v5940 = vld [vmem:[%s426 + $0x60] sm:$0xff]
          %v5941 = vld [vmem:[%s426 + $0x68] sm:$0xff]
          %v5942 = vld [vmem:[%s426 + $0x70] sm:$0xff]
          %v5943 = vld [vmem:[%s426 + $0x78] sm:$0xff]
          %v5944 = vld [vmem:[%s426 + $0x80] sm:$0xff]
          %v5945 = vld [vmem:[%s426 + $0x88] sm:$0xff]
          %v5946 = vld [vmem:[%s426 + $0x90] sm:$0xff]
          %v5947 = vld [vmem:[%s426 + $0x98] sm:$0xff]
          %v5948 = vld [vmem:[%s426 + $0xa0] sm:$0xff]
          %v5949 = vld [vmem:[%s426 + $0xa8] sm:$0xff]
          %v5950 = vld [vmem:[%s426 + $0xb0] sm:$0xff]
          %v5951 = vld [vmem:[%s426 + $0xb8] sm:$0xff]
          %v5952 = vld [vmem:[%s426 + $0xc0] sm:$0xff]
          %v5953 = vld [vmem:[%s426 + $0xc8] sm:$0xff]
          %v5954 = vld [vmem:[%s426 + $0xd0] sm:$0xff]
          %v5955 = vld [vmem:[%s426 + $0xd8] sm:$0xff]
          %v5956 = vld [vmem:[%s426 + $0xe0] sm:$0xff]
          %v5957 = vld [vmem:[%s426 + $0xe8] sm:$0xff]
          %v5958 = vld [vmem:[%s426 + $0xf0] sm:$0xff]
          %v5959 = vld [vmem:[%s426 + $0xf8] sm:$0xff]
          %v5960 = vld [vmem:[%s426 + $0x100] sm:$0xff]
          %v5961 = vld [vmem:[%s426 + $0x108] sm:$0xff]
          %v5962 = vld [vmem:[%s426 + $0x110] sm:$0xff]
          %v5963 = vld [vmem:[%s426 + $0x118] sm:$0xff]
          %v5964 = vld [vmem:[%s426 + $0x120] sm:$0xff]
          %v5965 = vld [vmem:[%s426 + $0x128] sm:$0xff]
          %v5966 = vld [vmem:[%s426 + $0x130] sm:$0xff]
          %v5967 = vld [vmem:[%s426 + $0x138] sm:$0xff]
          %v5968 = vld [vmem:[%s426 + $0x140] sm:$0xff]
          %v5969 = vld [vmem:[%s426 + $0x148] sm:$0xff]
          %v5970 = vld [vmem:[%s426 + $0x150] sm:$0xff]
          %v5971 = vld [vmem:[%s426 + $0x158] sm:$0xff]
          %v5972 = vld [vmem:[%s426 + $0x160] sm:$0xff]
          %v5973 = vld [vmem:[%s426 + $0x168] sm:$0xff]
          %v5974 = vld [vmem:[%s426 + $0x170] sm:$0xff]
          %v5975 = vld [vmem:[%s426 + $0x178] sm:$0xff]
          %v5976 = vld [vmem:[%s426 + $0x180] sm:$0xff]
          %v5977 = vld [vmem:[%s426 + $0x188] sm:$0xff]
          %v5978 = vld [vmem:[%s426 + $0x190] sm:$0xff]
          %v5979 = vld [vmem:[%s426 + $0x198] sm:$0xff]
          %v5980 = vld [vmem:[%s426 + $0x1a0] sm:$0xff]
          %v5981 = vld [vmem:[%s426 + $0x1a8] sm:$0xff]
          %v5982 = vld [vmem:[%s426 + $0x1b0] sm:$0xff]
          %v5983 = vld [vmem:[%s426 + $0x1b8] sm:$0xff]
          %v5984 = vld [vmem:[%s426 + $0x1c0] sm:$0xff]
          %v5985 = vld [vmem:[%s426 + $0x1c8] sm:$0xff]
          %v5986 = vld [vmem:[%s426 + $0x1d0] sm:$0xff]
          %v5987 = vld [vmem:[%s426 + $0x1d8] sm:$0xff]
          %v5988 = vld [vmem:[%s426 + $0x1e0] sm:$0xff]
          %v5989 = vld [vmem:[%s426 + $0x1e8] sm:$0xff]
          %v5990 = vld [vmem:[%s426 + $0x1f0] sm:$0xff]
          %v5991 = vld [vmem:[%s426 + $0x1f8] sm:$0xff]
          %v5992 = vld [vmem:[%s2] sm:$0xf]
          %v5994 = vperm.slane %v5992, 0
          %v5995 = vperm.slane %v5992, 1
          %v5996 = vperm.slane %v5992, 2
          %v5997 = vperm.slane %v5992, 3
          %v6002 = vadd.f32 %v5928, %v5994
          %v6003 = vadd.f32 %v5929, %v5995
          %v6004 = vadd.f32 %v5930, %v5996
          %v6005 = vadd.f32 %v5931, %v5997
          %v6006 = vadd.f32 %v5932, %v5994
          %v6007 = vadd.f32 %v5933, %v5995
          %v6008 = vadd.f32 %v5934, %v5996
          %v6009 = vadd.f32 %v5935, %v5997
          %v6010 = vadd.f32 %v5936, %v5994
          %v6011 = vadd.f32 %v5937, %v5995
          %v6012 = vadd.f32 %v5938, %v5996
          %v6013 = vadd.f32 %v5939, %v5997
          %v6014 = vadd.f32 %v5940, %v5994
          %v6015 = vadd.f32 %v5941, %v5995
          %v6016 = vadd.f32 %v5942, %v5996
          %v6017 = vadd.f32 %v5943, %v5997
          %v6018 = vadd.f32 %v5944, %v5994
          %v6019 = vadd.f32 %v5945, %v5995
          %v6020 = vadd.f32 %v5946, %v5996
          %v6021 = vadd.f32 %v5947, %v5997
          %v6022 = vadd.f32 %v5948, %v5994
          %v6023 = vadd.f32 %v5949, %v5995
          %v6024 = vadd.f32 %v5950, %v5996
          %v6025 = vadd.f32 %v5951, %v5997
          %v6026 = vadd.f32 %v5952, %v5994
          %v6027 = vadd.f32 %v5953, %v5995
          %v6028 = vadd.f32 %v5954, %v5996
          %v6029 = vadd.f32 %v5955, %v5997
          %v6030 = vadd.f32 %v5956, %v5994
          %v6031 = vadd.f32 %v5957, %v5995
          %v6032 = vadd.f32 %v5958, %v5996
          %v6033 = vadd.f32 %v5959, %v5997
          %v6034 = vadd.f32 %v5960, %v5994
          %v6035 = vadd.f32 %v5961, %v5995
          %v6036 = vadd.f32 %v5962, %v5996
          %v6037 = vadd.f32 %v5963, %v5997
          %v6038 = vadd.f32 %v5964, %v5994
          %v6039 = vadd.f32 %v5965, %v5995
          %v6040 = vadd.f32 %v5966, %v5996
          %v6041 = vadd.f32 %v5967, %v5997
          %v6042 = vadd.f32 %v5968, %v5994
          %v6043 = vadd.f32 %v5969, %v5995
          %v6044 = vadd.f32 %v5970, %v5996
          %v6045 = vadd.f32 %v5971, %v5997
          %v6046 = vadd.f32 %v5972, %v5994
          %v6047 = vadd.f32 %v5973, %v5995
          %v6048 = vadd.f32 %v5974, %v5996
          %v6049 = vadd.f32 %v5975, %v5997
          %v6050 = vadd.f32 %v5976, %v5994
          %v6051 = vadd.f32 %v5977, %v5995
          %v6052 = vadd.f32 %v5978, %v5996
          %v6053 = vadd.f32 %v5979, %v5997
          %v6054 = vadd.f32 %v5980, %v5994
          %v6055 = vadd.f32 %v5981, %v5995
          %v6056 = vadd.f32 %v5982, %v5996
          %v6057 = vadd.f32 %v5983, %v5997
          %v6058 = vadd.f32 %v5984, %v5994
          %v6059 = vadd.f32 %v5985, %v5995
          %v6060 = vadd.f32 %v5986, %v5996
          %v6061 = vadd.f32 %v5987, %v5997
          %v6062 = vadd.f32 %v5988, %v5994
          %v6063 = vadd.f32 %v5989, %v5995
          %v6064 = vadd.f32 %v5990, %v5996
          %v6065 = vadd.f32 %v5991, %v5997
          %v6066 = vmax.f32 %v6002, 0.0
          %v6067 = vmax.f32 %v6003, 0.0
          %v6068 = vmax.f32 %v6004, 0.0
          %v6069 = vmax.f32 %v6005, 0.0
          %v6070 = vmax.f32 %v6006, 0.0
          %v6071 = vmax.f32 %v6007, 0.0
          %v6072 = vmax.f32 %v6008, 0.0
          %v6073 = vmax.f32 %v6009, 0.0
          %v6074 = vmax.f32 %v6010, 0.0
          %v6075 = vmax.f32 %v6011, 0.0
          %v6076 = vmax.f32 %v6012, 0.0
          %v6077 = vmax.f32 %v6013, 0.0
          %v6078 = vmax.f32 %v6014, 0.0
          %v6079 = vmax.f32 %v6015, 0.0
          %v6080 = vmax.f32 %v6016, 0.0
          %v6081 = vmax.f32 %v6017, 0.0
          %v6082 = vmax.f32 %v6018, 0.0
          %v6083 = vmax.f32 %v6019, 0.0
          %v6084 = vmax.f32 %v6020, 0.0
          %v6085 = vmax.f32 %v6021, 0.0
          %v6086 = vmax.f32 %v6022, 0.0
          %v6087 = vmax.f32 %v6023, 0.0
          %v6088 = vmax.f32 %v6024, 0.0
          %v6089 = vmax.f32 %v6025, 0.0
          %v6090 = vmax.f32 %v6026, 0.0
          %v6091 = vmax.f32 %v6027, 0.0
          %v6092 = vmax.f32 %v6028, 0.0
          %v6093 = vmax.f32 %v6029, 0.0
          %v6094 = vmax.f32 %v6030, 0.0
          %v6095 = vmax.f32 %v6031, 0.0
          %v6096 = vmax.f32 %v6032, 0.0
          %v6097 = vmax.f32 %v6033, 0.0
          %v6098 = vmax.f32 %v6034, 0.0
          %v6099 = vmax.f32 %v6035, 0.0
          %v6100 = vmax.f32 %v6036, 0.0
          %v6101 = vmax.f32 %v6037, 0.0
          %v6102 = vmax.f32 %v6038, 0.0
          %v6103 = vmax.f32 %v6039, 0.0
          %v6104 = vmax.f32 %v6040, 0.0
          %v6105 = vmax.f32 %v6041, 0.0
          %v6106 = vmax.f32 %v6042, 0.0
          %v6107 = vmax.f32 %v6043, 0.0
          %v6108 = vmax.f32 %v6044, 0.0
          %v6109 = vmax.f32 %v6045, 0.0
          %v6110 = vmax.f32 %v6046, 0.0
          %v6111 = vmax.f32 %v6047, 0.0
          %v6112 = vmax.f32 %v6048, 0.0
          %v6113 = vmax.f32 %v6049, 0.0
          %v6114 = vmax.f32 %v6050, 0.0
          %v6115 = vmax.f32 %v6051, 0.0
          %v6116 = vmax.f32 %v6052, 0.0
          %v6117 = vmax.f32 %v6053, 0.0
          %v6118 = vmax.f32 %v6054, 0.0
          %v6119 = vmax.f32 %v6055, 0.0
          %v6120 = vmax.f32 %v6056, 0.0
          %v6121 = vmax.f32 %v6057, 0.0
          %v6122 = vmax.f32 %v6058, 0.0
          %v6123 = vmax.f32 %v6059, 0.0
          %v6124 = vmax.f32 %v6060, 0.0
          %v6125 = vmax.f32 %v6061, 0.0
          %v6126 = vmax.f32 %v6062, 0.0
          %v6127 = vmax.f32 %v6063, 0.0
          %v6128 = vmax.f32 %v6064, 0.0
          %v6129 = vmax.f32 %v6065, 0.0
          %6130 = vst [vmem:[%s426] sm:$0xff] %v6066
          %6131 = vst [vmem:[%s426 + $0x8] sm:$0xff] %v6067
          %6132 = vst [vmem:[%s426 + $0x10] sm:$0xff] %v6068
          %6133 = vst [vmem:[%s426 + $0x18] sm:$0xff] %v6069
          %6134 = vst [vmem:[%s426 + $0x20] sm:$0xff] %v6070
          %6135 = vst [vmem:[%s426 + $0x28] sm:$0xff] %v6071
          %6136 = vst [vmem:[%s426 + $0x30] sm:$0xff] %v6072
          %6137 = vst [vmem:[%s426 + $0x38] sm:$0xff] %v6073
          %6138 = vst [vmem:[%s426 + $0x40] sm:$0xff] %v6074
          %6139 = vst [vmem:[%s426 + $0x48] sm:$0xff] %v6075
          %6140 = vst [vmem:[%s426 + $0x50] sm:$0xff] %v6076
          %6141 = vst [vmem:[%s426 + $0x58] sm:$0xff] %v6077
          %6142 = vst [vmem:[%s426 + $0x60] sm:$0xff] %v6078
          %6143 = vst [vmem:[%s426 + $0x68] sm:$0xff] %v6079
          %6144 = vst [vmem:[%s426 + $0x70] sm:$0xff] %v6080
          %6145 = vst [vmem:[%s426 + $0x78] sm:$0xff] %v6081
          %6146 = vst [vmem:[%s426 + $0x80] sm:$0xff] %v6082
          %6147 = vst [vmem:[%s426 + $0x88] sm:$0xff] %v6083
          %6148 = vst [vmem:[%s426 + $0x90] sm:$0xff] %v6084
          %6149 = vst [vmem:[%s426 + $0x98] sm:$0xff] %v6085
          %6150 = vst [vmem:[%s426 + $0xa0] sm:$0xff] %v6086
          %6151 = vst [vmem:[%s426 + $0xa8] sm:$0xff] %v6087
          %6152 = vst [vmem:[%s426 + $0xb0] sm:$0xff] %v6088
          %6153 = vst [vmem:[%s426 + $0xb8] sm:$0xff] %v6089
          %6154 = vst [vmem:[%s426 + $0xc0] sm:$0xff] %v6090
          %6155 = vst [vmem:[%s426 + $0xc8] sm:$0xff] %v6091
          %6156 = vst [vmem:[%s426 + $0xd0] sm:$0xff] %v6092
          %6157 = vst [vmem:[%s426 + $0xd8] sm:$0xff] %v6093
          %6158 = vst [vmem:[%s426 + $0xe0] sm:$0xff] %v6094
          %6159 = vst [vmem:[%s426 + $0xe8] sm:$0xff] %v6095
          %6160 = vst [vmem:[%s426 + $0xf0] sm:$0xff] %v6096
          %6161 = vst [vmem:[%s426 + $0xf8] sm:$0xff] %v6097
          %6162 = vst [vmem:[%s426 + $0x100] sm:$0xff] %v6098
          %6163 = vst [vmem:[%s426 + $0x108] sm:$0xff] %v6099
          %6164 = vst [vmem:[%s426 + $0x110] sm:$0xff] %v6100
          %6165 = vst [vmem:[%s426 + $0x118] sm:$0xff] %v6101
          %6166 = vst [vmem:[%s426 + $0x120] sm:$0xff] %v6102
          %6167 = vst [vmem:[%s426 + $0x128] sm:$0xff] %v6103
          %6168 = vst [vmem:[%s426 + $0x130] sm:$0xff] %v6104
          %6169 = vst [vmem:[%s426 + $0x138] sm:$0xff] %v6105
          %6170 = vst [vmem:[%s426 + $0x140] sm:$0xff] %v6106
          %6171 = vst [vmem:[%s426 + $0x148] sm:$0xff] %v6107
          %6172 = vst [vmem:[%s426 + $0x150] sm:$0xff] %v6108
          %6173 = vst [vmem:[%s426 + $0x158] sm:$0xff] %v6109
          %6174 = vst [vmem:[%s426 + $0x160] sm:$0xff] %v6110
          %6175 = vst [vmem:[%s426 + $0x168] sm:$0xff] %v6111
          %6176 = vst [vmem:[%s426 + $0x170] sm:$0xff] %v6112
          %6177 = vst [vmem:[%s426 + $0x178] sm:$0xff] %v6113
          %6178 = vst [vmem:[%s426 + $0x180] sm:$0xff] %v6114
          %6179 = vst [vmem:[%s426 + $0x188] sm:$0xff] %v6115
          %6180 = vst [vmem:[%s426 + $0x190] sm:$0xff] %v6116
          %6181 = vst [vmem:[%s426 + $0x198] sm:$0xff] %v6117
          %6182 = vst [vmem:[%s426 + $0x1a0] sm:$0xff] %v6118
          %6183 = vst [vmem:[%s426 + $0x1a8] sm:$0xff] %v6119
          %6184 = vst [vmem:[%s426 + $0x1b0] sm:$0xff] %v6120
          %6185 = vst [vmem:[%s426 + $0x1b8] sm:$0xff] %v6121
          %6186 = vst [vmem:[%s426 + $0x1c0] sm:$0xff] %v6122
          %6187 = vst [vmem:[%s426 + $0x1c8] sm:$0xff] %v6123
          %6188 = vst [vmem:[%s426 + $0x1d0] sm:$0xff] %v6124
          %6189 = vst [vmem:[%s426 + $0x1d8] sm:$0xff] %v6125
          %6190 = vst [vmem:[%s426 + $0x1e0] sm:$0xff] %v6126
          %6191 = vst [vmem:[%s426 + $0x1e8] sm:$0xff] %v6127
          %6192 = vst [vmem:[%s426 + $0x1f0] sm:$0xff] %v6128
          %6193 = vst [vmem:[%s426 + $0x1f8] sm:$0xff] %v6129
        $region67: #{netD3_forward.3} parent=50 // pred_fallthru
          _
        %s6194 = smul.u32 16, %s18
        %p6195 = scmp.lt.s32.totalorder %s6194, 15
        %s6196 = scalar_select %p6195, %s6194, 15
        %s6197 = smul.addr %s6196, 4
        %s6198 = smul.addr %s6197, 8
        %s6199 = scalar_lea.vmem %s3, %s6198
        // Predicated region
        $region68: #{netD3_forward.3} parent=50 // pred_check
          %p6200 = pneg %p119
        $region69: #{netD3_forward.3} parent=50 // pred_check_branch
          %6202 = sbr.rel (%p6200) target = $region71
        $region70: #{netD3_forward.3} parent=50 // pred_region
          %s6203 = smul.u32 16, %s18
        $region71: #{netD3_forward.3} parent=50 // pred_fallthru
          _
        // Predicated region
        $region72: #{netD3_forward.3} parent=50 // pred_check
          %p6204 = pneg %p119
        $region73: #{netD3_forward.3} parent=50 // pred_check_branch
          %6206 = sbr.rel (%p6204) target = $region75
        $region74: #{netD3_forward.3} parent=50 // pred_region
          %s6207 = smul.u32 16, %s18
          %p6208 = scmp.lt.s32.totalorder %s6207, 15
          %s6209 = scalar_select %p6208, %s6207, 15
          %s6210 = smul.addr %s6209, 4
          %s6211 = smul.addr %s6210, 8
          %s6212 = scalar_lea.vmem %s3, %s6211
        $region75: #{netD3_forward.3} parent=50 // pred_fallthru
          _
      $region51: #{netD3_forward.3} parent=5 // pred_fallthru
        _
      %p6213 = scmp.le.s32.totalorder 2, %s9
      // Predicated region
      $region76: #{netD3_forward.3} parent=5 // pred_check
        %p6214 = pneg %p6213
      $region77: #{netD3_forward.3} parent=5 // pred_check_branch
        %6216 = sbr.rel (%p6214) target = $region79
      $region78: #{netD3_forward.3} parent=5 // pred_region
        %s6217 = ssub.s32 %s9, 2
      $region79: #{netD3_forward.3} parent=5 // pred_fallthru
        _
    $region6: #{netD3_forward.3} parent=1 // loop_footer
      %s13 = sadd.s32 1, %s9
    $region7: #{netD3_forward.3} parent=1 // loop_footer_branch
      %8 = sbr.rel target = $region3
    $region8: #{netD3_forward.3} parent=1 // loop_exit
      _

// kernel: netD3_forward.4
$region0: #{netD3_forward.4}
  #allocation0 [shape = 'u32[]', space=smem, size = 0x4, offset = 0x4, fixed_abs, tag = 'smem constant byte address 0x4 - core index']
  #allocation1 [shape = 'u32[72,128]{1,0:T(1,128)}', space=vmem, size = 0x9000, scoped, tag = 'internal scratch']
  %s0 = inlined_call_operand.vmem [shape: bf16[32,4608], index: 0, kind: input, shape index: {}]
  %s1 = inlined_call_operand.vmem [shape: bf16[4608,128], index: 1, kind: input, shape index: {}]
  %s2 = inlined_call_operand.vmem [shape: f32[1,128], index: 2, kind: input, shape index: {}]
  %s3 = inlined_call_operand.vmem [shape: f32[32,128], index: 3, kind: output, shape index: {}]
  %s4 = sld [smem:[#allocation0]]
  $region80: #{netD3_forward.4} parent=0
    _
  %s6 = ssub.s32 1, %s4
  %s7 = scalar_select 0, %s6, %s4
  $region1: #{netD3_forward.4} parent=0
    #allocation2 [shape = 'u8[196608]{0}', space=vmem, size = 0x30000, scoped, tag = 'input window, operand 0']
    loop: start=0, step=1, limit=5
    $region2: #{netD3_forward.4} parent=1 // loop_pre_header
      _
    $region3: #{netD3_forward.4} parent=1 // loop_header
      %s9 = sphi 0, %s13
      %p10 = scmp.ge.s32.totalorder %s9, 5
      %s16 = sphi 0, %s28
      %s17 = sphi 0, %s24
      %s18 = sphi 0, %s16
      %s19 = sphi 0, %s17
      %s20 = sphi 0, %s18
      %s21 = sphi 0, %s19
      %s33 = sphi 0, %s35
      %s36 = sphi 0, %s33
      %s37 = sphi 0, %s36
      %s53 = sphi 0, %s37
      %s59 = sphi 0, %s61
      %s62 = sphi 0, %s59
      %s63 = sphi 0, %s62
      %s79 = sphi 0, %s63
      %s83 = sphi 0, %s83
      %s85 = sphi 0, %s83
      %s86 = sphi 0, %s85
      %s100 = sphi 0, %s86
      %s106 = sphi 0, %s108
      %s109 = sphi 0, %s106
      %s110 = sphi 0, %s109
      %s126 = sphi 0, %s110
    $region4: #{netD3_forward.4} parent=1 // loop_header_branch
      %12 = sbr.rel (%p10) target = $region8
    $region5: #{netD3_forward.4} parent=1 // loop_body
      %s14 = ssub.s32 %s9, 1
      %s15 = ssub.s32 %s9, 2
      %s22 = sadd.s32 1, %s17
      %p23 = scmp.ge.s32.totalorder %s22, 3
      %s24 = scalar_select %p23, 0, %s22
      %s25 = sadd.s32 1, %s16
      %s26 = scalar_select %p23, %s25, %s16
      %p27 = scmp.ge.s32.totalorder %s26, 1
      %s28 = scalar_select %p27, 0, %s26
      %s29 = ssub.s32 %s16, %s28
      %s30 = ssub.s32 %s17, %s24
      %s31 = sor.u32 %s29, %s30
      %p32 = scmp.eq.s32.totalorder %s31, 0
      %s34 = sadd.s32 %s33, 1
      %s35 = scalar_select %p32, %s33, %s34
      %p38 = pneg %p32
      %p39 = scmp.eq.s32.totalorder %s9, 2
      %p40 = por %p38, %p39
      %p41 = scmp.ne.s32.totalorder %s33, %s36
      %p42 = scmp.eq.s32.totalorder %s9, 0
      %p43 = por %p41, %p42
      %p44 = scmp.ne.s32.totalorder %s33, %s36
      %p45 = scmp.eq.s32.totalorder %s14, 2
      %p46 = por %p44, %p45
      %p47 = scmp.ne.s32.totalorder %s36, %s37
      %p48 = scmp.eq.s32.totalorder %s14, 0
      %p49 = por %p47, %p48
      %p50 = scmp.ne.s32.totalorder %s36, %s37
      %p51 = scmp.eq.s32.totalorder %s15, 2
      %p52 = por %p50, %p51
      %p54 = scmp.ne.s32.totalorder %s37, %s53
      %p55 = scmp.eq.s32.totalorder %s15, 0
      %p56 = por %p54, %p55
      %s57 = ssub.s32 %s17, %s24
      %p58 = scmp.eq.s32.totalorder %s57, 0
      %s60 = sadd.s32 %s59, 1
      %s61 = scalar_select %p58, %s59, %s60
      %p64 = pneg %p58
      %p65 = scmp.eq.s32.totalorder %s9, 2
      %p66 = por %p64, %p65
      %p67 = scmp.ne.s32.totalorder %s59, %s62
      %p68 = scmp.eq.s32.totalorder %s9, 0
      %p69 = por %p67, %p68
      %p70 = scmp.ne.s32.totalorder %s59, %s62
      %p71 = scmp.eq.s32.totalorder %s14, 2
      %p72 = por %p70, %p71
      %p73 = scmp.ne.s32.totalorder %s62, %s63
      %p74 = scmp.eq.s32.totalorder %s14, 0
      %p75 = por %p73, %p74
      %p76 = scmp.ne.s32.totalorder %s62, %s63
      %p77 = scmp.eq.s32.totalorder %s15, 2
      %p78 = por %p76, %p77
      %p80 = scmp.ne.s32.totalorder %s63, %s79
      %p81 = scmp.eq.s32.totalorder %s15, 0
      %p82 = por %p80, %p81
      %s84 = sadd.s32 %s83, 1
      %p87 = scmp.eq.s32.totalorder %s9, 2
      %p88 = scmp.ne.s32.totalorder %s83, %s85
      %p89 = scmp.eq.s32.totalorder %s9, 0
      %p90 = por %p88, %p89
      %p91 = scmp.ne.s32.totalorder %s83, %s85
      %p92 = scmp.eq.s32.totalorder %s14, 2
      %p93 = por %p91, %p92
      %p94 = scmp.ne.s32.totalorder %s85, %s86
      %p95 = scmp.eq.s32.totalorder %s14, 0
      %p96 = por %p94, %p95
      %p97 = scmp.ne.s32.totalorder %s85, %s86
      %p98 = scmp.eq.s32.totalorder %s15, 2
      %p99 = por %p97, %p98
      %p101 = scmp.ne.s32.totalorder %s86, %s100
      %p102 = scmp.eq.s32.totalorder %s15, 0
      %p103 = por %p101, %p102
      %s104 = ssub.s32 %s16, %s28
      %p105 = scmp.eq.s32.totalorder %s104, 0
      %s107 = sadd.s32 %s106, 1
      %s108 = scalar_select %p105, %s106, %s107
      %p111 = pneg %p105
      %p112 = scmp.eq.s32.totalorder %s9, 2
      %p113 = por %p111, %p112
      %p114 = scmp.ne.s32.totalorder %s106, %s109
      %p115 = scmp.eq.s32.totalorder %s9, 0
      %p116 = por %p114, %p115
      %p117 = scmp.ne.s32.totalorder %s106, %s109
      %p118 = scmp.eq.s32.totalorder %s14, 2
      %p119 = por %p117, %p118
      %p120 = scmp.ne.s32.totalorder %s109, %s110
      %p121 = scmp.eq.s32.totalorder %s14, 0
      %p122 = por %p120, %p121
      %p123 = scmp.ne.s32.totalorder %s109, %s110
      %p124 = scmp.eq.s32.totalorder %s15, 2
      %p125 = por %p123, %p124
      %p127 = scmp.ne.s32.totalorder %s110, %s126
      %p128 = scmp.eq.s32.totalorder %s15, 0
      %p129 = por %p127, %p128
      %p130 = scmp.le.s32.totalorder 1, %s9
      %p131 = scmp.lt.s32.totalorder %s9, 4
      %p132 = pnand %p130, %p131
      %p133 = pneg %p132
      // Predicated region
      $region9: #{netD3_forward.4} parent=5 // pred_check
        _
      $region10: #{netD3_forward.4} parent=5 // pred_check_branch
        %135 = sbr.rel (%p132) target = $region12
      $region11: #{netD3_forward.4} parent=5 // pred_region
        %s136 = ssub.s32 %s9, 1
        // Predicated region
        $region13: #{netD3_forward.4} parent=11 // pred_check
          %p137 = pneg %p96
        $region14: #{netD3_forward.4} parent=11 // pred_check_branch
          %139 = sbr.rel (%p137) target = $region16
        $region15: #{netD3_forward.4} parent=11 // pred_region
          _
        $region16: #{netD3_forward.4} parent=11 // pred_fallthru
          _
      $region12: #{netD3_forward.4} parent=5 // pred_fallthru
        _
      %p140 = scmp.lt.s32.totalorder %s9, 3
      // Predicated region
      $region17: #{netD3_forward.4} parent=5 // pred_check
        %p141 = pneg %p140
      $region18: #{netD3_forward.4} parent=5 // pred_check_branch
        %143 = sbr.rel (%p141) target = $region20
      $region19: #{netD3_forward.4} parent=5 // pred_region
        // Predicated region
        $region21: #{netD3_forward.4} parent=19 // pred_check
          %p144 = pneg %p43
        $region22: #{netD3_forward.4} parent=19 // pred_check_branch
          %146 = sbr.rel (%p144) target = $region24
        $region23: #{netD3_forward.4} parent=19 // pred_region
          %s147 = sand.u32 %s33, 1
          %s148 = sand.u32 %s33, 1
          %s149 = smul.addr %s148, 192
          %s150 = scalar_lea.vmem [#allocation2], %s149
          %s151 = smul.u32 4, %s16
          %s152 = smul.u32 12, %s17
          %s153 = smul.addr %s151, 36
          %s154 = sadd.s32 %s152, %s153
          %s155 = smul.addr %s154, 4
          %s156 = scalar_lea.vmem %s0, %s155
          // Predicated region
          $region25: #{netD3_forward.4} parent=23 // pred_check
            _
          $region26: #{netD3_forward.4} parent=23 // pred_check_branch
            %158 = sbr.rel (0) target = $region28
          $region27: #{netD3_forward.4} parent=23 // pred_region
            // Predicated region
            $region29: #{netD3_forward.4} parent=27 // pred_check
              _
            $region30: #{netD3_forward.4} parent=27 // pred_check_branch
              %160 = sbr.rel (0) target = $region32
            $region31: #{netD3_forward.4} parent=27 // pred_region
              loop: start=0, step=1, limit=1
              $region33: #{netD3_forward.4} parent=31 // loop_pre_header
                _
              $region34: #{netD3_forward.4} parent=31 // loop_header
                %s162 = sphi 0, %s166
                %p163 = scmp.ge.s32.totalorder %s162, 1
                %s167 = sphi %s156, %s156
                %s168 = sphi %s150, %s150
              $region35: #{netD3_forward.4} parent=31 // loop_header_branch
                %165 = sbr.rel (%p163) target = $region39
              $region36: #{netD3_forward.4} parent=31 // loop_body
                %v169 = vld [vmem:[%s167] sm:$0xff]
                %170 = vst [vmem:[%s168] sm:$0xff] %v169
                %v171 = vld [vmem:[%s167 + $0x8] sm:$0xff]
                %172 = vst [vmem:[%s168 + $0x8] sm:$0xff] %v171
                %v173 = vld [vmem:[%s167 + $0x10] sm:$0xff]
                %174 = vst [vmem:[%s168 + $0x10] sm:$0xff] %v173
                %v175 = vld [vmem:[%s167 + $0x18] sm:$0xff]
                %176 = vst [vmem:[%s168 + $0x18] sm:$0xff] %v175
                %v177 = vld [vmem:[%s167 + $0x20] sm:$0xff]
                %178 = vst [vmem:[%s168 + $0x20] sm:$0xff] %v177
                %v179 = vld [vmem:[%s167 + $0x28] sm:$0xff]
                %180 = vst [vmem:[%s168 + $0x28] sm:$0xff] %v179
                %v181 = vld [vmem:[%s167 + $0x90] sm:$0xff]
                %182 = vst [vmem:[%s168 + $0x30] sm:$0xff] %v181
                %v183 = vld [vmem:[%s167 + $0x98] sm:$0xff]
                %184 = vst [vmem:[%s168 + $0x38] sm:$0xff] %v183
                %v185 = vld [vmem:[%s167 + $0xa0] sm:$0xff]
                %186 = vst [vmem:[%s168 + $0x40] sm:$0xff] %v185
                %v187 = vld [vmem:[%s167 + $0xa8] sm:$0xff]
                %188 = vst [vmem:[%s168 + $0x48] sm:$0xff] %v187
                %v189 = vld [vmem:[%s167 + $0xb0] sm:$0xff]
                %190 = vst [vmem:[%s168 + $0x50] sm:$0xff] %v189
                %v191 = vld [vmem:[%s167 + $0xb8] sm:$0xff]
                %192 = vst [vmem:[%s168 + $0x58] sm:$0xff] %v191
                %v193 = vld [vmem:[%s167 + $0x120] sm:$0xff]
                %194 = vst [vmem:[%s168 + $0x60] sm:$0xff] %v193
                %v195 = vld [vmem:[%s167 + $0x128] sm:$0xff]
                %196 = vst [vmem:[%s168 + $0x68] sm:$0xff] %v195
                %v197 = vld [vmem:[%s167 + $0x130] sm:$0xff]
                %198 = vst [vmem:[%s168 + $0x70] sm:$0xff] %v197
                %v199 = vld [vmem:[%s167 + $0x138] sm:$0xff]
                %200 = vst [vmem:[%s168 + $0x78] sm:$0xff] %v199
                %v201 = vld [vmem:[%s167 + $0x140] sm:$0xff]
                %202 = vst [vmem:[%s168 + $0x80] sm:$0xff] %v201
                %v203 = vld [vmem:[%s167 + $0x148] sm:$0xff]
                %204 = vst [vmem:[%s168 + $0x88] sm:$0xff] %v203
                %v205 = vld [vmem:[%s167 + $0x1b0] sm:$0xff]
                %206 = vst [vmem:[%s168 + $0x90] sm:$0xff] %v205
                %v207 = vld [vmem:[%s167 + $0x1b8] sm:$0xff]
                %208 = vst [vmem:[%s168 + $0x98] sm:$0xff] %v207
                %v209 = vld [vmem:[%s167 + $0x1c0] sm:$0xff]
                %210 = vst [vmem:[%s168 + $0xa0] sm:$0xff] %v209
                %v211 = vld [vmem:[%s167 + $0x1c8] sm:$0xff]
                %212 = vst [vmem:[%s168 + $0xa8] sm:$0xff] %v211
                %v213 = vld [vmem:[%s167 + $0x1d0] sm:$0xff]
                %214 = vst [vmem:[%s168 + $0xb0] sm:$0xff] %v213
                %v215 = vld [vmem:[%s167 + $0x1d8] sm:$0xff]
                %216 = vst [vmem:[%s168 + $0xb8] sm:$0xff] %v215
              $region37: #{netD3_forward.4} parent=31 // loop_footer
                %s166 = sadd.s32 1, %s162
              $region38: #{netD3_forward.4} parent=31 // loop_footer_branch
                %161 = sbr.rel target = $region34
              $region39: #{netD3_forward.4} parent=31 // loop_exit
                _
            $region32: #{netD3_forward.4} parent=27 // pred_fallthru
              _
            // Predicated region
            $region40: #{netD3_forward.4} parent=27 // pred_check
              _
            $region41: #{netD3_forward.4} parent=27 // pred_check_branch
              %218 = sbr.rel target = $region43
            $region42: #{netD3_forward.4} parent=27 // pred_region
              _
            $region43: #{netD3_forward.4} parent=27 // pred_fallthru
              _
          $region28: #{netD3_forward.4} parent=23 // pred_fallthru
            _
          %219 = vnop
        $region24: #{netD3_forward.4} parent=19 // pred_fallthru
          _
        // Predicated region
        $region44: #{netD3_forward.4} parent=19 // pred_check
          %p220 = pneg %p69
        $region45: #{netD3_forward.4} parent=19 // pred_check_branch
          %222 = sbr.rel (%p220) target = $region47
        $region46: #{netD3_forward.4} parent=19 // pred_region
          %s223 = smul.u32 192, %s17
          %p224 = scmp.lt.s32.totalorder %s223, 575
          %s225 = scalar_select %p224, %s223, 575
          %s226 = smul.addr %s225, 4
          %s227 = scalar_lea.vmem %s1, %s226
          %s228 = smul.u32 192, %s17
        $region47: #{netD3_forward.4} parent=19 // pred_fallthru
          _
      $region20: #{netD3_forward.4} parent=5 // pred_fallthru
        _
      %p229 = scmp.le.s32.totalorder 1, %s9
      %p230 = scmp.lt.s32.totalorder %s9, 4
      %p231 = pnand %p229, %p230
      %p232 = pneg %p231
      // Predicated region
      $region48: #{netD3_forward.4} parent=5 // pred_check
        _
      $region49: #{netD3_forward.4} parent=5 // pred_check_branch
        %234 = sbr.rel (%p231) target = $region51
      $region50: #{netD3_forward.4} parent=5 // pred_region
        %s235 = ssub.s32 %s9, 1
        %s236 = sand.u32 %s36, 1
        %s237 = sand.u32 %s36, 1
        %s238 = smul.addr %s237, 192
        %s239 = scalar_lea.vmem [#allocation2], %s238
        // Predicated region
        $region52: #{netD3_forward.4} parent=50 // pred_check
          %p240 = pneg %p49
        $region53: #{netD3_forward.4} parent=50 // pred_check_branch
          %242 = sbr.rel (%p240) target = $region55
        $region54: #{netD3_forward.4} parent=50 // pred_region
          _
        $region55: #{netD3_forward.4} parent=50 // pred_fallthru
          _
        %s243 = sand.u32 %s36, 1
        %s244 = sand.u32 %s36, 1
        %s245 = smul.addr %s244, 192
        %s246 = scalar_lea.vmem [#allocation2], %s245
        %p247 = pneg %p49
        %p248 = pneg %p46
        %s249 = smul.u32 192, %s19
        %p250 = scmp.lt.s32.totalorder %s249, 575
        %s251 = scalar_select %p250, %s249, 575
        %s252 = smul.addr %s251, 4
        %s253 = scalar_lea.vmem %s1, %s252
        %p254 = pneg %p75
        %p255 = pneg %p72
        %p256 = pneg %p96
        %p257 = pneg %p93
        %p258 = pneg %p122
        %p259 = pneg %p119
        %s260 = smul.u32 4, %s18
        %p261 = scmp.lt.s32.totalorder %s260, 3
        %s262 = scalar_select %p261, %s260, 3
        %s263 = smul.addr %s262, 8
        %s264 = scalar_lea.vmem %s3, %s263
        %s265 = smul.u32 4, %s18
        %s266 = smul.u32 12, %s19
        %s267 = smul.u32 192, %s19
        %p268 = scmp.lt.s32.totalorder %s267, 575
        %s269 = scalar_select %p268, %s267, 575
        %s270 = smul.addr %s269, 4
        %s271 = scalar_lea.vmem %s1, %s270
        %s272 = smul.u32 192, %s19
        %s273 = smul.u32 4, %s18
        %p274 = scmp.lt.s32.totalorder %s273, 3
        %s275 = scalar_select %p274, %s273, 3
        %s276 = smul.addr %s275, 8
        %s277 = scalar_lea.vmem %s3, %s276
        %s278 = smul.u32 4, %s18
        %v279 = vld [vmem:[%s239] sm:$0xff]
        %v280 = vld [vmem:[%s239 + $0x8] sm:$0xff]
        %v281 = vld [vmem:[%s239 + $0x10] sm:$0xff]
        %v282 = vld [vmem:[%s239 + $0x18] sm:$0xff]
        %v283 = vld [vmem:[%s239 + $0x20] sm:$0xff]
        %v284 = vld [vmem:[%s239 + $0x28] sm:$0xff]
        %v285 = vld [vmem:[%s239 + $0x30] sm:$0xff]
        %v286 = vld [vmem:[%s239 + $0x38] sm:$0xff]
        %v287 = vld [vmem:[%s239 + $0x40] sm:$0xff]
        %v288 = vld [vmem:[%s239 + $0x48] sm:$0xff]
        %v289 = vld [vmem:[%s239 + $0x50] sm:$0xff]
        %v290 = vld [vmem:[%s239 + $0x58] sm:$0xff]
        %v291 = vld [vmem:[%s239 + $0x60] sm:$0xff]
        %v292 = vld [vmem:[%s239 + $0x68] sm:$0xff]
        %v293 = vld [vmem:[%s239 + $0x70] sm:$0xff]
        %v294 = vld [vmem:[%s239 + $0x78] sm:$0xff]
        %v295 = vld [vmem:[%s239 + $0x80] sm:$0xff]
        %v296 = vld [vmem:[%s239 + $0x88] sm:$0xff]
        %v297 = vld [vmem:[%s239 + $0x90] sm:$0xff]
        %v298 = vld [vmem:[%s239 + $0x98] sm:$0xff]
        %v299 = vld [vmem:[%s239 + $0xa0] sm:$0xff]
        %v300 = vld [vmem:[%s239 + $0xa8] sm:$0xff]
        %v301 = vld [vmem:[%s239 + $0xb0] sm:$0xff]
        %v302 = vld [vmem:[%s239 + $0xb8] sm:$0xff]
        %v303 = vld [vmem:[%s271] sm:$0xf]
        %v304 = vld [vmem:[%s271 + $0x4] sm:$0xf]
        %v305 = vld [vmem:[%s271 + $0x8] sm:$0xf]
        %v306 = vld [vmem:[%s271 + $0xc] sm:$0xf]
        %v307 = vld [vmem:[%s271 + $0x10] sm:$0xf]
        %v308 = vld [vmem:[%s271 + $0x14] sm:$0xf]
        %v309 = vld [vmem:[%s271 + $0x18] sm:$0xf]
        %v310 = vld [vmem:[%s271 + $0x1c] sm:$0xf]
        %v311 = vld [vmem:[%s271 + $0x20] sm:$0xf]
        %v312 = vld [vmem:[%s271 + $0x24] sm:$0xf]
        %v313 = vld [vmem:[%s271 + $0x28] sm:$0xf]
        %v314 = vld [vmem:[%s271 + $0x2c] sm:$0xf]
        %v315 = vld [vmem:[%s271 + $0x30] sm:$0xf]
        %v316 = vld [vmem:[%s271 + $0x34] sm:$0xf]
        %v317 = vld [vmem:[%s271 + $0x38] sm:$0xf]
        %v318 = vld [vmem:[%s271 + $0x3c] sm:$0xf]
        %v319 = vld [vmem:[%s271 + $0x40] sm:$0xf]
        %v320 = vld [vmem:[%s271 + $0x44] sm:$0xf]
        %v321 = vld [vmem:[%s271 + $0x48] sm:$0xf]
        %v322 = vld [vmem:[%s271 + $0x4c] sm:$0xf]
        %v323 = vld [vmem:[%s271 + $0x50] sm:$0xf]
        %v324 = vld [vmem:[%s271 + $0x54] sm:$0xf]
        %v325 = vld [vmem:[%s271 + $0x58] sm:$0xf]
        %v326 = vld [vmem:[%s271 + $0x5c] sm:$0xf]
        %v327 = vld [vmem:[%s271 + $0x60] sm:$0xf]
        %v328 = vld [vmem:[%s271 + $0x64] sm:$0xf]
        %v329 = vld [vmem:[%s271 + $0x68] sm:$0xf]
        %v330 = vld [vmem:[%s271 + $0x6c] sm:$0xf]
        %v331 = vld [vmem:[%s271 + $0x70] sm:$0xf]
        %v332 = vld [vmem:[%s271 + $0x74] sm:$0xf]
        %v333 = vld [vmem:[%s271 + $0x78] sm:$0xf]
        %v334 = vld [vmem:[%s271 + $0x7c] sm:$0xf]
        %v335 = vld [vmem:[%s271 + $0x80] sm:$0xf]
        %v336 = vld [vmem:[%s271 + $0x84] sm:$0xf]
        %v337 = vld [vmem:[%s271 + $0x88] sm:$0xf]
        %v338 = vld [vmem:[%s271 + $0x8c] sm:$0xf]
        %v339 = vld [vmem:[%s271 + $0x90] sm:$0xf]
        %v340 = vld [vmem:[%s271 + $0x94] sm:$0xf]
        %v341 = vld [vmem:[%s271 + $0x98] sm:$0xf]
        %v342 = vld [vmem:[%s271 + $0x9c] sm:$0xf]
        %v343 = vld [vmem:[%s271 + $0xa0] sm:$0xf]
        %v344 = vld [vmem:[%s271 + $0xa4] sm:$0xf]
        %v345 = vld [vmem:[%s271 + $0xa8] sm:$0xf]
        %v346 = vld [vmem:[%s271 + $0xac] sm:$0xf]
        %v347 = vld [vmem:[%s271 + $0xb0] sm:$0xf]
        %v348 = vld [vmem:[%s271 + $0xb4] sm:$0xf]
        %v349 = vld [vmem:[%s271 + $0xb8] sm:$0xf]
        %v350 = vld [vmem:[%s271 + $0xbc] sm:$0xf]
        %v351 = vld [vmem:[%s271 + $0xc0] sm:$0xf]
        %v352 = vld [vmem:[%s271 + $0xc4] sm:$0xf]
        %v353 = vld [vmem:[%s271 + $0xc8] sm:$0xf]
        %v354 = vld [vmem:[%s271 + $0xcc] sm:$0xf]
        %v355 = vld [vmem:[%s271 + $0xd0] sm:$0xf]
        %v356 = vld [vmem:[%s271 + $0xd4] sm:$0xf]
        %v357 = vld [vmem:[%s271 + $0xd8] sm:$0xf]
        %v358 = vld [vmem:[%s271 + $0xdc] sm:$0xf]
        %v359 = vld [vmem:[%s271 + $0xe0] sm:$0xf]
        %v360 = vld [vmem:[%s271 + $0xe4] sm:$0xf]
        %v361 = vld [vmem:[%s271 + $0xe8] sm:$0xf]
        %v362 = vld [vmem:[%s271 + $0xec] sm:$0xf]
        %v363 = vld [vmem:[%s271 + $0xf0] sm:$0xf]
        %v364 = vld [vmem:[%s271 + $0xf4] sm:$0xf]
        %v365 = vld [vmem:[%s271 + $0xf8] sm:$0xf]
        %v366 = vld [vmem:[%s271 + $0xfc] sm:$0xf]
        %v367 = vld [vmem:[%s271 + $0x100] sm:$0xf]
        %v368 = vld [vmem:[%s271 + $0x104] sm:$0xf]
        %v369 = vld [vmem:[%s271 + $0x108] sm:$0xf]
        %v370 = vld [vmem:[%s271 + $0x10c] sm:$0xf]
        %v371 = vld [vmem:[%s271 + $0x110] sm:$0xf]
        %v372 = vld [vmem:[%s271 + $0x114] sm:$0xf]
        %v373 = vld [vmem:[%s271 + $0x118] sm:$0xf]
        %v374 = vld [vmem:[%s271 + $0x11c] sm:$0xf]
        %v375 = vld [vmem:[%s271 + $0x120] sm:$0xf]
        %v376 = vld [vmem:[%s271 + $0x124] sm:$0xf]
        %v377 = vld [vmem:[%s271 + $0x128] sm:$0xf]
        %v378 = vld [vmem:[%s271 + $0x12c] sm:$0xf]
        %v379 = vld [vmem:[%s271 + $0x130] sm:$0xf]
        %v380 = vld [vmem:[%s271 + $0x134] sm:$0xf]
        %v381 = vld [vmem:[%s271 + $0x138] sm:$0xf]
        %v382 = vld [vmem:[%s271 + $0x13c] sm:$0xf]
        %v383 = vld [vmem:[%s271 + $0x140] sm:$0xf]
        %v384 = vld [vmem:[%s271 + $0x144] sm:$0xf]
        %v385 = vld [vmem:[%s271 + $0x148] sm:$0xf]
        %v386 = vld [vmem:[%s271 + $0x14c] sm:$0xf]
        %v387 = vld [vmem:[%s271 + $0x150] sm:$0xf]
        %v388 = vld [vmem:[%s271 + $0x154] sm:$0xf]
        %v389 = vld [vmem:[%s271 + $0x158] sm:$0xf]
        %v390 = vld [vmem:[%s271 + $0x15c] sm:$0xf]
        %v391 = vld [vmem:[%s271 + $0x160] sm:$0xf]
        %v392 = vld [vmem:[%s271 + $0x164] sm:$0xf]
        %v393 = vld [vmem:[%s271 + $0x168] sm:$0xf]
        %v394 = vld [vmem:[%s271 + $0x16c] sm:$0xf]
        %v395 = vld [vmem:[%s271 + $0x170] sm:$0xf]
        %v396 = vld [vmem:[%s271 + $0x174] sm:$0xf]
        %v397 = vld [vmem:[%s271 + $0x178] sm:$0xf]
        %v398 = vld [vmem:[%s271 + $0x17c] sm:$0xf]
        %v399 = vld [vmem:[%s271 + $0x180] sm:$0xf]
        %v400 = vld [vmem:[%s271 + $0x184] sm:$0xf]
        %v401 = vld [vmem:[%s271 + $0x188] sm:$0xf]
        %v402 = vld [vmem:[%s271 + $0x18c] sm:$0xf]
        %v403 = vld [vmem:[%s271 + $0x190] sm:$0xf]
        %v404 = vld [vmem:[%s271 + $0x194] sm:$0xf]
        %v405 = vld [vmem:[%s271 + $0x198] sm:$0xf]
        %v406 = vld [vmem:[%s271 + $0x19c] sm:$0xf]
        %v407 = vld [vmem:[%s271 + $0x1a0] sm:$0xf]
        %v408 = vld [vmem:[%s271 + $0x1a4] sm:$0xf]
        %v409 = vld [vmem:[%s271 + $0x1a8] sm:$0xf]
        %v410 = vld [vmem:[%s271 + $0x1ac] sm:$0xf]
        %v411 = vld [vmem:[%s271 + $0x1b0] sm:$0xf]
        %v412 = vld [vmem:[%s271 + $0x1b4] sm:$0xf]
        %v413 = vld [vmem:[%s271 + $0x1b8] sm:$0xf]
        %v414 = vld [vmem:[%s271 + $0x1bc] sm:$0xf]
        %v415 = vld [vmem:[%s271 + $0x1c0] sm:$0xf]
        %v416 = vld [vmem:[%s271 + $0x1c4] sm:$0xf]
        %v417 = vld [vmem:[%s271 + $0x1c8] sm:$0xf]
        %v418 = vld [vmem:[%s271 + $0x1cc] sm:$0xf]
        %v419 = vld [vmem:[%s271 + $0x1d0] sm:$0xf]
        %v420 = vld [vmem:[%s271 + $0x1d4] sm:$0xf]
        %v421 = vld [vmem:[%s271 + $0x1d8] sm:$0xf]
        %v422 = vld [vmem:[%s271 + $0x1dc] sm:$0xf]
        %v423 = vld [vmem:[%s271 + $0x1e0] sm:$0xf]
        %v424 = vld [vmem:[%s271 + $0x1e4] sm:$0xf]
        %v425 = vld [vmem:[%s271 + $0x1e8] sm:$0xf]
        %v426 = vld [vmem:[%s271 + $0x1ec] sm:$0xf]
        %v427 = vld [vmem:[%s271 + $0x1f0] sm:$0xf]
        %v428 = vld [vmem:[%s271 + $0x1f4] sm:$0xf]
        %v429 = vld [vmem:[%s271 + $0x1f8] sm:$0xf]
        %v430 = vld [vmem:[%s271 + $0x1fc] sm:$0xf]
        %v431 = vld [vmem:[%s271 + $0x200] sm:$0xf]
        %v432 = vld [vmem:[%s271 + $0x204] sm:$0xf]
        %v433 = vld [vmem:[%s271 + $0x208] sm:$0xf]
        %v434 = vld [vmem:[%s271 + $0x20c] sm:$0xf]
        %v435 = vld [vmem:[%s271 + $0x210] sm:$0xf]
        %v436 = vld [vmem:[%s271 + $0x214] sm:$0xf]
        %v437 = vld [vmem:[%s271 + $0x218] sm:$0xf]
        %v438 = vld [vmem:[%s271 + $0x21c] sm:$0xf]
        %v439 = vld [vmem:[%s271 + $0x220] sm:$0xf]
        %v440 = vld [vmem:[%s271 + $0x224] sm:$0xf]
        %v441 = vld [vmem:[%s271 + $0x228] sm:$0xf]
        %v442 = vld [vmem:[%s271 + $0x22c] sm:$0xf]
        %v443 = vld [vmem:[%s271 + $0x230] sm:$0xf]
        %v444 = vld [vmem:[%s271 + $0x234] sm:$0xf]
        %v445 = vld [vmem:[%s271 + $0x238] sm:$0xf]
        %v446 = vld [vmem:[%s271 + $0x23c] sm:$0xf]
        %v447 = vld [vmem:[%s271 + $0x240] sm:$0xf]
        %v448 = vld [vmem:[%s271 + $0x244] sm:$0xf]
        %v449 = vld [vmem:[%s271 + $0x248] sm:$0xf]
        %v450 = vld [vmem:[%s271 + $0x24c] sm:$0xf]
        %v451 = vld [vmem:[%s271 + $0x250] sm:$0xf]
        %v452 = vld [vmem:[%s271 + $0x254] sm:$0xf]
        %v453 = vld [vmem:[%s271 + $0x258] sm:$0xf]
        %v454 = vld [vmem:[%s271 + $0x25c] sm:$0xf]
        %v455 = vld [vmem:[%s271 + $0x260] sm:$0xf]
        %v456 = vld [vmem:[%s271 + $0x264] sm:$0xf]
        %v457 = vld [vmem:[%s271 + $0x268] sm:$0xf]
        %v458 = vld [vmem:[%s271 + $0x26c] sm:$0xf]
        %v459 = vld [vmem:[%s271 + $0x270] sm:$0xf]
        %v460 = vld [vmem:[%s271 + $0x274] sm:$0xf]
        %v461 = vld [vmem:[%s271 + $0x278] sm:$0xf]
        %v462 = vld [vmem:[%s271 + $0x27c] sm:$0xf]
        %v463 = vld [vmem:[%s271 + $0x280] sm:$0xf]
        %v464 = vld [vmem:[%s271 + $0x284] sm:$0xf]
        %v465 = vld [vmem:[%s271 + $0x288] sm:$0xf]
        %v466 = vld [vmem:[%s271 + $0x28c] sm:$0xf]
        %v467 = vld [vmem:[%s271 + $0x290] sm:$0xf]
        %v468 = vld [vmem:[%s271 + $0x294] sm:$0xf]
        %v469 = vld [vmem:[%s271 + $0x298] sm:$0xf]
        %v470 = vld [vmem:[%s271 + $0x29c] sm:$0xf]
        %v471 = vld [vmem:[%s271 + $0x2a0] sm:$0xf]
        %v472 = vld [vmem:[%s271 + $0x2a4] sm:$0xf]
        %v473 = vld [vmem:[%s271 + $0x2a8] sm:$0xf]
        %v474 = vld [vmem:[%s271 + $0x2ac] sm:$0xf]
        %v475 = vld [vmem:[%s271 + $0x2b0] sm:$0xf]
        %v476 = vld [vmem:[%s271 + $0x2b4] sm:$0xf]
        %v477 = vld [vmem:[%s271 + $0x2b8] sm:$0xf]
        %v478 = vld [vmem:[%s271 + $0x2bc] sm:$0xf]
        %v479 = vld [vmem:[%s271 + $0x2c0] sm:$0xf]
        %v480 = vld [vmem:[%s271 + $0x2c4] sm:$0xf]
        %v481 = vld [vmem:[%s271 + $0x2c8] sm:$0xf]
        %v482 = vld [vmem:[%s271 + $0x2cc] sm:$0xf]
        %v483 = vld [vmem:[%s271 + $0x2d0] sm:$0xf]
        %v484 = vld [vmem:[%s271 + $0x2d4] sm:$0xf]
        %v485 = vld [vmem:[%s271 + $0x2d8] sm:$0xf]
        %v486 = vld [vmem:[%s271 + $0x2dc] sm:$0xf]
        %v487 = vld [vmem:[%s271 + $0x2e0] sm:$0xf]
        %v488 = vld [vmem:[%s271 + $0x2e4] sm:$0xf]
        %v489 = vld [vmem:[%s271 + $0x2e8] sm:$0xf]
        %v490 = vld [vmem:[%s271 + $0x2ec] sm:$0xf]
        %v491 = vld [vmem:[%s271 + $0x2f0] sm:$0xf]
        %v492 = vld [vmem:[%s271 + $0x2f4] sm:$0xf]
        %v493 = vld [vmem:[%s271 + $0x2f8] sm:$0xf]
        %v494 = vld [vmem:[%s271 + $0x2fc] sm:$0xf]
        %v519 = vunpack.c.l.b16 %v279
        %v520 = vunpack.c.h.b16 %v279
        %v521 = vunpack.c.l.b16 %v280
        %v522 = vunpack.c.h.b16 %v280
        %v523 = vunpack.c.l.b16 %v281
        %v524 = vunpack.c.h.b16 %v281
        %v525 = vunpack.c.l.b16 %v282
        %v526 = vunpack.c.h.b16 %v282
        %v527 = vunpack.c.l.b16 %v283
        %v528 = vunpack.c.h.b16 %v283
        %v529 = vunpack.c.l.b16 %v284
        %v530 = vunpack.c.h.b16 %v284
        %v531 = vunpack.c.l.b16 %v285
        %v532 = vunpack.c.h.b16 %v285
        %v533 = vunpack.c.l.b16 %v286
        %v534 = vunpack.c.h.b16 %v286
        %v535 = vunpack.c.l.b16 %v287
        %v536 = vunpack.c.h.b16 %v287
        %v537 = vunpack.c.l.b16 %v288
        %v538 = vunpack.c.h.b16 %v288
        %v539 = vunpack.c.l.b16 %v289
        %v540 = vunpack.c.h.b16 %v289
        %v541 = vunpack.c.l.b16 %v290
        %v542 = vunpack.c.h.b16 %v290
        %v543 = vunpack.c.l.b16 %v291
        %v544 = vunpack.c.h.b16 %v291
        %v545 = vunpack.c.l.b16 %v292
        %v546 = vunpack.c.h.b16 %v292
        %v547 = vunpack.c.l.b16 %v293
        %v548 = vunpack.c.h.b16 %v293
        %v549 = vunpack.c.l.b16 %v294
        %v550 = vunpack.c.h.b16 %v294
        %v551 = vunpack.c.l.b16 %v295
        %v552 = vunpack.c.h.b16 %v295
        %v553 = vunpack.c.l.b16 %v296
        %v554 = vunpack.c.h.b16 %v296
        %v555 = vunpack.c.l.b16 %v297
        %v556 = vunpack.c.h.b16 %v297
        %v557 = vunpack.c.l.b16 %v298
        %v558 = vunpack.c.h.b16 %v298
        %v559 = vunpack.c.l.b16 %v299
        %v560 = vunpack.c.h.b16 %v299
        %v561 = vunpack.c.l.b16 %v300
        %v562 = vunpack.c.h.b16 %v300
        %v563 = vunpack.c.l.b16 %v301
        %v564 = vunpack.c.h.b16 %v301
        %v565 = vunpack.c.l.b16 %v302
        %v566 = vunpack.c.h.b16 %v302
        %v567 = vpack.c.b16 %v531, %v519
        %v568 = vpack.c.b16 %v532, %v520
        %v569 = vpack.c.b16 %v533, %v521
        %v570 = vpack.c.b16 %v534, %v522
        %v571 = vpack.c.b16 %v535, %v523
        %v572 = vpack.c.b16 %v536, %v524
        %v573 = vpack.c.b16 %v537, %v525
        %v574 = vpack.c.b16 %v538, %v526
        %v575 = vpack.c.b16 %v539, %v527
        %v576 = vpack.c.b16 %v540, %v528
        %v577 = vpack.c.b16 %v541, %v529
        %v578 = vpack.c.b16 %v542, %v530
        %v579 = vpack.c.b16 %v555, %v543
        %v580 = vpack.c.b16 %v556, %v544
        %v581 = vpack.c.b16 %v557, %v545
        %v582 = vpack.c.b16 %v558, %v546
        %v583 = vpack.c.b16 %v559, %v547
        %v584 = vpack.c.b16 %v560, %v548
        %v585 = vpack.c.b16 %v561, %v549
        %v586 = vpack.c.b16 %v562, %v550
        %v587 = vpack.c.b16 %v563, %v551
        %v588 = vpack.c.b16 %v564, %v552
        %v589 = vpack.c.b16 %v565, %v553
        %v590 = vpack.c.b16 %v566, %v554
        %v807 = vunpack.c.l.b16 %v303
        %v808 = vunpack.c.l.b16 %v304
        %v809 = vunpack.c.l.b16 %v305
        %v810 = vunpack.c.l.b16 %v306
        %v811 = vunpack.c.l.b16 %v307
        %v812 = vunpack.c.l.b16 %v308
        %v813 = vunpack.c.l.b16 %v309
        %v814 = vunpack.c.l.b16 %v310
        %v815 = vunpack.c.l.b16 %v311
        %v816 = vunpack.c.l.b16 %v312
        %v817 = vunpack.c.l.b16 %v313
        %v818 = vunpack.c.l.b16 %v314
        %v819 = vunpack.c.l.b16 %v315
        %v820 = vunpack.c.l.b16 %v316
        %v821 = vunpack.c.l.b16 %v317
        %v822 = vunpack.c.l.b16 %v318
        %v823 = vunpack.c.l.b16 %v319
        %v824 = vunpack.c.l.b16 %v320
        %v825 = vunpack.c.l.b16 %v321
        %v826 = vunpack.c.l.b16 %v322
        %v827 = vunpack.c.l.b16 %v323
        %v828 = vunpack.c.l.b16 %v324
        %v829 = vunpack.c.l.b16 %v325
        %v830 = vunpack.c.l.b16 %v326
        %v831 = vunpack.c.l.b16 %v327
        %v832 = vunpack.c.l.b16 %v328
        %v833 = vunpack.c.l.b16 %v329
        %v834 = vunpack.c.l.b16 %v330
        %v835 = vunpack.c.l.b16 %v331
        %v836 = vunpack.c.l.b16 %v332
        %v837 = vunpack.c.l.b16 %v333
        %v838 = vunpack.c.l.b16 %v334
        %v839 = vunpack.c.l.b16 %v335
        %v840 = vunpack.c.l.b16 %v336
        %v841 = vunpack.c.l.b16 %v337
        %v842 = vunpack.c.l.b16 %v338
        %v843 = vunpack.c.l.b16 %v339
        %v844 = vunpack.c.l.b16 %v340
        %v845 = vunpack.c.l.b16 %v341
        %v846 = vunpack.c.l.b16 %v342
        %v847 = vunpack.c.l.b16 %v343
        %v848 = vunpack.c.l.b16 %v344
        %v849 = vunpack.c.l.b16 %v345
        %v850 = vunpack.c.l.b16 %v346
        %v851 = vunpack.c.l.b16 %v347
        %v852 = vunpack.c.l.b16 %v348
        %v853 = vunpack.c.l.b16 %v349
        %v854 = vunpack.c.l.b16 %v350
        %v855 = vunpack.c.l.b16 %v351
        %v856 = vunpack.c.l.b16 %v352
        %v857 = vunpack.c.l.b16 %v353
        %v858 = vunpack.c.l.b16 %v354
        %v859 = vunpack.c.l.b16 %v355
        %v860 = vunpack.c.l.b16 %v356
        %v861 = vunpack.c.l.b16 %v357
        %v862 = vunpack.c.l.b16 %v358
        %v863 = vunpack.c.l.b16 %v359
        %v864 = vunpack.c.l.b16 %v360
        %v865 = vunpack.c.l.b16 %v361
        %v866 = vunpack.c.l.b16 %v362
        %v867 = vunpack.c.l.b16 %v363
        %v868 = vunpack.c.l.b16 %v364
        %v869 = vunpack.c.l.b16 %v365
        %v870 = vunpack.c.l.b16 %v366
        %v871 = vunpack.c.l.b16 %v367
        %v872 = vunpack.c.l.b16 %v368
        %v873 = vunpack.c.l.b16 %v369
        %v874 = vunpack.c.l.b16 %v370
        %v875 = vunpack.c.l.b16 %v371
        %v876 = vunpack.c.l.b16 %v372
        %v877 = vunpack.c.l.b16 %v373
        %v878 = vunpack.c.l.b16 %v374
        %v879 = vunpack.c.l.b16 %v375
        %v880 = vunpack.c.l.b16 %v376
        %v881 = vunpack.c.l.b16 %v377
        %v882 = vunpack.c.l.b16 %v378
        %v883 = vunpack.c.l.b16 %v379
        %v884 = vunpack.c.l.b16 %v380
        %v885 = vunpack.c.l.b16 %v381
        %v886 = vunpack.c.l.b16 %v382
        %v887 = vunpack.c.l.b16 %v383
        %v888 = vunpack.c.l.b16 %v384
        %v889 = vunpack.c.l.b16 %v385
        %v890 = vunpack.c.l.b16 %v386
        %v891 = vunpack.c.l.b16 %v387
        %v892 = vunpack.c.l.b16 %v388
        %v893 = vunpack.c.l.b16 %v389
        %v894 = vunpack.c.l.b16 %v390
        %v895 = vunpack.c.l.b16 %v391
        %v896 = vunpack.c.l.b16 %v392
        %v897 = vunpack.c.l.b16 %v393
        %v898 = vunpack.c.l.b16 %v394
        %v899 = vunpack.c.l.b16 %v395
        %v900 = vunpack.c.l.b16 %v396
        %v901 = vunpack.c.l.b16 %v397
        %v902 = vunpack.c.l.b16 %v398
        %v903 = vunpack.c.l.b16 %v399
        %v904 = vunpack.c.l.b16 %v400
        %v905 = vunpack.c.l.b16 %v401
        %v906 = vunpack.c.l.b16 %v402
        %v907 = vunpack.c.l.b16 %v403
        %v908 = vunpack.c.l.b16 %v404
        %v909 = vunpack.c.l.b16 %v405
        %v910 = vunpack.c.l.b16 %v406
        %v911 = vunpack.c.l.b16 %v407
        %v912 = vunpack.c.l.b16 %v408
        %v913 = vunpack.c.l.b16 %v409
        %v914 = vunpack.c.l.b16 %v410
        %v915 = vunpack.c.l.b16 %v411
        %v916 = vunpack.c.l.b16 %v412
        %v917 = vunpack.c.l.b16 %v413
        %v918 = vunpack.c.l.b16 %v414
        %v919 = vunpack.c.l.b16 %v415
        %v920 = vunpack.c.l.b16 %v416
        %v921 = vunpack.c.l.b16 %v417
        %v922 = vunpack.c.l.b16 %v418
        %v923 = vunpack.c.l.b16 %v419
        %v924 = vunpack.c.l.b16 %v420
        %v925 = vunpack.c.l.b16 %v421
        %v926 = vunpack.c.l.b16 %v422
        %v927 = vunpack.c.l.b16 %v423
        %v928 = vunpack.c.l.b16 %v424
        %v929 = vunpack.c.l.b16 %v425
        %v930 = vunpack.c.l.b16 %v426
        %v931 = vunpack.c.l.b16 %v427
        %v932 = vunpack.c.l.b16 %v428
        %v933 = vunpack.c.l.b16 %v429
        %v934 = vunpack.c.l.b16 %v430
        %v935 = vunpack.c.l.b16 %v431
        %v936 = vunpack.c.l.b16 %v432
        %v937 = vunpack.c.l.b16 %v433
        %v938 = vunpack.c.l.b16 %v434
        %v939 = vunpack.c.l.b16 %v435
        %v940 = vunpack.c.l.b16 %v436
        %v941 = vunpack.c.l.b16 %v437
        %v942 = vunpack.c.l.b16 %v438
        %v943 = vunpack.c.l.b16 %v439
        %v944 = vunpack.c.l.b16 %v440
        %v945 = vunpack.c.l.b16 %v441
        %v946 = vunpack.c.l.b16 %v442
        %v947 = vunpack.c.l.b16 %v443
        %v948 = vunpack.c.l.b16 %v444
        %v949 = vunpack.c.l.b16 %v445
        %v950 = vunpack.c.l.b16 %v446
        %v951 = vunpack.c.l.b16 %v447
        %v952 = vunpack.c.l.b16 %v448
        %v953 = vunpack.c.l.b16 %v449
        %v954 = vunpack.c.l.b16 %v450
        %v955 = vunpack.c.l.b16 %v451
        %v956 = vunpack.c.l.b16 %v452
        %v957 = vunpack.c.l.b16 %v453
        %v958 = vunpack.c.l.b16 %v454
        %v959 = vunpack.c.l.b16 %v455
        %v960 = vunpack.c.l.b16 %v456
        %v961 = vunpack.c.l.b16 %v457
        %v962 = vunpack.c.l.b16 %v458
        %v963 = vunpack.c.l.b16 %v459
        %v964 = vunpack.c.l.b16 %v460
        %v965 = vunpack.c.l.b16 %v461
        %v966 = vunpack.c.l.b16 %v462
        %v967 = vunpack.c.l.b16 %v463
        %v968 = vunpack.c.l.b16 %v464
        %v969 = vunpack.c.l.b16 %v465
        %v970 = vunpack.c.l.b16 %v466
        %v971 = vunpack.c.l.b16 %v467
        %v972 = vunpack.c.l.b16 %v468
        %v973 = vunpack.c.l.b16 %v469
        %v974 = vunpack.c.l.b16 %v470
        %v975 = vunpack.c.l.b16 %v471
        %v976 = vunpack.c.l.b16 %v472
        %v977 = vunpack.c.l.b16 %v473
        %v978 = vunpack.c.l.b16 %v474
        %v979 = vunpack.c.l.b16 %v475
        %v980 = vunpack.c.l.b16 %v476
        %v981 = vunpack.c.l.b16 %v477
        %v982 = vunpack.c.l.b16 %v478
        %v983 = vunpack.c.l.b16 %v479
        %v984 = vunpack.c.l.b16 %v480
        %v985 = vunpack.c.l.b16 %v481
        %v986 = vunpack.c.l.b16 %v482
        %v987 = vunpack.c.l.b16 %v483
        %v988 = vunpack.c.l.b16 %v484
        %v989 = vunpack.c.l.b16 %v485
        %v990 = vunpack.c.l.b16 %v486
        %v991 = vunpack.c.l.b16 %v487
        %v992 = vunpack.c.l.b16 %v488
        %v993 = vunpack.c.l.b16 %v489
        %v994 = vunpack.c.l.b16 %v490
        %v995 = vunpack.c.l.b16 %v491
        %v996 = vunpack.c.l.b16 %v492
        %v997 = vunpack.c.l.b16 %v493
        %v998 = vunpack.c.l.b16 %v494
        %v999 = vpack.c.b16 %v808, %v807
        %v1000 = vpack.c.b16 %v810, %v809
        %v1001 = vpack.c.b16 %v812, %v811
        %v1002 = vpack.c.b16 %v814, %v813
        %v1003 = vpack.c.b16 %v816, %v815
        %v1004 = vpack.c.b16 %v818, %v817
        %v1005 = vpack.c.b16 %v820, %v819
        %v1006 = vpack.c.b16 %v822, %v821
        %v1007 = vpack.c.b16 %v824, %v823
        %v1008 = vpack.c.b16 %v826, %v825
        %v1009 = vpack.c.b16 %v828, %v827
        %v1010 = vpack.c.b16 %v830, %v829
        %v1011 = vpack.c.b16 %v832, %v831
        %v1012 = vpack.c.b16 %v834, %v833
        %v1013 = vpack.c.b16 %v836, %v835
        %v1014 = vpack.c.b16 %v838, %v837
        %v1015 = vpack.c.b16 %v840, %v839
        %v1016 = vpack.c.b16 %v842, %v841
        %v1017 = vpack.c.b16 %v844, %v843
        %v1018 = vpack.c.b16 %v846, %v845
        %v1019 = vpack.c.b16 %v848, %v847
        %v1020 = vpack.c.b16 %v850, %v849
        %v1021 = vpack.c.b16 %v852, %v851
        %v1022 = vpack.c.b16 %v854, %v853
        %v1023 = vpack.c.b16 %v856, %v855
        %v1024 = vpack.c.b16 %v858, %v857
        %v1025 = vpack.c.b16 %v860, %v859
        %v1026 = vpack.c.b16 %v862, %v861
        %v1027 = vpack.c.b16 %v864, %v863
        %v1028 = vpack.c.b16 %v866, %v865
        %v1029 = vpack.c.b16 %v868, %v867
        %v1030 = vpack.c.b16 %v870, %v869
        %v1031 = vpack.c.b16 %v872, %v871
        %v1032 = vpack.c.b16 %v874, %v873
        %v1033 = vpack.c.b16 %v876, %v875
        %v1034 = vpack.c.b16 %v878, %v877
        %v1035 = vpack.c.b16 %v880, %v879
        %v1036 = vpack.c.b16 %v882, %v881
        %v1037 = vpack.c.b16 %v884, %v883
        %v1038 = vpack.c.b16 %v886, %v885
        %v1039 = vpack.c.b16 %v888, %v887
        %v1040 = vpack.c.b16 %v890, %v889
        %v1041 = vpack.c.b16 %v892, %v891
        %v1042 = vpack.c.b16 %v894, %v893
        %v1043 = vpack.c.b16 %v896, %v895
        %v1044 = vpack.c.b16 %v898, %v897
        %v1045 = vpack.c.b16 %v900, %v899
        %v1046 = vpack.c.b16 %v902, %v901
        %v1047 = vpack.c.b16 %v904, %v903
        %v1048 = vpack.c.b16 %v906, %v905
        %v1049 = vpack.c.b16 %v908, %v907
        %v1050 = vpack.c.b16 %v910, %v909
        %v1051 = vpack.c.b16 %v912, %v911
        %v1052 = vpack.c.b16 %v914, %v913
        %v1053 = vpack.c.b16 %v916, %v915
        %v1054 = vpack.c.b16 %v918, %v917
        %v1055 = vpack.c.b16 %v920, %v919
        %v1056 = vpack.c.b16 %v922, %v921
        %v1057 = vpack.c.b16 %v924, %v923
        %v1058 = vpack.c.b16 %v926, %v925
        %v1059 = vpack.c.b16 %v928, %v927
        %v1060 = vpack.c.b16 %v930, %v929
        %v1061 = vpack.c.b16 %v932, %v931
        %v1062 = vpack.c.b16 %v934, %v933
        %v1063 = vpack.c.b16 %v936, %v935
        %v1064 = vpack.c.b16 %v938, %v937
        %v1065 = vpack.c.b16 %v940, %v939
        %v1066 = vpack.c.b16 %v942, %v941
        %v1067 = vpack.c.b16 %v944, %v943
        %v1068 = vpack.c.b16 %v946, %v945
        %v1069 = vpack.c.b16 %v948, %v947
        %v1070 = vpack.c.b16 %v950, %v949
        %v1071 = vpack.c.b16 %v952, %v951
        %v1072 = vpack.c.b16 %v954, %v953
        %v1073 = vpack.c.b16 %v956, %v955
        %v1074 = vpack.c.b16 %v958, %v957
        %v1075 = vpack.c.b16 %v960, %v959
        %v1076 = vpack.c.b16 %v962, %v961
        %v1077 = vpack.c.b16 %v964, %v963
        %v1078 = vpack.c.b16 %v966, %v965
        %v1079 = vpack.c.b16 %v968, %v967
        %v1080 = vpack.c.b16 %v970, %v969
        %v1081 = vpack.c.b16 %v972, %v971
        %v1082 = vpack.c.b16 %v974, %v973
        %v1083 = vpack.c.b16 %v976, %v975
        %v1084 = vpack.c.b16 %v978, %v977
        %v1085 = vpack.c.b16 %v980, %v979
        %v1086 = vpack.c.b16 %v982, %v981
        %v1087 = vpack.c.b16 %v984, %v983
        %v1088 = vpack.c.b16 %v986, %v985
        %v1089 = vpack.c.b16 %v988, %v987
        %v1090 = vpack.c.b16 %v990, %v989
        %v1091 = vpack.c.b16 %v992, %v991
        %v1092 = vpack.c.b16 %v994, %v993
        %v1093 = vpack.c.b16 %v996, %v995
        %v1094 = vpack.c.b16 %v998, %v997
        %1191 = vmatpush.bf16.msra.mxu0 %v1006
        %1192 = vmatpush.bf16.msra.mxu0 %v1005
        %1193 = vmatpush.bf16.msra.mxu0 %v1004
        %1194 = vmatpush.bf16.msra.mxu0 %v1003
        %1195 = vmatpush.bf16.msra.mxu0 %v1002
        %1196 = vmatpush.bf16.msra.mxu0 %v1001
        %1197 = vmatpush.bf16.msra.mxu0 %v1000
        %1198 = vmatpush.bf16.msra.mxu0 %v999
        %1199 = vmatmul.bf16.gmra.mxu0 %v567
        %v1200 = vpop.f32.mrf.mxu0
        %v1201 = vadd.f32 0.0, %v1200
        %v1202 = vpop.f32.mrf.mxu0
        %v1203 = vadd.f32 0.0, %v1202
        %1204 = vmatmul.bf16.gmra.mxu0 %v579
        %v1205 = vpop.f32.mrf.mxu0
        %v1206 = vadd.f32 0.0, %v1205
        %v1207 = vpop.f32.mrf.mxu0
        %v1208 = vadd.f32 0.0, %v1207
        %1209 = vdwg.mxu0
        %1210 = vmatpush.bf16.msra.mxu0 %v1014
        %1211 = vmatpush.bf16.msra.mxu0 %v1013
        %1212 = vmatpush.bf16.msra.mxu0 %v1012
        %1213 = vmatpush.bf16.msra.mxu0 %v1011
        %1214 = vmatpush.bf16.msra.mxu0 %v1010
        %1215 = vmatpush.bf16.msra.mxu0 %v1009
        %1216 = vmatpush.bf16.msra.mxu0 %v1008
        %1217 = vmatpush.bf16.msra.mxu0 %v1007
        %1218 = vmatmul.bf16.gmra.mxu0 %v568
        %v1219 = vpop.f32.mrf.mxu0
        %v1220 = vadd.f32 %v1201, %v1219
        %v1221 = vpop.f32.mrf.mxu0
        %v1222 = vadd.f32 %v1203, %v1221
        %1223 = vmatmul.bf16.gmra.mxu0 %v580
        %v1224 = vpop.f32.mrf.mxu0
        %v1225 = vadd.f32 %v1206, %v1224
        %v1226 = vpop.f32.mrf.mxu0
        %v1227 = vadd.f32 %v1208, %v1226
        %1228 = vdwg.mxu0
        %1229 = vmatpush.bf16.msra.mxu0 %v1022
        %1230 = vmatpush.bf16.msra.mxu0 %v1021
        %1231 = vmatpush.bf16.msra.mxu0 %v1020
        %1232 = vmatpush.bf16.msra.mxu0 %v1019
        %1233 = vmatpush.bf16.msra.mxu0 %v1018
        %1234 = vmatpush.bf16.msra.mxu0 %v1017
        %1235 = vmatpush.bf16.msra.mxu0 %v1016
        %1236 = vmatpush.bf16.msra.mxu0 %v1015
        %1237 = vmatmul.bf16.gmra.mxu0 %v569
        %v1238 = vpop.f32.mrf.mxu0
        %v1239 = vadd.f32 %v1220, %v1238
        %v1240 = vpop.f32.mrf.mxu0
        %v1241 = vadd.f32 %v1222, %v1240
        %1242 = vmatmul.bf16.gmra.mxu0 %v581
        %v1243 = vpop.f32.mrf.mxu0
        %v1244 = vadd.f32 %v1225, %v1243
        %v1245 = vpop.f32.mrf.mxu0
        %v1246 = vadd.f32 %v1227, %v1245
        %1247 = vdwg.mxu0
        %1248 = vmatpush.bf16.msra.mxu0 %v1030
        %1249 = vmatpush.bf16.msra.mxu0 %v1029
        %1250 = vmatpush.bf16.msra.mxu0 %v1028
        %1251 = vmatpush.bf16.msra.mxu0 %v1027
        %1252 = vmatpush.bf16.msra.mxu0 %v1026
        %1253 = vmatpush.bf16.msra.mxu0 %v1025
        %1254 = vmatpush.bf16.msra.mxu0 %v1024
        %1255 = vmatpush.bf16.msra.mxu0 %v1023
        %1256 = vmatmul.bf16.gmra.mxu0 %v570
        %v1257 = vpop.f32.mrf.mxu0
        %v1258 = vadd.f32 %v1239, %v1257
        %v1259 = vpop.f32.mrf.mxu0
        %v1260 = vadd.f32 %v1241, %v1259
        %1261 = vmatmul.bf16.gmra.mxu0 %v582
        %v1262 = vpop.f32.mrf.mxu0
        %v1263 = vadd.f32 %v1244, %v1262
        %v1264 = vpop.f32.mrf.mxu0
        %v1265 = vadd.f32 %v1246, %v1264
        %1266 = vdwg.mxu0
        %1267 = vmatpush.bf16.msra.mxu0 %v1038
        %1268 = vmatpush.bf16.msra.mxu0 %v1037
        %1269 = vmatpush.bf16.msra.mxu0 %v1036
        %1270 = vmatpush.bf16.msra.mxu0 %v1035
        %1271 = vmatpush.bf16.msra.mxu0 %v1034
        %1272 = vmatpush.bf16.msra.mxu0 %v1033
        %1273 = vmatpush.bf16.msra.mxu0 %v1032
        %1274 = vmatpush.bf16.msra.mxu0 %v1031
        %1275 = vmatmul.bf16.gmra.mxu0 %v571
        %v1276 = vpop.f32.mrf.mxu0
        %v1277 = vadd.f32 %v1258, %v1276
        %v1278 = vpop.f32.mrf.mxu0
        %v1279 = vadd.f32 %v1260, %v1278
        %1280 = vmatmul.bf16.gmra.mxu0 %v583
        %v1281 = vpop.f32.mrf.mxu0
        %v1282 = vadd.f32 %v1263, %v1281
        %v1283 = vpop.f32.mrf.mxu0
        %v1284 = vadd.f32 %v1265, %v1283
        %1285 = vdwg.mxu0
        %1286 = vmatpush.bf16.msra.mxu0 %v1046
        %1287 = vmatpush.bf16.msra.mxu0 %v1045
        %1288 = vmatpush.bf16.msra.mxu0 %v1044
        %1289 = vmatpush.bf16.msra.mxu0 %v1043
        %1290 = vmatpush.bf16.msra.mxu0 %v1042
        %1291 = vmatpush.bf16.msra.mxu0 %v1041
        %1292 = vmatpush.bf16.msra.mxu0 %v1040
        %1293 = vmatpush.bf16.msra.mxu0 %v1039
        %1294 = vmatmul.bf16.gmra.mxu0 %v572
        %v1295 = vpop.f32.mrf.mxu0
        %v1296 = vadd.f32 %v1277, %v1295
        %v1297 = vpop.f32.mrf.mxu0
        %v1298 = vadd.f32 %v1279, %v1297
        %1299 = vmatmul.bf16.gmra.mxu0 %v584
        %v1300 = vpop.f32.mrf.mxu0
        %v1301 = vadd.f32 %v1282, %v1300
        %v1302 = vpop.f32.mrf.mxu0
        %v1303 = vadd.f32 %v1284, %v1302
        %1304 = vdwg.mxu0
        %1305 = vmatpush.bf16.msra.mxu0 %v1054
        %1306 = vmatpush.bf16.msra.mxu0 %v1053
        %1307 = vmatpush.bf16.msra.mxu0 %v1052
        %1308 = vmatpush.bf16.msra.mxu0 %v1051
        %1309 = vmatpush.bf16.msra.mxu0 %v1050
        %1310 = vmatpush.bf16.msra.mxu0 %v1049
        %1311 = vmatpush.bf16.msra.mxu0 %v1048
        %1312 = vmatpush.bf16.msra.mxu0 %v1047
        %1313 = vmatmul.bf16.gmra.mxu0 %v573
        %v1314 = vpop.f32.mrf.mxu0
        %v1315 = vadd.f32 %v1296, %v1314
        %v1316 = vpop.f32.mrf.mxu0
        %v1317 = vadd.f32 %v1298, %v1316
        %1318 = vmatmul.bf16.gmra.mxu0 %v585
        %v1319 = vpop.f32.mrf.mxu0
        %v1320 = vadd.f32 %v1301, %v1319
        %v1321 = vpop.f32.mrf.mxu0
        %v1322 = vadd.f32 %v1303, %v1321
        %1323 = vdwg.mxu0
        %1324 = vmatpush.bf16.msra.mxu0 %v1062
        %1325 = vmatpush.bf16.msra.mxu0 %v1061
        %1326 = vmatpush.bf16.msra.mxu0 %v1060
        %1327 = vmatpush.bf16.msra.mxu0 %v1059
        %1328 = vmatpush.bf16.msra.mxu0 %v1058
        %1329 = vmatpush.bf16.msra.mxu0 %v1057
        %1330 = vmatpush.bf16.msra.mxu0 %v1056
        %1331 = vmatpush.bf16.msra.mxu0 %v1055
        %1332 = vmatmul.bf16.gmra.mxu0 %v574
        %v1333 = vpop.f32.mrf.mxu0
        %v1334 = vadd.f32 %v1315, %v1333
        %v1335 = vpop.f32.mrf.mxu0
        %v1336 = vadd.f32 %v1317, %v1335
        %1337 = vmatmul.bf16.gmra.mxu0 %v586
        %v1338 = vpop.f32.mrf.mxu0
        %v1339 = vadd.f32 %v1320, %v1338
        %v1340 = vpop.f32.mrf.mxu0
        %v1341 = vadd.f32 %v1322, %v1340
        %1342 = vdwg.mxu0
        %1343 = vmatpush.bf16.msra.mxu0 %v1070
        %1344 = vmatpush.bf16.msra.mxu0 %v1069
        %1345 = vmatpush.bf16.msra.mxu0 %v1068
        %1346 = vmatpush.bf16.msra.mxu0 %v1067
        %1347 = vmatpush.bf16.msra.mxu0 %v1066
        %1348 = vmatpush.bf16.msra.mxu0 %v1065
        %1349 = vmatpush.bf16.msra.mxu0 %v1064
        %1350 = vmatpush.bf16.msra.mxu0 %v1063
        %1351 = vmatmul.bf16.gmra.mxu0 %v575
        %v1352 = vpop.f32.mrf.mxu0
        %v1353 = vadd.f32 %v1334, %v1352
        %v1354 = vpop.f32.mrf.mxu0
        %v1355 = vadd.f32 %v1336, %v1354
        %1356 = vmatmul.bf16.gmra.mxu0 %v587
        %v1357 = vpop.f32.mrf.mxu0
        %v1358 = vadd.f32 %v1339, %v1357
        %v1359 = vpop.f32.mrf.mxu0
        %v1360 = vadd.f32 %v1341, %v1359
        %1361 = vdwg.mxu0
        %1362 = vmatpush.bf16.msra.mxu0 %v1078
        %1363 = vmatpush.bf16.msra.mxu0 %v1077
        %1364 = vmatpush.bf16.msra.mxu0 %v1076
        %1365 = vmatpush.bf16.msra.mxu0 %v1075
        %1366 = vmatpush.bf16.msra.mxu0 %v1074
        %1367 = vmatpush.bf16.msra.mxu0 %v1073
        %1368 = vmatpush.bf16.msra.mxu0 %v1072
        %1369 = vmatpush.bf16.msra.mxu0 %v1071
        %1370 = vmatmul.bf16.gmra.mxu0 %v576
        %v1371 = vpop.f32.mrf.mxu0
        %v1372 = vadd.f32 %v1353, %v1371
        %v1373 = vpop.f32.mrf.mxu0
        %v1374 = vadd.f32 %v1355, %v1373
        %1375 = vmatmul.bf16.gmra.mxu0 %v588
        %v1376 = vpop.f32.mrf.mxu0
        %v1377 = vadd.f32 %v1358, %v1376
        %v1378 = vpop.f32.mrf.mxu0
        %v1379 = vadd.f32 %v1360, %v1378
        %1380 = vdwg.mxu0
        %1381 = vmatpush.bf16.msra.mxu0 %v1086
        %1382 = vmatpush.bf16.msra.mxu0 %v1085
        %1383 = vmatpush.bf16.msra.mxu0 %v1084
        %1384 = vmatpush.bf16.msra.mxu0 %v1083
        %1385 = vmatpush.bf16.msra.mxu0 %v1082
        %1386 = vmatpush.bf16.msra.mxu0 %v1081
        %1387 = vmatpush.bf16.msra.mxu0 %v1080
        %1388 = vmatpush.bf16.msra.mxu0 %v1079
        %1389 = vmatmul.bf16.gmra.mxu0 %v577
        %v1390 = vpop.f32.mrf.mxu0
        %v1391 = vadd.f32 %v1372, %v1390
        %v1392 = vpop.f32.mrf.mxu0
        %v1393 = vadd.f32 %v1374, %v1392
        %1394 = vmatmul.bf16.gmra.mxu0 %v589
        %v1395 = vpop.f32.mrf.mxu0
        %v1396 = vadd.f32 %v1377, %v1395
        %v1397 = vpop.f32.mrf.mxu0
        %v1398 = vadd.f32 %v1379, %v1397
        %1399 = vdwg.mxu0
        %1400 = vmatpush.bf16.msra.mxu0 %v1094
        %1401 = vmatpush.bf16.msra.mxu0 %v1093
        %1402 = vmatpush.bf16.msra.mxu0 %v1092
        %1403 = vmatpush.bf16.msra.mxu0 %v1091
        %1404 = vmatpush.bf16.msra.mxu0 %v1090
        %1405 = vmatpush.bf16.msra.mxu0 %v1089
        %1406 = vmatpush.bf16.msra.mxu0 %v1088
        %1407 = vmatpush.bf16.msra.mxu0 %v1087
        %1408 = vmatmul.bf16.gmra.mxu0 %v578
        %v1409 = vpop.f32.mrf.mxu0
        %v1410 = vadd.f32 %v1391, %v1409
        %v1411 = vpop.f32.mrf.mxu0
        %v1412 = vadd.f32 %v1393, %v1411
        %1413 = vmatmul.bf16.gmra.mxu0 %v590
        %v1414 = vpop.f32.mrf.mxu0
        %v1415 = vadd.f32 %v1396, %v1414
        %v1416 = vpop.f32.mrf.mxu0
        %v1417 = vadd.f32 %v1398, %v1416
        %1418 = vdwg.mxu0
        %p1419 = scmp.eq.s32.totalorder %s19, 0
        // Predicated region
        $region56: #{netD3_forward.4} parent=50 // pred_check
          %p1420 = pneg %p1419
        $region57: #{netD3_forward.4} parent=50 // pred_check_branch
          %1422 = sbr.rel (%p1420) target = $region59
        $region58: #{netD3_forward.4} parent=50 // pred_region
          %1423 = vst [vmem:[%s277] sm:$0xff] %v1410
          %1424 = vst [vmem:[%s277 + $0x8] sm:$0xff] %v1412
          %1425 = vst [vmem:[%s277 + $0x10] sm:$0xff] %v1415
          %1426 = vst [vmem:[%s277 + $0x18] sm:$0xff] %v1417
        $region59: #{netD3_forward.4} parent=50 // pred_fallthru
          _
        %p1427 = scmp.gt.s32.totalorder %s19, 0
        // Predicated region
        $region60: #{netD3_forward.4} parent=50 // pred_check
          %p1428 = pneg %p1427
        $region61: #{netD3_forward.4} parent=50 // pred_check_branch
          %1430 = sbr.rel (%p1428) target = $region63
        $region62: #{netD3_forward.4} parent=50 // pred_region
          %v1431 = vld [vmem:[%s277] sm:$0xff]
          %v1432 = vld [vmem:[%s277 + $0x8] sm:$0xff]
          %v1433 = vld [vmem:[%s277 + $0x10] sm:$0xff]
          %v1434 = vld [vmem:[%s277 + $0x18] sm:$0xff]
          %v1435 = vadd.f32 %v1431, %v1410
          %v1436 = vadd.f32 %v1432, %v1412
          %v1437 = vadd.f32 %v1433, %v1415
          %v1438 = vadd.f32 %v1434, %v1417
          %1439 = vst [vmem:[%s277] sm:$0xff] %v1435
          %1440 = vst [vmem:[%s277 + $0x8] sm:$0xff] %v1436
          %1441 = vst [vmem:[%s277 + $0x10] sm:$0xff] %v1437
          %1442 = vst [vmem:[%s277 + $0x18] sm:$0xff] %v1438
        $region63: #{netD3_forward.4} parent=50 // pred_fallthru
          _
        %p1443 = scmp.eq.s32.totalorder %s19, 2
        // Predicated region
        $region64: #{netD3_forward.4} parent=50 // pred_check
          %p1444 = pneg %p1443
        $region65: #{netD3_forward.4} parent=50 // pred_check_branch
          %1446 = sbr.rel (%p1444) target = $region67
        $region66: #{netD3_forward.4} parent=50 // pred_region
          %v1447 = vld [vmem:[%s277] sm:$0xff]
          %v1448 = vld [vmem:[%s277 + $0x8] sm:$0xff]
          %v1449 = vld [vmem:[%s277 + $0x10] sm:$0xff]
          %v1450 = vld [vmem:[%s277 + $0x18] sm:$0xff]
          %v1451 = vld [vmem:[%s2] sm:$0x1]
          %v1453 = vperm.slane %v1451, 0
          %v1455 = vadd.f32 %v1447, %v1453
          %v1456 = vadd.f32 %v1448, %v1453
          %v1457 = vadd.f32 %v1449, %v1453
          %v1458 = vadd.f32 %v1450, %v1453
          %v1459 = vmax.f32 %v1455, 0.0
          %v1460 = vmax.f32 %v1456, 0.0
          %v1461 = vmax.f32 %v1457, 0.0
          %v1462 = vmax.f32 %v1458, 0.0
          %1463 = vst [vmem:[%s277] sm:$0xff] %v1459
          %1464 = vst [vmem:[%s277 + $0x8] sm:$0xff] %v1460
          %1465 = vst [vmem:[%s277 + $0x10] sm:$0xff] %v1461
          %1466 = vst [vmem:[%s277 + $0x18] sm:$0xff] %v1462
        $region67: #{netD3_forward.4} parent=50 // pred_fallthru
          _
        %s1467 = smul.u32 4, %s18
        %p1468 = scmp.lt.s32.totalorder %s1467, 3
        %s1469 = scalar_select %p1468, %s1467, 3
        %s1470 = smul.addr %s1469, 8
        %s1471 = scalar_lea.vmem %s3, %s1470
        // Predicated region
        $region68: #{netD3_forward.4} parent=50 // pred_check
          %p1472 = pneg %p119
        $region69: #{netD3_forward.4} parent=50 // pred_check_branch
          %1474 = sbr.rel (%p1472) target = $region71
        $region70: #{netD3_forward.4} parent=50 // pred_region
          %s1475 = smul.u32 4, %s18
        $region71: #{netD3_forward.4} parent=50 // pred_fallthru
          _
        // Predicated region
        $region72: #{netD3_forward.4} parent=50 // pred_check
          %p1476 = pneg %p119
        $region73: #{netD3_forward.4} parent=50 // pred_check_branch
          %1478 = sbr.rel (%p1476) target = $region75
        $region74: #{netD3_forward.4} parent=50 // pred_region
          %s1479 = smul.u32 4, %s18
          %p1480 = scmp.lt.s32.totalorder %s1479, 3
          %s1481 = scalar_select %p1480, %s1479, 3
          %s1482 = smul.addr %s1481, 8
          %s1483 = scalar_lea.vmem %s3, %s1482
        $region75: #{netD3_forward.4} parent=50 // pred_fallthru
          _
      $region51: #{netD3_forward.4} parent=5 // pred_fallthru
        _
      %p1484 = scmp.le.s32.totalorder 2, %s9
      // Predicated region
      $region76: #{netD3_forward.4} parent=5 // pred_check
        %p1485 = pneg %p1484
      $region77: #{netD3_forward.4} parent=5 // pred_check_branch
        %1487 = sbr.rel (%p1485) target = $region79
      $region78: #{netD3_forward.4} parent=5 // pred_region
        %s1488 = ssub.s32 %s9, 2
      $region79: #{netD3_forward.4} parent=5 // pred_fallthru
        _
    $region6: #{netD3_forward.4} parent=1 // loop_footer
      %s13 = sadd.s32 1, %s9
    $region7: #{netD3_forward.4} parent=1 // loop_footer_branch
      %8 = sbr.rel target = $region3
    $region8: #{netD3_forward.4} parent=1 // loop_exit
      _

// kernel: netD3_forward.5
$region0: #{netD3_forward.5}
  #allocation0 [shape = 'u32[]', space=smem, size = 0x4, offset = 0x4, fixed_abs, tag = 'smem constant byte address 0x4 - core index']
  #allocation1 [shape = 'u32[72,128]{1,0:T(1,128)}', space=vmem, size = 0x9000, scoped, tag = 'internal scratch']
  %s0 = inlined_call_operand.vmem [shape: bf16[8,1152], index: 0, kind: input, shape index: {}]
  %s1 = inlined_call_operand.vmem [shape: bf16[1152,128], index: 1, kind: input, shape index: {}]
  %s2 = inlined_call_operand.vmem [shape: f32[1,128], index: 2, kind: input, shape index: {}]
  %s3 = inlined_call_operand.vmem [shape: f32[2,8], index: 3, kind: input, shape index: {}]
  %s4 = inlined_call_operand.vmem [shape: f32[128,2], index: 4, kind: input, shape index: {}]
  %s5 = inlined_call_operand.vmem [shape: f32[1,2], index: 5, kind: input, shape index: {}]
  %s6 = inlined_call_operand.hbm [shape: f32[2,2], index: 6, kind: output, shape index: {}]
  %s7 = sld [smem:[#allocation0]]
  $region34: #{netD3_forward.5} parent=0
    _
  %s9 = ssub.s32 1, %s7
  %s10 = scalar_select 0, %s9, %s7
  $region1: #{netD3_forward.5} parent=0
    #allocation2 [shape = 'u8[1024]{0}', space=vmem, size = 0x400, scoped, tag = 'output window, operand 0, single buffered']
    #allocation3 [shape = 's32[1]{0}', space=sflag, size = 0x4, scoped, tag = 'scoped memory for netD3_forward.5']
    %11 = vsyncpa [#allocation3], 0
    // Predicated region
    $region2: #{netD3_forward.5} parent=1 // pred_check
      _
    $region3: #{netD3_forward.5} parent=1 // pred_check_branch
      %13 = sbr.rel (0) target = $region5
    $region4: #{netD3_forward.5} parent=1 // pred_region
      _
    $region5: #{netD3_forward.5} parent=1 // pred_fallthru
      _
    // Predicated region
    $region6: #{netD3_forward.5} parent=1 // pred_check
      _
    $region7: #{netD3_forward.5} parent=1 // pred_check_branch
      %15 = sbr.rel (0) target = $region9
    $region8: #{netD3_forward.5} parent=1 // pred_region
      _
    $region9: #{netD3_forward.5} parent=1 // pred_fallthru
      _
    // Predicated region
    $region10: #{netD3_forward.5} parent=1 // pred_check
      _
    $region11: #{netD3_forward.5} parent=1 // pred_check_branch
      %17 = sbr.rel (0) target = $region13
    $region12: #{netD3_forward.5} parent=1 // pred_region
      _
    $region13: #{netD3_forward.5} parent=1 // pred_fallthru
      _
    // Predicated region
    $region14: #{netD3_forward.5} parent=1 // pred_check
      _
    $region15: #{netD3_forward.5} parent=1 // pred_check_branch
      %19 = sbr.rel (0) target = $region17
    $region16: #{netD3_forward.5} parent=1 // pred_region
      _
    $region17: #{netD3_forward.5} parent=1 // pred_fallthru
      _
    // Predicated region
    $region18: #{netD3_forward.5} parent=1 // pred_check
      _
    $region19: #{netD3_forward.5} parent=1 // pred_check_branch
      %21 = sbr.rel (0) target = $region21
    $region20: #{netD3_forward.5} parent=1 // pred_region
      _
    $region21: #{netD3_forward.5} parent=1 // pred_fallthru
      _
    // Predicated region
    $region22: #{netD3_forward.5} parent=1 // pred_check
      _
    $region23: #{netD3_forward.5} parent=1 // pred_check_branch
      %23 = sbr.rel (0) target = $region25
    $region24: #{netD3_forward.5} parent=1 // pred_region
      _
    $region25: #{netD3_forward.5} parent=1 // pred_fallthru
      _
    %v24 = vld [vmem:[%s0] sm:$0xff]
    %v25 = vld [vmem:[%s0 + $0x8] sm:$0xff]
    %v26 = vld [vmem:[%s0 + $0x10] sm:$0xff]
    %v27 = vld [vmem:[%s0 + $0x18] sm:$0xff]
    %v28 = vld [vmem:[%s0 + $0x20] sm:$0xf]
    %v29 = vld [vmem:[%s1] sm:$0xf]
    %v30 = vld [vmem:[%s1 + $0x4] sm:$0xf]
    %v31 = vld [vmem:[%s1 + $0x8] sm:$0xf]
    %v32 = vld [vmem:[%s1 + $0xc] sm:$0xf]
    %v33 = vld [vmem:[%s1 + $0x10] sm:$0xf]
    %v34 = vld [vmem:[%s1 + $0x14] sm:$0xf]
    %v35 = vld [vmem:[%s1 + $0x18] sm:$0xf]
    %v36 = vld [vmem:[%s1 + $0x1c] sm:$0xf]
    %v37 = vld [vmem:[%s1 + $0x20] sm:$0xf]
    %v38 = vld [vmem:[%s1 + $0x24] sm:$0xf]
    %v39 = vld [vmem:[%s1 + $0x28] sm:$0xf]
    %v40 = vld [vmem:[%s1 + $0x2c] sm:$0xf]
    %v41 = vld [vmem:[%s1 + $0x30] sm:$0xf]
    %v42 = vld [vmem:[%s1 + $0x34] sm:$0xf]
    %v43 = vld [vmem:[%s1 + $0x38] sm:$0xf]
    %v44 = vld [vmem:[%s1 + $0x3c] sm:$0xf]
    %v45 = vld [vmem:[%s1 + $0x40] sm:$0xf]
    %v46 = vld [vmem:[%s1 + $0x44] sm:$0xf]
    %v47 = vld [vmem:[%s1 + $0x48] sm:$0xf]
    %v48 = vld [vmem:[%s1 + $0x4c] sm:$0xf]
    %v49 = vld [vmem:[%s1 + $0x50] sm:$0xf]
    %v50 = vld [vmem:[%s1 + $0x54] sm:$0xf]
    %v51 = vld [vmem:[%s1 + $0x58] sm:$0xf]
    %v52 = vld [vmem:[%s1 + $0x5c] sm:$0xf]
    %v53 = vld [vmem:[%s1 + $0x60] sm:$0xf]
    %v54 = vld [vmem:[%s1 + $0x64] sm:$0xf]
    %v55 = vld [vmem:[%s1 + $0x68] sm:$0xf]
    %v56 = vld [vmem:[%s1 + $0x6c] sm:$0xf]
    %v57 = vld [vmem:[%s1 + $0x70] sm:$0xf]
    %v58 = vld [vmem:[%s1 + $0x74] sm:$0xf]
    %v59 = vld [vmem:[%s1 + $0x78] sm:$0xf]
    %v60 = vld [vmem:[%s1 + $0x7c] sm:$0xf]
    %v61 = vld [vmem:[%s1 + $0x80] sm:$0xf]
    %v62 = vld [vmem:[%s1 + $0x84] sm:$0xf]
    %v63 = vld [vmem:[%s1 + $0x88] sm:$0xf]
    %v64 = vld [vmem:[%s1 + $0x8c] sm:$0xf]
    %v65 = vld [vmem:[%s1 + $0x90] sm:$0xf]
    %v66 = vld [vmem:[%s1 + $0x94] sm:$0xf]
    %v67 = vld [vmem:[%s1 + $0x98] sm:$0xf]
    %v68 = vld [vmem:[%s1 + $0x9c] sm:$0xf]
    %v69 = vld [vmem:[%s1 + $0xa0] sm:$0xf]
    %v70 = vld [vmem:[%s1 + $0xa4] sm:$0xf]
    %v71 = vld [vmem:[%s1 + $0xa8] sm:$0xf]
    %v72 = vld [vmem:[%s1 + $0xac] sm:$0xf]
    %v73 = vld [vmem:[%s1 + $0xb0] sm:$0xf]
    %v74 = vld [vmem:[%s1 + $0xb4] sm:$0xf]
    %v75 = vld [vmem:[%s1 + $0xb8] sm:$0xf]
    %v76 = vld [vmem:[%s1 + $0xbc] sm:$0xf]
    %v77 = vld [vmem:[%s1 + $0xc0] sm:$0xf]
    %v78 = vld [vmem:[%s1 + $0xc4] sm:$0xf]
    %v79 = vld [vmem:[%s1 + $0xc8] sm:$0xf]
    %v80 = vld [vmem:[%s1 + $0xcc] sm:$0xf]
    %v81 = vld [vmem:[%s1 + $0xd0] sm:$0xf]
    %v82 = vld [vmem:[%s1 + $0xd4] sm:$0xf]
    %v83 = vld [vmem:[%s1 + $0xd8] sm:$0xf]
    %v84 = vld [vmem:[%s1 + $0xdc] sm:$0xf]
    %v85 = vld [vmem:[%s1 + $0xe0] sm:$0xf]
    %v86 = vld [vmem:[%s1 + $0xe4] sm:$0xf]
    %v87 = vld [vmem:[%s1 + $0xe8] sm:$0xf]
    %v88 = vld [vmem:[%s1 + $0xec] sm:$0xf]
    %v89 = vld [vmem:[%s1 + $0xf0] sm:$0xf]
    %v90 = vld [vmem:[%s1 + $0xf4] sm:$0xf]
    %v91 = vld [vmem:[%s1 + $0xf8] sm:$0xf]
    %v92 = vld [vmem:[%s1 + $0xfc] sm:$0xf]
    %v93 = vld [vmem:[%s1 + $0x100] sm:$0xf]
    %v94 = vld [vmem:[%s1 + $0x104] sm:$0xf]
    %v95 = vld [vmem:[%s1 + $0x108] sm:$0xf]
    %v96 = vld [vmem:[%s1 + $0x10c] sm:$0xf]
    %v97 = vld [vmem:[%s1 + $0x110] sm:$0xf]
    %v98 = vld [vmem:[%s1 + $0x114] sm:$0xf]
    %v99 = vld [vmem:[%s1 + $0x118] sm:$0xf]
    %v100 = vld [vmem:[%s1 + $0x11c] sm:$0xf]
    %v101 = vld [vmem:[%s1 + $0x120] sm:$0xf]
    %v102 = vld [vmem:[%s1 + $0x124] sm:$0xf]
    %v103 = vld [vmem:[%s1 + $0x128] sm:$0xf]
    %v104 = vld [vmem:[%s1 + $0x12c] sm:$0xf]
    %v105 = vld [vmem:[%s1 + $0x130] sm:$0xf]
    %v106 = vld [vmem:[%s1 + $0x134] sm:$0xf]
    %v107 = vld [vmem:[%s1 + $0x138] sm:$0xf]
    %v108 = vld [vmem:[%s1 + $0x13c] sm:$0xf]
    %v109 = vld [vmem:[%s1 + $0x140] sm:$0xf]
    %v110 = vld [vmem:[%s1 + $0x144] sm:$0xf]
    %v111 = vld [vmem:[%s1 + $0x148] sm:$0xf]
    %v112 = vld [vmem:[%s1 + $0x14c] sm:$0xf]
    %v113 = vld [vmem:[%s1 + $0x150] sm:$0xf]
    %v114 = vld [vmem:[%s1 + $0x154] sm:$0xf]
    %v115 = vld [vmem:[%s1 + $0x158] sm:$0xf]
    %v116 = vld [vmem:[%s1 + $0x15c] sm:$0xf]
    %v117 = vld [vmem:[%s1 + $0x160] sm:$0xf]
    %v118 = vld [vmem:[%s1 + $0x164] sm:$0xf]
    %v119 = vld [vmem:[%s1 + $0x168] sm:$0xf]
    %v120 = vld [vmem:[%s1 + $0x16c] sm:$0xf]
    %v121 = vld [vmem:[%s1 + $0x170] sm:$0xf]
    %v122 = vld [vmem:[%s1 + $0x174] sm:$0xf]
    %v123 = vld [vmem:[%s1 + $0x178] sm:$0xf]
    %v124 = vld [vmem:[%s1 + $0x17c] sm:$0xf]
    %v125 = vld [vmem:[%s1 + $0x180] sm:$0xf]
    %v126 = vld [vmem:[%s1 + $0x184] sm:$0xf]
    %v127 = vld [vmem:[%s1 + $0x188] sm:$0xf]
    %v128 = vld [vmem:[%s1 + $0x18c] sm:$0xf]
    %v129 = vld [vmem:[%s1 + $0x190] sm:$0xf]
    %v130 = vld [vmem:[%s1 + $0x194] sm:$0xf]
    %v131 = vld [vmem:[%s1 + $0x198] sm:$0xf]
    %v132 = vld [vmem:[%s1 + $0x19c] sm:$0xf]
    %v133 = vld [vmem:[%s1 + $0x1a0] sm:$0xf]
    %v134 = vld [vmem:[%s1 + $0x1a4] sm:$0xf]
    %v135 = vld [vmem:[%s1 + $0x1a8] sm:$0xf]
    %v136 = vld [vmem:[%s1 + $0x1ac] sm:$0xf]
    %v137 = vld [vmem:[%s1 + $0x1b0] sm:$0xf]
    %v138 = vld [vmem:[%s1 + $0x1b4] sm:$0xf]
    %v139 = vld [vmem:[%s1 + $0x1b8] sm:$0xf]
    %v140 = vld [vmem:[%s1 + $0x1bc] sm:$0xf]
    %v141 = vld [vmem:[%s1 + $0x1c0] sm:$0xf]
    %v142 = vld [vmem:[%s1 + $0x1c4] sm:$0xf]
    %v143 = vld [vmem:[%s1 + $0x1c8] sm:$0xf]
    %v144 = vld [vmem:[%s1 + $0x1cc] sm:$0xf]
    %v145 = vld [vmem:[%s1 + $0x1d0] sm:$0xf]
    %v146 = vld [vmem:[%s1 + $0x1d4] sm:$0xf]
    %v147 = vld [vmem:[%s1 + $0x1d8] sm:$0xf]
    %v148 = vld [vmem:[%s1 + $0x1dc] sm:$0xf]
    %v149 = vld [vmem:[%s1 + $0x1e0] sm:$0xf]
    %v150 = vld [vmem:[%s1 + $0x1e4] sm:$0xf]
    %v151 = vld [vmem:[%s1 + $0x1e8] sm:$0xf]
    %v152 = vld [vmem:[%s1 + $0x1ec] sm:$0xf]
    %v153 = vld [vmem:[%s1 + $0x1f0] sm:$0xf]
    %v154 = vld [vmem:[%s1 + $0x1f4] sm:$0xf]
    %v155 = vld [vmem:[%s1 + $0x1f8] sm:$0xf]
    %v156 = vld [vmem:[%s1 + $0x1fc] sm:$0xf]
    %v157 = vld [vmem:[%s1 + $0x200] sm:$0xf]
    %v158 = vld [vmem:[%s1 + $0x204] sm:$0xf]
    %v159 = vld [vmem:[%s1 + $0x208] sm:$0xf]
    %v160 = vld [vmem:[%s1 + $0x20c] sm:$0xf]
    %v161 = vld [vmem:[%s1 + $0x210] sm:$0xf]
    %v162 = vld [vmem:[%s1 + $0x214] sm:$0xf]
    %v163 = vld [vmem:[%s1 + $0x218] sm:$0xf]
    %v164 = vld [vmem:[%s1 + $0x21c] sm:$0xf]
    %v165 = vld [vmem:[%s1 + $0x220] sm:$0xf]
    %v166 = vld [vmem:[%s1 + $0x224] sm:$0xf]
    %v167 = vld [vmem:[%s1 + $0x228] sm:$0xf]
    %v168 = vld [vmem:[%s1 + $0x22c] sm:$0xf]
    %v169 = vld [vmem:[%s1 + $0x230] sm:$0xf]
    %v170 = vld [vmem:[%s1 + $0x234] sm:$0xf]
    %v171 = vld [vmem:[%s1 + $0x238] sm:$0xf]
    %v172 = vld [vmem:[%s1 + $0x23c] sm:$0xf]
    %v173 = vld [vmem:[%s2] sm:$0x1]
    %v175 = vperm.slane %v173, 0
    %v182 = vunpack.c.l.b16 %v24
    %v183 = vunpack.c.h.b16 %v24
    %v184 = vunpack.c.l.b16 %v25
    %v185 = vunpack.c.h.b16 %v25
    %v186 = vunpack.c.l.b16 %v26
    %v187 = vunpack.c.h.b16 %v26
    %v188 = vunpack.c.l.b16 %v27
    %v189 = vunpack.c.h.b16 %v27
    %v190 = vunpack.c.l.b16 %v28
    %v191 = vpack.c.b16 %v182, %v182
    %v192 = vpack.c.b16 %v183, %v183
    %v193 = vpack.c.b16 %v184, %v184
    %v194 = vpack.c.b16 %v185, %v185
    %v195 = vpack.c.b16 %v186, %v186
    %v196 = vpack.c.b16 %v187, %v187
    %v197 = vpack.c.b16 %v188, %v188
    %v198 = vpack.c.b16 %v189, %v189
    %v199 = vpack.c.b16 %v190, %v190
    %v353 = vunpack.c.l.b16 %v29
    %v354 = vunpack.c.l.b16 %v30
    %v355 = vunpack.c.l.b16 %v31
    %v356 = vunpack.c.l.b16 %v32
    %v357 = vunpack.c.l.b16 %v33
    %v358 = vunpack.c.l.b16 %v34
    %v359 = vunpack.c.l.b16 %v35
    %v360 = vunpack.c.l.b16 %v36
    %v361 = vunpack.c.l.b16 %v37
    %v362 = vunpack.c.l.b16 %v38
    %v363 = vunpack.c.l.b16 %v39
    %v364 = vunpack.c.l.b16 %v40
    %v365 = vunpack.c.l.b16 %v41
    %v366 = vunpack.c.l.b16 %v42
    %v367 = vunpack.c.l.b16 %v43
    %v368 = vunpack.c.l.b16 %v44
    %v369 = vunpack.c.l.b16 %v45
    %v370 = vunpack.c.l.b16 %v46
    %v371 = vunpack.c.l.b16 %v47
    %v372 = vunpack.c.l.b16 %v48
    %v373 = vunpack.c.l.b16 %v49
    %v374 = vunpack.c.l.b16 %v50
    %v375 = vunpack.c.l.b16 %v51
    %v376 = vunpack.c.l.b16 %v52
    %v377 = vunpack.c.l.b16 %v53
    %v378 = vunpack.c.l.b16 %v54
    %v379 = vunpack.c.l.b16 %v55
    %v380 = vunpack.c.l.b16 %v56
    %v381 = vunpack.c.l.b16 %v57
    %v382 = vunpack.c.l.b16 %v58
    %v383 = vunpack.c.l.b16 %v59
    %v384 = vunpack.c.l.b16 %v60
    %v385 = vunpack.c.l.b16 %v61
    %v386 = vunpack.c.l.b16 %v62
    %v387 = vunpack.c.l.b16 %v63
    %v388 = vunpack.c.l.b16 %v64
    %v389 = vunpack.c.l.b16 %v65
    %v390 = vunpack.c.l.b16 %v66
    %v391 = vunpack.c.l.b16 %v67
    %v392 = vunpack.c.l.b16 %v68
    %v393 = vunpack.c.l.b16 %v69
    %v394 = vunpack.c.l.b16 %v70
    %v395 = vunpack.c.l.b16 %v71
    %v396 = vunpack.c.l.b16 %v72
    %v397 = vunpack.c.l.b16 %v73
    %v398 = vunpack.c.l.b16 %v74
    %v399 = vunpack.c.l.b16 %v75
    %v400 = vunpack.c.l.b16 %v76
    %v401 = vunpack.c.l.b16 %v77
    %v402 = vunpack.c.l.b16 %v78
    %v403 = vunpack.c.l.b16 %v79
    %v404 = vunpack.c.l.b16 %v80
    %v405 = vunpack.c.l.b16 %v81
    %v406 = vunpack.c.l.b16 %v82
    %v407 = vunpack.c.l.b16 %v83
    %v408 = vunpack.c.l.b16 %v84
    %v409 = vunpack.c.l.b16 %v85
    %v410 = vunpack.c.l.b16 %v86
    %v411 = vunpack.c.l.b16 %v87
    %v412 = vunpack.c.l.b16 %v88
    %v413 = vunpack.c.l.b16 %v89
    %v414 = vunpack.c.l.b16 %v90
    %v415 = vunpack.c.l.b16 %v91
    %v416 = vunpack.c.l.b16 %v92
    %v417 = vunpack.c.l.b16 %v93
    %v418 = vunpack.c.l.b16 %v94
    %v419 = vunpack.c.l.b16 %v95
    %v420 = vunpack.c.l.b16 %v96
    %v421 = vunpack.c.l.b16 %v97
    %v422 = vunpack.c.l.b16 %v98
    %v423 = vunpack.c.l.b16 %v99
    %v424 = vunpack.c.l.b16 %v100
    %v425 = vunpack.c.l.b16 %v101
    %v426 = vunpack.c.l.b16 %v102
    %v427 = vunpack.c.l.b16 %v103
    %v428 = vunpack.c.l.b16 %v104
    %v429 = vunpack.c.l.b16 %v105
    %v430 = vunpack.c.l.b16 %v106
    %v431 = vunpack.c.l.b16 %v107
    %v432 = vunpack.c.l.b16 %v108
    %v433 = vunpack.c.l.b16 %v109
    %v434 = vunpack.c.l.b16 %v110
    %v435 = vunpack.c.l.b16 %v111
    %v436 = vunpack.c.l.b16 %v112
    %v437 = vunpack.c.l.b16 %v113
    %v438 = vunpack.c.l.b16 %v114
    %v439 = vunpack.c.l.b16 %v115
    %v440 = vunpack.c.l.b16 %v116
    %v441 = vunpack.c.l.b16 %v117
    %v442 = vunpack.c.l.b16 %v118
    %v443 = vunpack.c.l.b16 %v119
    %v444 = vunpack.c.l.b16 %v120
    %v445 = vunpack.c.l.b16 %v121
    %v446 = vunpack.c.l.b16 %v122
    %v447 = vunpack.c.l.b16 %v123
    %v448 = vunpack.c.l.b16 %v124
    %v449 = vunpack.c.l.b16 %v125
    %v450 = vunpack.c.l.b16 %v126
    %v451 = vunpack.c.l.b16 %v127
    %v452 = vunpack.c.l.b16 %v128
    %v453 = vunpack.c.l.b16 %v129
    %v454 = vunpack.c.l.b16 %v130
    %v455 = vunpack.c.l.b16 %v131
    %v456 = vunpack.c.l.b16 %v132
    %v457 = vunpack.c.l.b16 %v133
    %v458 = vunpack.c.l.b16 %v134
    %v459 = vunpack.c.l.b16 %v135
    %v460 = vunpack.c.l.b16 %v136
    %v461 = vunpack.c.l.b16 %v137
    %v462 = vunpack.c.l.b16 %v138
    %v463 = vunpack.c.l.b16 %v139
    %v464 = vunpack.c.l.b16 %v140
    %v465 = vunpack.c.l.b16 %v141
    %v466 = vunpack.c.l.b16 %v142
    %v467 = vunpack.c.l.b16 %v143
    %v468 = vunpack.c.l.b16 %v144
    %v469 = vunpack.c.l.b16 %v145
    %v470 = vunpack.c.l.b16 %v146
    %v471 = vunpack.c.l.b16 %v147
    %v472 = vunpack.c.l.b16 %v148
    %v473 = vunpack.c.l.b16 %v149
    %v474 = vunpack.c.l.b16 %v150
    %v475 = vunpack.c.l.b16 %v151
    %v476 = vunpack.c.l.b16 %v152
    %v477 = vunpack.c.l.b16 %v153
    %v478 = vunpack.c.l.b16 %v154
    %v479 = vunpack.c.l.b16 %v155
    %v480 = vunpack.c.l.b16 %v156
    %v481 = vunpack.c.l.b16 %v157
    %v482 = vunpack.c.l.b16 %v158
    %v483 = vunpack.c.l.b16 %v159
    %v484 = vunpack.c.l.b16 %v160
    %v485 = vunpack.c.l.b16 %v161
    %v486 = vunpack.c.l.b16 %v162
    %v487 = vunpack.c.l.b16 %v163
    %v488 = vunpack.c.l.b16 %v164
    %v489 = vunpack.c.l.b16 %v165
    %v490 = vunpack.c.l.b16 %v166
    %v491 = vunpack.c.l.b16 %v167
    %v492 = vunpack.c.l.b16 %v168
    %v493 = vunpack.c.l.b16 %v169
    %v494 = vunpack.c.l.b16 %v170
    %v495 = vunpack.c.l.b16 %v171
    %v496 = vunpack.c.l.b16 %v172
    %v497 = vpack.c.b16 %v354, %v353
    %v498 = vpack.c.b16 %v356, %v355
    %v499 = vpack.c.b16 %v358, %v357
    %v500 = vpack.c.b16 %v360, %v359
    %v501 = vpack.c.b16 %v362, %v361
    %v502 = vpack.c.b16 %v364, %v363
    %v503 = vpack.c.b16 %v366, %v365
    %v504 = vpack.c.b16 %v368, %v367
    %v505 = vpack.c.b16 %v370, %v369
    %v506 = vpack.c.b16 %v372, %v371
    %v507 = vpack.c.b16 %v374, %v373
    %v508 = vpack.c.b16 %v376, %v375
    %v509 = vpack.c.b16 %v378, %v377
    %v510 = vpack.c.b16 %v380, %v379
    %v511 = vpack.c.b16 %v382, %v381
    %v512 = vpack.c.b16 %v384, %v383
    %v513 = vpack.c.b16 %v386, %v385
    %v514 = vpack.c.b16 %v388, %v387
    %v515 = vpack.c.b16 %v390, %v389
    %v516 = vpack.c.b16 %v392, %v391
    %v517 = vpack.c.b16 %v394, %v393
    %v518 = vpack.c.b16 %v396, %v395
    %v519 = vpack.c.b16 %v398, %v397
    %v520 = vpack.c.b16 %v400, %v399
    %v521 = vpack.c.b16 %v402, %v401
    %v522 = vpack.c.b16 %v404, %v403
    %v523 = vpack.c.b16 %v406, %v405
    %v524 = vpack.c.b16 %v408, %v407
    %v525 = vpack.c.b16 %v410, %v409
    %v526 = vpack.c.b16 %v412, %v411
    %v527 = vpack.c.b16 %v414, %v413
    %v528 = vpack.c.b16 %v416, %v415
    %v529 = vpack.c.b16 %v418, %v417
    %v530 = vpack.c.b16 %v420, %v419
    %v531 = vpack.c.b16 %v422, %v421
    %v532 = vpack.c.b16 %v424, %v423
    %v533 = vpack.c.b16 %v426, %v425
    %v534 = vpack.c.b16 %v428, %v427
    %v535 = vpack.c.b16 %v430, %v429
    %v536 = vpack.c.b16 %v432, %v431
    %v537 = vpack.c.b16 %v434, %v433
    %v538 = vpack.c.b16 %v436, %v435
    %v539 = vpack.c.b16 %v438, %v437
    %v540 = vpack.c.b16 %v440, %v439
    %v541 = vpack.c.b16 %v442, %v441
    %v542 = vpack.c.b16 %v444, %v443
    %v543 = vpack.c.b16 %v446, %v445
    %v544 = vpack.c.b16 %v448, %v447
    %v545 = vpack.c.b16 %v450, %v449
    %v546 = vpack.c.b16 %v452, %v451
    %v547 = vpack.c.b16 %v454, %v453
    %v548 = vpack.c.b16 %v456, %v455
    %v549 = vpack.c.b16 %v458, %v457
    %v550 = vpack.c.b16 %v460, %v459
    %v551 = vpack.c.b16 %v462, %v461
    %v552 = vpack.c.b16 %v464, %v463
    %v553 = vpack.c.b16 %v466, %v465
    %v554 = vpack.c.b16 %v468, %v467
    %v555 = vpack.c.b16 %v470, %v469
    %v556 = vpack.c.b16 %v472, %v471
    %v557 = vpack.c.b16 %v474, %v473
    %v558 = vpack.c.b16 %v476, %v475
    %v559 = vpack.c.b16 %v478, %v477
    %v560 = vpack.c.b16 %v480, %v479
    %v561 = vpack.c.b16 %v482, %v481
    %v562 = vpack.c.b16 %v484, %v483
    %v563 = vpack.c.b16 %v486, %v485
    %v564 = vpack.c.b16 %v488, %v487
    %v565 = vpack.c.b16 %v490, %v489
    %v566 = vpack.c.b16 %v492, %v491
    %v567 = vpack.c.b16 %v494, %v493
    %v568 = vpack.c.b16 %v496, %v495
    %641 = vmatpush.bf16.msra.mxu0 %v504
    %642 = vmatpush.bf16.msra.mxu0 %v503
    %643 = vmatpush.bf16.msra.mxu0 %v502
    %644 = vmatpush.bf16.msra.mxu0 %v501
    %645 = vmatpush.bf16.msra.mxu0 %v500
    %646 = vmatpush.bf16.msra.mxu0 %v499
    %647 = vmatpush.bf16.msra.mxu0 %v498
    %648 = vmatpush.bf16.msra.mxu0 %v497
    %649 = vmatmul.bf16.gmra.mxu0 %v191
    %v650 = vpop.f32.mrf.mxu0
    %v651 = vadd.f32 %v175, %v650
    %v652 = vpop.f32.mrf.mxu0
    %653 = vdwg.mxu0
    %654 = vmatpush.bf16.msra.mxu0 %v512
    %655 = vmatpush.bf16.msra.mxu0 %v511
    %656 = vmatpush.bf16.msra.mxu0 %v510
    %657 = vmatpush.bf16.msra.mxu0 %v509
    %658 = vmatpush.bf16.msra.mxu0 %v508
    %659 = vmatpush.bf16.msra.mxu0 %v507
    %660 = vmatpush.bf16.msra.mxu0 %v506
    %661 = vmatpush.bf16.msra.mxu0 %v505
    %662 = vmatmul.bf16.gmra.mxu0 %v192
    %v663 = vpop.f32.mrf.mxu0
    %v664 = vadd.f32 %v651, %v663
    %v665 = vpop.f32.mrf.mxu0
    %666 = vdwg.mxu0
    %667 = vmatpush.bf16.msra.mxu0 %v520
    %668 = vmatpush.bf16.msra.mxu0 %v519
    %669 = vmatpush.bf16.msra.mxu0 %v518
    %670 = vmatpush.bf16.msra.mxu0 %v517
    %671 = vmatpush.bf16.msra.mxu0 %v516
    %672 = vmatpush.bf16.msra.mxu0 %v515
    %673 = vmatpush.bf16.msra.mxu0 %v514
    %674 = vmatpush.bf16.msra.mxu0 %v513
    %675 = vmatmul.bf16.gmra.mxu0 %v193
    %v676 = vpop.f32.mrf.mxu0
    %v677 = vadd.f32 %v664, %v676
    %v678 = vpop.f32.mrf.mxu0
    %679 = vdwg.mxu0
    %680 = vmatpush.bf16.msra.mxu0 %v528
    %681 = vmatpush.bf16.msra.mxu0 %v527
    %682 = vmatpush.bf16.msra.mxu0 %v526
    %683 = vmatpush.bf16.msra.mxu0 %v525
    %684 = vmatpush.bf16.msra.mxu0 %v524
    %685 = vmatpush.bf16.msra.mxu0 %v523
    %686 = vmatpush.bf16.msra.mxu0 %v522
    %687 = vmatpush.bf16.msra.mxu0 %v521
    %688 = vmatmul.bf16.gmra.mxu0 %v194
    %v689 = vpop.f32.mrf.mxu0
    %v690 = vadd.f32 %v677, %v689
    %v691 = vpop.f32.mrf.mxu0
    %692 = vdwg.mxu0
    %693 = vmatpush.bf16.msra.mxu0 %v536
    %694 = vmatpush.bf16.msra.mxu0 %v535
    %695 = vmatpush.bf16.msra.mxu0 %v534
    %696 = vmatpush.bf16.msra.mxu0 %v533
    %697 = vmatpush.bf16.msra.mxu0 %v532
    %698 = vmatpush.bf16.msra.mxu0 %v531
    %699 = vmatpush.bf16.msra.mxu0 %v530
    %700 = vmatpush.bf16.msra.mxu0 %v529
    %701 = vmatmul.bf16.gmra.mxu0 %v195
    %v702 = vpop.f32.mrf.mxu0
    %v703 = vadd.f32 %v690, %v702
    %v704 = vpop.f32.mrf.mxu0
    %705 = vdwg.mxu0
    %706 = vmatpush.bf16.msra.mxu0 %v544
    %707 = vmatpush.bf16.msra.mxu0 %v543
    %708 = vmatpush.bf16.msra.mxu0 %v542
    %709 = vmatpush.bf16.msra.mxu0 %v541
    %710 = vmatpush.bf16.msra.mxu0 %v540
    %711 = vmatpush.bf16.msra.mxu0 %v539
    %712 = vmatpush.bf16.msra.mxu0 %v538
    %713 = vmatpush.bf16.msra.mxu0 %v537
    %714 = vmatmul.bf16.gmra.mxu0 %v196
    %v715 = vpop.f32.mrf.mxu0
    %v716 = vadd.f32 %v703, %v715
    %v717 = vpop.f32.mrf.mxu0
    %718 = vdwg.mxu0
    %719 = vmatpush.bf16.msra.mxu0 %v552
    %720 = vmatpush.bf16.msra.mxu0 %v551
    %721 = vmatpush.bf16.msra.mxu0 %v550
    %722 = vmatpush.bf16.msra.mxu0 %v549
    %723 = vmatpush.bf16.msra.mxu0 %v548
    %724 = vmatpush.bf16.msra.mxu0 %v547
    %725 = vmatpush.bf16.msra.mxu0 %v546
    %726 = vmatpush.bf16.msra.mxu0 %v545
    %727 = vmatmul.bf16.gmra.mxu0 %v197
    %v728 = vpop.f32.mrf.mxu0
    %v729 = vadd.f32 %v716, %v728
    %v730 = vpop.f32.mrf.mxu0
    %731 = vdwg.mxu0
    %732 = vmatpush.bf16.msra.mxu0 %v560
    %733 = vmatpush.bf16.msra.mxu0 %v559
    %734 = vmatpush.bf16.msra.mxu0 %v558
    %735 = vmatpush.bf16.msra.mxu0 %v557
    %736 = vmatpush.bf16.msra.mxu0 %v556
    %737 = vmatpush.bf16.msra.mxu0 %v555
    %738 = vmatpush.bf16.msra.mxu0 %v554
    %739 = vmatpush.bf16.msra.mxu0 %v553
    %740 = vmatmul.bf16.gmra.mxu0 %v198
    %v741 = vpop.f32.mrf.mxu0
    %v742 = vadd.f32 %v729, %v741
    %v743 = vpop.f32.mrf.mxu0
    %744 = vdwg.mxu0
    %745 = vmatpush.bf16.msra.mxu0 %v568
    %746 = vmatpush.bf16.msra.mxu0 %v567
    %747 = vmatpush.bf16.msra.mxu0 %v566
    %748 = vmatpush.bf16.msra.mxu0 %v565
    %749 = vmatpush.bf16.msra.mxu0 %v564
    %750 = vmatpush.bf16.msra.mxu0 %v563
    %751 = vmatpush.bf16.msra.mxu0 %v562
    %752 = vmatpush.bf16.msra.mxu0 %v561
    %753 = vmatmul.bf16.gmra.mxu0 %v199
    %v754 = vpop.f32.mrf.mxu0
    %v755 = vadd.f32 %v742, %v754
    %v756 = vpop.f32.mrf.mxu0
    %757 = vdwg.mxu0
    %v758 = vmax.f32 %v755, 0.0
    %v759 = vld [vmem:[%s3] sm:$0x3]
    %vm760 = vcmask 64512
    %v762 = vsel %vm760, %v759, 0
    %764 = vmatpush.msra.mxu0 0.0
    %765 = vmatpush.msra.mxu0 0.0
    %766 = vmatpush.msra.mxu0 0.0
    %767 = vmatpush.msra.mxu0 0.0
    %768 = vmatpush.msra.mxu0 0.0
    %769 = vmatpush.msra.mxu0 0.0
    %770 = vmatpush.msra.mxu0 0.0
    %771 = vmatpush.msra.mxu0 0.0
    %772 = vmatpush.msra.mxu0 0.0
    %773 = vmatpush.msra.mxu0 0.0
    %774 = vmatpush.msra.mxu0 0.0
    %775 = vmatpush.msra.mxu0 0.0
    %776 = vmatpush.msra.mxu0 0.0
    %777 = vmatpush.msra.mxu0 0.0
    %778 = vmatpush.msra.mxu0 0.0
    %779 = vmatpush.msra.mxu0 %v758
    %780 = vmatmul.f32.gmra.mxu0 %v762
    %v781 = vpop.f32.mrf.mxu0
    %v782 = vadd.f32 0.0, %v781
    %783 = vdwg.mxu0
    %v784 = vld [vmem:[%s4] sm:$0xff]
    %v785 = vld [vmem:[%s4 + $0x8] sm:$0xff]
    %v786 = vld [vmem:[%s4 + $0x10] sm:$0xff]
    %v787 = vld [vmem:[%s4 + $0x18] sm:$0xff]
    %v788 = vld [vmem:[%s4 + $0x20] sm:$0xff]
    %v789 = vld [vmem:[%s4 + $0x28] sm:$0xff]
    %v790 = vld [vmem:[%s4 + $0x30] sm:$0xff]
    %v791 = vld [vmem:[%s4 + $0x38] sm:$0xff]
    %v792 = vld [vmem:[%s4 + $0x40] sm:$0xff]
    %v793 = vld [vmem:[%s4 + $0x48] sm:$0xff]
    %v794 = vld [vmem:[%s4 + $0x50] sm:$0xff]
    %v795 = vld [vmem:[%s4 + $0x58] sm:$0xff]
    %v796 = vld [vmem:[%s4 + $0x60] sm:$0xff]
    %v797 = vld [vmem:[%s4 + $0x68] sm:$0xff]
    %v798 = vld [vmem:[%s4 + $0x70] sm:$0xff]
    %v799 = vld [vmem:[%s4 + $0x78] sm:$0xff]
    %v800 = vld [vmem:[%s5] sm:$0x1]
    %v802 = vperm.slane %v800, 0
    %804 = vmatpush.msra.mxu0 %v799
    %805 = vmatpush.msra.mxu0 %v798
    %806 = vmatpush.msra.mxu0 %v797
    %807 = vmatpush.msra.mxu0 %v796
    %808 = vmatpush.msra.mxu0 %v795
    %809 = vmatpush.msra.mxu0 %v794
    %810 = vmatpush.msra.mxu0 %v793
    %811 = vmatpush.msra.mxu0 %v792
    %812 = vmatpush.msra.mxu0 %v791
    %813 = vmatpush.msra.mxu0 %v790
    %814 = vmatpush.msra.mxu0 %v789
    %815 = vmatpush.msra.mxu0 %v788
    %816 = vmatpush.msra.mxu0 %v787
    %817 = vmatpush.msra.mxu0 %v786
    %818 = vmatpush.msra.mxu0 %v785
    %819 = vmatpush.msra.mxu0 %v784
    %820 = vmatmul.f32.gmra.mxu0 %v782
    %v821 = vpop.f32.mrf.mxu0
    %v822 = vadd.f32 %v802, %v821
    %823 = vdwg.mxu0
    %vm824 = vcmask 9216
    %825 = vst.msk [vmem:[#allocation2] sm:$0x3] %vm824, %v822
    // Predicated region
    $region26: #{netD3_forward.5} parent=1 // pred_check
      _
    $region27: #{netD3_forward.5} parent=1 // pred_check_branch
      %827 = sbr.rel (0) target = $region29
    $region28: #{netD3_forward.5} parent=1 // pred_region
      %829 = vsyncadd [#allocation3], 0
      %s831 = sshll.u32 [#allocation2], 4
      %s832 = int_to_ptr.vmem [resolvable:$true] %s831
      %s833 = sshll.u32 %s6, 4
      %s834 = int_to_ptr.hbm [resolvable:$true] %s833
      %836 = dma.vmem_to_hbm [thread:$0]  %s832, 32, %s834, [#allocation3]
    $region29: #{netD3_forward.5} parent=1 // pred_fallthru
      _
    // Predicated region
    $region30: #{netD3_forward.5} parent=1 // pred_check
      _
    $region31: #{netD3_forward.5} parent=1 // pred_check_branch
      %838 = sbr.rel (0) target = $region33
    $region32: #{netD3_forward.5} parent=1 // pred_region
      %840 = dma.done [#allocation3], 32
    $region33: #{netD3_forward.5} parent=1 // pred_fallthru
      _
    %841 = vsyncpa [#allocation3], 1

</llo_original>
